<compile_context>
chip_gen: v7x
topology: tpu7x:2x2x1
jax: 0.10.0
libtpu: 0.0.40
codegen_flags: <defaults>
</compile_context>

<pallas_src>
import functools
import math

import jax
import jax.numpy as jnp
from jax.experimental import pallas as pl
from jax.experimental.pallas import tpu as pltpu

_PAR = pltpu.CompilerParams(dimension_semantics=("parallel",))


def _pick_tile(p, cap=1024):
    """Largest row tile <= cap that divides p and is a multiple of 8 (else p)."""
    if p <= cap:
        return p
    for t in range(cap - cap % 8, 7, -8):
        if p % t == 0:
            return t
    return p


# --------------------------------------------------------------------------
# Pallas kernels
# --------------------------------------------------------------------------
def _conv1x1_bn_kernel(x_ref, w_ref, b_ref, o_ref):
    # x: (TP, Cin) bf16, w: (Cin, mid) bf16 (BN scale folded), b: (1, mid) f32
    y = jnp.dot(x_ref[...], w_ref[...], preferred_element_type=jnp.float32)
    o_ref[...] = (y + b_ref[...]).astype(o_ref.dtype)


def _abf_front_fused_kernel(x_ref, y_ref, w_ref, b_ref, wa_ref, ba_ref, o_ref):
    # Fused conv1x1 + BN + sigmoid-attention fuse on one P-tile.
    # x: (TP, Cin) bf16, y: (TP, mid) bf16 (already nearest-upsampled)
    # w: (Cin, mid) bf16, b: (1, mid) f32, wa: (2, 2*mid) f32, ba: (1, 2) f32
    mid = w_ref.shape[1]
    x1 = jnp.dot(x_ref[...], w_ref[...],
                 preferred_element_type=jnp.float32) + b_ref[...]
    y = y_ref[...].astype(jnp.float32)
    # 2-channel 1x1 attention conv as VPU mul + XLU lane-reduce (an MXU matmul
    # with N=2 output lanes would waste the MXU).
    l0 = (jnp.sum(x1 * wa_ref[0:1, :mid], axis=-1, keepdims=True)
          + jnp.sum(y * wa_ref[0:1, mid:], axis=-1, keepdims=True)
          + ba_ref[0:1, 0:1])
    l1 = (jnp.sum(x1 * wa_ref[1:2, :mid], axis=-1, keepdims=True)
          + jnp.sum(y * wa_ref[1:2, mid:], axis=-1, keepdims=True)
          + ba_ref[0:1, 1:2])
    z0 = jax.nn.sigmoid(l0)
    z1 = jax.nn.sigmoid(l1)
    o_ref[...] = (x1 * z0 + y * z1).astype(o_ref.dtype)


def _conv3x3_bn_kernel(xp_ref, w_ref, b_ref, o_ref, *, W):
    # One image per grid step.
    # xp: (PW + 2*halo, mid) f32 -- flattened (H+2)x(W+2) zero-padded image,
    #     with `halo` extra zero rows on each side so every tap slice is
    #     in-bounds. PW = (H+2)*(W+2), halo = W+3.
    # w : (9, mid, Cout) bf16 (BN scale folded), tap t = dh*3 + dw.
    # o : (PW, Cout) f32 in the same padded-flat layout (wrapper slices interior).
    PW, _ = o_ref.shape
    halo = W + 3
    acc = jnp.zeros(o_ref.shape, jnp.float32)
    for t in range(9):
        dh, dw = divmod(t, 3)
        off = (dh - 1) * (W + 2) + (dw - 1)        # constant flat shift of tap t
        xt = xp_ref[pl.ds(halo + off, PW), :].astype(jnp.bfloat16)
        acc = acc + jnp.dot(xt, w_ref[t], preferred_element_type=jnp.float32)
    o_ref[...] = acc + b_ref[...]


# --------------------------------------------------------------------------
# Wrappers (layout glue only)
# --------------------------------------------------------------------------
def abf_front(x2, p, y2=None):
    """conv1x1+BN (optionally fused with attention) over flattened (P, C)."""
    P, Cin = x2.shape
    mid = p["w1"].shape[1]
    tp = _pick_tile(P)
    grid = (P // tp,)
    out_shape = jax.ShapeDtypeStruct((P, mid), jnp.float32)
    row = lambda i: (i, 0)
    rep = lambda i: (0, 0)
    if y2 is None:
        return pl.pallas_call(
            _conv1x1_bn_kernel,
            out_shape=out_shape,
            grid=grid,
            in_specs=[pl.BlockSpec((tp, Cin), row),
                      pl.BlockSpec((Cin, mid), rep),
                      pl.BlockSpec((1, mid), rep)],
            out_specs=pl.BlockSpec((tp, mid), row),
            compiler_params=_PAR,
        )(x2, p["w1"], p["b1"])
    return pl.pallas_call(
        _abf_front_fused_kernel,
        out_shape=out_shape,
        grid=grid,
        in_specs=[pl.BlockSpec((tp, Cin), row),
                  pl.BlockSpec((tp, mid), row),
                  pl.BlockSpec((Cin, mid), rep),
                  pl.BlockSpec((1, mid), rep),
                  pl.BlockSpec((2, 2 * mid), rep),
                  pl.BlockSpec((1, 2), rep)],
        out_specs=pl.BlockSpec((tp, mid), row),
        compiler_params=_PAR,
    )(x2, y2, p["w1"], p["b1"], p["att_w"], p["att_b"])


def conv3x3_bn(res_nhwc, w2, b2):
    """3x3 stride-1 pad-1 conv + BN shift; grid over images, taps taken in-kernel."""
    N, H, W, mid = res_nhwc.shape
    Cout = w2.shape[-1]
    PW = (H + 2) * (W + 2)
    halo = W + 3
    # conv padding (1 px) + flatten + halo rows: ~1.3x bytes instead of the 9x im2col.
    xp = jnp.pad(res_nhwc, ((0, 0), (1, 1), (1, 1), (0, 0)))
    xpf = jnp.pad(xp.reshape(N, PW, mid), ((0, 0), (halo, halo), (0, 0)))
    out = pl.pallas_call(
        functools.partial(_conv3x3_bn_kernel, W=W),
        out_shape=jax.ShapeDtypeStruct((N, PW, Cout), jnp.float32),
        grid=(N,),
        in_specs=[pl.BlockSpec((None, PW + 2 * halo, mid), lambda i: (i, 0, 0)),
                  pl.BlockSpec((9, mid, Cout), lambda i: (0, 0, 0)),
                  pl.BlockSpec((1, Cout), lambda i: (0, 0))],
        out_specs=pl.BlockSpec((None, PW, Cout), lambda i: (i, 0, 0)),
        compiler_params=_PAR,
    )(xpf, w2, b2)
    return out.reshape(N, H + 2, W + 2, Cout)[:, 1:H + 1, 1:W + 1, :]


def nearest_interp_nhwc(y, out_h, out_w):
    # F.interpolate(..., mode='nearest'): src = floor(dst * src_size / dst_size)
    N, H, W, C = y.shape
    ih = (jnp.arange(out_h) * H // out_h).astype(jnp.int32)
    iw = (jnp.arange(out_w) * W // out_w).astype(jnp.int32)
    return y[:, ih][:, :, iw]


# --------------------------------------------------------------------------
# ABF / ReviewKD forward
# --------------------------------------------------------------------------
def abf_forward(p, x_nhwc, y_nhwc=None, shape=None):
    N, H, W, Cin = x_nhwc.shape
    mid = p["w1"].shape[1]
    x2 = x_nhwc.reshape(N * H * W, Cin)
    if p["att_w"] is not None:
        # TODO(synk): fuse the nearest-neighbor upsample into the front kernel's
        # index_map instead of materializing the upsampled y once in HBM.
        y_up = nearest_interp_nhwc(y_nhwc, shape, shape).astype(jnp.bfloat16)
        res2 = abf_front(x2, p, y_up.reshape(N * H * W, mid))
    else:
        res2 = abf_front(x2, p)
    res = res2.reshape(N, H, W, mid)            # f32, fed to conv2 and next stage
    out = conv3x3_bn(res, p["w2"], p["b2"])     # (N, H, W, Cout) f32
    return out, res


def review_kd_forward(abf_params_rev, shapes, feats_nchw, logit):
    """feats_nchw: student features, shallow -> deep (PyTorch order)."""
    # reverse (deep first); cast to bf16 BEFORE the NCHW->NHWC transpose.
    x = [jnp.transpose(f.astype(jnp.bfloat16), (0, 2, 3, 1))
         for f in feats_nchw[::-1]]
    results = []
    out, res = abf_forward(abf_params_rev[0], x[0])
    results.append(out)
    for feat, params, shape in zip(x[1:], abf_params_rev[1:], shapes[1:]):
        out, res = abf_forward(params, feat, res, shape)
        results.insert(0, out)
    # TODO(synk): NCHW<->NHWC boundary transposes kept only for PyTorch parity.
    results = [jnp.transpose(r, (0, 3, 1, 2)) for r in results]
    return results, logit


# --------------------------------------------------------------------------
# Deterministic parameter init (mirrors the PyTorch __init__, BN folded)
# --------------------------------------------------------------------------
def _kaiming_uniform(key, shape, fan_in, a):
    gain = math.sqrt(2.0 / (1.0 + a * a))
    bound = gain * math.sqrt(3.0 / fan_in)
    return jax.random.uniform(key, shape, jnp.float32, -bound, bound)


def _bn_fold(c, eps=1e-5):
    gamma = jnp.ones((c,), jnp.float32)
    beta = jnp.zeros((c,), jnp.float32)
    mean = jnp.zeros((c,), jnp.float32)
    var = jnp.ones((c,), jnp.float32)
    scale = gamma / jnp.sqrt(var + eps)
    shift = beta - mean * scale
    return scale, shift


def init_abf(key, in_c, mid_c, out_c, fuse):
    k1, k2, k3, k4 = jax.random.split(key, 4)
    p = {}
    # conv1: 1x1, no bias, kaiming_uniform(a=1); stored (Cin, Cout), BN scale folded.
    s1, b1 = _bn_fold(mid_c)
    w1 = _kaiming_uniform(k1, (in_c, mid_c), fan_in=in_c, a=1.0)
    p["w1"] = (w1 * s1[None, :]).astype(jnp.bfloat16)
    p["b1"] = b1.reshape(1, mid_c)
    # conv2: 3x3, no bias, kaiming_uniform(a=1); stored (9, Cin, Cout), tap t = dh*3+dw.
    # NOTE: if real PyTorch weights are loaded, map weight[co, ci, dh, dw] -> w2[dh*3+dw, ci, co].
    s2, b2 = _bn_fold(out_c)
    w2 = _kaiming_uniform(k2, (9, mid_c, out_c), fan_in=mid_c * 9, a=1.0)
    p["w2"] = (w2 * s2[None, None, :]).astype(jnp.bfloat16)
    p["b2"] = b2.reshape(1, out_c)
    if fuse:
        fan_in = 2 * mid_c
        bound = 1.0 / math.sqrt(fan_in)          # default Conv2d init (a=sqrt(5))
        p["att_w"] = jax.random.uniform(k3, (2, 2 * mid_c), jnp.float32, -bound, bound)
        p["att_b"] = jax.random.uniform(k4, (1, 2), jnp.float32, -bound, bound)
    else:
        p["att_w"] = None
        p["att_b"] = None
    return p


# --------------------------------------------------------------------------
if __name__ == "__main__":
    key = jax.random.PRNGKey(0)

    # small synthetic ReviewKD config
    in_channels = [8, 16, 32]      # shallow -> deep
    out_channels = [8, 16, 32]
    mid_channel = 16
    shapes = [4, 8, 16]            # custom_shape: deepest -> shallowest spatial
    N = 2
    num_classes = 10

    keys = jax.random.split(key, 2 * len(in_channels) + 2)
    abfs = [
        init_abf(keys[i], in_channels[i], mid_channel, out_channels[i],
                 fuse=(i < len(in_channels) - 1))
        for i in range(len(in_channels))
    ]
    abfs_rev = abfs[::-1]

    # synthetic "student" outputs: features (shallow -> deep, NCHW) + logit
    spatials = shapes[::-1]        # [16, 8, 4] shallow -> deep
    feat_keys = keys[len(in_channels):2 * len(in_channels)]
    feats = [
        jax.random.normal(feat_keys[i],
                          (N, in_channels[i], spatials[i], spatials[i]),
                          jnp.float32)
        for i in range(len(in_channels))
    ]
    logit = jax.random.normal(keys[-1], (N, num_classes), jnp.float32)

    fwd = jax.jit(functools.partial(review_kd_forward, abfs_rev, shapes))
    results, logit_out = fwd(feats, logit)
    jax.block_until_ready((results, logit_out))

    expected = [(N, out_channels[i], spatials[i], spatials[i])
                for i in range(len(in_channels))]
    assert [tuple(r.shape) for r in results] == expected, \
        f"got {[r.shape for r in results]}, want {expected}"
    assert logit_out.shape == (N, num_classes)
    assert all(bool(jnp.isfinite(r).all()) for r in results)

    print("KERNEL_OK")
</pallas_src>

<mosaic_0001>
module attributes {stable_mosaic.version = 11 : i64} {
  func.func @_conv1x1_bn_kernel(%arg0: i32, %arg1: memref<32x32xbf16, #tpu.memory_space<vmem>>, %arg2: memref<32x16xbf16, #tpu.memory_space<vmem>>, %arg3: memref<1x16xf32, #tpu.memory_space<vmem>>, %arg4: memref<32x16xf32, #tpu.memory_space<vmem>>) attributes {dimension_semantics = [#tpu.dimension_semantics<parallel>], iteration_bounds = array<i64: 1>, scalar_prefetch = 0 : i64, scratch_operands = 0 : i64, tpu.core_type = #tpu.core_type<tc>, window_params = [{transform_indices = @transform_0, window_bounds = array<i64: 32, 32>}, {pipeline_mode = #tpu.pipeline_mode<synchronous>, transform_indices = @transform_1, window_bounds = array<i64: 32, 16>}, {pipeline_mode = #tpu.pipeline_mode<synchronous>, transform_indices = @transform_2, window_bounds = array<i64: 1, 16>}, {transform_indices = @transform_3, window_bounds = array<i64: 32, 16>}]} {
    %c0 = arith.constant 0 : index
    %c0_0 = arith.constant 0 : index
    %0 = vector.load %arg1[%c0, %c0_0] : memref<32x32xbf16, #tpu.memory_space<vmem>>, vector<32x32xbf16>
    %c0_1 = arith.constant 0 : index
    %c0_2 = arith.constant 0 : index
    %1 = vector.load %arg2[%c0_1, %c0_2] : memref<32x16xbf16, #tpu.memory_space<vmem>>, vector<32x16xbf16>
    %cst = arith.constant dense<0.000000e+00> : vector<32x16xf32>
    %2 = tpu.matmul %0, %1, %cst {dimension_numbers = #tpu.dot_dimension_numbers<[1], [0], [0], [1], [0, 0, 1, 1], [], []>} : vector<32x32xbf16>, vector<32x16xbf16>, vector<32x16xf32> -> vector<32x16xf32>
    %c0_3 = arith.constant 0 : index
    %c0_4 = arith.constant 0 : index
    %3 = vector.load %arg3[%c0_3, %c0_4] : memref<1x16xf32, #tpu.memory_space<vmem>>, vector<1x16xf32>
    %4 = vector.broadcast %3 : vector<1x16xf32> to vector<32x16xf32>
    %5 = arith.addf %2, %4 : vector<32x16xf32>
    %c0_5 = arith.constant 0 : index
    %c0_6 = arith.constant 0 : index
    %6 = vector.load %arg4[%c0_5, %c0_6] : memref<32x16xf32, #tpu.memory_space<vmem>>, vector<32x16xf32>
    tpu.vector_store %arg4[%c0_5, %c0_6], %5 {strides = array<i32>} : memref<32x16xf32, #tpu.memory_space<vmem>>, vector<32x16xf32>,
    return
  }
  func.func @transform_0(%arg0: i32) -> (i32, i32) {
    %c0_i32 = arith.constant 0 : i32
    %c0_i32_0 = arith.constant 0 : i32
    return %arg0, %c0_i32 : i32, i32
  }
  func.func @transform_1(%arg0: i32) -> (i32, i32) {
    %c0_i32 = arith.constant 0 : i32
    %c0_i32_0 = arith.constant 0 : i32
    %c0_i32_1 = arith.constant 0 : i32
    return %c0_i32, %c0_i32_0 : i32, i32
  }
  func.func @transform_2(%arg0: i32) -> (i32, i32) {
    %c0_i32 = arith.constant 0 : i32
    %c0_i32_0 = arith.constant 0 : i32
    %c0_i32_1 = arith.constant 0 : i32
    return %c0_i32, %c0_i32_0 : i32, i32
  }
  func.func @transform_3(%arg0: i32) -> (i32, i32) {
    %c0_i32 = arith.constant 0 : i32
    %c0_i32_0 = arith.constant 0 : i32
    return %arg0, %c0_i32 : i32, i32
  }
}

module attributes {stable_mosaic.version = 11 : i64} {
  func.func @_abf_front_fused_kernel(%arg0: i32, %arg1: memref<128x16xbf16, #tpu.memory_space<vmem>>, %arg2: memref<128x16xbf16, #tpu.memory_space<vmem>>, %arg3: memref<16x16xbf16, #tpu.memory_space<vmem>>, %arg4: memref<1x16xf32, #tpu.memory_space<vmem>>, %arg5: memref<2x32xf32, #tpu.memory_space<vmem>>, %arg6: memref<1x2xf32, #tpu.memory_space<vmem>>, %arg7: memref<128x16xf32, #tpu.memory_space<vmem>>) attributes {dimension_semantics = [#tpu.dimension_semantics<parallel>], iteration_bounds = array<i64: 1>, scalar_prefetch = 0 : i64, scratch_operands = 0 : i64, tpu.core_type = #tpu.core_type<tc>, window_params = [{transform_indices = @transform_0, window_bounds = array<i64: 128, 16>}, {transform_indices = @transform_1, window_bounds = array<i64: 128, 16>}, {pipeline_mode = #tpu.pipeline_mode<synchronous>, transform_indices = @transform_2, window_bounds = array<i64: 16, 16>}, {pipeline_mode = #tpu.pipeline_mode<synchronous>, transform_indices = @transform_3, window_bounds = array<i64: 1, 16>}, {pipeline_mode = #tpu.pipeline_mode<synchronous>, transform_indices = @transform_4, window_bounds = array<i64: 2, 32>}, {pipeline_mode = #tpu.pipeline_mode<synchronous>, transform_indices = @transform_5, window_bounds = array<i64: 1, 2>}, {transform_indices = @transform_6, window_bounds = array<i64: 128, 16>}]} {
    %c0 = arith.constant 0 : index
    %c0_0 = arith.constant 0 : index
    %0 = vector.load %arg1[%c0, %c0_0] : memref<128x16xbf16, #tpu.memory_space<vmem>>, vector<128x16xbf16>
    %c0_1 = arith.constant 0 : index
    %c0_2 = arith.constant 0 : index
    %1 = vector.load %arg3[%c0_1, %c0_2] : memref<16x16xbf16, #tpu.memory_space<vmem>>, vector<16x16xbf16>
    %cst = arith.constant dense<0.000000e+00> : vector<128x16xf32>
    %2 = tpu.matmul %0, %1, %cst {dimension_numbers = #tpu.dot_dimension_numbers<[1], [0], [0], [1], [0, 0, 1, 1], [], []>} : vector<128x16xbf16>, vector<16x16xbf16>, vector<128x16xf32> -> vector<128x16xf32>
    %c0_3 = arith.constant 0 : index
    %c0_4 = arith.constant 0 : index
    %3 = vector.load %arg4[%c0_3, %c0_4] : memref<1x16xf32, #tpu.memory_space<vmem>>, vector<1x16xf32>
    %4 = vector.broadcast %3 : vector<1x16xf32> to vector<128x16xf32>
    %5 = arith.addf %2, %4 : vector<128x16xf32>
    %c0_5 = arith.constant 0 : index
    %c0_6 = arith.constant 0 : index
    %6 = vector.load %arg2[%c0_5, %c0_6] : memref<128x16xbf16, #tpu.memory_space<vmem>>, vector<128x16xbf16>
    %7 = arith.extf %6 : vector<128x16xbf16> to vector<128x16xf32>
    %c0_7 = arith.constant 0 : index
    %c0_8 = arith.constant 0 : index
    %8 = vector.load %arg5[%c0_7, %c0_8] : memref<2x32xf32, #tpu.memory_space<vmem>>, vector<1x16xf32>
    %9 = vector.broadcast %8 : vector<1x16xf32> to vector<128x16xf32>
    %10 = arith.mulf %5, %9 : vector<128x16xf32>
    %cst_9 = arith.constant dense<0.000000e+00> : vector<128xf32>
    %11 = vector.multi_reduction <add>, %10, %cst_9 [1] : vector<128x16xf32> to vector<128xf32>
    %12 = vector.shape_cast %11 : vector<128xf32> to vector<128x1xf32>
    %c0_10 = arith.constant 0 : index
    %c16 = arith.constant 16 : index
    %13 = vector.load %arg5[%c0_10, %c16] : memref<2x32xf32, #tpu.memory_space<vmem>>, vector<1x16xf32>
    %14 = vector.broadcast %13 : vector<1x16xf32> to vector<128x16xf32>
    %15 = arith.mulf %7, %14 : vector<128x16xf32>
    %cst_11 = arith.constant dense<0.000000e+00> : vector<128xf32>
    %16 = vector.multi_reduction <add>, %15, %cst_11 [1] : vector<128x16xf32> to vector<128xf32>
    %17 = vector.shape_cast %16 : vector<128xf32> to vector<128x1xf32>
    %18 = arith.addf %12, %17 : vector<128x1xf32>
    %c0_12 = arith.constant 0 : index
    %c0_13 = arith.constant 0 : index
    %19 = vector.load %arg6[%c0_12, %c0_13] : memref<1x2xf32, #tpu.memory_space<vmem>>, vector<1x1xf32>
    %20 = vector.broadcast %19 : vector<1x1xf32> to vector<128x1xf32>
    %21 = arith.addf %18, %20 : vector<128x1xf32>
    %c1 = arith.constant 1 : index
    %c0_14 = arith.constant 0 : index
    %22 = vector.load %arg5[%c1, %c0_14] : memref<2x32xf32, #tpu.memory_space<vmem>>, vector<1x16xf32>
    %23 = vector.broadcast %22 : vector<1x16xf32> to vector<128x16xf32>
    %24 = arith.mulf %5, %23 : vector<128x16xf32>
    %cst_15 = arith.constant dense<0.000000e+00> : vector<128xf32>
    %25 = vector.multi_reduction <add>, %24, %cst_15 [1] : vector<128x16xf32> to vector<128xf32>
    %26 = vector.shape_cast %25 : vector<128xf32> to vector<128x1xf32>
    %c1_16 = arith.constant 1 : index
    %c16_17 = arith.constant 16 : index
    %27 = vector.load %arg5[%c1_16, %c16_17] : memref<2x32xf32, #tpu.memory_space<vmem>>, vector<1x16xf32>
    %28 = vector.broadcast %27 : vector<1x16xf32> to vector<128x16xf32>
    %29 = arith.mulf %7, %28 : vector<128x16xf32>
    %cst_18 = arith.constant dense<0.000000e+00> : vector<128xf32>
    %30 = vector.multi_reduction <add>, %29, %cst_18 [1] : vector<128x16xf32> to vector<128xf32>
    %31 = vector.shape_cast %30 : vector<128xf32> to vector<128x1xf32>
    %32 = arith.addf %26, %31 : vector<128x1xf32>
    %c0_19 = arith.constant 0 : index
    %c1_20 = arith.constant 1 : index
    %33 = vector.load %arg6[%c0_19, %c1_20] : memref<1x2xf32, #tpu.memory_space<vmem>>, vector<1x1xf32>
    %34 = vector.broadcast %33 : vector<1x1xf32> to vector<128x1xf32>
    %35 = arith.addf %32, %34 : vector<128x1xf32>
    %36 = arith.negf %21 : vector<128x1xf32>
    %37 = math.exp %36 : vector<128x1xf32>
    %cst_21 = arith.constant 1.000000e+00 : f32
    %38 = vector.broadcast %cst_21 : f32 to vector<128x1xf32>
    %39 = arith.addf %38, %37 : vector<128x1xf32>
    %40 = arith.divf %38, %39 : vector<128x1xf32>
    %41 = arith.negf %35 : vector<128x1xf32>
    %42 = math.exp %41 : vector<128x1xf32>
    %cst_22 = arith.constant 1.000000e+00 : f32
    %43 = vector.broadcast %cst_22 : f32 to vector<128x1xf32>
    %44 = arith.addf %43, %42 : vector<128x1xf32>
    %45 = arith.divf %43, %44 : vector<128x1xf32>
    %46 = vector.broadcast %40 : vector<128x1xf32> to vector<128x16xf32>
    %47 = arith.mulf %5, %46 : vector<128x16xf32>
    %48 = vector.broadcast %45 : vector<128x1xf32> to vector<128x16xf32>
    %49 = arith.mulf %7, %48 : vector<128x16xf32>
    %50 = arith.addf %47, %49 : vector<128x16xf32>
    %c0_23 = arith.constant 0 : index
    %c0_24 = arith.constant 0 : index
    %51 = vector.load %arg7[%c0_23, %c0_24] : memref<128x16xf32, #tpu.memory_space<vmem>>, vector<128x16xf32>
    tpu.vector_store %arg7[%c0_23, %c0_24], %50 {strides = array<i32>} : memref<128x16xf32, #tpu.memory_space<vmem>>, vector<128x16xf32>,
    return
  }
  func.func @transform_0(%arg0: i32) -> (i32, i32) {
    %c0_i32 = arith.constant 0 : i32
    %c0_i32_0 = arith.constant 0 : i32
    return %arg0, %c0_i32 : i32, i32
  }
  func.func @transform_1(%arg0: i32) -> (i32, i32) {
    %c0_i32 = arith.constant 0 : i32
    %c0_i32_0 = arith.constant 0 : i32
    return %arg0, %c0_i32 : i32, i32
  }
  func.func @transform_2(%arg0: i32) -> (i32, i32) {
    %c0_i32 = arith.constant 0 : i32
    %c0_i32_0 = arith.constant 0 : i32
    %c0_i32_1 = arith.constant 0 : i32
    return %c0_i32, %c0_i32_0 : i32, i32
  }
  func.func @transform_3(%arg0: i32) -> (i32, i32) {
    %c0_i32 = arith.constant 0 : i32
    %c0_i32_0 = arith.constant 0 : i32
    %c0_i32_1 = arith.constant 0 : i32
    return %c0_i32, %c0_i32_0 : i32, i32
  }
  func.func @transform_4(%arg0: i32) -> (i32, i32) {
    %c0_i32 = arith.constant 0 : i32
    %c0_i32_0 = arith.constant 0 : i32
    %c0_i32_1 = arith.constant 0 : i32
    return %c0_i32, %c0_i32_0 : i32, i32
  }
  func.func @transform_5(%arg0: i32) -> (i32, i32) {
    %c0_i32 = arith.constant 0 : i32
    %c0_i32_0 = arith.constant 0 : i32
    %c0_i32_1 = arith.constant 0 : i32
    return %c0_i32, %c0_i32_0 : i32, i32
  }
  func.func @transform_6(%arg0: i32) -> (i32, i32) {
    %c0_i32 = arith.constant 0 : i32
    %c0_i32_0 = arith.constant 0 : i32
    return %arg0, %c0_i32 : i32, i32
  }
}

module attributes {stable_mosaic.version = 11 : i64} {
  func.func @_abf_front_fused_kernel(%arg0: i32, %arg1: memref<512x8xbf16, #tpu.memory_space<vmem>>, %arg2: memref<512x16xbf16, #tpu.memory_space<vmem>>, %arg3: memref<8x16xbf16, #tpu.memory_space<vmem>>, %arg4: memref<1x16xf32, #tpu.memory_space<vmem>>, %arg5: memref<2x32xf32, #tpu.memory_space<vmem>>, %arg6: memref<1x2xf32, #tpu.memory_space<vmem>>, %arg7: memref<512x16xf32, #tpu.memory_space<vmem>>) attributes {dimension_semantics = [#tpu.dimension_semantics<parallel>], iteration_bounds = array<i64: 1>, scalar_prefetch = 0 : i64, scratch_operands = 0 : i64, tpu.core_type = #tpu.core_type<tc>, window_params = [{transform_indices = @transform_0, window_bounds = array<i64: 512, 8>}, {transform_indices = @transform_1, window_bounds = array<i64: 512, 16>}, {pipeline_mode = #tpu.pipeline_mode<synchronous>, transform_indices = @transform_2, window_bounds = array<i64: 8, 16>}, {pipeline_mode = #tpu.pipeline_mode<synchronous>, transform_indices = @transform_3, window_bounds = array<i64: 1, 16>}, {pipeline_mode = #tpu.pipeline_mode<synchronous>, transform_indices = @transform_4, window_bounds = array<i64: 2, 32>}, {pipeline_mode = #tpu.pipeline_mode<synchronous>, transform_indices = @transform_5, window_bounds = array<i64: 1, 2>}, {transform_indices = @transform_6, window_bounds = array<i64: 512, 16>}]} {
    %c0 = arith.constant 0 : index
    %c0_0 = arith.constant 0 : index
    %0 = vector.load %arg1[%c0, %c0_0] : memref<512x8xbf16, #tpu.memory_space<vmem>>, vector<512x8xbf16>
    %c0_1 = arith.constant 0 : index
    %c0_2 = arith.constant 0 : index
    %1 = vector.load %arg3[%c0_1, %c0_2] : memref<8x16xbf16, #tpu.memory_space<vmem>>, vector<8x16xbf16>
    %cst = arith.constant dense<0.000000e+00> : vector<512x16xf32>
    %2 = tpu.matmul %0, %1, %cst {dimension_numbers = #tpu.dot_dimension_numbers<[1], [0], [0], [1], [0, 0, 1, 1], [], []>} : vector<512x8xbf16>, vector<8x16xbf16>, vector<512x16xf32> -> vector<512x16xf32>
    %c0_3 = arith.constant 0 : index
    %c0_4 = arith.constant 0 : index
    %3 = vector.load %arg4[%c0_3, %c0_4] : memref<1x16xf32, #tpu.memory_space<vmem>>, vector<1x16xf32>
    %4 = vector.broadcast %3 : vector<1x16xf32> to vector<512x16xf32>
    %5 = arith.addf %2, %4 : vector<512x16xf32>
    %c0_5 = arith.constant 0 : index
    %c0_6 = arith.constant 0 : index
    %6 = vector.load %arg2[%c0_5, %c0_6] : memref<512x16xbf16, #tpu.memory_space<vmem>>, vector<512x16xbf16>
    %7 = arith.extf %6 : vector<512x16xbf16> to vector<512x16xf32>
    %c0_7 = arith.constant 0 : index
    %c0_8 = arith.constant 0 : index
    %8 = vector.load %arg5[%c0_7, %c0_8] : memref<2x32xf32, #tpu.memory_space<vmem>>, vector<1x16xf32>
    %9 = vector.broadcast %8 : vector<1x16xf32> to vector<512x16xf32>
    %10 = arith.mulf %5, %9 : vector<512x16xf32>
    %cst_9 = arith.constant dense<0.000000e+00> : vector<512xf32>
    %11 = vector.multi_reduction <add>, %10, %cst_9 [1] : vector<512x16xf32> to vector<512xf32>
    %12 = vector.shape_cast %11 : vector<512xf32> to vector<512x1xf32>
    %c0_10 = arith.constant 0 : index
    %c16 = arith.constant 16 : index
    %13 = vector.load %arg5[%c0_10, %c16] : memref<2x32xf32, #tpu.memory_space<vmem>>, vector<1x16xf32>
    %14 = vector.broadcast %13 : vector<1x16xf32> to vector<512x16xf32>
    %15 = arith.mulf %7, %14 : vector<512x16xf32>
    %cst_11 = arith.constant dense<0.000000e+00> : vector<512xf32>
    %16 = vector.multi_reduction <add>, %15, %cst_11 [1] : vector<512x16xf32> to vector<512xf32>
    %17 = vector.shape_cast %16 : vector<512xf32> to vector<512x1xf32>
    %18 = arith.addf %12, %17 : vector<512x1xf32>
    %c0_12 = arith.constant 0 : index
    %c0_13 = arith.constant 0 : index
    %19 = vector.load %arg6[%c0_12, %c0_13] : memref<1x2xf32, #tpu.memory_space<vmem>>, vector<1x1xf32>
    %20 = vector.broadcast %19 : vector<1x1xf32> to vector<512x1xf32>
    %21 = arith.addf %18, %20 : vector<512x1xf32>
    %c1 = arith.constant 1 : index
    %c0_14 = arith.constant 0 : index
    %22 = vector.load %arg5[%c1, %c0_14] : memref<2x32xf32, #tpu.memory_space<vmem>>, vector<1x16xf32>
    %23 = vector.broadcast %22 : vector<1x16xf32> to vector<512x16xf32>
    %24 = arith.mulf %5, %23 : vector<512x16xf32>
    %cst_15 = arith.constant dense<0.000000e+00> : vector<512xf32>
    %25 = vector.multi_reduction <add>, %24, %cst_15 [1] : vector<512x16xf32> to vector<512xf32>
    %26 = vector.shape_cast %25 : vector<512xf32> to vector<512x1xf32>
    %c1_16 = arith.constant 1 : index
    %c16_17 = arith.constant 16 : index
    %27 = vector.load %arg5[%c1_16, %c16_17] : memref<2x32xf32, #tpu.memory_space<vmem>>, vector<1x16xf32>
    %28 = vector.broadcast %27 : vector<1x16xf32> to vector<512x16xf32>
    %29 = arith.mulf %7, %28 : vector<512x16xf32>
    %cst_18 = arith.constant dense<0.000000e+00> : vector<512xf32>
    %30 = vector.multi_reduction <add>, %29, %cst_18 [1] : vector<512x16xf32> to vector<512xf32>
    %31 = vector.shape_cast %30 : vector<512xf32> to vector<512x1xf32>
    %32 = arith.addf %26, %31 : vector<512x1xf32>
    %c0_19 = arith.constant 0 : index
    %c1_20 = arith.constant 1 : index
    %33 = vector.load %arg6[%c0_19, %c1_20] : memref<1x2xf32, #tpu.memory_space<vmem>>, vector<1x1xf32>
    %34 = vector.broadcast %33 : vector<1x1xf32> to vector<512x1xf32>
    %35 = arith.addf %32, %34 : vector<512x1xf32>
    %36 = arith.negf %21 : vector<512x1xf32>
    %37 = math.exp %36 : vector<512x1xf32>
    %cst_21 = arith.constant 1.000000e+00 : f32
    %38 = vector.broadcast %cst_21 : f32 to vector<512x1xf32>
    %39 = arith.addf %38, %37 : vector<512x1xf32>
    %40 = arith.divf %38, %39 : vector<512x1xf32>
    %41 = arith.negf %35 : vector<512x1xf32>
    %42 = math.exp %41 : vector<512x1xf32>
    %cst_22 = arith.constant 1.000000e+00 : f32
    %43 = vector.broadcast %cst_22 : f32 to vector<512x1xf32>
    %44 = arith.addf %43, %42 : vector<512x1xf32>
    %45 = arith.divf %43, %44 : vector<512x1xf32>
    %46 = vector.broadcast %40 : vector<512x1xf32> to vector<512x16xf32>
    %47 = arith.mulf %5, %46 : vector<512x16xf32>
    %48 = vector.broadcast %45 : vector<512x1xf32> to vector<512x16xf32>
    %49 = arith.mulf %7, %48 : vector<512x16xf32>
    %50 = arith.addf %47, %49 : vector<512x16xf32>
    %c0_23 = arith.constant 0 : index
    %c0_24 = arith.constant 0 : index
    %51 = vector.load %arg7[%c0_23, %c0_24] : memref<512x16xf32, #tpu.memory_space<vmem>>, vector<512x16xf32>
    tpu.vector_store %arg7[%c0_23, %c0_24], %50 {strides = array<i32>} : memref<512x16xf32, #tpu.memory_space<vmem>>, vector<512x16xf32>,
    return
  }
  func.func @transform_0(%arg0: i32) -> (i32, i32) {
    %c0_i32 = arith.constant 0 : i32
    %c0_i32_0 = arith.constant 0 : i32
    return %arg0, %c0_i32 : i32, i32
  }
  func.func @transform_1(%arg0: i32) -> (i32, i32) {
    %c0_i32 = arith.constant 0 : i32
    %c0_i32_0 = arith.constant 0 : i32
    return %arg0, %c0_i32 : i32, i32
  }
  func.func @transform_2(%arg0: i32) -> (i32, i32) {
    %c0_i32 = arith.constant 0 : i32
    %c0_i32_0 = arith.constant 0 : i32
    %c0_i32_1 = arith.constant 0 : i32
    return %c0_i32, %c0_i32_0 : i32, i32
  }
  func.func @transform_3(%arg0: i32) -> (i32, i32) {
    %c0_i32 = arith.constant 0 : i32
    %c0_i32_0 = arith.constant 0 : i32
    %c0_i32_1 = arith.constant 0 : i32
    return %c0_i32, %c0_i32_0 : i32, i32
  }
  func.func @transform_4(%arg0: i32) -> (i32, i32) {
    %c0_i32 = arith.constant 0 : i32
    %c0_i32_0 = arith.constant 0 : i32
    %c0_i32_1 = arith.constant 0 : i32
    return %c0_i32, %c0_i32_0 : i32, i32
  }
  func.func @transform_5(%arg0: i32) -> (i32, i32) {
    %c0_i32 = arith.constant 0 : i32
    %c0_i32_0 = arith.constant 0 : i32
    %c0_i32_1 = arith.constant 0 : i32
    return %c0_i32, %c0_i32_0 : i32, i32
  }
  func.func @transform_6(%arg0: i32) -> (i32, i32) {
    %c0_i32 = arith.constant 0 : i32
    %c0_i32_0 = arith.constant 0 : i32
    return %arg0, %c0_i32 : i32, i32
  }
}

module attributes {stable_mosaic.version = 11 : i64} {
  func.func @_conv3x3_bn_kernel(%arg0: i32, %arg1: memref<1x362x16xf32, #tpu.memory_space<vmem>>, %arg2: memref<9x16x8xbf16, #tpu.memory_space<vmem>>, %arg3: memref<1x8xf32, #tpu.memory_space<vmem>>, %arg4: memref<1x324x8xf32, #tpu.memory_space<vmem>>) attributes {dimension_semantics = [#tpu.dimension_semantics<parallel>], iteration_bounds = array<i64: 2>, scalar_prefetch = 0 : i64, scratch_operands = 0 : i64, tpu.core_type = #tpu.core_type<tc>, window_params = [{transform_indices = @transform_0, window_bounds = array<i64: 1, 362, 16>}, {pipeline_mode = #tpu.pipeline_mode<synchronous>, transform_indices = @transform_1, window_bounds = array<i64: 9, 16, 8>}, {pipeline_mode = #tpu.pipeline_mode<synchronous>, transform_indices = @transform_2, window_bounds = array<i64: 1, 8>}, {transform_indices = @transform_3, window_bounds = array<i64: 1, 324, 8>}]} {
    %cst = arith.constant 0.000000e+00 : f32
    %0 = vector.broadcast %cst : f32 to vector<324x8xf32>
    %c0 = arith.constant 0 : index
    %c0_0 = arith.constant 0 : index
    %c0_1 = arith.constant 0 : index
    %1 = vector.load %arg1[%c0, %c0_0, %c0_1] : memref<1x362x16xf32, #tpu.memory_space<vmem>>, vector<1x324x16xf32>
    %2 = vector.shape_cast %1 : vector<1x324x16xf32> to vector<324x16xf32>
    %3 = arith.truncf %2 : vector<324x16xf32> to vector<324x16xbf16>
    %c0_2 = arith.constant 0 : index
    %c0_3 = arith.constant 0 : index
    %c0_4 = arith.constant 0 : index
    %4 = vector.load %arg2[%c0_2, %c0_3, %c0_4] : memref<9x16x8xbf16, #tpu.memory_space<vmem>>, vector<1x16x8xbf16>
    %5 = vector.shape_cast %4 : vector<1x16x8xbf16> to vector<16x8xbf16>
    %cst_5 = arith.constant dense<0.000000e+00> : vector<324x8xf32>
    %6 = tpu.matmul %3, %5, %cst_5 {dimension_numbers = #tpu.dot_dimension_numbers<[1], [0], [0], [1], [0, 0, 1, 1], [], []>} : vector<324x16xbf16>, vector<16x8xbf16>, vector<324x8xf32> -> vector<324x8xf32>
    %7 = arith.addf %0, %6 : vector<324x8xf32>
    %c0_6 = arith.constant 0 : index
    %c1 = arith.constant 1 : index
    %c0_7 = arith.constant 0 : index
    %8 = vector.load %arg1[%c0_6, %c1, %c0_7] : memref<1x362x16xf32, #tpu.memory_space<vmem>>, vector<1x324x16xf32>
    %9 = vector.shape_cast %8 : vector<1x324x16xf32> to vector<324x16xf32>
    %10 = arith.truncf %9 : vector<324x16xf32> to vector<324x16xbf16>
    %c1_8 = arith.constant 1 : index
    %c0_9 = arith.constant 0 : index
    %c0_10 = arith.constant 0 : index
    %11 = vector.load %arg2[%c1_8, %c0_9, %c0_10] : memref<9x16x8xbf16, #tpu.memory_space<vmem>>, vector<1x16x8xbf16>
    %12 = vector.shape_cast %11 : vector<1x16x8xbf16> to vector<16x8xbf16>
    %cst_11 = arith.constant dense<0.000000e+00> : vector<324x8xf32>
    %13 = tpu.matmul %10, %12, %cst_11 {dimension_numbers = #tpu.dot_dimension_numbers<[1], [0], [0], [1], [0, 0, 1, 1], [], []>} : vector<324x16xbf16>, vector<16x8xbf16>, vector<324x8xf32> -> vector<324x8xf32>
    %14 = arith.addf %7, %13 : vector<324x8xf32>
    %c0_12 = arith.constant 0 : index
    %c2 = arith.constant 2 : index
    %c0_13 = arith.constant 0 : index
    %15 = vector.load %arg1[%c0_12, %c2, %c0_13] : memref<1x362x16xf32, #tpu.memory_space<vmem>>, vector<1x324x16xf32>
    %16 = vector.shape_cast %15 : vector<1x324x16xf32> to vector<324x16xf32>
    %17 = arith.truncf %16 : vector<324x16xf32> to vector<324x16xbf16>
    %c2_14 = arith.constant 2 : index
    %c0_15 = arith.constant 0 : index
    %c0_16 = arith.constant 0 : index
    %18 = vector.load %arg2[%c2_14, %c0_15, %c0_16] : memref<9x16x8xbf16, #tpu.memory_space<vmem>>, vector<1x16x8xbf16>
    %19 = vector.shape_cast %18 : vector<1x16x8xbf16> to vector<16x8xbf16>
    %cst_17 = arith.constant dense<0.000000e+00> : vector<324x8xf32>
    %20 = tpu.matmul %17, %19, %cst_17 {dimension_numbers = #tpu.dot_dimension_numbers<[1], [0], [0], [1], [0, 0, 1, 1], [], []>} : vector<324x16xbf16>, vector<16x8xbf16>, vector<324x8xf32> -> vector<324x8xf32>
    %21 = arith.addf %14, %20 : vector<324x8xf32>
    %c0_18 = arith.constant 0 : index
    %c18 = arith.constant 18 : index
    %c0_19 = arith.constant 0 : index
    %22 = vector.load %arg1[%c0_18, %c18, %c0_19] : memref<1x362x16xf32, #tpu.memory_space<vmem>>, vector<1x324x16xf32>
    %23 = vector.shape_cast %22 : vector<1x324x16xf32> to vector<324x16xf32>
    %24 = arith.truncf %23 : vector<324x16xf32> to vector<324x16xbf16>
    %c3 = arith.constant 3 : index
    %c0_20 = arith.constant 0 : index
    %c0_21 = arith.constant 0 : index
    %25 = vector.load %arg2[%c3, %c0_20, %c0_21] : memref<9x16x8xbf16, #tpu.memory_space<vmem>>, vector<1x16x8xbf16>
    %26 = vector.shape_cast %25 : vector<1x16x8xbf16> to vector<16x8xbf16>
    %cst_22 = arith.constant dense<0.000000e+00> : vector<324x8xf32>
    %27 = tpu.matmul %24, %26, %cst_22 {dimension_numbers = #tpu.dot_dimension_numbers<[1], [0], [0], [1], [0, 0, 1, 1], [], []>} : vector<324x16xbf16>, vector<16x8xbf16>, vector<324x8xf32> -> vector<324x8xf32>
    %28 = arith.addf %21, %27 : vector<324x8xf32>
    %c0_23 = arith.constant 0 : index
    %c19 = arith.constant 19 : index
    %c0_24 = arith.constant 0 : index
    %29 = vector.load %arg1[%c0_23, %c19, %c0_24] : memref<1x362x16xf32, #tpu.memory_space<vmem>>, vector<1x324x16xf32>
    %30 = vector.shape_cast %29 : vector<1x324x16xf32> to vector<324x16xf32>
    %31 = arith.truncf %30 : vector<324x16xf32> to vector<324x16xbf16>
    %c4 = arith.constant 4 : index
    %c0_25 = arith.constant 0 : index
    %c0_26 = arith.constant 0 : index
    %32 = vector.load %arg2[%c4, %c0_25, %c0_26] : memref<9x16x8xbf16, #tpu.memory_space<vmem>>, vector<1x16x8xbf16>
    %33 = vector.shape_cast %32 : vector<1x16x8xbf16> to vector<16x8xbf16>
    %cst_27 = arith.constant dense<0.000000e+00> : vector<324x8xf32>
    %34 = tpu.matmul %31, %33, %cst_27 {dimension_numbers = #tpu.dot_dimension_numbers<[1], [0], [0], [1], [0, 0, 1, 1], [], []>} : vector<324x16xbf16>, vector<16x8xbf16>, vector<324x8xf32> -> vector<324x8xf32>
    %35 = arith.addf %28, %34 : vector<324x8xf32>
    %c0_28 = arith.constant 0 : index
    %c20 = arith.constant 20 : index
    %c0_29 = arith.constant 0 : index
    %36 = vector.load %arg1[%c0_28, %c20, %c0_29] : memref<1x362x16xf32, #tpu.memory_space<vmem>>, vector<1x324x16xf32>
    %37 = vector.shape_cast %36 : vector<1x324x16xf32> to vector<324x16xf32>
    %38 = arith.truncf %37 : vector<324x16xf32> to vector<324x16xbf16>
    %c5 = arith.constant 5 : index
    %c0_30 = arith.constant 0 : index
    %c0_31 = arith.constant 0 : index
    %39 = vector.load %arg2[%c5, %c0_30, %c0_31] : memref<9x16x8xbf16, #tpu.memory_space<vmem>>, vector<1x16x8xbf16>
    %40 = vector.shape_cast %39 : vector<1x16x8xbf16> to vector<16x8xbf16>
    %cst_32 = arith.constant dense<0.000000e+00> : vector<324x8xf32>
    %41 = tpu.matmul %38, %40, %cst_32 {dimension_numbers = #tpu.dot_dimension_numbers<[1], [0], [0], [1], [0, 0, 1, 1], [], []>} : vector<324x16xbf16>, vector<16x8xbf16>, vector<324x8xf32> -> vector<324x8xf32>
    %42 = arith.addf %35, %41 : vector<324x8xf32>
    %c0_33 = arith.constant 0 : index
    %c36 = arith.constant 36 : index
    %c0_34 = arith.constant 0 : index
    %43 = vector.load %arg1[%c0_33, %c36, %c0_34] : memref<1x362x16xf32, #tpu.memory_space<vmem>>, vector<1x324x16xf32>
    %44 = vector.shape_cast %43 : vector<1x324x16xf32> to vector<324x16xf32>
    %45 = arith.truncf %44 : vector<324x16xf32> to vector<324x16xbf16>
    %c6 = arith.constant 6 : index
    %c0_35 = arith.constant 0 : index
    %c0_36 = arith.constant 0 : index
    %46 = vector.load %arg2[%c6, %c0_35, %c0_36] : memref<9x16x8xbf16, #tpu.memory_space<vmem>>, vector<1x16x8xbf16>
    %47 = vector.shape_cast %46 : vector<1x16x8xbf16> to vector<16x8xbf16>
    %cst_37 = arith.constant dense<0.000000e+00> : vector<324x8xf32>
    %48 = tpu.matmul %45, %47, %cst_37 {dimension_numbers = #tpu.dot_dimension_numbers<[1], [0], [0], [1], [0, 0, 1, 1], [], []>} : vector<324x16xbf16>, vector<16x8xbf16>, vector<324x8xf32> -> vector<324x8xf32>
    %49 = arith.addf %42, %48 : vector<324x8xf32>
    %c0_38 = arith.constant 0 : index
    %c37 = arith.constant 37 : index
    %c0_39 = arith.constant 0 : index
    %50 = vector.load %arg1[%c0_38, %c37, %c0_39] : memref<1x362x16xf32, #tpu.memory_space<vmem>>, vector<1x324x16xf32>
    %51 = vector.shape_cast %50 : vector<1x324x16xf32> to vector<324x16xf32>
    %52 = arith.truncf %51 : vector<324x16xf32> to vector<324x16xbf16>
    %c7 = arith.constant 7 : index
    %c0_40 = arith.constant 0 : index
    %c0_41 = arith.constant 0 : index
    %53 = vector.load %arg2[%c7, %c0_40, %c0_41] : memref<9x16x8xbf16, #tpu.memory_space<vmem>>, vector<1x16x8xbf16>
    %54 = vector.shape_cast %53 : vector<1x16x8xbf16> to vector<16x8xbf16>
    %cst_42 = arith.constant dense<0.000000e+00> : vector<324x8xf32>
    %55 = tpu.matmul %52, %54, %cst_42 {dimension_numbers = #tpu.dot_dimension_numbers<[1], [0], [0], [1], [0, 0, 1, 1], [], []>} : vector<324x16xbf16>, vector<16x8xbf16>, vector<324x8xf32> -> vector<324x8xf32>
    %56 = arith.addf %49, %55 : vector<324x8xf32>
    %c0_43 = arith.constant 0 : index
    %c38 = arith.constant 38 : index
    %c0_44 = arith.constant 0 : index
    %57 = vector.load %arg1[%c0_43, %c38, %c0_44] : memref<1x362x16xf32, #tpu.memory_space<vmem>>, vector<1x324x16xf32>
    %58 = vector.shape_cast %57 : vector<1x324x16xf32> to vector<324x16xf32>
    %59 = arith.truncf %58 : vector<324x16xf32> to vector<324x16xbf16>
    %c8 = arith.constant 8 : index
    %c0_45 = arith.constant 0 : index
    %c0_46 = arith.constant 0 : index
    %60 = vector.load %arg2[%c8, %c0_45, %c0_46] : memref<9x16x8xbf16, #tpu.memory_space<vmem>>, vector<1x16x8xbf16>
    %61 = vector.shape_cast %60 : vector<1x16x8xbf16> to vector<16x8xbf16>
    %cst_47 = arith.constant dense<0.000000e+00> : vector<324x8xf32>
    %62 = tpu.matmul %59, %61, %cst_47 {dimension_numbers = #tpu.dot_dimension_numbers<[1], [0], [0], [1], [0, 0, 1, 1], [], []>} : vector<324x16xbf16>, vector<16x8xbf16>, vector<324x8xf32> -> vector<324x8xf32>
    %63 = arith.addf %56, %62 : vector<324x8xf32>
    %c0_48 = arith.constant 0 : index
    %c0_49 = arith.constant 0 : index
    %64 = vector.load %arg3[%c0_48, %c0_49] : memref<1x8xf32, #tpu.memory_space<vmem>>, vector<1x8xf32>
    %65 = vector.broadcast %64 : vector<1x8xf32> to vector<324x8xf32>
    %66 = arith.addf %63, %65 : vector<324x8xf32>
    %c0_50 = arith.constant 0 : index
    %c0_51 = arith.constant 0 : index
    %c0_52 = arith.constant 0 : index
    %67 = vector.load %arg4[%c0_50, %c0_51, %c0_52] : memref<1x324x8xf32, #tpu.memory_space<vmem>>, vector<1x324x8xf32>
    %68 = vector.shape_cast %67 : vector<1x324x8xf32> to vector<324x8xf32>
    %69 = vector.shape_cast %66 : vector<324x8xf32> to vector<1x324x8xf32>
    tpu.vector_store %arg4[%c0_50, %c0_51, %c0_52], %69 {strides = array<i32>} : memref<1x324x8xf32, #tpu.memory_space<vmem>>, vector<1x324x8xf32>,
    return
  }
  func.func @transform_0(%arg0: i32) -> (i32, i32, i32) {
    %c0_i32 = arith.constant 0 : i32
    %c0_i32_0 = arith.constant 0 : i32
    %c0_i32_1 = arith.constant 0 : i32
    return %arg0, %c0_i32, %c0_i32_0 : i32, i32, i32
  }
  func.func @transform_1(%arg0: i32) -> (i32, i32, i32) {
    %c0_i32 = arith.constant 0 : i32
    %c0_i32_0 = arith.constant 0 : i32
    %c0_i32_1 = arith.constant 0 : i32
    %c0_i32_2 = arith.constant 0 : i32
    return %c0_i32, %c0_i32_0, %c0_i32_1 : i32, i32, i32
  }
  func.func @transform_2(%arg0: i32) -> (i32, i32) {
    %c0_i32 = arith.constant 0 : i32
    %c0_i32_0 = arith.constant 0 : i32
    %c0_i32_1 = arith.constant 0 : i32
    return %c0_i32, %c0_i32_0 : i32, i32
  }
  func.func @transform_3(%arg0: i32) -> (i32, i32, i32) {
    %c0_i32 = arith.constant 0 : i32
    %c0_i32_0 = arith.constant 0 : i32
    %c0_i32_1 = arith.constant 0 : i32
    return %arg0, %c0_i32, %c0_i32_0 : i32, i32, i32
  }
}

module attributes {stable_mosaic.version = 11 : i64} {
  func.func @_conv3x3_bn_kernel(%arg0: i32, %arg1: memref<1x122x16xf32, #tpu.memory_space<vmem>>, %arg2: memref<9x16x16xbf16, #tpu.memory_space<vmem>>, %arg3: memref<1x16xf32, #tpu.memory_space<vmem>>, %arg4: memref<1x100x16xf32, #tpu.memory_space<vmem>>) attributes {dimension_semantics = [#tpu.dimension_semantics<parallel>], iteration_bounds = array<i64: 2>, scalar_prefetch = 0 : i64, scratch_operands = 0 : i64, tpu.core_type = #tpu.core_type<tc>, window_params = [{transform_indices = @transform_0, window_bounds = array<i64: 1, 122, 16>}, {pipeline_mode = #tpu.pipeline_mode<synchronous>, transform_indices = @transform_1, window_bounds = array<i64: 9, 16, 16>}, {pipeline_mode = #tpu.pipeline_mode<synchronous>, transform_indices = @transform_2, window_bounds = array<i64: 1, 16>}, {transform_indices = @transform_3, window_bounds = array<i64: 1, 100, 16>}]} {
    %cst = arith.constant 0.000000e+00 : f32
    %0 = vector.broadcast %cst : f32 to vector<100x16xf32>
    %c0 = arith.constant 0 : index
    %c0_0 = arith.constant 0 : index
    %c0_1 = arith.constant 0 : index
    %1 = vector.load %arg1[%c0, %c0_0, %c0_1] : memref<1x122x16xf32, #tpu.memory_space<vmem>>, vector<1x100x16xf32>
    %2 = vector.shape_cast %1 : vector<1x100x16xf32> to vector<100x16xf32>
    %3 = arith.truncf %2 : vector<100x16xf32> to vector<100x16xbf16>
    %c0_2 = arith.constant 0 : index
    %c0_3 = arith.constant 0 : index
    %c0_4 = arith.constant 0 : index
    %4 = vector.load %arg2[%c0_2, %c0_3, %c0_4] : memref<9x16x16xbf16, #tpu.memory_space<vmem>>, vector<1x16x16xbf16>
    %5 = vector.shape_cast %4 : vector<1x16x16xbf16> to vector<16x16xbf16>
    %cst_5 = arith.constant dense<0.000000e+00> : vector<100x16xf32>
    %6 = tpu.matmul %3, %5, %cst_5 {dimension_numbers = #tpu.dot_dimension_numbers<[1], [0], [0], [1], [0, 0, 1, 1], [], []>} : vector<100x16xbf16>, vector<16x16xbf16>, vector<100x16xf32> -> vector<100x16xf32>
    %7 = arith.addf %0, %6 : vector<100x16xf32>
    %c0_6 = arith.constant 0 : index
    %c1 = arith.constant 1 : index
    %c0_7 = arith.constant 0 : index
    %8 = vector.load %arg1[%c0_6, %c1, %c0_7] : memref<1x122x16xf32, #tpu.memory_space<vmem>>, vector<1x100x16xf32>
    %9 = vector.shape_cast %8 : vector<1x100x16xf32> to vector<100x16xf32>
    %10 = arith.truncf %9 : vector<100x16xf32> to vector<100x16xbf16>
    %c1_8 = arith.constant 1 : index
    %c0_9 = arith.constant 0 : index
    %c0_10 = arith.constant 0 : index
    %11 = vector.load %arg2[%c1_8, %c0_9, %c0_10] : memref<9x16x16xbf16, #tpu.memory_space<vmem>>, vector<1x16x16xbf16>
    %12 = vector.shape_cast %11 : vector<1x16x16xbf16> to vector<16x16xbf16>
    %cst_11 = arith.constant dense<0.000000e+00> : vector<100x16xf32>
    %13 = tpu.matmul %10, %12, %cst_11 {dimension_numbers = #tpu.dot_dimension_numbers<[1], [0], [0], [1], [0, 0, 1, 1], [], []>} : vector<100x16xbf16>, vector<16x16xbf16>, vector<100x16xf32> -> vector<100x16xf32>
    %14 = arith.addf %7, %13 : vector<100x16xf32>
    %c0_12 = arith.constant 0 : index
    %c2 = arith.constant 2 : index
    %c0_13 = arith.constant 0 : index
    %15 = vector.load %arg1[%c0_12, %c2, %c0_13] : memref<1x122x16xf32, #tpu.memory_space<vmem>>, vector<1x100x16xf32>
    %16 = vector.shape_cast %15 : vector<1x100x16xf32> to vector<100x16xf32>
    %17 = arith.truncf %16 : vector<100x16xf32> to vector<100x16xbf16>
    %c2_14 = arith.constant 2 : index
    %c0_15 = arith.constant 0 : index
    %c0_16 = arith.constant 0 : index
    %18 = vector.load %arg2[%c2_14, %c0_15, %c0_16] : memref<9x16x16xbf16, #tpu.memory_space<vmem>>, vector<1x16x16xbf16>
    %19 = vector.shape_cast %18 : vector<1x16x16xbf16> to vector<16x16xbf16>
    %cst_17 = arith.constant dense<0.000000e+00> : vector<100x16xf32>
    %20 = tpu.matmul %17, %19, %cst_17 {dimension_numbers = #tpu.dot_dimension_numbers<[1], [0], [0], [1], [0, 0, 1, 1], [], []>} : vector<100x16xbf16>, vector<16x16xbf16>, vector<100x16xf32> -> vector<100x16xf32>
    %21 = arith.addf %14, %20 : vector<100x16xf32>
    %c0_18 = arith.constant 0 : index
    %c10 = arith.constant 10 : index
    %c0_19 = arith.constant 0 : index
    %22 = vector.load %arg1[%c0_18, %c10, %c0_19] : memref<1x122x16xf32, #tpu.memory_space<vmem>>, vector<1x100x16xf32>
    %23 = vector.shape_cast %22 : vector<1x100x16xf32> to vector<100x16xf32>
    %24 = arith.truncf %23 : vector<100x16xf32> to vector<100x16xbf16>
    %c3 = arith.constant 3 : index
    %c0_20 = arith.constant 0 : index
    %c0_21 = arith.constant 0 : index
    %25 = vector.load %arg2[%c3, %c0_20, %c0_21] : memref<9x16x16xbf16, #tpu.memory_space<vmem>>, vector<1x16x16xbf16>
    %26 = vector.shape_cast %25 : vector<1x16x16xbf16> to vector<16x16xbf16>
    %cst_22 = arith.constant dense<0.000000e+00> : vector<100x16xf32>
    %27 = tpu.matmul %24, %26, %cst_22 {dimension_numbers = #tpu.dot_dimension_numbers<[1], [0], [0], [1], [0, 0, 1, 1], [], []>} : vector<100x16xbf16>, vector<16x16xbf16>, vector<100x16xf32> -> vector<100x16xf32>
    %28 = arith.addf %21, %27 : vector<100x16xf32>
    %c0_23 = arith.constant 0 : index
    %c11 = arith.constant 11 : index
    %c0_24 = arith.constant 0 : index
    %29 = vector.load %arg1[%c0_23, %c11, %c0_24] : memref<1x122x16xf32, #tpu.memory_space<vmem>>, vector<1x100x16xf32>
    %30 = vector.shape_cast %29 : vector<1x100x16xf32> to vector<100x16xf32>
    %31 = arith.truncf %30 : vector<100x16xf32> to vector<100x16xbf16>
    %c4 = arith.constant 4 : index
    %c0_25 = arith.constant 0 : index
    %c0_26 = arith.constant 0 : index
    %32 = vector.load %arg2[%c4, %c0_25, %c0_26] : memref<9x16x16xbf16, #tpu.memory_space<vmem>>, vector<1x16x16xbf16>
    %33 = vector.shape_cast %32 : vector<1x16x16xbf16> to vector<16x16xbf16>
    %cst_27 = arith.constant dense<0.000000e+00> : vector<100x16xf32>
    %34 = tpu.matmul %31, %33, %cst_27 {dimension_numbers = #tpu.dot_dimension_numbers<[1], [0], [0], [1], [0, 0, 1, 1], [], []>} : vector<100x16xbf16>, vector<16x16xbf16>, vector<100x16xf32> -> vector<100x16xf32>
    %35 = arith.addf %28, %34 : vector<100x16xf32>
    %c0_28 = arith.constant 0 : index
    %c12 = arith.constant 12 : index
    %c0_29 = arith.constant 0 : index
    %36 = vector.load %arg1[%c0_28, %c12, %c0_29] : memref<1x122x16xf32, #tpu.memory_space<vmem>>, vector<1x100x16xf32>
    %37 = vector.shape_cast %36 : vector<1x100x16xf32> to vector<100x16xf32>
    %38 = arith.truncf %37 : vector<100x16xf32> to vector<100x16xbf16>
    %c5 = arith.constant 5 : index
    %c0_30 = arith.constant 0 : index
    %c0_31 = arith.constant 0 : index
    %39 = vector.load %arg2[%c5, %c0_30, %c0_31] : memref<9x16x16xbf16, #tpu.memory_space<vmem>>, vector<1x16x16xbf16>
    %40 = vector.shape_cast %39 : vector<1x16x16xbf16> to vector<16x16xbf16>
    %cst_32 = arith.constant dense<0.000000e+00> : vector<100x16xf32>
    %41 = tpu.matmul %38, %40, %cst_32 {dimension_numbers = #tpu.dot_dimension_numbers<[1], [0], [0], [1], [0, 0, 1, 1], [], []>} : vector<100x16xbf16>, vector<16x16xbf16>, vector<100x16xf32> -> vector<100x16xf32>
    %42 = arith.addf %35, %41 : vector<100x16xf32>
    %c0_33 = arith.constant 0 : index
    %c20 = arith.constant 20 : index
    %c0_34 = arith.constant 0 : index
    %43 = vector.load %arg1[%c0_33, %c20, %c0_34] : memref<1x122x16xf32, #tpu.memory_space<vmem>>, vector<1x100x16xf32>
    %44 = vector.shape_cast %43 : vector<1x100x16xf32> to vector<100x16xf32>
    %45 = arith.truncf %44 : vector<100x16xf32> to vector<100x16xbf16>
    %c6 = arith.constant 6 : index
    %c0_35 = arith.constant 0 : index
    %c0_36 = arith.constant 0 : index
    %46 = vector.load %arg2[%c6, %c0_35, %c0_36] : memref<9x16x16xbf16, #tpu.memory_space<vmem>>, vector<1x16x16xbf16>
    %47 = vector.shape_cast %46 : vector<1x16x16xbf16> to vector<16x16xbf16>
    %cst_37 = arith.constant dense<0.000000e+00> : vector<100x16xf32>
    %48 = tpu.matmul %45, %47, %cst_37 {dimension_numbers = #tpu.dot_dimension_numbers<[1], [0], [0], [1], [0, 0, 1, 1], [], []>} : vector<100x16xbf16>, vector<16x16xbf16>, vector<100x16xf32> -> vector<100x16xf32>
    %49 = arith.addf %42, %48 : vector<100x16xf32>
    %c0_38 = arith.constant 0 : index
    %c21 = arith.constant 21 : index
    %c0_39 = arith.constant 0 : index
    %50 = vector.load %arg1[%c0_38, %c21, %c0_39] : memref<1x122x16xf32, #tpu.memory_space<vmem>>, vector<1x100x16xf32>
    %51 = vector.shape_cast %50 : vector<1x100x16xf32> to vector<100x16xf32>
    %52 = arith.truncf %51 : vector<100x16xf32> to vector<100x16xbf16>
    %c7 = arith.constant 7 : index
    %c0_40 = arith.constant 0 : index
    %c0_41 = arith.constant 0 : index
    %53 = vector.load %arg2[%c7, %c0_40, %c0_41] : memref<9x16x16xbf16, #tpu.memory_space<vmem>>, vector<1x16x16xbf16>
    %54 = vector.shape_cast %53 : vector<1x16x16xbf16> to vector<16x16xbf16>
    %cst_42 = arith.constant dense<0.000000e+00> : vector<100x16xf32>
    %55 = tpu.matmul %52, %54, %cst_42 {dimension_numbers = #tpu.dot_dimension_numbers<[1], [0], [0], [1], [0, 0, 1, 1], [], []>} : vector<100x16xbf16>, vector<16x16xbf16>, vector<100x16xf32> -> vector<100x16xf32>
    %56 = arith.addf %49, %55 : vector<100x16xf32>
    %c0_43 = arith.constant 0 : index
    %c22 = arith.constant 22 : index
    %c0_44 = arith.constant 0 : index
    %57 = vector.load %arg1[%c0_43, %c22, %c0_44] : memref<1x122x16xf32, #tpu.memory_space<vmem>>, vector<1x100x16xf32>
    %58 = vector.shape_cast %57 : vector<1x100x16xf32> to vector<100x16xf32>
    %59 = arith.truncf %58 : vector<100x16xf32> to vector<100x16xbf16>
    %c8 = arith.constant 8 : index
    %c0_45 = arith.constant 0 : index
    %c0_46 = arith.constant 0 : index
    %60 = vector.load %arg2[%c8, %c0_45, %c0_46] : memref<9x16x16xbf16, #tpu.memory_space<vmem>>, vector<1x16x16xbf16>
    %61 = vector.shape_cast %60 : vector<1x16x16xbf16> to vector<16x16xbf16>
    %cst_47 = arith.constant dense<0.000000e+00> : vector<100x16xf32>
    %62 = tpu.matmul %59, %61, %cst_47 {dimension_numbers = #tpu.dot_dimension_numbers<[1], [0], [0], [1], [0, 0, 1, 1], [], []>} : vector<100x16xbf16>, vector<16x16xbf16>, vector<100x16xf32> -> vector<100x16xf32>
    %63 = arith.addf %56, %62 : vector<100x16xf32>
    %c0_48 = arith.constant 0 : index
    %c0_49 = arith.constant 0 : index
    %64 = vector.load %arg3[%c0_48, %c0_49] : memref<1x16xf32, #tpu.memory_space<vmem>>, vector<1x16xf32>
    %65 = vector.broadcast %64 : vector<1x16xf32> to vector<100x16xf32>
    %66 = arith.addf %63, %65 : vector<100x16xf32>
    %c0_50 = arith.constant 0 : index
    %c0_51 = arith.constant 0 : index
    %c0_52 = arith.constant 0 : index
    %67 = vector.load %arg4[%c0_50, %c0_51, %c0_52] : memref<1x100x16xf32, #tpu.memory_space<vmem>>, vector<1x100x16xf32>
    %68 = vector.shape_cast %67 : vector<1x100x16xf32> to vector<100x16xf32>
    %69 = vector.shape_cast %66 : vector<100x16xf32> to vector<1x100x16xf32>
    tpu.vector_store %arg4[%c0_50, %c0_51, %c0_52], %69 {strides = array<i32>} : memref<1x100x16xf32, #tpu.memory_space<vmem>>, vector<1x100x16xf32>,
    return
  }
  func.func @transform_0(%arg0: i32) -> (i32, i32, i32) {
    %c0_i32 = arith.constant 0 : i32
    %c0_i32_0 = arith.constant 0 : i32
    %c0_i32_1 = arith.constant 0 : i32
    return %arg0, %c0_i32, %c0_i32_0 : i32, i32, i32
  }
  func.func @transform_1(%arg0: i32) -> (i32, i32, i32) {
    %c0_i32 = arith.constant 0 : i32
    %c0_i32_0 = arith.constant 0 : i32
    %c0_i32_1 = arith.constant 0 : i32
    %c0_i32_2 = arith.constant 0 : i32
    return %c0_i32, %c0_i32_0, %c0_i32_1 : i32, i32, i32
  }
  func.func @transform_2(%arg0: i32) -> (i32, i32) {
    %c0_i32 = arith.constant 0 : i32
    %c0_i32_0 = arith.constant 0 : i32
    %c0_i32_1 = arith.constant 0 : i32
    return %c0_i32, %c0_i32_0 : i32, i32
  }
  func.func @transform_3(%arg0: i32) -> (i32, i32, i32) {
    %c0_i32 = arith.constant 0 : i32
    %c0_i32_0 = arith.constant 0 : i32
    %c0_i32_1 = arith.constant 0 : i32
    return %arg0, %c0_i32, %c0_i32_0 : i32, i32, i32
  }
}

module attributes {stable_mosaic.version = 11 : i64} {
  func.func @_conv3x3_bn_kernel(%arg0: i32, %arg1: memref<1x50x16xf32, #tpu.memory_space<vmem>>, %arg2: memref<9x16x32xbf16, #tpu.memory_space<vmem>>, %arg3: memref<1x32xf32, #tpu.memory_space<vmem>>, %arg4: memref<1x36x32xf32, #tpu.memory_space<vmem>>) attributes {dimension_semantics = [#tpu.dimension_semantics<parallel>], iteration_bounds = array<i64: 2>, scalar_prefetch = 0 : i64, scratch_operands = 0 : i64, tpu.core_type = #tpu.core_type<tc>, window_params = [{transform_indices = @transform_0, window_bounds = array<i64: 1, 50, 16>}, {pipeline_mode = #tpu.pipeline_mode<synchronous>, transform_indices = @transform_1, window_bounds = array<i64: 9, 16, 32>}, {pipeline_mode = #tpu.pipeline_mode<synchronous>, transform_indices = @transform_2, window_bounds = array<i64: 1, 32>}, {transform_indices = @transform_3, window_bounds = array<i64: 1, 36, 32>}]} {
    %cst = arith.constant 0.000000e+00 : f32
    %0 = vector.broadcast %cst : f32 to vector<36x32xf32>
    %c0 = arith.constant 0 : index
    %c0_0 = arith.constant 0 : index
    %c0_1 = arith.constant 0 : index
    %1 = vector.load %arg1[%c0, %c0_0, %c0_1] : memref<1x50x16xf32, #tpu.memory_space<vmem>>, vector<1x36x16xf32>
    %2 = vector.shape_cast %1 : vector<1x36x16xf32> to vector<36x16xf32>
    %3 = arith.truncf %2 : vector<36x16xf32> to vector<36x16xbf16>
    %c0_2 = arith.constant 0 : index
    %c0_3 = arith.constant 0 : index
    %c0_4 = arith.constant 0 : index
    %4 = vector.load %arg2[%c0_2, %c0_3, %c0_4] : memref<9x16x32xbf16, #tpu.memory_space<vmem>>, vector<1x16x32xbf16>
    %5 = vector.shape_cast %4 : vector<1x16x32xbf16> to vector<16x32xbf16>
    %cst_5 = arith.constant dense<0.000000e+00> : vector<36x32xf32>
    %6 = tpu.matmul %3, %5, %cst_5 {dimension_numbers = #tpu.dot_dimension_numbers<[1], [0], [0], [1], [0, 0, 1, 1], [], []>} : vector<36x16xbf16>, vector<16x32xbf16>, vector<36x32xf32> -> vector<36x32xf32>
    %7 = arith.addf %0, %6 : vector<36x32xf32>
    %c0_6 = arith.constant 0 : index
    %c1 = arith.constant 1 : index
    %c0_7 = arith.constant 0 : index
    %8 = vector.load %arg1[%c0_6, %c1, %c0_7] : memref<1x50x16xf32, #tpu.memory_space<vmem>>, vector<1x36x16xf32>
    %9 = vector.shape_cast %8 : vector<1x36x16xf32> to vector<36x16xf32>
    %10 = arith.truncf %9 : vector<36x16xf32> to vector<36x16xbf16>
    %c1_8 = arith.constant 1 : index
    %c0_9 = arith.constant 0 : index
    %c0_10 = arith.constant 0 : index
    %11 = vector.load %arg2[%c1_8, %c0_9, %c0_10] : memref<9x16x32xbf16, #tpu.memory_space<vmem>>, vector<1x16x32xbf16>
    %12 = vector.shape_cast %11 : vector<1x16x32xbf16> to vector<16x32xbf16>
    %cst_11 = arith.constant dense<0.000000e+00> : vector<36x32xf32>
    %13 = tpu.matmul %10, %12, %cst_11 {dimension_numbers = #tpu.dot_dimension_numbers<[1], [0], [0], [1], [0, 0, 1, 1], [], []>} : vector<36x16xbf16>, vector<16x32xbf16>, vector<36x32xf32> -> vector<36x32xf32>
    %14 = arith.addf %7, %13 : vector<36x32xf32>
    %c0_12 = arith.constant 0 : index
    %c2 = arith.constant 2 : index
    %c0_13 = arith.constant 0 : index
    %15 = vector.load %arg1[%c0_12, %c2, %c0_13] : memref<1x50x16xf32, #tpu.memory_space<vmem>>, vector<1x36x16xf32>
    %16 = vector.shape_cast %15 : vector<1x36x16xf32> to vector<36x16xf32>
    %17 = arith.truncf %16 : vector<36x16xf32> to vector<36x16xbf16>
    %c2_14 = arith.constant 2 : index
    %c0_15 = arith.constant 0 : index
    %c0_16 = arith.constant 0 : index
    %18 = vector.load %arg2[%c2_14, %c0_15, %c0_16] : memref<9x16x32xbf16, #tpu.memory_space<vmem>>, vector<1x16x32xbf16>
    %19 = vector.shape_cast %18 : vector<1x16x32xbf16> to vector<16x32xbf16>
    %cst_17 = arith.constant dense<0.000000e+00> : vector<36x32xf32>
    %20 = tpu.matmul %17, %19, %cst_17 {dimension_numbers = #tpu.dot_dimension_numbers<[1], [0], [0], [1], [0, 0, 1, 1], [], []>} : vector<36x16xbf16>, vector<16x32xbf16>, vector<36x32xf32> -> vector<36x32xf32>
    %21 = arith.addf %14, %20 : vector<36x32xf32>
    %c0_18 = arith.constant 0 : index
    %c6 = arith.constant 6 : index
    %c0_19 = arith.constant 0 : index
    %22 = vector.load %arg1[%c0_18, %c6, %c0_19] : memref<1x50x16xf32, #tpu.memory_space<vmem>>, vector<1x36x16xf32>
    %23 = vector.shape_cast %22 : vector<1x36x16xf32> to vector<36x16xf32>
    %24 = arith.truncf %23 : vector<36x16xf32> to vector<36x16xbf16>
    %c3 = arith.constant 3 : index
    %c0_20 = arith.constant 0 : index
    %c0_21 = arith.constant 0 : index
    %25 = vector.load %arg2[%c3, %c0_20, %c0_21] : memref<9x16x32xbf16, #tpu.memory_space<vmem>>, vector<1x16x32xbf16>
    %26 = vector.shape_cast %25 : vector<1x16x32xbf16> to vector<16x32xbf16>
    %cst_22 = arith.constant dense<0.000000e+00> : vector<36x32xf32>
    %27 = tpu.matmul %24, %26, %cst_22 {dimension_numbers = #tpu.dot_dimension_numbers<[1], [0], [0], [1], [0, 0, 1, 1], [], []>} : vector<36x16xbf16>, vector<16x32xbf16>, vector<36x32xf32> -> vector<36x32xf32>
    %28 = arith.addf %21, %27 : vector<36x32xf32>
    %c0_23 = arith.constant 0 : index
    %c7 = arith.constant 7 : index
    %c0_24 = arith.constant 0 : index
    %29 = vector.load %arg1[%c0_23, %c7, %c0_24] : memref<1x50x16xf32, #tpu.memory_space<vmem>>, vector<1x36x16xf32>
    %30 = vector.shape_cast %29 : vector<1x36x16xf32> to vector<36x16xf32>
    %31 = arith.truncf %30 : vector<36x16xf32> to vector<36x16xbf16>
    %c4 = arith.constant 4 : index
    %c0_25 = arith.constant 0 : index
    %c0_26 = arith.constant 0 : index
    %32 = vector.load %arg2[%c4, %c0_25, %c0_26] : memref<9x16x32xbf16, #tpu.memory_space<vmem>>, vector<1x16x32xbf16>
    %33 = vector.shape_cast %32 : vector<1x16x32xbf16> to vector<16x32xbf16>
    %cst_27 = arith.constant dense<0.000000e+00> : vector<36x32xf32>
    %34 = tpu.matmul %31, %33, %cst_27 {dimension_numbers = #tpu.dot_dimension_numbers<[1], [0], [0], [1], [0, 0, 1, 1], [], []>} : vector<36x16xbf16>, vector<16x32xbf16>, vector<36x32xf32> -> vector<36x32xf32>
    %35 = arith.addf %28, %34 : vector<36x32xf32>
    %c0_28 = arith.constant 0 : index
    %c8 = arith.constant 8 : index
    %c0_29 = arith.constant 0 : index
    %36 = vector.load %arg1[%c0_28, %c8, %c0_29] : memref<1x50x16xf32, #tpu.memory_space<vmem>>, vector<1x36x16xf32>
    %37 = vector.shape_cast %36 : vector<1x36x16xf32> to vector<36x16xf32>
    %38 = arith.truncf %37 : vector<36x16xf32> to vector<36x16xbf16>
    %c5 = arith.constant 5 : index
    %c0_30 = arith.constant 0 : index
    %c0_31 = arith.constant 0 : index
    %39 = vector.load %arg2[%c5, %c0_30, %c0_31] : memref<9x16x32xbf16, #tpu.memory_space<vmem>>, vector<1x16x32xbf16>
    %40 = vector.shape_cast %39 : vector<1x16x32xbf16> to vector<16x32xbf16>
    %cst_32 = arith.constant dense<0.000000e+00> : vector<36x32xf32>
    %41 = tpu.matmul %38, %40, %cst_32 {dimension_numbers = #tpu.dot_dimension_numbers<[1], [0], [0], [1], [0, 0, 1, 1], [], []>} : vector<36x16xbf16>, vector<16x32xbf16>, vector<36x32xf32> -> vector<36x32xf32>
    %42 = arith.addf %35, %41 : vector<36x32xf32>
    %c0_33 = arith.constant 0 : index
    %c12 = arith.constant 12 : index
    %c0_34 = arith.constant 0 : index
    %43 = vector.load %arg1[%c0_33, %c12, %c0_34] : memref<1x50x16xf32, #tpu.memory_space<vmem>>, vector<1x36x16xf32>
    %44 = vector.shape_cast %43 : vector<1x36x16xf32> to vector<36x16xf32>
    %45 = arith.truncf %44 : vector<36x16xf32> to vector<36x16xbf16>
    %c6_35 = arith.constant 6 : index
    %c0_36 = arith.constant 0 : index
    %c0_37 = arith.constant 0 : index
    %46 = vector.load %arg2[%c6_35, %c0_36, %c0_37] : memref<9x16x32xbf16, #tpu.memory_space<vmem>>, vector<1x16x32xbf16>
    %47 = vector.shape_cast %46 : vector<1x16x32xbf16> to vector<16x32xbf16>
    %cst_38 = arith.constant dense<0.000000e+00> : vector<36x32xf32>
    %48 = tpu.matmul %45, %47, %cst_38 {dimension_numbers = #tpu.dot_dimension_numbers<[1], [0], [0], [1], [0, 0, 1, 1], [], []>} : vector<36x16xbf16>, vector<16x32xbf16>, vector<36x32xf32> -> vector<36x32xf32>
    %49 = arith.addf %42, %48 : vector<36x32xf32>
    %c0_39 = arith.constant 0 : index
    %c13 = arith.constant 13 : index
    %c0_40 = arith.constant 0 : index
    %50 = vector.load %arg1[%c0_39, %c13, %c0_40] : memref<1x50x16xf32, #tpu.memory_space<vmem>>, vector<1x36x16xf32>
    %51 = vector.shape_cast %50 : vector<1x36x16xf32> to vector<36x16xf32>
    %52 = arith.truncf %51 : vector<36x16xf32> to vector<36x16xbf16>
    %c7_41 = arith.constant 7 : index
    %c0_42 = arith.constant 0 : index
    %c0_43 = arith.constant 0 : index
    %53 = vector.load %arg2[%c7_41, %c0_42, %c0_43] : memref<9x16x32xbf16, #tpu.memory_space<vmem>>, vector<1x16x32xbf16>
    %54 = vector.shape_cast %53 : vector<1x16x32xbf16> to vector<16x32xbf16>
    %cst_44 = arith.constant dense<0.000000e+00> : vector<36x32xf32>
    %55 = tpu.matmul %52, %54, %cst_44 {dimension_numbers = #tpu.dot_dimension_numbers<[1], [0], [0], [1], [0, 0, 1, 1], [], []>} : vector<36x16xbf16>, vector<16x32xbf16>, vector<36x32xf32> -> vector<36x32xf32>
    %56 = arith.addf %49, %55 : vector<36x32xf32>
    %c0_45 = arith.constant 0 : index
    %c14 = arith.constant 14 : index
    %c0_46 = arith.constant 0 : index
    %57 = vector.load %arg1[%c0_45, %c14, %c0_46] : memref<1x50x16xf32, #tpu.memory_space<vmem>>, vector<1x36x16xf32>
    %58 = vector.shape_cast %57 : vector<1x36x16xf32> to vector<36x16xf32>
    %59 = arith.truncf %58 : vector<36x16xf32> to vector<36x16xbf16>
    %c8_47 = arith.constant 8 : index
    %c0_48 = arith.constant 0 : index
    %c0_49 = arith.constant 0 : index
    %60 = vector.load %arg2[%c8_47, %c0_48, %c0_49] : memref<9x16x32xbf16, #tpu.memory_space<vmem>>, vector<1x16x32xbf16>
    %61 = vector.shape_cast %60 : vector<1x16x32xbf16> to vector<16x32xbf16>
    %cst_50 = arith.constant dense<0.000000e+00> : vector<36x32xf32>
    %62 = tpu.matmul %59, %61, %cst_50 {dimension_numbers = #tpu.dot_dimension_numbers<[1], [0], [0], [1], [0, 0, 1, 1], [], []>} : vector<36x16xbf16>, vector<16x32xbf16>, vector<36x32xf32> -> vector<36x32xf32>
    %63 = arith.addf %56, %62 : vector<36x32xf32>
    %c0_51 = arith.constant 0 : index
    %c0_52 = arith.constant 0 : index
    %64 = vector.load %arg3[%c0_51, %c0_52] : memref<1x32xf32, #tpu.memory_space<vmem>>, vector<1x32xf32>
    %65 = vector.broadcast %64 : vector<1x32xf32> to vector<36x32xf32>
    %66 = arith.addf %63, %65 : vector<36x32xf32>
    %c0_53 = arith.constant 0 : index
    %c0_54 = arith.constant 0 : index
    %c0_55 = arith.constant 0 : index
    %67 = vector.load %arg4[%c0_53, %c0_54, %c0_55] : memref<1x36x32xf32, #tpu.memory_space<vmem>>, vector<1x36x32xf32>
    %68 = vector.shape_cast %67 : vector<1x36x32xf32> to vector<36x32xf32>
    %69 = vector.shape_cast %66 : vector<36x32xf32> to vector<1x36x32xf32>
    tpu.vector_store %arg4[%c0_53, %c0_54, %c0_55], %69 {strides = array<i32>} : memref<1x36x32xf32, #tpu.memory_space<vmem>>, vector<1x36x32xf32>,
    return
  }
  func.func @transform_0(%arg0: i32) -> (i32, i32, i32) {
    %c0_i32 = arith.constant 0 : i32
    %c0_i32_0 = arith.constant 0 : i32
    %c0_i32_1 = arith.constant 0 : i32
    return %arg0, %c0_i32, %c0_i32_0 : i32, i32, i32
  }
  func.func @transform_1(%arg0: i32) -> (i32, i32, i32) {
    %c0_i32 = arith.constant 0 : i32
    %c0_i32_0 = arith.constant 0 : i32
    %c0_i32_1 = arith.constant 0 : i32
    %c0_i32_2 = arith.constant 0 : i32
    return %c0_i32, %c0_i32_0, %c0_i32_1 : i32, i32, i32
  }
  func.func @transform_2(%arg0: i32) -> (i32, i32) {
    %c0_i32 = arith.constant 0 : i32
    %c0_i32_0 = arith.constant 0 : i32
    %c0_i32_1 = arith.constant 0 : i32
    return %c0_i32, %c0_i32_0 : i32, i32
  }
  func.func @transform_3(%arg0: i32) -> (i32, i32, i32) {
    %c0_i32 = arith.constant 0 : i32
    %c0_i32_0 = arith.constant 0 : i32
    %c0_i32_1 = arith.constant 0 : i32
    return %arg0, %c0_i32, %c0_i32_0 : i32, i32, i32
  }
}

</mosaic_0001>

<llo_original>
// kernel: review_kd_forward.6
$region0: #{review_kd_forward.6}
  #allocation0 [shape = 'u32[]', space=smem, size = 0x4, offset = 0x4, fixed_abs, tag = 'smem constant byte address 0x4 - core index']
  #allocation1 [shape = 'u32[144,128]{1,0:T(1,128)}', space=vmem, size = 0x12000, scoped, tag = 'internal scratch']
  %s0 = inlined_call_operand.vmem [shape: bf16[32,32], index: 0, kind: input, shape index: {}]
  %s1 = inlined_call_operand.vmem [shape: bf16[32,16], index: 1, kind: input, shape index: {}]
  %s2 = inlined_call_operand.vmem [shape: f32[1,16], index: 2, kind: input, shape index: {}]
  %s3 = inlined_call_operand.vmem [shape: f32[32,16], index: 3, kind: output, shape index: {}]
  %s4 = sld [smem:[#allocation0]]
  $region22: #{review_kd_forward.6} parent=0
    _
  %s6 = ssub.s32 1, %s4
  %s7 = scalar_select 0, %s6, %s4
  // Predicated region
  $region2: #{review_kd_forward.6} parent=0 // pred_check
    _
  $region3: #{review_kd_forward.6} parent=0 // pred_check_branch
    %9 = sbr.rel (0) target = $region5
  $region4: #{review_kd_forward.6} parent=0 // pred_region
    _
  $region5: #{review_kd_forward.6} parent=0 // pred_fallthru
    _
  // Predicated region
  $region6: #{review_kd_forward.6} parent=0 // pred_check
    _
  $region7: #{review_kd_forward.6} parent=0 // pred_check_branch
    %11 = sbr.rel (0) target = $region9
  $region8: #{review_kd_forward.6} parent=0 // pred_region
    _
  $region9: #{review_kd_forward.6} parent=0 // pred_fallthru
    _
  // Predicated region
  $region10: #{review_kd_forward.6} parent=0 // pred_check
    _
  $region11: #{review_kd_forward.6} parent=0 // pred_check_branch
    %13 = sbr.rel (0) target = $region13
  $region12: #{review_kd_forward.6} parent=0 // pred_region
    _
  $region13: #{review_kd_forward.6} parent=0 // pred_fallthru
    _
  %v15 = vld [vmem:[%s0] sm:$0xf]
  %v16 = vld [vmem:[%s0 + $0x4] sm:$0xf]
  %v17 = vld [vmem:[%s0 + $0x8] sm:$0xf]
  %v18 = vld [vmem:[%s0 + $0xc] sm:$0xf]
  %v19 = vld [vmem:[%s1] sm:$0xf]
  %v20 = vld [vmem:[%s1 + $0x4] sm:$0xf]
  %v21 = vld [vmem:[%s1 + $0x8] sm:$0xf]
  %v22 = vld [vmem:[%s1 + $0xc] sm:$0xf]
  %v23 = vld [vmem:[%s2] sm:$0x1]
  %v25 = vlaneseq
  %v26 = vshrl.u32 %v25, 7
  %v27 = vsub.s32 0, %v26
  %v28 = vrot.slane %v23, %v27
  %v34 = vunpack.c.l.b16 %v15
  %v35 = vunpack.c.l.b16 %v16
  %v36 = vunpack.c.l.b16 %v17
  %v37 = vunpack.c.l.b16 %v18
  %v38 = vpack.c.b16 %v35, %v34
  %v39 = vpack.c.b16 %v37, %v36
  %v44 = vunpack.c.l.b16 %v19
  %v45 = vunpack.c.l.b16 %v20
  %v46 = vunpack.c.l.b16 %v21
  %v47 = vunpack.c.l.b16 %v22
  %v48 = vpack.c.b16 %v45, %v44
  %v49 = vpack.c.b16 %v47, %v46
  %vm52 = vcmask 261120
  %v54 = vsel %vm52, %v38, 0
  %v57 = vsel %vm52, %v39, 0
  %59 = vmatprep.subr.bf16.mxu0 0
  %60 = vmatpush1.bf16.msra.mxu0 %v48
  %61 = vmatprep.subr.bf16.mxu0 0
  %62 = vmatpush1.bf16.msra.mxu0 %v49
  %63 = vmatprep.subr.bf16.mxu0 0
  %64 = vmatpush1.bf16.msra.mxu0 0
  %65 = vmatprep.subr.bf16.mxu0 0
  %66 = vmatpush1.bf16.msra.mxu0 0
  %67 = vmatprep.subr.bf16.mxu0 0
  %68 = vmatpush1.bf16.msra.mxu0 0
  %69 = vmatprep.subr.bf16.mxu0 0
  %70 = vmatpush1.bf16.msra.mxu0 0
  %71 = vmatprep.subr.bf16.mxu0 0
  %72 = vmatpush1.bf16.msra.mxu0 0
  %73 = vmatprep.subr.bf16.mxu0 0
  %74 = vmatpush1.bf16.msra.mxu0 0
  %75 = vmatprep.subr.bf16.mxu0 0
  %76 = vmatpush1.bf16.msra.mxu0 0
  %77 = vmatprep.subr.bf16.mxu0 0
  %78 = vmatpush1.bf16.msra.mxu0 0
  %79 = vmatprep.subr.bf16.mxu0 0
  %80 = vmatpush1.bf16.msra.mxu0 0
  %81 = vmatprep.subr.bf16.mxu0 0
  %82 = vmatpush1.bf16.msra.mxu0 0
  %83 = vmatprep.subr.bf16.mxu0 0
  %84 = vmatpush1.bf16.msra.mxu0 0
  %85 = vmatprep.subr.bf16.mxu0 0
  %86 = vmatpush1.bf16.msra.mxu0 0
  %87 = vmatprep.subr.bf16.mxu0 0
  %88 = vmatpush1.bf16.msra.mxu0 0
  %89 = vmatprep.subr.bf16.mxu0 0
  %90 = vmatpush1.bf16.msra.mxu0 0
  %91 = vmatprep.mubr.bf16.mxu0 0
  %92 = vmatmul.mubr.bf16.gmra.mrb[0].mxu0 %v54
  %v93 = vpop.f32.mrb[0].mxu0
  %v94 = vadd.f32 %v28, %v93
  %v95 = vpop.f32.mrb[0].mxu0
  %v96 = vpop.f32.mrb[0].mxu0
  %v97 = vadd.f32 %v28, %v96
  %v98 = vpop.f32.mrb[0].mxu0
  %99 = vmatprep.mubr.bf16.mxu0 0
  %100 = vmatmul.mubr.bf16.gmra.mrb[0].mxu0 %v57
  %v101 = vpop.f32.mrb[0].mxu0
  %v102 = vadd.f32 %v28, %v101
  %v103 = vpop.f32.mrb[0].mxu0
  %v104 = vpop.f32.mrb[0].mxu0
  %v105 = vadd.f32 %v28, %v104
  %v106 = vpop.f32.mrb[0].mxu0
  %107 = vdwg.mxu0
  %vm108 = vcmask 130048
  %109 = vst.msk [vmem:[%s3] sm:$0xff] %vm108, %v94
  %110 = vst.msk [vmem:[%s3 + $0x8] sm:$0xff] %vm108, %v97
  %111 = vst.msk [vmem:[%s3 + $0x10] sm:$0xff] %vm108, %v102
  %112 = vst.msk [vmem:[%s3 + $0x18] sm:$0xff] %vm108, %v105
  // Predicated region
  $region14: #{review_kd_forward.6} parent=0 // pred_check
    _
  $region15: #{review_kd_forward.6} parent=0 // pred_check_branch
    %114 = sbr.rel (0) target = $region17
  $region16: #{review_kd_forward.6} parent=0 // pred_region
    _
  $region17: #{review_kd_forward.6} parent=0 // pred_fallthru
    _
  // Predicated region
  $region18: #{review_kd_forward.6} parent=0 // pred_check
    _
  $region19: #{review_kd_forward.6} parent=0 // pred_check_branch
    %116 = sbr.rel (0) target = $region21
  $region20: #{review_kd_forward.6} parent=0 // pred_region
    _
  $region21: #{review_kd_forward.6} parent=0 // pred_fallthru
    _

// kernel: review_kd_forward.8
$region0: #{review_kd_forward.8}
  #allocation0 [shape = 'u32[]', space=smem, size = 0x4, offset = 0x4, fixed_abs, tag = 'smem constant byte address 0x4 - core index']
  #allocation1 [shape = 'u32[144,128]{1,0:T(1,128)}', space=vmem, size = 0x12000, scoped, tag = 'internal scratch']
  %s0 = inlined_call_operand.vmem [shape: bf16[128,16], index: 0, kind: input, shape index: {}]
  %s1 = inlined_call_operand.vmem [shape: bf16[128,16], index: 1, kind: input, shape index: {}]
  %s2 = inlined_call_operand.vmem [shape: bf16[16,16], index: 2, kind: input, shape index: {}]
  %s3 = inlined_call_operand.vmem [shape: f32[1,16], index: 3, kind: input, shape index: {}]
  %s4 = inlined_call_operand.vmem [shape: f32[2,32], index: 4, kind: input, shape index: {}]
  %s5 = inlined_call_operand.vmem [shape: f32[1,2], index: 5, kind: input, shape index: {}]
  %s6 = inlined_call_operand.vmem [shape: f32[128,16], index: 6, kind: output, shape index: {}]
  %s7 = sld [smem:[#allocation0]]
  $region34: #{review_kd_forward.8} parent=0
    _
  %s9 = ssub.s32 1, %s7
  %s10 = scalar_select 0, %s9, %s7
  // Predicated region
  $region2: #{review_kd_forward.8} parent=0 // pred_check
    _
  $region3: #{review_kd_forward.8} parent=0 // pred_check_branch
    %12 = sbr.rel (0) target = $region5
  $region4: #{review_kd_forward.8} parent=0 // pred_region
    _
  $region5: #{review_kd_forward.8} parent=0 // pred_fallthru
    _
  // Predicated region
  $region6: #{review_kd_forward.8} parent=0 // pred_check
    _
  $region7: #{review_kd_forward.8} parent=0 // pred_check_branch
    %14 = sbr.rel (0) target = $region9
  $region8: #{review_kd_forward.8} parent=0 // pred_region
    _
  $region9: #{review_kd_forward.8} parent=0 // pred_fallthru
    _
  // Predicated region
  $region10: #{review_kd_forward.8} parent=0 // pred_check
    _
  $region11: #{review_kd_forward.8} parent=0 // pred_check_branch
    %16 = sbr.rel (0) target = $region13
  $region12: #{review_kd_forward.8} parent=0 // pred_region
    _
  $region13: #{review_kd_forward.8} parent=0 // pred_fallthru
    _
  // Predicated region
  $region14: #{review_kd_forward.8} parent=0 // pred_check
    _
  $region15: #{review_kd_forward.8} parent=0 // pred_check_branch
    %18 = sbr.rel (0) target = $region17
  $region16: #{review_kd_forward.8} parent=0 // pred_region
    _
  $region17: #{review_kd_forward.8} parent=0 // pred_fallthru
    _
  // Predicated region
  $region18: #{review_kd_forward.8} parent=0 // pred_check
    _
  $region19: #{review_kd_forward.8} parent=0 // pred_check_branch
    %20 = sbr.rel (0) target = $region21
  $region20: #{review_kd_forward.8} parent=0 // pred_region
    _
  $region21: #{review_kd_forward.8} parent=0 // pred_fallthru
    _
  // Predicated region
  $region22: #{review_kd_forward.8} parent=0 // pred_check
    _
  $region23: #{review_kd_forward.8} parent=0 // pred_check_branch
    %22 = sbr.rel (0) target = $region25
  $region24: #{review_kd_forward.8} parent=0 // pred_region
    _
  $region25: #{review_kd_forward.8} parent=0 // pred_fallthru
    _
  %v24 = vld [vmem:[%s0] sm:$0xf]
  %v25 = vld [vmem:[%s0 + $0x4] sm:$0xf]
  %v26 = vld [vmem:[%s0 + $0x8] sm:$0xf]
  %v27 = vld [vmem:[%s0 + $0xc] sm:$0xf]
  %v28 = vld [vmem:[%s0 + $0x10] sm:$0xf]
  %v29 = vld [vmem:[%s0 + $0x14] sm:$0xf]
  %v30 = vld [vmem:[%s0 + $0x18] sm:$0xf]
  %v31 = vld [vmem:[%s0 + $0x1c] sm:$0xf]
  %v32 = vld [vmem:[%s0 + $0x20] sm:$0xf]
  %v33 = vld [vmem:[%s0 + $0x24] sm:$0xf]
  %v34 = vld [vmem:[%s0 + $0x28] sm:$0xf]
  %v35 = vld [vmem:[%s0 + $0x2c] sm:$0xf]
  %v36 = vld [vmem:[%s0 + $0x30] sm:$0xf]
  %v37 = vld [vmem:[%s0 + $0x34] sm:$0xf]
  %v38 = vld [vmem:[%s0 + $0x38] sm:$0xf]
  %v39 = vld [vmem:[%s0 + $0x3c] sm:$0xf]
  %v40 = vld [vmem:[%s2] sm:$0xf]
  %v41 = vld [vmem:[%s2 + $0x4] sm:$0xf]
  %v42 = vld [vmem:[%s3] sm:$0x1]
  %v44 = vlaneseq
  %v45 = vshrl.u32 %v44, 7
  %v46 = vsub.s32 0, %v45
  %v47 = vrot.slane %v42, %v46
  %v65 = vunpack.c.l.b16 %v24
  %v66 = vunpack.c.l.b16 %v25
  %v67 = vunpack.c.l.b16 %v26
  %v68 = vunpack.c.l.b16 %v27
  %v69 = vunpack.c.l.b16 %v28
  %v70 = vunpack.c.l.b16 %v29
  %v71 = vunpack.c.l.b16 %v30
  %v72 = vunpack.c.l.b16 %v31
  %v73 = vunpack.c.l.b16 %v32
  %v74 = vunpack.c.l.b16 %v33
  %v75 = vunpack.c.l.b16 %v34
  %v76 = vunpack.c.l.b16 %v35
  %v77 = vunpack.c.l.b16 %v36
  %v78 = vunpack.c.l.b16 %v37
  %v79 = vunpack.c.l.b16 %v38
  %v80 = vunpack.c.l.b16 %v39
  %v81 = vpack.c.b16 %v66, %v65
  %v82 = vpack.c.b16 %v68, %v67
  %v83 = vpack.c.b16 %v70, %v69
  %v84 = vpack.c.b16 %v72, %v71
  %v85 = vpack.c.b16 %v74, %v73
  %v86 = vpack.c.b16 %v76, %v75
  %v87 = vpack.c.b16 %v78, %v77
  %v88 = vpack.c.b16 %v80, %v79
  %v91 = vunpack.c.l.b16 %v40
  %v92 = vunpack.c.l.b16 %v41
  %v93 = vpack.c.b16 %v92, %v91
  %vm95 = vcmask 130048
  %v97 = vsel %vm95, %v81, 0
  %v100 = vsel %vm95, %v82, 0
  %v103 = vsel %vm95, %v83, 0
  %v106 = vsel %vm95, %v84, 0
  %v109 = vsel %vm95, %v85, 0
  %v112 = vsel %vm95, %v86, 0
  %v115 = vsel %vm95, %v87, 0
  %v118 = vsel %vm95, %v88, 0
  %120 = vmatprep.subr.bf16.mxu0 0
  %121 = vmatpush1.bf16.msra.mxu0 %v93
  %122 = vmatprep.subr.bf16.mxu0 0
  %123 = vmatpush1.bf16.msra.mxu0 0
  %124 = vmatprep.subr.bf16.mxu0 0
  %125 = vmatpush1.bf16.msra.mxu0 0
  %126 = vmatprep.subr.bf16.mxu0 0
  %127 = vmatpush1.bf16.msra.mxu0 0
  %128 = vmatprep.subr.bf16.mxu0 0
  %129 = vmatpush1.bf16.msra.mxu0 0
  %130 = vmatprep.subr.bf16.mxu0 0
  %131 = vmatpush1.bf16.msra.mxu0 0
  %132 = vmatprep.subr.bf16.mxu0 0
  %133 = vmatpush1.bf16.msra.mxu0 0
  %134 = vmatprep.subr.bf16.mxu0 0
  %135 = vmatpush1.bf16.msra.mxu0 0
  %136 = vmatprep.subr.bf16.mxu0 0
  %137 = vmatpush1.bf16.msra.mxu0 0
  %138 = vmatprep.subr.bf16.mxu0 0
  %139 = vmatpush1.bf16.msra.mxu0 0
  %140 = vmatprep.subr.bf16.mxu0 0
  %141 = vmatpush1.bf16.msra.mxu0 0
  %142 = vmatprep.subr.bf16.mxu0 0
  %143 = vmatpush1.bf16.msra.mxu0 0
  %144 = vmatprep.subr.bf16.mxu0 0
  %145 = vmatpush1.bf16.msra.mxu0 0
  %146 = vmatprep.subr.bf16.mxu0 0
  %147 = vmatpush1.bf16.msra.mxu0 0
  %148 = vmatprep.subr.bf16.mxu0 0
  %149 = vmatpush1.bf16.msra.mxu0 0
  %150 = vmatprep.subr.bf16.mxu0 0
  %151 = vmatpush1.bf16.msra.mxu0 0
  %152 = vmatprep.mubr.bf16.mxu0 0
  %153 = vmatmul.mubr.bf16.gmra.mrb[0].mxu0 %v97
  %v154 = vpop.f32.mrb[0].mxu0
  %v155 = vadd.f32 %v47, %v154
  %v156 = vpop.f32.mrb[0].mxu0
  %v157 = vpop.f32.mrb[0].mxu0
  %v158 = vadd.f32 %v47, %v157
  %v159 = vpop.f32.mrb[0].mxu0
  %160 = vmatprep.mubr.bf16.mxu0 0
  %161 = vmatmul.mubr.bf16.gmra.mrb[0].mxu0 %v100
  %v162 = vpop.f32.mrb[0].mxu0
  %v163 = vadd.f32 %v47, %v162
  %v164 = vpop.f32.mrb[0].mxu0
  %v165 = vpop.f32.mrb[0].mxu0
  %v166 = vadd.f32 %v47, %v165
  %v167 = vpop.f32.mrb[0].mxu0
  %168 = vmatprep.mubr.bf16.mxu0 0
  %169 = vmatmul.mubr.bf16.gmra.mrb[0].mxu0 %v103
  %v170 = vpop.f32.mrb[0].mxu0
  %v171 = vadd.f32 %v47, %v170
  %v172 = vpop.f32.mrb[0].mxu0
  %v173 = vpop.f32.mrb[0].mxu0
  %v174 = vadd.f32 %v47, %v173
  %v175 = vpop.f32.mrb[0].mxu0
  %176 = vmatprep.mubr.bf16.mxu0 0
  %177 = vmatmul.mubr.bf16.gmra.mrb[0].mxu0 %v106
  %v178 = vpop.f32.mrb[0].mxu0
  %v179 = vadd.f32 %v47, %v178
  %v180 = vpop.f32.mrb[0].mxu0
  %v181 = vpop.f32.mrb[0].mxu0
  %v182 = vadd.f32 %v47, %v181
  %v183 = vpop.f32.mrb[0].mxu0
  %184 = vmatprep.mubr.bf16.mxu0 0
  %185 = vmatmul.mubr.bf16.gmra.mrb[0].mxu0 %v109
  %v186 = vpop.f32.mrb[0].mxu0
  %v187 = vadd.f32 %v47, %v186
  %v188 = vpop.f32.mrb[0].mxu0
  %v189 = vpop.f32.mrb[0].mxu0
  %v190 = vadd.f32 %v47, %v189
  %v191 = vpop.f32.mrb[0].mxu0
  %192 = vmatprep.mubr.bf16.mxu0 0
  %193 = vmatmul.mubr.bf16.gmra.mrb[0].mxu0 %v112
  %v194 = vpop.f32.mrb[0].mxu0
  %v195 = vadd.f32 %v47, %v194
  %v196 = vpop.f32.mrb[0].mxu0
  %v197 = vpop.f32.mrb[0].mxu0
  %v198 = vadd.f32 %v47, %v197
  %v199 = vpop.f32.mrb[0].mxu0
  %200 = vmatprep.mubr.bf16.mxu0 0
  %201 = vmatmul.mubr.bf16.gmra.mrb[0].mxu0 %v115
  %v202 = vpop.f32.mrb[0].mxu0
  %v203 = vadd.f32 %v47, %v202
  %v204 = vpop.f32.mrb[0].mxu0
  %v205 = vpop.f32.mrb[0].mxu0
  %v206 = vadd.f32 %v47, %v205
  %v207 = vpop.f32.mrb[0].mxu0
  %208 = vmatprep.mubr.bf16.mxu0 0
  %209 = vmatmul.mubr.bf16.gmra.mrb[0].mxu0 %v118
  %v210 = vpop.f32.mrb[0].mxu0
  %v211 = vadd.f32 %v47, %v210
  %v212 = vpop.f32.mrb[0].mxu0
  %v213 = vpop.f32.mrb[0].mxu0
  %v214 = vadd.f32 %v47, %v213
  %v215 = vpop.f32.mrb[0].mxu0
  %216 = vdwg.mxu0
  %v217 = vld [vmem:[%s1] sm:$0xf]
  %v218 = vld [vmem:[%s1 + $0x4] sm:$0xf]
  %v219 = vld [vmem:[%s1 + $0x8] sm:$0xf]
  %v220 = vld [vmem:[%s1 + $0xc] sm:$0xf]
  %v221 = vld [vmem:[%s1 + $0x10] sm:$0xf]
  %v222 = vld [vmem:[%s1 + $0x14] sm:$0xf]
  %v223 = vld [vmem:[%s1 + $0x18] sm:$0xf]
  %v224 = vld [vmem:[%s1 + $0x1c] sm:$0xf]
  %v225 = vld [vmem:[%s1 + $0x20] sm:$0xf]
  %v226 = vld [vmem:[%s1 + $0x24] sm:$0xf]
  %v227 = vld [vmem:[%s1 + $0x28] sm:$0xf]
  %v228 = vld [vmem:[%s1 + $0x2c] sm:$0xf]
  %v229 = vld [vmem:[%s1 + $0x30] sm:$0xf]
  %v230 = vld [vmem:[%s1 + $0x34] sm:$0xf]
  %v231 = vld [vmem:[%s1 + $0x38] sm:$0xf]
  %v232 = vld [vmem:[%s1 + $0x3c] sm:$0xf]
  %v233 = vunpack.c.l.bf16 %v217
  %v234 = vunpack.c.l.bf16 %v218
  %v235 = vunpack.c.l.bf16 %v219
  %v236 = vunpack.c.l.bf16 %v220
  %v237 = vunpack.c.l.bf16 %v221
  %v238 = vunpack.c.l.bf16 %v222
  %v239 = vunpack.c.l.bf16 %v223
  %v240 = vunpack.c.l.bf16 %v224
  %v241 = vunpack.c.l.bf16 %v225
  %v242 = vunpack.c.l.bf16 %v226
  %v243 = vunpack.c.l.bf16 %v227
  %v244 = vunpack.c.l.bf16 %v228
  %v245 = vunpack.c.l.bf16 %v229
  %v246 = vunpack.c.l.bf16 %v230
  %v247 = vunpack.c.l.bf16 %v231
  %v248 = vunpack.c.l.bf16 %v232
  %v249 = vld [vmem:[%s4] sm:$0x1]
  %v250 = vlaneseq
  %v251 = vshrl.u32 %v250, 7
  %v252 = vsub.s32 0, %v251
  %v253 = vrot.slane %v249, %v252
  %v254 = vmul.f32 %v155, %v253
  %v255 = vmul.f32 %v158, %v253
  %v256 = vmul.f32 %v163, %v253
  %v257 = vmul.f32 %v166, %v253
  %v258 = vmul.f32 %v171, %v253
  %v259 = vmul.f32 %v174, %v253
  %v260 = vmul.f32 %v179, %v253
  %v261 = vmul.f32 %v182, %v253
  %v262 = vmul.f32 %v187, %v253
  %v263 = vmul.f32 %v190, %v253
  %v264 = vmul.f32 %v195, %v253
  %v265 = vmul.f32 %v198, %v253
  %v266 = vmul.f32 %v203, %v253
  %v267 = vmul.f32 %v206, %v253
  %v268 = vmul.f32 %v211, %v253
  %v269 = vmul.f32 %v214, %v253
  %v270 = vsel %vm95, %v254, 0.0
  %271 = vadd.xlane.f32.xlu0 %v270
  %v272 = vpop.xlane.xlu0 %271
  %v273 = vsel %vm95, %v255, 0.0
  %274 = vadd.xlane.f32.xlu0 %v273
  %v275 = vpop.xlane.xlu0 %274
  %v276 = vsel %vm95, %v256, 0.0
  %277 = vadd.xlane.f32.xlu0 %v276
  %v278 = vpop.xlane.xlu0 %277
  %v279 = vsel %vm95, %v257, 0.0
  %280 = vadd.xlane.f32.xlu0 %v279
  %v281 = vpop.xlane.xlu0 %280
  %v282 = vsel %vm95, %v258, 0.0
  %283 = vadd.xlane.f32.xlu0 %v282
  %v284 = vpop.xlane.xlu0 %283
  %v285 = vsel %vm95, %v259, 0.0
  %286 = vadd.xlane.f32.xlu0 %v285
  %v287 = vpop.xlane.xlu0 %286
  %v288 = vsel %vm95, %v260, 0.0
  %289 = vadd.xlane.f32.xlu0 %v288
  %v290 = vpop.xlane.xlu0 %289
  %v291 = vsel %vm95, %v261, 0.0
  %292 = vadd.xlane.f32.xlu0 %v291
  %v293 = vpop.xlane.xlu0 %292
  %v294 = vsel %vm95, %v262, 0.0
  %295 = vadd.xlane.f32.xlu0 %v294
  %v296 = vpop.xlane.xlu0 %295
  %v297 = vsel %vm95, %v263, 0.0
  %298 = vadd.xlane.f32.xlu0 %v297
  %v299 = vpop.xlane.xlu0 %298
  %v300 = vsel %vm95, %v264, 0.0
  %301 = vadd.xlane.f32.xlu0 %v300
  %v302 = vpop.xlane.xlu0 %301
  %v303 = vsel %vm95, %v265, 0.0
  %304 = vadd.xlane.f32.xlu0 %v303
  %v305 = vpop.xlane.xlu0 %304
  %v306 = vsel %vm95, %v266, 0.0
  %307 = vadd.xlane.f32.xlu0 %v306
  %v308 = vpop.xlane.xlu0 %307
  %v309 = vsel %vm95, %v267, 0.0
  %310 = vadd.xlane.f32.xlu0 %v309
  %v311 = vpop.xlane.xlu0 %310
  %v312 = vsel %vm95, %v268, 0.0
  %313 = vadd.xlane.f32.xlu0 %v312
  %v314 = vpop.xlane.xlu0 %313
  %v315 = vsel %vm95, %v269, 0.0
  %316 = vadd.xlane.f32.xlu0 %v315
  %v317 = vpop.xlane.xlu0 %316
  %319 = vrot.lane.b32.xlu0 %v253, 112
  %v320 = vpop.permute.xlu0 %319
  %v322 = vmul.f32 %v233, %v320
  %v323 = vmul.f32 %v234, %v320
  %v324 = vmul.f32 %v235, %v320
  %v325 = vmul.f32 %v236, %v320
  %v326 = vmul.f32 %v237, %v320
  %v327 = vmul.f32 %v238, %v320
  %v328 = vmul.f32 %v239, %v320
  %v329 = vmul.f32 %v240, %v320
  %v330 = vmul.f32 %v241, %v320
  %v331 = vmul.f32 %v242, %v320
  %v332 = vmul.f32 %v243, %v320
  %v333 = vmul.f32 %v244, %v320
  %v334 = vmul.f32 %v245, %v320
  %v335 = vmul.f32 %v246, %v320
  %v336 = vmul.f32 %v247, %v320
  %v337 = vmul.f32 %v248, %v320
  %v338 = vsel %vm95, %v322, 0.0
  %339 = vadd.xlane.f32.xlu0 %v338
  %v340 = vpop.xlane.xlu0 %339
  %v341 = vsel %vm95, %v323, 0.0
  %342 = vadd.xlane.f32.xlu0 %v341
  %v343 = vpop.xlane.xlu0 %342
  %v344 = vsel %vm95, %v324, 0.0
  %345 = vadd.xlane.f32.xlu0 %v344
  %v346 = vpop.xlane.xlu0 %345
  %v347 = vsel %vm95, %v325, 0.0
  %348 = vadd.xlane.f32.xlu0 %v347
  %v349 = vpop.xlane.xlu0 %348
  %v350 = vsel %vm95, %v326, 0.0
  %351 = vadd.xlane.f32.xlu0 %v350
  %v352 = vpop.xlane.xlu0 %351
  %v353 = vsel %vm95, %v327, 0.0
  %354 = vadd.xlane.f32.xlu0 %v353
  %v355 = vpop.xlane.xlu0 %354
  %v356 = vsel %vm95, %v328, 0.0
  %357 = vadd.xlane.f32.xlu0 %v356
  %v358 = vpop.xlane.xlu0 %357
  %v359 = vsel %vm95, %v329, 0.0
  %360 = vadd.xlane.f32.xlu0 %v359
  %v361 = vpop.xlane.xlu0 %360
  %v362 = vsel %vm95, %v330, 0.0
  %363 = vadd.xlane.f32.xlu0 %v362
  %v364 = vpop.xlane.xlu0 %363
  %v365 = vsel %vm95, %v331, 0.0
  %366 = vadd.xlane.f32.xlu0 %v365
  %v367 = vpop.xlane.xlu0 %366
  %v368 = vsel %vm95, %v332, 0.0
  %369 = vadd.xlane.f32.xlu0 %v368
  %v370 = vpop.xlane.xlu0 %369
  %v371 = vsel %vm95, %v333, 0.0
  %372 = vadd.xlane.f32.xlu0 %v371
  %v373 = vpop.xlane.xlu0 %372
  %v374 = vsel %vm95, %v334, 0.0
  %375 = vadd.xlane.f32.xlu0 %v374
  %v376 = vpop.xlane.xlu0 %375
  %v377 = vsel %vm95, %v335, 0.0
  %378 = vadd.xlane.f32.xlu0 %v377
  %v379 = vpop.xlane.xlu0 %378
  %v380 = vsel %vm95, %v336, 0.0
  %381 = vadd.xlane.f32.xlu0 %v380
  %v382 = vpop.xlane.xlu0 %381
  %v383 = vsel %vm95, %v337, 0.0
  %384 = vadd.xlane.f32.xlu0 %v383
  %v385 = vpop.xlane.xlu0 %384
  %v386 = vadd.f32 %v272, %v340
  %v387 = vadd.f32 %v275, %v343
  %v388 = vadd.f32 %v278, %v346
  %v389 = vadd.f32 %v281, %v349
  %v390 = vadd.f32 %v284, %v352
  %v391 = vadd.f32 %v287, %v355
  %v392 = vadd.f32 %v290, %v358
  %v393 = vadd.f32 %v293, %v361
  %v394 = vadd.f32 %v296, %v364
  %v395 = vadd.f32 %v299, %v367
  %v396 = vadd.f32 %v302, %v370
  %v397 = vadd.f32 %v305, %v373
  %v398 = vadd.f32 %v308, %v376
  %v399 = vadd.f32 %v311, %v379
  %v400 = vadd.f32 %v314, %v382
  %v401 = vadd.f32 %v317, %v385
  %v402 = vld [vmem:[%s5] sm:$0x1]
  %v404 = vlaneseq
  %v405 = vshrl.u32 %v404, 7
  %v406 = vsub.s32 0, %v405
  %v407 = vrot.slane %v402, %v406
  %v409 = vadd.f32 %v386, %v407
  %v410 = vadd.f32 %v387, %v407
  %v411 = vadd.f32 %v388, %v407
  %v412 = vadd.f32 %v389, %v407
  %v413 = vadd.f32 %v390, %v407
  %v414 = vadd.f32 %v391, %v407
  %v415 = vadd.f32 %v392, %v407
  %v416 = vadd.f32 %v393, %v407
  %v417 = vadd.f32 %v394, %v407
  %v418 = vadd.f32 %v395, %v407
  %v419 = vadd.f32 %v396, %v407
  %v420 = vadd.f32 %v397, %v407
  %v421 = vadd.f32 %v398, %v407
  %v422 = vadd.f32 %v399, %v407
  %v423 = vadd.f32 %v400, %v407
  %v424 = vadd.f32 %v401, %v407
  %v425 = vld [vmem:[%s4 + $0x1] sm:$0x1]
  %v426 = vlaneseq
  %v427 = vshrl.u32 %v426, 7
  %v428 = vsub.s32 0, %v427
  %v429 = vrot.slane %v425, %v428
  %v430 = vmul.f32 %v155, %v429
  %v431 = vmul.f32 %v158, %v429
  %v432 = vmul.f32 %v163, %v429
  %v433 = vmul.f32 %v166, %v429
  %v434 = vmul.f32 %v171, %v429
  %v435 = vmul.f32 %v174, %v429
  %v436 = vmul.f32 %v179, %v429
  %v437 = vmul.f32 %v182, %v429
  %v438 = vmul.f32 %v187, %v429
  %v439 = vmul.f32 %v190, %v429
  %v440 = vmul.f32 %v195, %v429
  %v441 = vmul.f32 %v198, %v429
  %v442 = vmul.f32 %v203, %v429
  %v443 = vmul.f32 %v206, %v429
  %v444 = vmul.f32 %v211, %v429
  %v445 = vmul.f32 %v214, %v429
  %v446 = vsel %vm95, %v430, 0.0
  %447 = vadd.xlane.f32.xlu0 %v446
  %v448 = vpop.xlane.xlu0 %447
  %v449 = vsel %vm95, %v431, 0.0
  %450 = vadd.xlane.f32.xlu0 %v449
  %v451 = vpop.xlane.xlu0 %450
  %v452 = vsel %vm95, %v432, 0.0
  %453 = vadd.xlane.f32.xlu0 %v452
  %v454 = vpop.xlane.xlu0 %453
  %v455 = vsel %vm95, %v433, 0.0
  %456 = vadd.xlane.f32.xlu0 %v455
  %v457 = vpop.xlane.xlu0 %456
  %v458 = vsel %vm95, %v434, 0.0
  %459 = vadd.xlane.f32.xlu0 %v458
  %v460 = vpop.xlane.xlu0 %459
  %v461 = vsel %vm95, %v435, 0.0
  %462 = vadd.xlane.f32.xlu0 %v461
  %v463 = vpop.xlane.xlu0 %462
  %v464 = vsel %vm95, %v436, 0.0
  %465 = vadd.xlane.f32.xlu0 %v464
  %v466 = vpop.xlane.xlu0 %465
  %v467 = vsel %vm95, %v437, 0.0
  %468 = vadd.xlane.f32.xlu0 %v467
  %v469 = vpop.xlane.xlu0 %468
  %v470 = vsel %vm95, %v438, 0.0
  %471 = vadd.xlane.f32.xlu0 %v470
  %v472 = vpop.xlane.xlu0 %471
  %v473 = vsel %vm95, %v439, 0.0
  %474 = vadd.xlane.f32.xlu0 %v473
  %v475 = vpop.xlane.xlu0 %474
  %v476 = vsel %vm95, %v440, 0.0
  %477 = vadd.xlane.f32.xlu0 %v476
  %v478 = vpop.xlane.xlu0 %477
  %v479 = vsel %vm95, %v441, 0.0
  %480 = vadd.xlane.f32.xlu0 %v479
  %v481 = vpop.xlane.xlu0 %480
  %v482 = vsel %vm95, %v442, 0.0
  %483 = vadd.xlane.f32.xlu0 %v482
  %v484 = vpop.xlane.xlu0 %483
  %v485 = vsel %vm95, %v443, 0.0
  %486 = vadd.xlane.f32.xlu0 %v485
  %v487 = vpop.xlane.xlu0 %486
  %v488 = vsel %vm95, %v444, 0.0
  %489 = vadd.xlane.f32.xlu0 %v488
  %v490 = vpop.xlane.xlu0 %489
  %v491 = vsel %vm95, %v445, 0.0
  %492 = vadd.xlane.f32.xlu0 %v491
  %v493 = vpop.xlane.xlu0 %492
  %495 = vrot.lane.b32.xlu0 %v429, 112
  %v496 = vpop.permute.xlu0 %495
  %v498 = vmul.f32 %v233, %v496
  %v499 = vmul.f32 %v234, %v496
  %v500 = vmul.f32 %v235, %v496
  %v501 = vmul.f32 %v236, %v496
  %v502 = vmul.f32 %v237, %v496
  %v503 = vmul.f32 %v238, %v496
  %v504 = vmul.f32 %v239, %v496
  %v505 = vmul.f32 %v240, %v496
  %v506 = vmul.f32 %v241, %v496
  %v507 = vmul.f32 %v242, %v496
  %v508 = vmul.f32 %v243, %v496
  %v509 = vmul.f32 %v244, %v496
  %v510 = vmul.f32 %v245, %v496
  %v511 = vmul.f32 %v246, %v496
  %v512 = vmul.f32 %v247, %v496
  %v513 = vmul.f32 %v248, %v496
  %v514 = vsel %vm95, %v498, 0.0
  %515 = vadd.xlane.f32.xlu0 %v514
  %v516 = vpop.xlane.xlu0 %515
  %v517 = vsel %vm95, %v499, 0.0
  %518 = vadd.xlane.f32.xlu0 %v517
  %v519 = vpop.xlane.xlu0 %518
  %v520 = vsel %vm95, %v500, 0.0
  %521 = vadd.xlane.f32.xlu0 %v520
  %v522 = vpop.xlane.xlu0 %521
  %v523 = vsel %vm95, %v501, 0.0
  %524 = vadd.xlane.f32.xlu0 %v523
  %v525 = vpop.xlane.xlu0 %524
  %v526 = vsel %vm95, %v502, 0.0
  %527 = vadd.xlane.f32.xlu0 %v526
  %v528 = vpop.xlane.xlu0 %527
  %v529 = vsel %vm95, %v503, 0.0
  %530 = vadd.xlane.f32.xlu0 %v529
  %v531 = vpop.xlane.xlu0 %530
  %v532 = vsel %vm95, %v504, 0.0
  %533 = vadd.xlane.f32.xlu0 %v532
  %v534 = vpop.xlane.xlu0 %533
  %v535 = vsel %vm95, %v505, 0.0
  %536 = vadd.xlane.f32.xlu0 %v535
  %v537 = vpop.xlane.xlu0 %536
  %v538 = vsel %vm95, %v506, 0.0
  %539 = vadd.xlane.f32.xlu0 %v538
  %v540 = vpop.xlane.xlu0 %539
  %v541 = vsel %vm95, %v507, 0.0
  %542 = vadd.xlane.f32.xlu0 %v541
  %v543 = vpop.xlane.xlu0 %542
  %v544 = vsel %vm95, %v508, 0.0
  %545 = vadd.xlane.f32.xlu0 %v544
  %v546 = vpop.xlane.xlu0 %545
  %v547 = vsel %vm95, %v509, 0.0
  %548 = vadd.xlane.f32.xlu0 %v547
  %v549 = vpop.xlane.xlu0 %548
  %v550 = vsel %vm95, %v510, 0.0
  %551 = vadd.xlane.f32.xlu0 %v550
  %v552 = vpop.xlane.xlu0 %551
  %v553 = vsel %vm95, %v511, 0.0
  %554 = vadd.xlane.f32.xlu0 %v553
  %v555 = vpop.xlane.xlu0 %554
  %v556 = vsel %vm95, %v512, 0.0
  %557 = vadd.xlane.f32.xlu0 %v556
  %v558 = vpop.xlane.xlu0 %557
  %v559 = vsel %vm95, %v513, 0.0
  %560 = vadd.xlane.f32.xlu0 %v559
  %v561 = vpop.xlane.xlu0 %560
  %v562 = vadd.f32 %v448, %v516
  %v563 = vadd.f32 %v451, %v519
  %v564 = vadd.f32 %v454, %v522
  %v565 = vadd.f32 %v457, %v525
  %v566 = vadd.f32 %v460, %v528
  %v567 = vadd.f32 %v463, %v531
  %v568 = vadd.f32 %v466, %v534
  %v569 = vadd.f32 %v469, %v537
  %v570 = vadd.f32 %v472, %v540
  %v571 = vadd.f32 %v475, %v543
  %v572 = vadd.f32 %v478, %v546
  %v573 = vadd.f32 %v481, %v549
  %v574 = vadd.f32 %v484, %v552
  %v575 = vadd.f32 %v487, %v555
  %v576 = vadd.f32 %v490, %v558
  %v577 = vadd.f32 %v493, %v561
  %v578 = vadd.f32 %v562, %v407
  %v579 = vadd.f32 %v563, %v407
  %v580 = vadd.f32 %v564, %v407
  %v581 = vadd.f32 %v565, %v407
  %v582 = vadd.f32 %v566, %v407
  %v583 = vadd.f32 %v567, %v407
  %v584 = vadd.f32 %v568, %v407
  %v585 = vadd.f32 %v569, %v407
  %v586 = vadd.f32 %v570, %v407
  %v587 = vadd.f32 %v571, %v407
  %v588 = vadd.f32 %v572, %v407
  %v589 = vadd.f32 %v573, %v407
  %v590 = vadd.f32 %v574, %v407
  %v591 = vadd.f32 %v575, %v407
  %v592 = vadd.f32 %v576, %v407
  %v593 = vadd.f32 %v577, %v407
  %v594 = vxor.u32 %v409, 2147483648
  %v595 = vxor.u32 %v410, 2147483648
  %v596 = vxor.u32 %v411, 2147483648
  %v597 = vxor.u32 %v412, 2147483648
  %v598 = vxor.u32 %v413, 2147483648
  %v599 = vxor.u32 %v414, 2147483648
  %v600 = vxor.u32 %v415, 2147483648
  %v601 = vxor.u32 %v416, 2147483648
  %v602 = vxor.u32 %v417, 2147483648
  %v603 = vxor.u32 %v418, 2147483648
  %v604 = vxor.u32 %v419, 2147483648
  %v605 = vxor.u32 %v420, 2147483648
  %v606 = vxor.u32 %v421, 2147483648
  %v607 = vxor.u32 %v422, 2147483648
  %v608 = vxor.u32 %v423, 2147483648
  %v609 = vxor.u32 %v424, 2147483648
  %v610 = vmul.f32 %v594, 1.442695
  %v611 = vpow.pop %v610
  %v612 = vmul.f32 %v595, 1.442695
  %v613 = vpow.pop %v612
  %v614 = vmul.f32 %v596, 1.442695
  %v615 = vpow.pop %v614
  %v616 = vmul.f32 %v597, 1.442695
  %v617 = vpow.pop %v616
  %v618 = vmul.f32 %v598, 1.442695
  %v619 = vpow.pop %v618
  %v620 = vmul.f32 %v599, 1.442695
  %v621 = vpow.pop %v620
  %v622 = vmul.f32 %v600, 1.442695
  %v623 = vpow.pop %v622
  %v624 = vmul.f32 %v601, 1.442695
  %v625 = vpow.pop %v624
  %v626 = vmul.f32 %v602, 1.442695
  %v627 = vpow.pop %v626
  %v628 = vmul.f32 %v603, 1.442695
  %v629 = vpow.pop %v628
  %v630 = vmul.f32 %v604, 1.442695
  %v631 = vpow.pop %v630
  %v632 = vmul.f32 %v605, 1.442695
  %v633 = vpow.pop %v632
  %v634 = vmul.f32 %v606, 1.442695
  %v635 = vpow.pop %v634
  %v636 = vmul.f32 %v607, 1.442695
  %v637 = vpow.pop %v636
  %v638 = vmul.f32 %v608, 1.442695
  %v639 = vpow.pop %v638
  %v640 = vmul.f32 %v609, 1.442695
  %v641 = vpow.pop %v640
  %v642 = vadd.f32 %v611, 1.0
  %v643 = vadd.f32 %v613, 1.0
  %v644 = vadd.f32 %v615, 1.0
  %v645 = vadd.f32 %v617, 1.0
  %v646 = vadd.f32 %v619, 1.0
  %v647 = vadd.f32 %v621, 1.0
  %v648 = vadd.f32 %v623, 1.0
  %v649 = vadd.f32 %v625, 1.0
  %v650 = vadd.f32 %v627, 1.0
  %v651 = vadd.f32 %v629, 1.0
  %v652 = vadd.f32 %v631, 1.0
  %v653 = vadd.f32 %v633, 1.0
  %v654 = vadd.f32 %v635, 1.0
  %v655 = vadd.f32 %v637, 1.0
  %v656 = vadd.f32 %v639, 1.0
  %v657 = vadd.f32 %v641, 1.0
  %v658 = vrcp.pop %v642
  %v659 = vmul.f32 1.0, %v658
  %v660 = vrcp.pop %v643
  %v661 = vmul.f32 1.0, %v660
  %v662 = vrcp.pop %v644
  %v663 = vmul.f32 1.0, %v662
  %v664 = vrcp.pop %v645
  %v665 = vmul.f32 1.0, %v664
  %v666 = vrcp.pop %v646
  %v667 = vmul.f32 1.0, %v666
  %v668 = vrcp.pop %v647
  %v669 = vmul.f32 1.0, %v668
  %v670 = vrcp.pop %v648
  %v671 = vmul.f32 1.0, %v670
  %v672 = vrcp.pop %v649
  %v673 = vmul.f32 1.0, %v672
  %v674 = vrcp.pop %v650
  %v675 = vmul.f32 1.0, %v674
  %v676 = vrcp.pop %v651
  %v677 = vmul.f32 1.0, %v676
  %v678 = vrcp.pop %v652
  %v679 = vmul.f32 1.0, %v678
  %v680 = vrcp.pop %v653
  %v681 = vmul.f32 1.0, %v680
  %v682 = vrcp.pop %v654
  %v683 = vmul.f32 1.0, %v682
  %v684 = vrcp.pop %v655
  %v685 = vmul.f32 1.0, %v684
  %v686 = vrcp.pop %v656
  %v687 = vmul.f32 1.0, %v686
  %v688 = vrcp.pop %v657
  %v689 = vmul.f32 1.0, %v688
  %v690 = vxor.u32 %v578, 2147483648
  %v691 = vxor.u32 %v579, 2147483648
  %v692 = vxor.u32 %v580, 2147483648
  %v693 = vxor.u32 %v581, 2147483648
  %v694 = vxor.u32 %v582, 2147483648
  %v695 = vxor.u32 %v583, 2147483648
  %v696 = vxor.u32 %v584, 2147483648
  %v697 = vxor.u32 %v585, 2147483648
  %v698 = vxor.u32 %v586, 2147483648
  %v699 = vxor.u32 %v587, 2147483648
  %v700 = vxor.u32 %v588, 2147483648
  %v701 = vxor.u32 %v589, 2147483648
  %v702 = vxor.u32 %v590, 2147483648
  %v703 = vxor.u32 %v591, 2147483648
  %v704 = vxor.u32 %v592, 2147483648
  %v705 = vxor.u32 %v593, 2147483648
  %v706 = vmul.f32 %v690, 1.442695
  %v707 = vpow.pop %v706
  %v708 = vmul.f32 %v691, 1.442695
  %v709 = vpow.pop %v708
  %v710 = vmul.f32 %v692, 1.442695
  %v711 = vpow.pop %v710
  %v712 = vmul.f32 %v693, 1.442695
  %v713 = vpow.pop %v712
  %v714 = vmul.f32 %v694, 1.442695
  %v715 = vpow.pop %v714
  %v716 = vmul.f32 %v695, 1.442695
  %v717 = vpow.pop %v716
  %v718 = vmul.f32 %v696, 1.442695
  %v719 = vpow.pop %v718
  %v720 = vmul.f32 %v697, 1.442695
  %v721 = vpow.pop %v720
  %v722 = vmul.f32 %v698, 1.442695
  %v723 = vpow.pop %v722
  %v724 = vmul.f32 %v699, 1.442695
  %v725 = vpow.pop %v724
  %v726 = vmul.f32 %v700, 1.442695
  %v727 = vpow.pop %v726
  %v728 = vmul.f32 %v701, 1.442695
  %v729 = vpow.pop %v728
  %v730 = vmul.f32 %v702, 1.442695
  %v731 = vpow.pop %v730
  %v732 = vmul.f32 %v703, 1.442695
  %v733 = vpow.pop %v732
  %v734 = vmul.f32 %v704, 1.442695
  %v735 = vpow.pop %v734
  %v736 = vmul.f32 %v705, 1.442695
  %v737 = vpow.pop %v736
  %v738 = vadd.f32 %v707, 1.0
  %v739 = vadd.f32 %v709, 1.0
  %v740 = vadd.f32 %v711, 1.0
  %v741 = vadd.f32 %v713, 1.0
  %v742 = vadd.f32 %v715, 1.0
  %v743 = vadd.f32 %v717, 1.0
  %v744 = vadd.f32 %v719, 1.0
  %v745 = vadd.f32 %v721, 1.0
  %v746 = vadd.f32 %v723, 1.0
  %v747 = vadd.f32 %v725, 1.0
  %v748 = vadd.f32 %v727, 1.0
  %v749 = vadd.f32 %v729, 1.0
  %v750 = vadd.f32 %v731, 1.0
  %v751 = vadd.f32 %v733, 1.0
  %v752 = vadd.f32 %v735, 1.0
  %v753 = vadd.f32 %v737, 1.0
  %v754 = vrcp.pop %v738
  %v755 = vmul.f32 1.0, %v754
  %v756 = vrcp.pop %v739
  %v757 = vmul.f32 1.0, %v756
  %v758 = vrcp.pop %v740
  %v759 = vmul.f32 1.0, %v758
  %v760 = vrcp.pop %v741
  %v761 = vmul.f32 1.0, %v760
  %v762 = vrcp.pop %v742
  %v763 = vmul.f32 1.0, %v762
  %v764 = vrcp.pop %v743
  %v765 = vmul.f32 1.0, %v764
  %v766 = vrcp.pop %v744
  %v767 = vmul.f32 1.0, %v766
  %v768 = vrcp.pop %v745
  %v769 = vmul.f32 1.0, %v768
  %v770 = vrcp.pop %v746
  %v771 = vmul.f32 1.0, %v770
  %v772 = vrcp.pop %v747
  %v773 = vmul.f32 1.0, %v772
  %v774 = vrcp.pop %v748
  %v775 = vmul.f32 1.0, %v774
  %v776 = vrcp.pop %v749
  %v777 = vmul.f32 1.0, %v776
  %v778 = vrcp.pop %v750
  %v779 = vmul.f32 1.0, %v778
  %v780 = vrcp.pop %v751
  %v781 = vmul.f32 1.0, %v780
  %v782 = vrcp.pop %v752
  %v783 = vmul.f32 1.0, %v782
  %v784 = vrcp.pop %v753
  %v785 = vmul.f32 1.0, %v784
  %787 = vset.pattern.permute.xlu0 0
  %788 = vperm.xlu0 %787, %v659
  %v789 = vpop.permute.xlu0 %788
  %792 = vset.pattern.permute.xlu0 0
  %793 = vperm.xlu0 %792, %v661
  %v794 = vpop.permute.xlu0 %793
  %797 = vset.pattern.permute.xlu0 0
  %798 = vperm.xlu0 %797, %v663
  %v799 = vpop.permute.xlu0 %798
  %802 = vset.pattern.permute.xlu0 0
  %803 = vperm.xlu0 %802, %v665
  %v804 = vpop.permute.xlu0 %803
  %807 = vset.pattern.permute.xlu0 0
  %808 = vperm.xlu0 %807, %v667
  %v809 = vpop.permute.xlu0 %808
  %812 = vset.pattern.permute.xlu0 0
  %813 = vperm.xlu0 %812, %v669
  %v814 = vpop.permute.xlu0 %813
  %817 = vset.pattern.permute.xlu0 0
  %818 = vperm.xlu0 %817, %v671
  %v819 = vpop.permute.xlu0 %818
  %822 = vset.pattern.permute.xlu0 0
  %823 = vperm.xlu0 %822, %v673
  %v824 = vpop.permute.xlu0 %823
  %827 = vset.pattern.permute.xlu0 0
  %828 = vperm.xlu0 %827, %v675
  %v829 = vpop.permute.xlu0 %828
  %832 = vset.pattern.permute.xlu0 0
  %833 = vperm.xlu0 %832, %v677
  %v834 = vpop.permute.xlu0 %833
  %837 = vset.pattern.permute.xlu0 0
  %838 = vperm.xlu0 %837, %v679
  %v839 = vpop.permute.xlu0 %838
  %842 = vset.pattern.permute.xlu0 0
  %843 = vperm.xlu0 %842, %v681
  %v844 = vpop.permute.xlu0 %843
  %847 = vset.pattern.permute.xlu0 0
  %848 = vperm.xlu0 %847, %v683
  %v849 = vpop.permute.xlu0 %848
  %852 = vset.pattern.permute.xlu0 0
  %853 = vperm.xlu0 %852, %v685
  %v854 = vpop.permute.xlu0 %853
  %857 = vset.pattern.permute.xlu0 0
  %858 = vperm.xlu0 %857, %v687
  %v859 = vpop.permute.xlu0 %858
  %862 = vset.pattern.permute.xlu0 0
  %863 = vperm.xlu0 %862, %v689
  %v864 = vpop.permute.xlu0 %863
  %v866 = vmul.f32 %v155, %v789
  %v867 = vmul.f32 %v158, %v794
  %v868 = vmul.f32 %v163, %v799
  %v869 = vmul.f32 %v166, %v804
  %v870 = vmul.f32 %v171, %v809
  %v871 = vmul.f32 %v174, %v814
  %v872 = vmul.f32 %v179, %v819
  %v873 = vmul.f32 %v182, %v824
  %v874 = vmul.f32 %v187, %v829
  %v875 = vmul.f32 %v190, %v834
  %v876 = vmul.f32 %v195, %v839
  %v877 = vmul.f32 %v198, %v844
  %v878 = vmul.f32 %v203, %v849
  %v879 = vmul.f32 %v206, %v854
  %v880 = vmul.f32 %v211, %v859
  %v881 = vmul.f32 %v214, %v864
  %883 = vset.pattern.permute.xlu0 1
  %884 = vperm.xlu0 %883, %v755
  %v885 = vpop.permute.xlu0 %884
  %888 = vset.pattern.permute.xlu0 1
  %889 = vperm.xlu0 %888, %v757
  %v890 = vpop.permute.xlu0 %889
  %893 = vset.pattern.permute.xlu0 1
  %894 = vperm.xlu0 %893, %v759
  %v895 = vpop.permute.xlu0 %894
  %898 = vset.pattern.permute.xlu0 1
  %899 = vperm.xlu0 %898, %v761
  %v900 = vpop.permute.xlu0 %899
  %903 = vset.pattern.permute.xlu0 1
  %904 = vperm.xlu0 %903, %v763
  %v905 = vpop.permute.xlu0 %904
  %908 = vset.pattern.permute.xlu0 1
  %909 = vperm.xlu0 %908, %v765
  %v910 = vpop.permute.xlu0 %909
  %913 = vset.pattern.permute.xlu0 1
  %914 = vperm.xlu0 %913, %v767
  %v915 = vpop.permute.xlu0 %914
  %918 = vset.pattern.permute.xlu0 1
  %919 = vperm.xlu0 %918, %v769
  %v920 = vpop.permute.xlu0 %919
  %923 = vset.pattern.permute.xlu0 1
  %924 = vperm.xlu0 %923, %v771
  %v925 = vpop.permute.xlu0 %924
  %928 = vset.pattern.permute.xlu0 1
  %929 = vperm.xlu0 %928, %v773
  %v930 = vpop.permute.xlu0 %929
  %933 = vset.pattern.permute.xlu0 1
  %934 = vperm.xlu0 %933, %v775
  %v935 = vpop.permute.xlu0 %934
  %938 = vset.pattern.permute.xlu0 1
  %939 = vperm.xlu0 %938, %v777
  %v940 = vpop.permute.xlu0 %939
  %943 = vset.pattern.permute.xlu0 1
  %944 = vperm.xlu0 %943, %v779
  %v945 = vpop.permute.xlu0 %944
  %948 = vset.pattern.permute.xlu0 1
  %949 = vperm.xlu0 %948, %v781
  %v950 = vpop.permute.xlu0 %949
  %953 = vset.pattern.permute.xlu0 1
  %954 = vperm.xlu0 %953, %v783
  %v955 = vpop.permute.xlu0 %954
  %958 = vset.pattern.permute.xlu0 1
  %959 = vperm.xlu0 %958, %v785
  %v960 = vpop.permute.xlu0 %959
  %v962 = vmul.f32 %v233, %v885
  %v963 = vmul.f32 %v234, %v890
  %v964 = vmul.f32 %v235, %v895
  %v965 = vmul.f32 %v236, %v900
  %v966 = vmul.f32 %v237, %v905
  %v967 = vmul.f32 %v238, %v910
  %v968 = vmul.f32 %v239, %v915
  %v969 = vmul.f32 %v240, %v920
  %v970 = vmul.f32 %v241, %v925
  %v971 = vmul.f32 %v242, %v930
  %v972 = vmul.f32 %v243, %v935
  %v973 = vmul.f32 %v244, %v940
  %v974 = vmul.f32 %v245, %v945
  %v975 = vmul.f32 %v246, %v950
  %v976 = vmul.f32 %v247, %v955
  %v977 = vmul.f32 %v248, %v960
  %v978 = vadd.f32 %v866, %v962
  %v979 = vadd.f32 %v867, %v963
  %v980 = vadd.f32 %v868, %v964
  %v981 = vadd.f32 %v869, %v965
  %v982 = vadd.f32 %v870, %v966
  %v983 = vadd.f32 %v871, %v967
  %v984 = vadd.f32 %v872, %v968
  %v985 = vadd.f32 %v873, %v969
  %v986 = vadd.f32 %v874, %v970
  %v987 = vadd.f32 %v875, %v971
  %v988 = vadd.f32 %v876, %v972
  %v989 = vadd.f32 %v877, %v973
  %v990 = vadd.f32 %v878, %v974
  %v991 = vadd.f32 %v879, %v975
  %v992 = vadd.f32 %v880, %v976
  %v993 = vadd.f32 %v881, %v977
  %994 = vst.msk [vmem:[%s6] sm:$0xff] %vm95, %v978
  %995 = vst.msk [vmem:[%s6 + $0x8] sm:$0xff] %vm95, %v979
  %996 = vst.msk [vmem:[%s6 + $0x10] sm:$0xff] %vm95, %v980
  %997 = vst.msk [vmem:[%s6 + $0x18] sm:$0xff] %vm95, %v981
  %998 = vst.msk [vmem:[%s6 + $0x20] sm:$0xff] %vm95, %v982
  %999 = vst.msk [vmem:[%s6 + $0x28] sm:$0xff] %vm95, %v983
  %1000 = vst.msk [vmem:[%s6 + $0x30] sm:$0xff] %vm95, %v984
  %1001 = vst.msk [vmem:[%s6 + $0x38] sm:$0xff] %vm95, %v985
  %1002 = vst.msk [vmem:[%s6 + $0x40] sm:$0xff] %vm95, %v986
  %1003 = vst.msk [vmem:[%s6 + $0x48] sm:$0xff] %vm95, %v987
  %1004 = vst.msk [vmem:[%s6 + $0x50] sm:$0xff] %vm95, %v988
  %1005 = vst.msk [vmem:[%s6 + $0x58] sm:$0xff] %vm95, %v989
  %1006 = vst.msk [vmem:[%s6 + $0x60] sm:$0xff] %vm95, %v990
  %1007 = vst.msk [vmem:[%s6 + $0x68] sm:$0xff] %vm95, %v991
  %1008 = vst.msk [vmem:[%s6 + $0x70] sm:$0xff] %vm95, %v992
  %1009 = vst.msk [vmem:[%s6 + $0x78] sm:$0xff] %vm95, %v993
  // Predicated region
  $region26: #{review_kd_forward.8} parent=0 // pred_check
    _
  $region27: #{review_kd_forward.8} parent=0 // pred_check_branch
    %1011 = sbr.rel (0) target = $region29
  $region28: #{review_kd_forward.8} parent=0 // pred_region
    _
  $region29: #{review_kd_forward.8} parent=0 // pred_fallthru
    _
  // Predicated region
  $region30: #{review_kd_forward.8} parent=0 // pred_check
    _
  $region31: #{review_kd_forward.8} parent=0 // pred_check_branch
    %1013 = sbr.rel (0) target = $region33
  $region32: #{review_kd_forward.8} parent=0 // pred_region
    _
  $region33: #{review_kd_forward.8} parent=0 // pred_fallthru
    _

// kernel: review_kd_forward.10
$region0: #{review_kd_forward.10}
  #allocation0 [shape = 'u32[]', space=smem, size = 0x4, offset = 0x4, fixed_abs, tag = 'smem constant byte address 0x4 - core index']
  #allocation1 [shape = 'u32[144,128]{1,0:T(1,128)}', space=vmem, size = 0x12000, scoped, tag = 'internal scratch']
  %s0 = inlined_call_operand.vmem [shape: bf16[512,8], index: 0, kind: input, shape index: {}]
  %s1 = inlined_call_operand.vmem [shape: bf16[512,16], index: 1, kind: input, shape index: {}]
  %s2 = inlined_call_operand.vmem [shape: bf16[8,16], index: 2, kind: input, shape index: {}]
  %s3 = inlined_call_operand.vmem [shape: f32[1,16], index: 3, kind: input, shape index: {}]
  %s4 = inlined_call_operand.vmem [shape: f32[2,32], index: 4, kind: input, shape index: {}]
  %s5 = inlined_call_operand.vmem [shape: f32[1,2], index: 5, kind: input, shape index: {}]
  %s6 = inlined_call_operand.vmem [shape: f32[512,16], index: 6, kind: output, shape index: {}]
  %s7 = sld [smem:[#allocation0]]
  $region34: #{review_kd_forward.10} parent=0
    _
  %s9 = ssub.s32 1, %s7
  %s10 = scalar_select 0, %s9, %s7
  // Predicated region
  $region2: #{review_kd_forward.10} parent=0 // pred_check
    _
  $region3: #{review_kd_forward.10} parent=0 // pred_check_branch
    %12 = sbr.rel (0) target = $region5
  $region4: #{review_kd_forward.10} parent=0 // pred_region
    _
  $region5: #{review_kd_forward.10} parent=0 // pred_fallthru
    _
  // Predicated region
  $region6: #{review_kd_forward.10} parent=0 // pred_check
    _
  $region7: #{review_kd_forward.10} parent=0 // pred_check_branch
    %14 = sbr.rel (0) target = $region9
  $region8: #{review_kd_forward.10} parent=0 // pred_region
    _
  $region9: #{review_kd_forward.10} parent=0 // pred_fallthru
    _
  // Predicated region
  $region10: #{review_kd_forward.10} parent=0 // pred_check
    _
  $region11: #{review_kd_forward.10} parent=0 // pred_check_branch
    %16 = sbr.rel (0) target = $region13
  $region12: #{review_kd_forward.10} parent=0 // pred_region
    _
  $region13: #{review_kd_forward.10} parent=0 // pred_fallthru
    _
  // Predicated region
  $region14: #{review_kd_forward.10} parent=0 // pred_check
    _
  $region15: #{review_kd_forward.10} parent=0 // pred_check_branch
    %18 = sbr.rel (0) target = $region17
  $region16: #{review_kd_forward.10} parent=0 // pred_region
    _
  $region17: #{review_kd_forward.10} parent=0 // pred_fallthru
    _
  // Predicated region
  $region18: #{review_kd_forward.10} parent=0 // pred_check
    _
  $region19: #{review_kd_forward.10} parent=0 // pred_check_branch
    %20 = sbr.rel (0) target = $region21
  $region20: #{review_kd_forward.10} parent=0 // pred_region
    _
  $region21: #{review_kd_forward.10} parent=0 // pred_fallthru
    _
  // Predicated region
  $region22: #{review_kd_forward.10} parent=0 // pred_check
    _
  $region23: #{review_kd_forward.10} parent=0 // pred_check_branch
    %22 = sbr.rel (0) target = $region25
  $region24: #{review_kd_forward.10} parent=0 // pred_region
    _
  $region25: #{review_kd_forward.10} parent=0 // pred_fallthru
    _
  %v24 = vld [vmem:[%s0] sm:$0xf]
  %v25 = vld [vmem:[%s0 + $0x4] sm:$0xf]
  %v26 = vld [vmem:[%s0 + $0x8] sm:$0xf]
  %v27 = vld [vmem:[%s0 + $0xc] sm:$0xf]
  %v28 = vld [vmem:[%s0 + $0x10] sm:$0xf]
  %v29 = vld [vmem:[%s0 + $0x14] sm:$0xf]
  %v30 = vld [vmem:[%s0 + $0x18] sm:$0xf]
  %v31 = vld [vmem:[%s0 + $0x1c] sm:$0xf]
  %v32 = vld [vmem:[%s0 + $0x20] sm:$0xf]
  %v33 = vld [vmem:[%s0 + $0x24] sm:$0xf]
  %v34 = vld [vmem:[%s0 + $0x28] sm:$0xf]
  %v35 = vld [vmem:[%s0 + $0x2c] sm:$0xf]
  %v36 = vld [vmem:[%s0 + $0x30] sm:$0xf]
  %v37 = vld [vmem:[%s0 + $0x34] sm:$0xf]
  %v38 = vld [vmem:[%s0 + $0x38] sm:$0xf]
  %v39 = vld [vmem:[%s0 + $0x3c] sm:$0xf]
  %v40 = vld [vmem:[%s0 + $0x40] sm:$0xf]
  %v41 = vld [vmem:[%s0 + $0x44] sm:$0xf]
  %v42 = vld [vmem:[%s0 + $0x48] sm:$0xf]
  %v43 = vld [vmem:[%s0 + $0x4c] sm:$0xf]
  %v44 = vld [vmem:[%s0 + $0x50] sm:$0xf]
  %v45 = vld [vmem:[%s0 + $0x54] sm:$0xf]
  %v46 = vld [vmem:[%s0 + $0x58] sm:$0xf]
  %v47 = vld [vmem:[%s0 + $0x5c] sm:$0xf]
  %v48 = vld [vmem:[%s0 + $0x60] sm:$0xf]
  %v49 = vld [vmem:[%s0 + $0x64] sm:$0xf]
  %v50 = vld [vmem:[%s0 + $0x68] sm:$0xf]
  %v51 = vld [vmem:[%s0 + $0x6c] sm:$0xf]
  %v52 = vld [vmem:[%s0 + $0x70] sm:$0xf]
  %v53 = vld [vmem:[%s0 + $0x74] sm:$0xf]
  %v54 = vld [vmem:[%s0 + $0x78] sm:$0xf]
  %v55 = vld [vmem:[%s0 + $0x7c] sm:$0xf]
  %v56 = vld [vmem:[%s0 + $0x80] sm:$0xf]
  %v57 = vld [vmem:[%s0 + $0x84] sm:$0xf]
  %v58 = vld [vmem:[%s0 + $0x88] sm:$0xf]
  %v59 = vld [vmem:[%s0 + $0x8c] sm:$0xf]
  %v60 = vld [vmem:[%s0 + $0x90] sm:$0xf]
  %v61 = vld [vmem:[%s0 + $0x94] sm:$0xf]
  %v62 = vld [vmem:[%s0 + $0x98] sm:$0xf]
  %v63 = vld [vmem:[%s0 + $0x9c] sm:$0xf]
  %v64 = vld [vmem:[%s0 + $0xa0] sm:$0xf]
  %v65 = vld [vmem:[%s0 + $0xa4] sm:$0xf]
  %v66 = vld [vmem:[%s0 + $0xa8] sm:$0xf]
  %v67 = vld [vmem:[%s0 + $0xac] sm:$0xf]
  %v68 = vld [vmem:[%s0 + $0xb0] sm:$0xf]
  %v69 = vld [vmem:[%s0 + $0xb4] sm:$0xf]
  %v70 = vld [vmem:[%s0 + $0xb8] sm:$0xf]
  %v71 = vld [vmem:[%s0 + $0xbc] sm:$0xf]
  %v72 = vld [vmem:[%s0 + $0xc0] sm:$0xf]
  %v73 = vld [vmem:[%s0 + $0xc4] sm:$0xf]
  %v74 = vld [vmem:[%s0 + $0xc8] sm:$0xf]
  %v75 = vld [vmem:[%s0 + $0xcc] sm:$0xf]
  %v76 = vld [vmem:[%s0 + $0xd0] sm:$0xf]
  %v77 = vld [vmem:[%s0 + $0xd4] sm:$0xf]
  %v78 = vld [vmem:[%s0 + $0xd8] sm:$0xf]
  %v79 = vld [vmem:[%s0 + $0xdc] sm:$0xf]
  %v80 = vld [vmem:[%s0 + $0xe0] sm:$0xf]
  %v81 = vld [vmem:[%s0 + $0xe4] sm:$0xf]
  %v82 = vld [vmem:[%s0 + $0xe8] sm:$0xf]
  %v83 = vld [vmem:[%s0 + $0xec] sm:$0xf]
  %v84 = vld [vmem:[%s0 + $0xf0] sm:$0xf]
  %v85 = vld [vmem:[%s0 + $0xf4] sm:$0xf]
  %v86 = vld [vmem:[%s0 + $0xf8] sm:$0xf]
  %v87 = vld [vmem:[%s0 + $0xfc] sm:$0xf]
  %v88 = vld [vmem:[%s2] sm:$0xf]
  %v89 = vld [vmem:[%s3] sm:$0x1]
  %v91 = vlaneseq
  %v92 = vshrl.u32 %v91, 7
  %v93 = vsub.s32 0, %v92
  %v94 = vrot.slane %v89, %v93
  %v160 = vunpack.c.l.b16 %v24
  %v161 = vunpack.c.l.b16 %v25
  %v162 = vunpack.c.l.b16 %v26
  %v163 = vunpack.c.l.b16 %v27
  %v164 = vunpack.c.l.b16 %v28
  %v165 = vunpack.c.l.b16 %v29
  %v166 = vunpack.c.l.b16 %v30
  %v167 = vunpack.c.l.b16 %v31
  %v168 = vunpack.c.l.b16 %v32
  %v169 = vunpack.c.l.b16 %v33
  %v170 = vunpack.c.l.b16 %v34
  %v171 = vunpack.c.l.b16 %v35
  %v172 = vunpack.c.l.b16 %v36
  %v173 = vunpack.c.l.b16 %v37
  %v174 = vunpack.c.l.b16 %v38
  %v175 = vunpack.c.l.b16 %v39
  %v176 = vunpack.c.l.b16 %v40
  %v177 = vunpack.c.l.b16 %v41
  %v178 = vunpack.c.l.b16 %v42
  %v179 = vunpack.c.l.b16 %v43
  %v180 = vunpack.c.l.b16 %v44
  %v181 = vunpack.c.l.b16 %v45
  %v182 = vunpack.c.l.b16 %v46
  %v183 = vunpack.c.l.b16 %v47
  %v184 = vunpack.c.l.b16 %v48
  %v185 = vunpack.c.l.b16 %v49
  %v186 = vunpack.c.l.b16 %v50
  %v187 = vunpack.c.l.b16 %v51
  %v188 = vunpack.c.l.b16 %v52
  %v189 = vunpack.c.l.b16 %v53
  %v190 = vunpack.c.l.b16 %v54
  %v191 = vunpack.c.l.b16 %v55
  %v192 = vunpack.c.l.b16 %v56
  %v193 = vunpack.c.l.b16 %v57
  %v194 = vunpack.c.l.b16 %v58
  %v195 = vunpack.c.l.b16 %v59
  %v196 = vunpack.c.l.b16 %v60
  %v197 = vunpack.c.l.b16 %v61
  %v198 = vunpack.c.l.b16 %v62
  %v199 = vunpack.c.l.b16 %v63
  %v200 = vunpack.c.l.b16 %v64
  %v201 = vunpack.c.l.b16 %v65
  %v202 = vunpack.c.l.b16 %v66
  %v203 = vunpack.c.l.b16 %v67
  %v204 = vunpack.c.l.b16 %v68
  %v205 = vunpack.c.l.b16 %v69
  %v206 = vunpack.c.l.b16 %v70
  %v207 = vunpack.c.l.b16 %v71
  %v208 = vunpack.c.l.b16 %v72
  %v209 = vunpack.c.l.b16 %v73
  %v210 = vunpack.c.l.b16 %v74
  %v211 = vunpack.c.l.b16 %v75
  %v212 = vunpack.c.l.b16 %v76
  %v213 = vunpack.c.l.b16 %v77
  %v214 = vunpack.c.l.b16 %v78
  %v215 = vunpack.c.l.b16 %v79
  %v216 = vunpack.c.l.b16 %v80
  %v217 = vunpack.c.l.b16 %v81
  %v218 = vunpack.c.l.b16 %v82
  %v219 = vunpack.c.l.b16 %v83
  %v220 = vunpack.c.l.b16 %v84
  %v221 = vunpack.c.l.b16 %v85
  %v222 = vunpack.c.l.b16 %v86
  %v223 = vunpack.c.l.b16 %v87
  %v224 = vpack.c.b16 %v161, %v160
  %v225 = vpack.c.b16 %v163, %v162
  %v226 = vpack.c.b16 %v165, %v164
  %v227 = vpack.c.b16 %v167, %v166
  %v228 = vpack.c.b16 %v169, %v168
  %v229 = vpack.c.b16 %v171, %v170
  %v230 = vpack.c.b16 %v173, %v172
  %v231 = vpack.c.b16 %v175, %v174
  %v232 = vpack.c.b16 %v177, %v176
  %v233 = vpack.c.b16 %v179, %v178
  %v234 = vpack.c.b16 %v181, %v180
  %v235 = vpack.c.b16 %v183, %v182
  %v236 = vpack.c.b16 %v185, %v184
  %v237 = vpack.c.b16 %v187, %v186
  %v238 = vpack.c.b16 %v189, %v188
  %v239 = vpack.c.b16 %v191, %v190
  %v240 = vpack.c.b16 %v193, %v192
  %v241 = vpack.c.b16 %v195, %v194
  %v242 = vpack.c.b16 %v197, %v196
  %v243 = vpack.c.b16 %v199, %v198
  %v244 = vpack.c.b16 %v201, %v200
  %v245 = vpack.c.b16 %v203, %v202
  %v246 = vpack.c.b16 %v205, %v204
  %v247 = vpack.c.b16 %v207, %v206
  %v248 = vpack.c.b16 %v209, %v208
  %v249 = vpack.c.b16 %v211, %v210
  %v250 = vpack.c.b16 %v213, %v212
  %v251 = vpack.c.b16 %v215, %v214
  %v252 = vpack.c.b16 %v217, %v216
  %v253 = vpack.c.b16 %v219, %v218
  %v254 = vpack.c.b16 %v221, %v220
  %v255 = vpack.c.b16 %v223, %v222
  %vm256 = vcmask 64512
  %v258 = vsel %vm256, %v224, 0
  %v261 = vsel %vm256, %v225, 0
  %v264 = vsel %vm256, %v226, 0
  %v267 = vsel %vm256, %v227, 0
  %v270 = vsel %vm256, %v228, 0
  %v273 = vsel %vm256, %v229, 0
  %v276 = vsel %vm256, %v230, 0
  %v279 = vsel %vm256, %v231, 0
  %v282 = vsel %vm256, %v232, 0
  %v285 = vsel %vm256, %v233, 0
  %v288 = vsel %vm256, %v234, 0
  %v291 = vsel %vm256, %v235, 0
  %v294 = vsel %vm256, %v236, 0
  %v297 = vsel %vm256, %v237, 0
  %v300 = vsel %vm256, %v238, 0
  %v303 = vsel %vm256, %v239, 0
  %v306 = vsel %vm256, %v240, 0
  %v309 = vsel %vm256, %v241, 0
  %v312 = vsel %vm256, %v242, 0
  %v315 = vsel %vm256, %v243, 0
  %v318 = vsel %vm256, %v244, 0
  %v321 = vsel %vm256, %v245, 0
  %v324 = vsel %vm256, %v246, 0
  %v327 = vsel %vm256, %v247, 0
  %v330 = vsel %vm256, %v248, 0
  %v333 = vsel %vm256, %v249, 0
  %v336 = vsel %vm256, %v250, 0
  %v339 = vsel %vm256, %v251, 0
  %v342 = vsel %vm256, %v252, 0
  %v345 = vsel %vm256, %v253, 0
  %v348 = vsel %vm256, %v254, 0
  %v351 = vsel %vm256, %v255, 0
  %vm353 = vcmask 1043456
  %v355 = vsel %vm353, %v88, 0
  %357 = vmatprep.subr.bf16.mxu0 0
  %358 = vmatpush1.bf16.msra.mxu0 %v355
  %359 = vmatprep.subr.bf16.mxu0 0
  %360 = vmatpush1.bf16.msra.mxu0 0
  %361 = vmatprep.subr.bf16.mxu0 0
  %362 = vmatpush1.bf16.msra.mxu0 0
  %363 = vmatprep.subr.bf16.mxu0 0
  %364 = vmatpush1.bf16.msra.mxu0 0
  %365 = vmatprep.subr.bf16.mxu0 0
  %366 = vmatpush1.bf16.msra.mxu0 0
  %367 = vmatprep.subr.bf16.mxu0 0
  %368 = vmatpush1.bf16.msra.mxu0 0
  %369 = vmatprep.subr.bf16.mxu0 0
  %370 = vmatpush1.bf16.msra.mxu0 0
  %371 = vmatprep.subr.bf16.mxu0 0
  %372 = vmatpush1.bf16.msra.mxu0 0
  %373 = vmatprep.subr.bf16.mxu0 0
  %374 = vmatpush1.bf16.msra.mxu0 0
  %375 = vmatprep.subr.bf16.mxu0 0
  %376 = vmatpush1.bf16.msra.mxu0 0
  %377 = vmatprep.subr.bf16.mxu0 0
  %378 = vmatpush1.bf16.msra.mxu0 0
  %379 = vmatprep.subr.bf16.mxu0 0
  %380 = vmatpush1.bf16.msra.mxu0 0
  %381 = vmatprep.subr.bf16.mxu0 0
  %382 = vmatpush1.bf16.msra.mxu0 0
  %383 = vmatprep.subr.bf16.mxu0 0
  %384 = vmatpush1.bf16.msra.mxu0 0
  %385 = vmatprep.subr.bf16.mxu0 0
  %386 = vmatpush1.bf16.msra.mxu0 0
  %387 = vmatprep.subr.bf16.mxu0 0
  %388 = vmatpush1.bf16.msra.mxu0 0
  %389 = vmatprep.mubr.bf16.mxu0 0
  %390 = vmatmul.mubr.bf16.gmra.mrb[0].mxu0 %v258
  %v391 = vpop.f32.mrb[0].mxu0
  %v392 = vadd.f32 %v94, %v391
  %v393 = vpop.f32.mrb[0].mxu0
  %v394 = vpop.f32.mrb[0].mxu0
  %v395 = vadd.f32 %v94, %v394
  %v396 = vpop.f32.mrb[0].mxu0
  %397 = vmatprep.mubr.bf16.mxu0 0
  %398 = vmatmul.mubr.bf16.gmra.mrb[0].mxu0 %v261
  %v399 = vpop.f32.mrb[0].mxu0
  %v400 = vadd.f32 %v94, %v399
  %v401 = vpop.f32.mrb[0].mxu0
  %v402 = vpop.f32.mrb[0].mxu0
  %v403 = vadd.f32 %v94, %v402
  %v404 = vpop.f32.mrb[0].mxu0
  %405 = vmatprep.mubr.bf16.mxu0 0
  %406 = vmatmul.mubr.bf16.gmra.mrb[0].mxu0 %v264
  %v407 = vpop.f32.mrb[0].mxu0
  %v408 = vadd.f32 %v94, %v407
  %v409 = vpop.f32.mrb[0].mxu0
  %v410 = vpop.f32.mrb[0].mxu0
  %v411 = vadd.f32 %v94, %v410
  %v412 = vpop.f32.mrb[0].mxu0
  %413 = vmatprep.mubr.bf16.mxu0 0
  %414 = vmatmul.mubr.bf16.gmra.mrb[0].mxu0 %v267
  %v415 = vpop.f32.mrb[0].mxu0
  %v416 = vadd.f32 %v94, %v415
  %v417 = vpop.f32.mrb[0].mxu0
  %v418 = vpop.f32.mrb[0].mxu0
  %v419 = vadd.f32 %v94, %v418
  %v420 = vpop.f32.mrb[0].mxu0
  %421 = vmatprep.mubr.bf16.mxu0 0
  %422 = vmatmul.mubr.bf16.gmra.mrb[0].mxu0 %v270
  %v423 = vpop.f32.mrb[0].mxu0
  %v424 = vadd.f32 %v94, %v423
  %v425 = vpop.f32.mrb[0].mxu0
  %v426 = vpop.f32.mrb[0].mxu0
  %v427 = vadd.f32 %v94, %v426
  %v428 = vpop.f32.mrb[0].mxu0
  %429 = vmatprep.mubr.bf16.mxu0 0
  %430 = vmatmul.mubr.bf16.gmra.mrb[0].mxu0 %v273
  %v431 = vpop.f32.mrb[0].mxu0
  %v432 = vadd.f32 %v94, %v431
  %v433 = vpop.f32.mrb[0].mxu0
  %v434 = vpop.f32.mrb[0].mxu0
  %v435 = vadd.f32 %v94, %v434
  %v436 = vpop.f32.mrb[0].mxu0
  %437 = vmatprep.mubr.bf16.mxu0 0
  %438 = vmatmul.mubr.bf16.gmra.mrb[0].mxu0 %v276
  %v439 = vpop.f32.mrb[0].mxu0
  %v440 = vadd.f32 %v94, %v439
  %v441 = vpop.f32.mrb[0].mxu0
  %v442 = vpop.f32.mrb[0].mxu0
  %v443 = vadd.f32 %v94, %v442
  %v444 = vpop.f32.mrb[0].mxu0
  %445 = vmatprep.mubr.bf16.mxu0 0
  %446 = vmatmul.mubr.bf16.gmra.mrb[0].mxu0 %v279
  %v447 = vpop.f32.mrb[0].mxu0
  %v448 = vadd.f32 %v94, %v447
  %v449 = vpop.f32.mrb[0].mxu0
  %v450 = vpop.f32.mrb[0].mxu0
  %v451 = vadd.f32 %v94, %v450
  %v452 = vpop.f32.mrb[0].mxu0
  %453 = vmatprep.mubr.bf16.mxu0 0
  %454 = vmatmul.mubr.bf16.gmra.mrb[0].mxu0 %v282
  %v455 = vpop.f32.mrb[0].mxu0
  %v456 = vadd.f32 %v94, %v455
  %v457 = vpop.f32.mrb[0].mxu0
  %v458 = vpop.f32.mrb[0].mxu0
  %v459 = vadd.f32 %v94, %v458
  %v460 = vpop.f32.mrb[0].mxu0
  %461 = vmatprep.mubr.bf16.mxu0 0
  %462 = vmatmul.mubr.bf16.gmra.mrb[0].mxu0 %v285
  %v463 = vpop.f32.mrb[0].mxu0
  %v464 = vadd.f32 %v94, %v463
  %v465 = vpop.f32.mrb[0].mxu0
  %v466 = vpop.f32.mrb[0].mxu0
  %v467 = vadd.f32 %v94, %v466
  %v468 = vpop.f32.mrb[0].mxu0
  %469 = vmatprep.mubr.bf16.mxu0 0
  %470 = vmatmul.mubr.bf16.gmra.mrb[0].mxu0 %v288
  %v471 = vpop.f32.mrb[0].mxu0
  %v472 = vadd.f32 %v94, %v471
  %v473 = vpop.f32.mrb[0].mxu0
  %v474 = vpop.f32.mrb[0].mxu0
  %v475 = vadd.f32 %v94, %v474
  %v476 = vpop.f32.mrb[0].mxu0
  %477 = vmatprep.mubr.bf16.mxu0 0
  %478 = vmatmul.mubr.bf16.gmra.mrb[0].mxu0 %v291
  %v479 = vpop.f32.mrb[0].mxu0
  %v480 = vadd.f32 %v94, %v479
  %v481 = vpop.f32.mrb[0].mxu0
  %v482 = vpop.f32.mrb[0].mxu0
  %v483 = vadd.f32 %v94, %v482
  %v484 = vpop.f32.mrb[0].mxu0
  %485 = vmatprep.mubr.bf16.mxu0 0
  %486 = vmatmul.mubr.bf16.gmra.mrb[0].mxu0 %v294
  %v487 = vpop.f32.mrb[0].mxu0
  %v488 = vadd.f32 %v94, %v487
  %v489 = vpop.f32.mrb[0].mxu0
  %v490 = vpop.f32.mrb[0].mxu0
  %v491 = vadd.f32 %v94, %v490
  %v492 = vpop.f32.mrb[0].mxu0
  %493 = vmatprep.mubr.bf16.mxu0 0
  %494 = vmatmul.mubr.bf16.gmra.mrb[0].mxu0 %v297
  %v495 = vpop.f32.mrb[0].mxu0
  %v496 = vadd.f32 %v94, %v495
  %v497 = vpop.f32.mrb[0].mxu0
  %v498 = vpop.f32.mrb[0].mxu0
  %v499 = vadd.f32 %v94, %v498
  %v500 = vpop.f32.mrb[0].mxu0
  %501 = vmatprep.mubr.bf16.mxu0 0
  %502 = vmatmul.mubr.bf16.gmra.mrb[0].mxu0 %v300
  %v503 = vpop.f32.mrb[0].mxu0
  %v504 = vadd.f32 %v94, %v503
  %v505 = vpop.f32.mrb[0].mxu0
  %v506 = vpop.f32.mrb[0].mxu0
  %v507 = vadd.f32 %v94, %v506
  %v508 = vpop.f32.mrb[0].mxu0
  %509 = vmatprep.mubr.bf16.mxu0 0
  %510 = vmatmul.mubr.bf16.gmra.mrb[0].mxu0 %v303
  %v511 = vpop.f32.mrb[0].mxu0
  %v512 = vadd.f32 %v94, %v511
  %v513 = vpop.f32.mrb[0].mxu0
  %v514 = vpop.f32.mrb[0].mxu0
  %v515 = vadd.f32 %v94, %v514
  %v516 = vpop.f32.mrb[0].mxu0
  %517 = vmatprep.mubr.bf16.mxu0 0
  %518 = vmatmul.mubr.bf16.gmra.mrb[0].mxu0 %v306
  %v519 = vpop.f32.mrb[0].mxu0
  %v520 = vadd.f32 %v94, %v519
  %v521 = vpop.f32.mrb[0].mxu0
  %v522 = vpop.f32.mrb[0].mxu0
  %v523 = vadd.f32 %v94, %v522
  %v524 = vpop.f32.mrb[0].mxu0
  %525 = vmatprep.mubr.bf16.mxu0 0
  %526 = vmatmul.mubr.bf16.gmra.mrb[0].mxu0 %v309
  %v527 = vpop.f32.mrb[0].mxu0
  %v528 = vadd.f32 %v94, %v527
  %v529 = vpop.f32.mrb[0].mxu0
  %v530 = vpop.f32.mrb[0].mxu0
  %v531 = vadd.f32 %v94, %v530
  %v532 = vpop.f32.mrb[0].mxu0
  %533 = vmatprep.mubr.bf16.mxu0 0
  %534 = vmatmul.mubr.bf16.gmra.mrb[0].mxu0 %v312
  %v535 = vpop.f32.mrb[0].mxu0
  %v536 = vadd.f32 %v94, %v535
  %v537 = vpop.f32.mrb[0].mxu0
  %v538 = vpop.f32.mrb[0].mxu0
  %v539 = vadd.f32 %v94, %v538
  %v540 = vpop.f32.mrb[0].mxu0
  %541 = vmatprep.mubr.bf16.mxu0 0
  %542 = vmatmul.mubr.bf16.gmra.mrb[0].mxu0 %v315
  %v543 = vpop.f32.mrb[0].mxu0
  %v544 = vadd.f32 %v94, %v543
  %v545 = vpop.f32.mrb[0].mxu0
  %v546 = vpop.f32.mrb[0].mxu0
  %v547 = vadd.f32 %v94, %v546
  %v548 = vpop.f32.mrb[0].mxu0
  %549 = vmatprep.mubr.bf16.mxu0 0
  %550 = vmatmul.mubr.bf16.gmra.mrb[0].mxu0 %v318
  %v551 = vpop.f32.mrb[0].mxu0
  %v552 = vadd.f32 %v94, %v551
  %v553 = vpop.f32.mrb[0].mxu0
  %v554 = vpop.f32.mrb[0].mxu0
  %v555 = vadd.f32 %v94, %v554
  %v556 = vpop.f32.mrb[0].mxu0
  %557 = vmatprep.mubr.bf16.mxu0 0
  %558 = vmatmul.mubr.bf16.gmra.mrb[0].mxu0 %v321
  %v559 = vpop.f32.mrb[0].mxu0
  %v560 = vadd.f32 %v94, %v559
  %v561 = vpop.f32.mrb[0].mxu0
  %v562 = vpop.f32.mrb[0].mxu0
  %v563 = vadd.f32 %v94, %v562
  %v564 = vpop.f32.mrb[0].mxu0
  %565 = vmatprep.mubr.bf16.mxu0 0
  %566 = vmatmul.mubr.bf16.gmra.mrb[0].mxu0 %v324
  %v567 = vpop.f32.mrb[0].mxu0
  %v568 = vadd.f32 %v94, %v567
  %v569 = vpop.f32.mrb[0].mxu0
  %v570 = vpop.f32.mrb[0].mxu0
  %v571 = vadd.f32 %v94, %v570
  %v572 = vpop.f32.mrb[0].mxu0
  %573 = vmatprep.mubr.bf16.mxu0 0
  %574 = vmatmul.mubr.bf16.gmra.mrb[0].mxu0 %v327
  %v575 = vpop.f32.mrb[0].mxu0
  %v576 = vadd.f32 %v94, %v575
  %v577 = vpop.f32.mrb[0].mxu0
  %v578 = vpop.f32.mrb[0].mxu0
  %v579 = vadd.f32 %v94, %v578
  %v580 = vpop.f32.mrb[0].mxu0
  %581 = vmatprep.mubr.bf16.mxu0 0
  %582 = vmatmul.mubr.bf16.gmra.mrb[0].mxu0 %v330
  %v583 = vpop.f32.mrb[0].mxu0
  %v584 = vadd.f32 %v94, %v583
  %v585 = vpop.f32.mrb[0].mxu0
  %v586 = vpop.f32.mrb[0].mxu0
  %v587 = vadd.f32 %v94, %v586
  %v588 = vpop.f32.mrb[0].mxu0
  %589 = vmatprep.mubr.bf16.mxu0 0
  %590 = vmatmul.mubr.bf16.gmra.mrb[0].mxu0 %v333
  %v591 = vpop.f32.mrb[0].mxu0
  %v592 = vadd.f32 %v94, %v591
  %v593 = vpop.f32.mrb[0].mxu0
  %v594 = vpop.f32.mrb[0].mxu0
  %v595 = vadd.f32 %v94, %v594
  %v596 = vpop.f32.mrb[0].mxu0
  %597 = vmatprep.mubr.bf16.mxu0 0
  %598 = vmatmul.mubr.bf16.gmra.mrb[0].mxu0 %v336
  %v599 = vpop.f32.mrb[0].mxu0
  %v600 = vadd.f32 %v94, %v599
  %v601 = vpop.f32.mrb[0].mxu0
  %v602 = vpop.f32.mrb[0].mxu0
  %v603 = vadd.f32 %v94, %v602
  %v604 = vpop.f32.mrb[0].mxu0
  %605 = vmatprep.mubr.bf16.mxu0 0
  %606 = vmatmul.mubr.bf16.gmra.mrb[0].mxu0 %v339
  %v607 = vpop.f32.mrb[0].mxu0
  %v608 = vadd.f32 %v94, %v607
  %v609 = vpop.f32.mrb[0].mxu0
  %v610 = vpop.f32.mrb[0].mxu0
  %v611 = vadd.f32 %v94, %v610
  %v612 = vpop.f32.mrb[0].mxu0
  %613 = vmatprep.mubr.bf16.mxu0 0
  %614 = vmatmul.mubr.bf16.gmra.mrb[0].mxu0 %v342
  %v615 = vpop.f32.mrb[0].mxu0
  %v616 = vadd.f32 %v94, %v615
  %v617 = vpop.f32.mrb[0].mxu0
  %v618 = vpop.f32.mrb[0].mxu0
  %v619 = vadd.f32 %v94, %v618
  %v620 = vpop.f32.mrb[0].mxu0
  %621 = vmatprep.mubr.bf16.mxu0 0
  %622 = vmatmul.mubr.bf16.gmra.mrb[0].mxu0 %v345
  %v623 = vpop.f32.mrb[0].mxu0
  %v624 = vadd.f32 %v94, %v623
  %v625 = vpop.f32.mrb[0].mxu0
  %v626 = vpop.f32.mrb[0].mxu0
  %v627 = vadd.f32 %v94, %v626
  %v628 = vpop.f32.mrb[0].mxu0
  %629 = vmatprep.mubr.bf16.mxu0 0
  %630 = vmatmul.mubr.bf16.gmra.mrb[0].mxu0 %v348
  %v631 = vpop.f32.mrb[0].mxu0
  %v632 = vadd.f32 %v94, %v631
  %v633 = vpop.f32.mrb[0].mxu0
  %v634 = vpop.f32.mrb[0].mxu0
  %v635 = vadd.f32 %v94, %v634
  %v636 = vpop.f32.mrb[0].mxu0
  %637 = vmatprep.mubr.bf16.mxu0 0
  %638 = vmatmul.mubr.bf16.gmra.mrb[0].mxu0 %v351
  %v639 = vpop.f32.mrb[0].mxu0
  %v640 = vadd.f32 %v94, %v639
  %v641 = vpop.f32.mrb[0].mxu0
  %v642 = vpop.f32.mrb[0].mxu0
  %v643 = vadd.f32 %v94, %v642
  %v644 = vpop.f32.mrb[0].mxu0
  %645 = vdwg.mxu0
  %v646 = vld [vmem:[%s1] sm:$0xf]
  %v647 = vld [vmem:[%s1 + $0x4] sm:$0xf]
  %v648 = vld [vmem:[%s1 + $0x8] sm:$0xf]
  %v649 = vld [vmem:[%s1 + $0xc] sm:$0xf]
  %v650 = vld [vmem:[%s1 + $0x10] sm:$0xf]
  %v651 = vld [vmem:[%s1 + $0x14] sm:$0xf]
  %v652 = vld [vmem:[%s1 + $0x18] sm:$0xf]
  %v653 = vld [vmem:[%s1 + $0x1c] sm:$0xf]
  %v654 = vld [vmem:[%s1 + $0x20] sm:$0xf]
  %v655 = vld [vmem:[%s1 + $0x24] sm:$0xf]
  %v656 = vld [vmem:[%s1 + $0x28] sm:$0xf]
  %v657 = vld [vmem:[%s1 + $0x2c] sm:$0xf]
  %v658 = vld [vmem:[%s1 + $0x30] sm:$0xf]
  %v659 = vld [vmem:[%s1 + $0x34] sm:$0xf]
  %v660 = vld [vmem:[%s1 + $0x38] sm:$0xf]
  %v661 = vld [vmem:[%s1 + $0x3c] sm:$0xf]
  %v662 = vld [vmem:[%s1 + $0x40] sm:$0xf]
  %v663 = vld [vmem:[%s1 + $0x44] sm:$0xf]
  %v664 = vld [vmem:[%s1 + $0x48] sm:$0xf]
  %v665 = vld [vmem:[%s1 + $0x4c] sm:$0xf]
  %v666 = vld [vmem:[%s1 + $0x50] sm:$0xf]
  %v667 = vld [vmem:[%s1 + $0x54] sm:$0xf]
  %v668 = vld [vmem:[%s1 + $0x58] sm:$0xf]
  %v669 = vld [vmem:[%s1 + $0x5c] sm:$0xf]
  %v670 = vld [vmem:[%s1 + $0x60] sm:$0xf]
  %v671 = vld [vmem:[%s1 + $0x64] sm:$0xf]
  %v672 = vld [vmem:[%s1 + $0x68] sm:$0xf]
  %v673 = vld [vmem:[%s1 + $0x6c] sm:$0xf]
  %v674 = vld [vmem:[%s1 + $0x70] sm:$0xf]
  %v675 = vld [vmem:[%s1 + $0x74] sm:$0xf]
  %v676 = vld [vmem:[%s1 + $0x78] sm:$0xf]
  %v677 = vld [vmem:[%s1 + $0x7c] sm:$0xf]
  %v678 = vld [vmem:[%s1 + $0x80] sm:$0xf]
  %v679 = vld [vmem:[%s1 + $0x84] sm:$0xf]
  %v680 = vld [vmem:[%s1 + $0x88] sm:$0xf]
  %v681 = vld [vmem:[%s1 + $0x8c] sm:$0xf]
  %v682 = vld [vmem:[%s1 + $0x90] sm:$0xf]
  %v683 = vld [vmem:[%s1 + $0x94] sm:$0xf]
  %v684 = vld [vmem:[%s1 + $0x98] sm:$0xf]
  %v685 = vld [vmem:[%s1 + $0x9c] sm:$0xf]
  %v686 = vld [vmem:[%s1 + $0xa0] sm:$0xf]
  %v687 = vld [vmem:[%s1 + $0xa4] sm:$0xf]
  %v688 = vld [vmem:[%s1 + $0xa8] sm:$0xf]
  %v689 = vld [vmem:[%s1 + $0xac] sm:$0xf]
  %v690 = vld [vmem:[%s1 + $0xb0] sm:$0xf]
  %v691 = vld [vmem:[%s1 + $0xb4] sm:$0xf]
  %v692 = vld [vmem:[%s1 + $0xb8] sm:$0xf]
  %v693 = vld [vmem:[%s1 + $0xbc] sm:$0xf]
  %v694 = vld [vmem:[%s1 + $0xc0] sm:$0xf]
  %v695 = vld [vmem:[%s1 + $0xc4] sm:$0xf]
  %v696 = vld [vmem:[%s1 + $0xc8] sm:$0xf]
  %v697 = vld [vmem:[%s1 + $0xcc] sm:$0xf]
  %v698 = vld [vmem:[%s1 + $0xd0] sm:$0xf]
  %v699 = vld [vmem:[%s1 + $0xd4] sm:$0xf]
  %v700 = vld [vmem:[%s1 + $0xd8] sm:$0xf]
  %v701 = vld [vmem:[%s1 + $0xdc] sm:$0xf]
  %v702 = vld [vmem:[%s1 + $0xe0] sm:$0xf]
  %v703 = vld [vmem:[%s1 + $0xe4] sm:$0xf]
  %v704 = vld [vmem:[%s1 + $0xe8] sm:$0xf]
  %v705 = vld [vmem:[%s1 + $0xec] sm:$0xf]
  %v706 = vld [vmem:[%s1 + $0xf0] sm:$0xf]
  %v707 = vld [vmem:[%s1 + $0xf4] sm:$0xf]
  %v708 = vld [vmem:[%s1 + $0xf8] sm:$0xf]
  %v709 = vld [vmem:[%s1 + $0xfc] sm:$0xf]
  %v710 = vunpack.c.l.bf16 %v646
  %v711 = vunpack.c.l.bf16 %v647
  %v712 = vunpack.c.l.bf16 %v648
  %v713 = vunpack.c.l.bf16 %v649
  %v714 = vunpack.c.l.bf16 %v650
  %v715 = vunpack.c.l.bf16 %v651
  %v716 = vunpack.c.l.bf16 %v652
  %v717 = vunpack.c.l.bf16 %v653
  %v718 = vunpack.c.l.bf16 %v654
  %v719 = vunpack.c.l.bf16 %v655
  %v720 = vunpack.c.l.bf16 %v656
  %v721 = vunpack.c.l.bf16 %v657
  %v722 = vunpack.c.l.bf16 %v658
  %v723 = vunpack.c.l.bf16 %v659
  %v724 = vunpack.c.l.bf16 %v660
  %v725 = vunpack.c.l.bf16 %v661
  %v726 = vunpack.c.l.bf16 %v662
  %v727 = vunpack.c.l.bf16 %v663
  %v728 = vunpack.c.l.bf16 %v664
  %v729 = vunpack.c.l.bf16 %v665
  %v730 = vunpack.c.l.bf16 %v666
  %v731 = vunpack.c.l.bf16 %v667
  %v732 = vunpack.c.l.bf16 %v668
  %v733 = vunpack.c.l.bf16 %v669
  %v734 = vunpack.c.l.bf16 %v670
  %v735 = vunpack.c.l.bf16 %v671
  %v736 = vunpack.c.l.bf16 %v672
  %v737 = vunpack.c.l.bf16 %v673
  %v738 = vunpack.c.l.bf16 %v674
  %v739 = vunpack.c.l.bf16 %v675
  %v740 = vunpack.c.l.bf16 %v676
  %v741 = vunpack.c.l.bf16 %v677
  %v742 = vunpack.c.l.bf16 %v678
  %v743 = vunpack.c.l.bf16 %v679
  %v744 = vunpack.c.l.bf16 %v680
  %v745 = vunpack.c.l.bf16 %v681
  %v746 = vunpack.c.l.bf16 %v682
  %v747 = vunpack.c.l.bf16 %v683
  %v748 = vunpack.c.l.bf16 %v684
  %v749 = vunpack.c.l.bf16 %v685
  %v750 = vunpack.c.l.bf16 %v686
  %v751 = vunpack.c.l.bf16 %v687
  %v752 = vunpack.c.l.bf16 %v688
  %v753 = vunpack.c.l.bf16 %v689
  %v754 = vunpack.c.l.bf16 %v690
  %v755 = vunpack.c.l.bf16 %v691
  %v756 = vunpack.c.l.bf16 %v692
  %v757 = vunpack.c.l.bf16 %v693
  %v758 = vunpack.c.l.bf16 %v694
  %v759 = vunpack.c.l.bf16 %v695
  %v760 = vunpack.c.l.bf16 %v696
  %v761 = vunpack.c.l.bf16 %v697
  %v762 = vunpack.c.l.bf16 %v698
  %v763 = vunpack.c.l.bf16 %v699
  %v764 = vunpack.c.l.bf16 %v700
  %v765 = vunpack.c.l.bf16 %v701
  %v766 = vunpack.c.l.bf16 %v702
  %v767 = vunpack.c.l.bf16 %v703
  %v768 = vunpack.c.l.bf16 %v704
  %v769 = vunpack.c.l.bf16 %v705
  %v770 = vunpack.c.l.bf16 %v706
  %v771 = vunpack.c.l.bf16 %v707
  %v772 = vunpack.c.l.bf16 %v708
  %v773 = vunpack.c.l.bf16 %v709
  %v774 = vld [vmem:[%s4] sm:$0x1]
  %v775 = vlaneseq
  %v776 = vshrl.u32 %v775, 7
  %v777 = vsub.s32 0, %v776
  %v778 = vrot.slane %v774, %v777
  %v779 = vmul.f32 %v392, %v778
  %v780 = vmul.f32 %v395, %v778
  %v781 = vmul.f32 %v400, %v778
  %v782 = vmul.f32 %v403, %v778
  %v783 = vmul.f32 %v408, %v778
  %v784 = vmul.f32 %v411, %v778
  %v785 = vmul.f32 %v416, %v778
  %v786 = vmul.f32 %v419, %v778
  %v787 = vmul.f32 %v424, %v778
  %v788 = vmul.f32 %v427, %v778
  %v789 = vmul.f32 %v432, %v778
  %v790 = vmul.f32 %v435, %v778
  %v791 = vmul.f32 %v440, %v778
  %v792 = vmul.f32 %v443, %v778
  %v793 = vmul.f32 %v448, %v778
  %v794 = vmul.f32 %v451, %v778
  %v795 = vmul.f32 %v456, %v778
  %v796 = vmul.f32 %v459, %v778
  %v797 = vmul.f32 %v464, %v778
  %v798 = vmul.f32 %v467, %v778
  %v799 = vmul.f32 %v472, %v778
  %v800 = vmul.f32 %v475, %v778
  %v801 = vmul.f32 %v480, %v778
  %v802 = vmul.f32 %v483, %v778
  %v803 = vmul.f32 %v488, %v778
  %v804 = vmul.f32 %v491, %v778
  %v805 = vmul.f32 %v496, %v778
  %v806 = vmul.f32 %v499, %v778
  %v807 = vmul.f32 %v504, %v778
  %v808 = vmul.f32 %v507, %v778
  %v809 = vmul.f32 %v512, %v778
  %v810 = vmul.f32 %v515, %v778
  %v811 = vmul.f32 %v520, %v778
  %v812 = vmul.f32 %v523, %v778
  %v813 = vmul.f32 %v528, %v778
  %v814 = vmul.f32 %v531, %v778
  %v815 = vmul.f32 %v536, %v778
  %v816 = vmul.f32 %v539, %v778
  %v817 = vmul.f32 %v544, %v778
  %v818 = vmul.f32 %v547, %v778
  %v819 = vmul.f32 %v552, %v778
  %v820 = vmul.f32 %v555, %v778
  %v821 = vmul.f32 %v560, %v778
  %v822 = vmul.f32 %v563, %v778
  %v823 = vmul.f32 %v568, %v778
  %v824 = vmul.f32 %v571, %v778
  %v825 = vmul.f32 %v576, %v778
  %v826 = vmul.f32 %v579, %v778
  %v827 = vmul.f32 %v584, %v778
  %v828 = vmul.f32 %v587, %v778
  %v829 = vmul.f32 %v592, %v778
  %v830 = vmul.f32 %v595, %v778
  %v831 = vmul.f32 %v600, %v778
  %v832 = vmul.f32 %v603, %v778
  %v833 = vmul.f32 %v608, %v778
  %v834 = vmul.f32 %v611, %v778
  %v835 = vmul.f32 %v616, %v778
  %v836 = vmul.f32 %v619, %v778
  %v837 = vmul.f32 %v624, %v778
  %v838 = vmul.f32 %v627, %v778
  %v839 = vmul.f32 %v632, %v778
  %v840 = vmul.f32 %v635, %v778
  %v841 = vmul.f32 %v640, %v778
  %v842 = vmul.f32 %v643, %v778
  %vm843 = vcmask 130048
  %v844 = vsel %vm843, %v779, 0.0
  %845 = vadd.xlane.f32.xlu0 %v844
  %v846 = vpop.xlane.xlu0 %845
  %v847 = vsel %vm843, %v780, 0.0
  %848 = vadd.xlane.f32.xlu0 %v847
  %v849 = vpop.xlane.xlu0 %848
  %v850 = vsel %vm843, %v781, 0.0
  %851 = vadd.xlane.f32.xlu0 %v850
  %v852 = vpop.xlane.xlu0 %851
  %v853 = vsel %vm843, %v782, 0.0
  %854 = vadd.xlane.f32.xlu0 %v853
  %v855 = vpop.xlane.xlu0 %854
  %v856 = vsel %vm843, %v783, 0.0
  %857 = vadd.xlane.f32.xlu0 %v856
  %v858 = vpop.xlane.xlu0 %857
  %v859 = vsel %vm843, %v784, 0.0
  %860 = vadd.xlane.f32.xlu0 %v859
  %v861 = vpop.xlane.xlu0 %860
  %v862 = vsel %vm843, %v785, 0.0
  %863 = vadd.xlane.f32.xlu0 %v862
  %v864 = vpop.xlane.xlu0 %863
  %v865 = vsel %vm843, %v786, 0.0
  %866 = vadd.xlane.f32.xlu0 %v865
  %v867 = vpop.xlane.xlu0 %866
  %v868 = vsel %vm843, %v787, 0.0
  %869 = vadd.xlane.f32.xlu0 %v868
  %v870 = vpop.xlane.xlu0 %869
  %v871 = vsel %vm843, %v788, 0.0
  %872 = vadd.xlane.f32.xlu0 %v871
  %v873 = vpop.xlane.xlu0 %872
  %v874 = vsel %vm843, %v789, 0.0
  %875 = vadd.xlane.f32.xlu0 %v874
  %v876 = vpop.xlane.xlu0 %875
  %v877 = vsel %vm843, %v790, 0.0
  %878 = vadd.xlane.f32.xlu0 %v877
  %v879 = vpop.xlane.xlu0 %878
  %v880 = vsel %vm843, %v791, 0.0
  %881 = vadd.xlane.f32.xlu0 %v880
  %v882 = vpop.xlane.xlu0 %881
  %v883 = vsel %vm843, %v792, 0.0
  %884 = vadd.xlane.f32.xlu0 %v883
  %v885 = vpop.xlane.xlu0 %884
  %v886 = vsel %vm843, %v793, 0.0
  %887 = vadd.xlane.f32.xlu0 %v886
  %v888 = vpop.xlane.xlu0 %887
  %v889 = vsel %vm843, %v794, 0.0
  %890 = vadd.xlane.f32.xlu0 %v889
  %v891 = vpop.xlane.xlu0 %890
  %v892 = vsel %vm843, %v795, 0.0
  %893 = vadd.xlane.f32.xlu0 %v892
  %v894 = vpop.xlane.xlu0 %893
  %v895 = vsel %vm843, %v796, 0.0
  %896 = vadd.xlane.f32.xlu0 %v895
  %v897 = vpop.xlane.xlu0 %896
  %v898 = vsel %vm843, %v797, 0.0
  %899 = vadd.xlane.f32.xlu0 %v898
  %v900 = vpop.xlane.xlu0 %899
  %v901 = vsel %vm843, %v798, 0.0
  %902 = vadd.xlane.f32.xlu0 %v901
  %v903 = vpop.xlane.xlu0 %902
  %v904 = vsel %vm843, %v799, 0.0
  %905 = vadd.xlane.f32.xlu0 %v904
  %v906 = vpop.xlane.xlu0 %905
  %v907 = vsel %vm843, %v800, 0.0
  %908 = vadd.xlane.f32.xlu0 %v907
  %v909 = vpop.xlane.xlu0 %908
  %v910 = vsel %vm843, %v801, 0.0
  %911 = vadd.xlane.f32.xlu0 %v910
  %v912 = vpop.xlane.xlu0 %911
  %v913 = vsel %vm843, %v802, 0.0
  %914 = vadd.xlane.f32.xlu0 %v913
  %v915 = vpop.xlane.xlu0 %914
  %v916 = vsel %vm843, %v803, 0.0
  %917 = vadd.xlane.f32.xlu0 %v916
  %v918 = vpop.xlane.xlu0 %917
  %v919 = vsel %vm843, %v804, 0.0
  %920 = vadd.xlane.f32.xlu0 %v919
  %v921 = vpop.xlane.xlu0 %920
  %v922 = vsel %vm843, %v805, 0.0
  %923 = vadd.xlane.f32.xlu0 %v922
  %v924 = vpop.xlane.xlu0 %923
  %v925 = vsel %vm843, %v806, 0.0
  %926 = vadd.xlane.f32.xlu0 %v925
  %v927 = vpop.xlane.xlu0 %926
  %v928 = vsel %vm843, %v807, 0.0
  %929 = vadd.xlane.f32.xlu0 %v928
  %v930 = vpop.xlane.xlu0 %929
  %v931 = vsel %vm843, %v808, 0.0
  %932 = vadd.xlane.f32.xlu0 %v931
  %v933 = vpop.xlane.xlu0 %932
  %v934 = vsel %vm843, %v809, 0.0
  %935 = vadd.xlane.f32.xlu0 %v934
  %v936 = vpop.xlane.xlu0 %935
  %v937 = vsel %vm843, %v810, 0.0
  %938 = vadd.xlane.f32.xlu0 %v937
  %v939 = vpop.xlane.xlu0 %938
  %v940 = vsel %vm843, %v811, 0.0
  %941 = vadd.xlane.f32.xlu0 %v940
  %v942 = vpop.xlane.xlu0 %941
  %v943 = vsel %vm843, %v812, 0.0
  %944 = vadd.xlane.f32.xlu0 %v943
  %v945 = vpop.xlane.xlu0 %944
  %v946 = vsel %vm843, %v813, 0.0
  %947 = vadd.xlane.f32.xlu0 %v946
  %v948 = vpop.xlane.xlu0 %947
  %v949 = vsel %vm843, %v814, 0.0
  %950 = vadd.xlane.f32.xlu0 %v949
  %v951 = vpop.xlane.xlu0 %950
  %v952 = vsel %vm843, %v815, 0.0
  %953 = vadd.xlane.f32.xlu0 %v952
  %v954 = vpop.xlane.xlu0 %953
  %v955 = vsel %vm843, %v816, 0.0
  %956 = vadd.xlane.f32.xlu0 %v955
  %v957 = vpop.xlane.xlu0 %956
  %v958 = vsel %vm843, %v817, 0.0
  %959 = vadd.xlane.f32.xlu0 %v958
  %v960 = vpop.xlane.xlu0 %959
  %v961 = vsel %vm843, %v818, 0.0
  %962 = vadd.xlane.f32.xlu0 %v961
  %v963 = vpop.xlane.xlu0 %962
  %v964 = vsel %vm843, %v819, 0.0
  %965 = vadd.xlane.f32.xlu0 %v964
  %v966 = vpop.xlane.xlu0 %965
  %v967 = vsel %vm843, %v820, 0.0
  %968 = vadd.xlane.f32.xlu0 %v967
  %v969 = vpop.xlane.xlu0 %968
  %v970 = vsel %vm843, %v821, 0.0
  %971 = vadd.xlane.f32.xlu0 %v970
  %v972 = vpop.xlane.xlu0 %971
  %v973 = vsel %vm843, %v822, 0.0
  %974 = vadd.xlane.f32.xlu0 %v973
  %v975 = vpop.xlane.xlu0 %974
  %v976 = vsel %vm843, %v823, 0.0
  %977 = vadd.xlane.f32.xlu0 %v976
  %v978 = vpop.xlane.xlu0 %977
  %v979 = vsel %vm843, %v824, 0.0
  %980 = vadd.xlane.f32.xlu0 %v979
  %v981 = vpop.xlane.xlu0 %980
  %v982 = vsel %vm843, %v825, 0.0
  %983 = vadd.xlane.f32.xlu0 %v982
  %v984 = vpop.xlane.xlu0 %983
  %v985 = vsel %vm843, %v826, 0.0
  %986 = vadd.xlane.f32.xlu0 %v985
  %v987 = vpop.xlane.xlu0 %986
  %v988 = vsel %vm843, %v827, 0.0
  %989 = vadd.xlane.f32.xlu0 %v988
  %v990 = vpop.xlane.xlu0 %989
  %v991 = vsel %vm843, %v828, 0.0
  %992 = vadd.xlane.f32.xlu0 %v991
  %v993 = vpop.xlane.xlu0 %992
  %v994 = vsel %vm843, %v829, 0.0
  %995 = vadd.xlane.f32.xlu0 %v994
  %v996 = vpop.xlane.xlu0 %995
  %v997 = vsel %vm843, %v830, 0.0
  %998 = vadd.xlane.f32.xlu0 %v997
  %v999 = vpop.xlane.xlu0 %998
  %v1000 = vsel %vm843, %v831, 0.0
  %1001 = vadd.xlane.f32.xlu0 %v1000
  %v1002 = vpop.xlane.xlu0 %1001
  %v1003 = vsel %vm843, %v832, 0.0
  %1004 = vadd.xlane.f32.xlu0 %v1003
  %v1005 = vpop.xlane.xlu0 %1004
  %v1006 = vsel %vm843, %v833, 0.0
  %1007 = vadd.xlane.f32.xlu0 %v1006
  %v1008 = vpop.xlane.xlu0 %1007
  %v1009 = vsel %vm843, %v834, 0.0
  %1010 = vadd.xlane.f32.xlu0 %v1009
  %v1011 = vpop.xlane.xlu0 %1010
  %v1012 = vsel %vm843, %v835, 0.0
  %1013 = vadd.xlane.f32.xlu0 %v1012
  %v1014 = vpop.xlane.xlu0 %1013
  %v1015 = vsel %vm843, %v836, 0.0
  %1016 = vadd.xlane.f32.xlu0 %v1015
  %v1017 = vpop.xlane.xlu0 %1016
  %v1018 = vsel %vm843, %v837, 0.0
  %1019 = vadd.xlane.f32.xlu0 %v1018
  %v1020 = vpop.xlane.xlu0 %1019
  %v1021 = vsel %vm843, %v838, 0.0
  %1022 = vadd.xlane.f32.xlu0 %v1021
  %v1023 = vpop.xlane.xlu0 %1022
  %v1024 = vsel %vm843, %v839, 0.0
  %1025 = vadd.xlane.f32.xlu0 %v1024
  %v1026 = vpop.xlane.xlu0 %1025
  %v1027 = vsel %vm843, %v840, 0.0
  %1028 = vadd.xlane.f32.xlu0 %v1027
  %v1029 = vpop.xlane.xlu0 %1028
  %v1030 = vsel %vm843, %v841, 0.0
  %1031 = vadd.xlane.f32.xlu0 %v1030
  %v1032 = vpop.xlane.xlu0 %1031
  %v1033 = vsel %vm843, %v842, 0.0
  %1034 = vadd.xlane.f32.xlu0 %v1033
  %v1035 = vpop.xlane.xlu0 %1034
  %1037 = vrot.lane.b32.xlu0 %v778, 112
  %v1038 = vpop.permute.xlu0 %1037
  %v1040 = vmul.f32 %v710, %v1038
  %v1041 = vmul.f32 %v711, %v1038
  %v1042 = vmul.f32 %v712, %v1038
  %v1043 = vmul.f32 %v713, %v1038
  %v1044 = vmul.f32 %v714, %v1038
  %v1045 = vmul.f32 %v715, %v1038
  %v1046 = vmul.f32 %v716, %v1038
  %v1047 = vmul.f32 %v717, %v1038
  %v1048 = vmul.f32 %v718, %v1038
  %v1049 = vmul.f32 %v719, %v1038
  %v1050 = vmul.f32 %v720, %v1038
  %v1051 = vmul.f32 %v721, %v1038
  %v1052 = vmul.f32 %v722, %v1038
  %v1053 = vmul.f32 %v723, %v1038
  %v1054 = vmul.f32 %v724, %v1038
  %v1055 = vmul.f32 %v725, %v1038
  %v1056 = vmul.f32 %v726, %v1038
  %v1057 = vmul.f32 %v727, %v1038
  %v1058 = vmul.f32 %v728, %v1038
  %v1059 = vmul.f32 %v729, %v1038
  %v1060 = vmul.f32 %v730, %v1038
  %v1061 = vmul.f32 %v731, %v1038
  %v1062 = vmul.f32 %v732, %v1038
  %v1063 = vmul.f32 %v733, %v1038
  %v1064 = vmul.f32 %v734, %v1038
  %v1065 = vmul.f32 %v735, %v1038
  %v1066 = vmul.f32 %v736, %v1038
  %v1067 = vmul.f32 %v737, %v1038
  %v1068 = vmul.f32 %v738, %v1038
  %v1069 = vmul.f32 %v739, %v1038
  %v1070 = vmul.f32 %v740, %v1038
  %v1071 = vmul.f32 %v741, %v1038
  %v1072 = vmul.f32 %v742, %v1038
  %v1073 = vmul.f32 %v743, %v1038
  %v1074 = vmul.f32 %v744, %v1038
  %v1075 = vmul.f32 %v745, %v1038
  %v1076 = vmul.f32 %v746, %v1038
  %v1077 = vmul.f32 %v747, %v1038
  %v1078 = vmul.f32 %v748, %v1038
  %v1079 = vmul.f32 %v749, %v1038
  %v1080 = vmul.f32 %v750, %v1038
  %v1081 = vmul.f32 %v751, %v1038
  %v1082 = vmul.f32 %v752, %v1038
  %v1083 = vmul.f32 %v753, %v1038
  %v1084 = vmul.f32 %v754, %v1038
  %v1085 = vmul.f32 %v755, %v1038
  %v1086 = vmul.f32 %v756, %v1038
  %v1087 = vmul.f32 %v757, %v1038
  %v1088 = vmul.f32 %v758, %v1038
  %v1089 = vmul.f32 %v759, %v1038
  %v1090 = vmul.f32 %v760, %v1038
  %v1091 = vmul.f32 %v761, %v1038
  %v1092 = vmul.f32 %v762, %v1038
  %v1093 = vmul.f32 %v763, %v1038
  %v1094 = vmul.f32 %v764, %v1038
  %v1095 = vmul.f32 %v765, %v1038
  %v1096 = vmul.f32 %v766, %v1038
  %v1097 = vmul.f32 %v767, %v1038
  %v1098 = vmul.f32 %v768, %v1038
  %v1099 = vmul.f32 %v769, %v1038
  %v1100 = vmul.f32 %v770, %v1038
  %v1101 = vmul.f32 %v771, %v1038
  %v1102 = vmul.f32 %v772, %v1038
  %v1103 = vmul.f32 %v773, %v1038
  %v1104 = vsel %vm843, %v1040, 0.0
  %1105 = vadd.xlane.f32.xlu0 %v1104
  %v1106 = vpop.xlane.xlu0 %1105
  %v1107 = vsel %vm843, %v1041, 0.0
  %1108 = vadd.xlane.f32.xlu0 %v1107
  %v1109 = vpop.xlane.xlu0 %1108
  %v1110 = vsel %vm843, %v1042, 0.0
  %1111 = vadd.xlane.f32.xlu0 %v1110
  %v1112 = vpop.xlane.xlu0 %1111
  %v1113 = vsel %vm843, %v1043, 0.0
  %1114 = vadd.xlane.f32.xlu0 %v1113
  %v1115 = vpop.xlane.xlu0 %1114
  %v1116 = vsel %vm843, %v1044, 0.0
  %1117 = vadd.xlane.f32.xlu0 %v1116
  %v1118 = vpop.xlane.xlu0 %1117
  %v1119 = vsel %vm843, %v1045, 0.0
  %1120 = vadd.xlane.f32.xlu0 %v1119
  %v1121 = vpop.xlane.xlu0 %1120
  %v1122 = vsel %vm843, %v1046, 0.0
  %1123 = vadd.xlane.f32.xlu0 %v1122
  %v1124 = vpop.xlane.xlu0 %1123
  %v1125 = vsel %vm843, %v1047, 0.0
  %1126 = vadd.xlane.f32.xlu0 %v1125
  %v1127 = vpop.xlane.xlu0 %1126
  %v1128 = vsel %vm843, %v1048, 0.0
  %1129 = vadd.xlane.f32.xlu0 %v1128
  %v1130 = vpop.xlane.xlu0 %1129
  %v1131 = vsel %vm843, %v1049, 0.0
  %1132 = vadd.xlane.f32.xlu0 %v1131
  %v1133 = vpop.xlane.xlu0 %1132
  %v1134 = vsel %vm843, %v1050, 0.0
  %1135 = vadd.xlane.f32.xlu0 %v1134
  %v1136 = vpop.xlane.xlu0 %1135
  %v1137 = vsel %vm843, %v1051, 0.0
  %1138 = vadd.xlane.f32.xlu0 %v1137
  %v1139 = vpop.xlane.xlu0 %1138
  %v1140 = vsel %vm843, %v1052, 0.0
  %1141 = vadd.xlane.f32.xlu0 %v1140
  %v1142 = vpop.xlane.xlu0 %1141
  %v1143 = vsel %vm843, %v1053, 0.0
  %1144 = vadd.xlane.f32.xlu0 %v1143
  %v1145 = vpop.xlane.xlu0 %1144
  %v1146 = vsel %vm843, %v1054, 0.0
  %1147 = vadd.xlane.f32.xlu0 %v1146
  %v1148 = vpop.xlane.xlu0 %1147
  %v1149 = vsel %vm843, %v1055, 0.0
  %1150 = vadd.xlane.f32.xlu0 %v1149
  %v1151 = vpop.xlane.xlu0 %1150
  %v1152 = vsel %vm843, %v1056, 0.0
  %1153 = vadd.xlane.f32.xlu0 %v1152
  %v1154 = vpop.xlane.xlu0 %1153
  %v1155 = vsel %vm843, %v1057, 0.0
  %1156 = vadd.xlane.f32.xlu0 %v1155
  %v1157 = vpop.xlane.xlu0 %1156
  %v1158 = vsel %vm843, %v1058, 0.0
  %1159 = vadd.xlane.f32.xlu0 %v1158
  %v1160 = vpop.xlane.xlu0 %1159
  %v1161 = vsel %vm843, %v1059, 0.0
  %1162 = vadd.xlane.f32.xlu0 %v1161
  %v1163 = vpop.xlane.xlu0 %1162
  %v1164 = vsel %vm843, %v1060, 0.0
  %1165 = vadd.xlane.f32.xlu0 %v1164
  %v1166 = vpop.xlane.xlu0 %1165
  %v1167 = vsel %vm843, %v1061, 0.0
  %1168 = vadd.xlane.f32.xlu0 %v1167
  %v1169 = vpop.xlane.xlu0 %1168
  %v1170 = vsel %vm843, %v1062, 0.0
  %1171 = vadd.xlane.f32.xlu0 %v1170
  %v1172 = vpop.xlane.xlu0 %1171
  %v1173 = vsel %vm843, %v1063, 0.0
  %1174 = vadd.xlane.f32.xlu0 %v1173
  %v1175 = vpop.xlane.xlu0 %1174
  %v1176 = vsel %vm843, %v1064, 0.0
  %1177 = vadd.xlane.f32.xlu0 %v1176
  %v1178 = vpop.xlane.xlu0 %1177
  %v1179 = vsel %vm843, %v1065, 0.0
  %1180 = vadd.xlane.f32.xlu0 %v1179
  %v1181 = vpop.xlane.xlu0 %1180
  %v1182 = vsel %vm843, %v1066, 0.0
  %1183 = vadd.xlane.f32.xlu0 %v1182
  %v1184 = vpop.xlane.xlu0 %1183
  %v1185 = vsel %vm843, %v1067, 0.0
  %1186 = vadd.xlane.f32.xlu0 %v1185
  %v1187 = vpop.xlane.xlu0 %1186
  %v1188 = vsel %vm843, %v1068, 0.0
  %1189 = vadd.xlane.f32.xlu0 %v1188
  %v1190 = vpop.xlane.xlu0 %1189
  %v1191 = vsel %vm843, %v1069, 0.0
  %1192 = vadd.xlane.f32.xlu0 %v1191
  %v1193 = vpop.xlane.xlu0 %1192
  %v1194 = vsel %vm843, %v1070, 0.0
  %1195 = vadd.xlane.f32.xlu0 %v1194
  %v1196 = vpop.xlane.xlu0 %1195
  %v1197 = vsel %vm843, %v1071, 0.0
  %1198 = vadd.xlane.f32.xlu0 %v1197
  %v1199 = vpop.xlane.xlu0 %1198
  %v1200 = vsel %vm843, %v1072, 0.0
  %1201 = vadd.xlane.f32.xlu0 %v1200
  %v1202 = vpop.xlane.xlu0 %1201
  %v1203 = vsel %vm843, %v1073, 0.0
  %1204 = vadd.xlane.f32.xlu0 %v1203
  %v1205 = vpop.xlane.xlu0 %1204
  %v1206 = vsel %vm843, %v1074, 0.0
  %1207 = vadd.xlane.f32.xlu0 %v1206
  %v1208 = vpop.xlane.xlu0 %1207
  %v1209 = vsel %vm843, %v1075, 0.0
  %1210 = vadd.xlane.f32.xlu0 %v1209
  %v1211 = vpop.xlane.xlu0 %1210
  %v1212 = vsel %vm843, %v1076, 0.0
  %1213 = vadd.xlane.f32.xlu0 %v1212
  %v1214 = vpop.xlane.xlu0 %1213
  %v1215 = vsel %vm843, %v1077, 0.0
  %1216 = vadd.xlane.f32.xlu0 %v1215
  %v1217 = vpop.xlane.xlu0 %1216
  %v1218 = vsel %vm843, %v1078, 0.0
  %1219 = vadd.xlane.f32.xlu0 %v1218
  %v1220 = vpop.xlane.xlu0 %1219
  %v1221 = vsel %vm843, %v1079, 0.0
  %1222 = vadd.xlane.f32.xlu0 %v1221
  %v1223 = vpop.xlane.xlu0 %1222
  %v1224 = vsel %vm843, %v1080, 0.0
  %1225 = vadd.xlane.f32.xlu0 %v1224
  %v1226 = vpop.xlane.xlu0 %1225
  %v1227 = vsel %vm843, %v1081, 0.0
  %1228 = vadd.xlane.f32.xlu0 %v1227
  %v1229 = vpop.xlane.xlu0 %1228
  %v1230 = vsel %vm843, %v1082, 0.0
  %1231 = vadd.xlane.f32.xlu0 %v1230
  %v1232 = vpop.xlane.xlu0 %1231
  %v1233 = vsel %vm843, %v1083, 0.0
  %1234 = vadd.xlane.f32.xlu0 %v1233
  %v1235 = vpop.xlane.xlu0 %1234
  %v1236 = vsel %vm843, %v1084, 0.0
  %1237 = vadd.xlane.f32.xlu0 %v1236
  %v1238 = vpop.xlane.xlu0 %1237
  %v1239 = vsel %vm843, %v1085, 0.0
  %1240 = vadd.xlane.f32.xlu0 %v1239
  %v1241 = vpop.xlane.xlu0 %1240
  %v1242 = vsel %vm843, %v1086, 0.0
  %1243 = vadd.xlane.f32.xlu0 %v1242
  %v1244 = vpop.xlane.xlu0 %1243
  %v1245 = vsel %vm843, %v1087, 0.0
  %1246 = vadd.xlane.f32.xlu0 %v1245
  %v1247 = vpop.xlane.xlu0 %1246
  %v1248 = vsel %vm843, %v1088, 0.0
  %1249 = vadd.xlane.f32.xlu0 %v1248
  %v1250 = vpop.xlane.xlu0 %1249
  %v1251 = vsel %vm843, %v1089, 0.0
  %1252 = vadd.xlane.f32.xlu0 %v1251
  %v1253 = vpop.xlane.xlu0 %1252
  %v1254 = vsel %vm843, %v1090, 0.0
  %1255 = vadd.xlane.f32.xlu0 %v1254
  %v1256 = vpop.xlane.xlu0 %1255
  %v1257 = vsel %vm843, %v1091, 0.0
  %1258 = vadd.xlane.f32.xlu0 %v1257
  %v1259 = vpop.xlane.xlu0 %1258
  %v1260 = vsel %vm843, %v1092, 0.0
  %1261 = vadd.xlane.f32.xlu0 %v1260
  %v1262 = vpop.xlane.xlu0 %1261
  %v1263 = vsel %vm843, %v1093, 0.0
  %1264 = vadd.xlane.f32.xlu0 %v1263
  %v1265 = vpop.xlane.xlu0 %1264
  %v1266 = vsel %vm843, %v1094, 0.0
  %1267 = vadd.xlane.f32.xlu0 %v1266
  %v1268 = vpop.xlane.xlu0 %1267
  %v1269 = vsel %vm843, %v1095, 0.0
  %1270 = vadd.xlane.f32.xlu0 %v1269
  %v1271 = vpop.xlane.xlu0 %1270
  %v1272 = vsel %vm843, %v1096, 0.0
  %1273 = vadd.xlane.f32.xlu0 %v1272
  %v1274 = vpop.xlane.xlu0 %1273
  %v1275 = vsel %vm843, %v1097, 0.0
  %1276 = vadd.xlane.f32.xlu0 %v1275
  %v1277 = vpop.xlane.xlu0 %1276
  %v1278 = vsel %vm843, %v1098, 0.0
  %1279 = vadd.xlane.f32.xlu0 %v1278
  %v1280 = vpop.xlane.xlu0 %1279
  %v1281 = vsel %vm843, %v1099, 0.0
  %1282 = vadd.xlane.f32.xlu0 %v1281
  %v1283 = vpop.xlane.xlu0 %1282
  %v1284 = vsel %vm843, %v1100, 0.0
  %1285 = vadd.xlane.f32.xlu0 %v1284
  %v1286 = vpop.xlane.xlu0 %1285
  %v1287 = vsel %vm843, %v1101, 0.0
  %1288 = vadd.xlane.f32.xlu0 %v1287
  %v1289 = vpop.xlane.xlu0 %1288
  %v1290 = vsel %vm843, %v1102, 0.0
  %1291 = vadd.xlane.f32.xlu0 %v1290
  %v1292 = vpop.xlane.xlu0 %1291
  %v1293 = vsel %vm843, %v1103, 0.0
  %1294 = vadd.xlane.f32.xlu0 %v1293
  %v1295 = vpop.xlane.xlu0 %1294
  %v1296 = vadd.f32 %v846, %v1106
  %v1297 = vadd.f32 %v849, %v1109
  %v1298 = vadd.f32 %v852, %v1112
  %v1299 = vadd.f32 %v855, %v1115
  %v1300 = vadd.f32 %v858, %v1118
  %v1301 = vadd.f32 %v861, %v1121
  %v1302 = vadd.f32 %v864, %v1124
  %v1303 = vadd.f32 %v867, %v1127
  %v1304 = vadd.f32 %v870, %v1130
  %v1305 = vadd.f32 %v873, %v1133
  %v1306 = vadd.f32 %v876, %v1136
  %v1307 = vadd.f32 %v879, %v1139
  %v1308 = vadd.f32 %v882, %v1142
  %v1309 = vadd.f32 %v885, %v1145
  %v1310 = vadd.f32 %v888, %v1148
  %v1311 = vadd.f32 %v891, %v1151
  %v1312 = vadd.f32 %v894, %v1154
  %v1313 = vadd.f32 %v897, %v1157
  %v1314 = vadd.f32 %v900, %v1160
  %v1315 = vadd.f32 %v903, %v1163
  %v1316 = vadd.f32 %v906, %v1166
  %v1317 = vadd.f32 %v909, %v1169
  %v1318 = vadd.f32 %v912, %v1172
  %v1319 = vadd.f32 %v915, %v1175
  %v1320 = vadd.f32 %v918, %v1178
  %v1321 = vadd.f32 %v921, %v1181
  %v1322 = vadd.f32 %v924, %v1184
  %v1323 = vadd.f32 %v927, %v1187
  %v1324 = vadd.f32 %v930, %v1190
  %v1325 = vadd.f32 %v933, %v1193
  %v1326 = vadd.f32 %v936, %v1196
  %v1327 = vadd.f32 %v939, %v1199
  %v1328 = vadd.f32 %v942, %v1202
  %v1329 = vadd.f32 %v945, %v1205
  %v1330 = vadd.f32 %v948, %v1208
  %v1331 = vadd.f32 %v951, %v1211
  %v1332 = vadd.f32 %v954, %v1214
  %v1333 = vadd.f32 %v957, %v1217
  %v1334 = vadd.f32 %v960, %v1220
  %v1335 = vadd.f32 %v963, %v1223
  %v1336 = vadd.f32 %v966, %v1226
  %v1337 = vadd.f32 %v969, %v1229
  %v1338 = vadd.f32 %v972, %v1232
  %v1339 = vadd.f32 %v975, %v1235
  %v1340 = vadd.f32 %v978, %v1238
  %v1341 = vadd.f32 %v981, %v1241
  %v1342 = vadd.f32 %v984, %v1244
  %v1343 = vadd.f32 %v987, %v1247
  %v1344 = vadd.f32 %v990, %v1250
  %v1345 = vadd.f32 %v993, %v1253
  %v1346 = vadd.f32 %v996, %v1256
  %v1347 = vadd.f32 %v999, %v1259
  %v1348 = vadd.f32 %v1002, %v1262
  %v1349 = vadd.f32 %v1005, %v1265
  %v1350 = vadd.f32 %v1008, %v1268
  %v1351 = vadd.f32 %v1011, %v1271
  %v1352 = vadd.f32 %v1014, %v1274
  %v1353 = vadd.f32 %v1017, %v1277
  %v1354 = vadd.f32 %v1020, %v1280
  %v1355 = vadd.f32 %v1023, %v1283
  %v1356 = vadd.f32 %v1026, %v1286
  %v1357 = vadd.f32 %v1029, %v1289
  %v1358 = vadd.f32 %v1032, %v1292
  %v1359 = vadd.f32 %v1035, %v1295
  %v1360 = vld [vmem:[%s5] sm:$0x1]
  %v1362 = vlaneseq
  %v1363 = vshrl.u32 %v1362, 7
  %v1364 = vsub.s32 0, %v1363
  %v1365 = vrot.slane %v1360, %v1364
  %v1367 = vadd.f32 %v1296, %v1365
  %v1368 = vadd.f32 %v1297, %v1365
  %v1369 = vadd.f32 %v1298, %v1365
  %v1370 = vadd.f32 %v1299, %v1365
  %v1371 = vadd.f32 %v1300, %v1365
  %v1372 = vadd.f32 %v1301, %v1365
  %v1373 = vadd.f32 %v1302, %v1365
  %v1374 = vadd.f32 %v1303, %v1365
  %v1375 = vadd.f32 %v1304, %v1365
  %v1376 = vadd.f32 %v1305, %v1365
  %v1377 = vadd.f32 %v1306, %v1365
  %v1378 = vadd.f32 %v1307, %v1365
  %v1379 = vadd.f32 %v1308, %v1365
  %v1380 = vadd.f32 %v1309, %v1365
  %v1381 = vadd.f32 %v1310, %v1365
  %v1382 = vadd.f32 %v1311, %v1365
  %v1383 = vadd.f32 %v1312, %v1365
  %v1384 = vadd.f32 %v1313, %v1365
  %v1385 = vadd.f32 %v1314, %v1365
  %v1386 = vadd.f32 %v1315, %v1365
  %v1387 = vadd.f32 %v1316, %v1365
  %v1388 = vadd.f32 %v1317, %v1365
  %v1389 = vadd.f32 %v1318, %v1365
  %v1390 = vadd.f32 %v1319, %v1365
  %v1391 = vadd.f32 %v1320, %v1365
  %v1392 = vadd.f32 %v1321, %v1365
  %v1393 = vadd.f32 %v1322, %v1365
  %v1394 = vadd.f32 %v1323, %v1365
  %v1395 = vadd.f32 %v1324, %v1365
  %v1396 = vadd.f32 %v1325, %v1365
  %v1397 = vadd.f32 %v1326, %v1365
  %v1398 = vadd.f32 %v1327, %v1365
  %v1399 = vadd.f32 %v1328, %v1365
  %v1400 = vadd.f32 %v1329, %v1365
  %v1401 = vadd.f32 %v1330, %v1365
  %v1402 = vadd.f32 %v1331, %v1365
  %v1403 = vadd.f32 %v1332, %v1365
  %v1404 = vadd.f32 %v1333, %v1365
  %v1405 = vadd.f32 %v1334, %v1365
  %v1406 = vadd.f32 %v1335, %v1365
  %v1407 = vadd.f32 %v1336, %v1365
  %v1408 = vadd.f32 %v1337, %v1365
  %v1409 = vadd.f32 %v1338, %v1365
  %v1410 = vadd.f32 %v1339, %v1365
  %v1411 = vadd.f32 %v1340, %v1365
  %v1412 = vadd.f32 %v1341, %v1365
  %v1413 = vadd.f32 %v1342, %v1365
  %v1414 = vadd.f32 %v1343, %v1365
  %v1415 = vadd.f32 %v1344, %v1365
  %v1416 = vadd.f32 %v1345, %v1365
  %v1417 = vadd.f32 %v1346, %v1365
  %v1418 = vadd.f32 %v1347, %v1365
  %v1419 = vadd.f32 %v1348, %v1365
  %v1420 = vadd.f32 %v1349, %v1365
  %v1421 = vadd.f32 %v1350, %v1365
  %v1422 = vadd.f32 %v1351, %v1365
  %v1423 = vadd.f32 %v1352, %v1365
  %v1424 = vadd.f32 %v1353, %v1365
  %v1425 = vadd.f32 %v1354, %v1365
  %v1426 = vadd.f32 %v1355, %v1365
  %v1427 = vadd.f32 %v1356, %v1365
  %v1428 = vadd.f32 %v1357, %v1365
  %v1429 = vadd.f32 %v1358, %v1365
  %v1430 = vadd.f32 %v1359, %v1365
  %v1431 = vld [vmem:[%s4 + $0x1] sm:$0x1]
  %v1432 = vlaneseq
  %v1433 = vshrl.u32 %v1432, 7
  %v1434 = vsub.s32 0, %v1433
  %v1435 = vrot.slane %v1431, %v1434
  %v1436 = vmul.f32 %v392, %v1435
  %v1437 = vmul.f32 %v395, %v1435
  %v1438 = vmul.f32 %v400, %v1435
  %v1439 = vmul.f32 %v403, %v1435
  %v1440 = vmul.f32 %v408, %v1435
  %v1441 = vmul.f32 %v411, %v1435
  %v1442 = vmul.f32 %v416, %v1435
  %v1443 = vmul.f32 %v419, %v1435
  %v1444 = vmul.f32 %v424, %v1435
  %v1445 = vmul.f32 %v427, %v1435
  %v1446 = vmul.f32 %v432, %v1435
  %v1447 = vmul.f32 %v435, %v1435
  %v1448 = vmul.f32 %v440, %v1435
  %v1449 = vmul.f32 %v443, %v1435
  %v1450 = vmul.f32 %v448, %v1435
  %v1451 = vmul.f32 %v451, %v1435
  %v1452 = vmul.f32 %v456, %v1435
  %v1453 = vmul.f32 %v459, %v1435
  %v1454 = vmul.f32 %v464, %v1435
  %v1455 = vmul.f32 %v467, %v1435
  %v1456 = vmul.f32 %v472, %v1435
  %v1457 = vmul.f32 %v475, %v1435
  %v1458 = vmul.f32 %v480, %v1435
  %v1459 = vmul.f32 %v483, %v1435
  %v1460 = vmul.f32 %v488, %v1435
  %v1461 = vmul.f32 %v491, %v1435
  %v1462 = vmul.f32 %v496, %v1435
  %v1463 = vmul.f32 %v499, %v1435
  %v1464 = vmul.f32 %v504, %v1435
  %v1465 = vmul.f32 %v507, %v1435
  %v1466 = vmul.f32 %v512, %v1435
  %v1467 = vmul.f32 %v515, %v1435
  %v1468 = vmul.f32 %v520, %v1435
  %v1469 = vmul.f32 %v523, %v1435
  %v1470 = vmul.f32 %v528, %v1435
  %v1471 = vmul.f32 %v531, %v1435
  %v1472 = vmul.f32 %v536, %v1435
  %v1473 = vmul.f32 %v539, %v1435
  %v1474 = vmul.f32 %v544, %v1435
  %v1475 = vmul.f32 %v547, %v1435
  %v1476 = vmul.f32 %v552, %v1435
  %v1477 = vmul.f32 %v555, %v1435
  %v1478 = vmul.f32 %v560, %v1435
  %v1479 = vmul.f32 %v563, %v1435
  %v1480 = vmul.f32 %v568, %v1435
  %v1481 = vmul.f32 %v571, %v1435
  %v1482 = vmul.f32 %v576, %v1435
  %v1483 = vmul.f32 %v579, %v1435
  %v1484 = vmul.f32 %v584, %v1435
  %v1485 = vmul.f32 %v587, %v1435
  %v1486 = vmul.f32 %v592, %v1435
  %v1487 = vmul.f32 %v595, %v1435
  %v1488 = vmul.f32 %v600, %v1435
  %v1489 = vmul.f32 %v603, %v1435
  %v1490 = vmul.f32 %v608, %v1435
  %v1491 = vmul.f32 %v611, %v1435
  %v1492 = vmul.f32 %v616, %v1435
  %v1493 = vmul.f32 %v619, %v1435
  %v1494 = vmul.f32 %v624, %v1435
  %v1495 = vmul.f32 %v627, %v1435
  %v1496 = vmul.f32 %v632, %v1435
  %v1497 = vmul.f32 %v635, %v1435
  %v1498 = vmul.f32 %v640, %v1435
  %v1499 = vmul.f32 %v643, %v1435
  %v1500 = vsel %vm843, %v1436, 0.0
  %1501 = vadd.xlane.f32.xlu0 %v1500
  %v1502 = vpop.xlane.xlu0 %1501
  %v1503 = vsel %vm843, %v1437, 0.0
  %1504 = vadd.xlane.f32.xlu0 %v1503
  %v1505 = vpop.xlane.xlu0 %1504
  %v1506 = vsel %vm843, %v1438, 0.0
  %1507 = vadd.xlane.f32.xlu0 %v1506
  %v1508 = vpop.xlane.xlu0 %1507
  %v1509 = vsel %vm843, %v1439, 0.0
  %1510 = vadd.xlane.f32.xlu0 %v1509
  %v1511 = vpop.xlane.xlu0 %1510
  %v1512 = vsel %vm843, %v1440, 0.0
  %1513 = vadd.xlane.f32.xlu0 %v1512
  %v1514 = vpop.xlane.xlu0 %1513
  %v1515 = vsel %vm843, %v1441, 0.0
  %1516 = vadd.xlane.f32.xlu0 %v1515
  %v1517 = vpop.xlane.xlu0 %1516
  %v1518 = vsel %vm843, %v1442, 0.0
  %1519 = vadd.xlane.f32.xlu0 %v1518
  %v1520 = vpop.xlane.xlu0 %1519
  %v1521 = vsel %vm843, %v1443, 0.0
  %1522 = vadd.xlane.f32.xlu0 %v1521
  %v1523 = vpop.xlane.xlu0 %1522
  %v1524 = vsel %vm843, %v1444, 0.0
  %1525 = vadd.xlane.f32.xlu0 %v1524
  %v1526 = vpop.xlane.xlu0 %1525
  %v1527 = vsel %vm843, %v1445, 0.0
  %1528 = vadd.xlane.f32.xlu0 %v1527
  %v1529 = vpop.xlane.xlu0 %1528
  %v1530 = vsel %vm843, %v1446, 0.0
  %1531 = vadd.xlane.f32.xlu0 %v1530
  %v1532 = vpop.xlane.xlu0 %1531
  %v1533 = vsel %vm843, %v1447, 0.0
  %1534 = vadd.xlane.f32.xlu0 %v1533
  %v1535 = vpop.xlane.xlu0 %1534
  %v1536 = vsel %vm843, %v1448, 0.0
  %1537 = vadd.xlane.f32.xlu0 %v1536
  %v1538 = vpop.xlane.xlu0 %1537
  %v1539 = vsel %vm843, %v1449, 0.0
  %1540 = vadd.xlane.f32.xlu0 %v1539
  %v1541 = vpop.xlane.xlu0 %1540
  %v1542 = vsel %vm843, %v1450, 0.0
  %1543 = vadd.xlane.f32.xlu0 %v1542
  %v1544 = vpop.xlane.xlu0 %1543
  %v1545 = vsel %vm843, %v1451, 0.0
  %1546 = vadd.xlane.f32.xlu0 %v1545
  %v1547 = vpop.xlane.xlu0 %1546
  %v1548 = vsel %vm843, %v1452, 0.0
  %1549 = vadd.xlane.f32.xlu0 %v1548
  %v1550 = vpop.xlane.xlu0 %1549
  %v1551 = vsel %vm843, %v1453, 0.0
  %1552 = vadd.xlane.f32.xlu0 %v1551
  %v1553 = vpop.xlane.xlu0 %1552
  %v1554 = vsel %vm843, %v1454, 0.0
  %1555 = vadd.xlane.f32.xlu0 %v1554
  %v1556 = vpop.xlane.xlu0 %1555
  %v1557 = vsel %vm843, %v1455, 0.0
  %1558 = vadd.xlane.f32.xlu0 %v1557
  %v1559 = vpop.xlane.xlu0 %1558
  %v1560 = vsel %vm843, %v1456, 0.0
  %1561 = vadd.xlane.f32.xlu0 %v1560
  %v1562 = vpop.xlane.xlu0 %1561
  %v1563 = vsel %vm843, %v1457, 0.0
  %1564 = vadd.xlane.f32.xlu0 %v1563
  %v1565 = vpop.xlane.xlu0 %1564
  %v1566 = vsel %vm843, %v1458, 0.0
  %1567 = vadd.xlane.f32.xlu0 %v1566
  %v1568 = vpop.xlane.xlu0 %1567
  %v1569 = vsel %vm843, %v1459, 0.0
  %1570 = vadd.xlane.f32.xlu0 %v1569
  %v1571 = vpop.xlane.xlu0 %1570
  %v1572 = vsel %vm843, %v1460, 0.0
  %1573 = vadd.xlane.f32.xlu0 %v1572
  %v1574 = vpop.xlane.xlu0 %1573
  %v1575 = vsel %vm843, %v1461, 0.0
  %1576 = vadd.xlane.f32.xlu0 %v1575
  %v1577 = vpop.xlane.xlu0 %1576
  %v1578 = vsel %vm843, %v1462, 0.0
  %1579 = vadd.xlane.f32.xlu0 %v1578
  %v1580 = vpop.xlane.xlu0 %1579
  %v1581 = vsel %vm843, %v1463, 0.0
  %1582 = vadd.xlane.f32.xlu0 %v1581
  %v1583 = vpop.xlane.xlu0 %1582
  %v1584 = vsel %vm843, %v1464, 0.0
  %1585 = vadd.xlane.f32.xlu0 %v1584
  %v1586 = vpop.xlane.xlu0 %1585
  %v1587 = vsel %vm843, %v1465, 0.0
  %1588 = vadd.xlane.f32.xlu0 %v1587
  %v1589 = vpop.xlane.xlu0 %1588
  %v1590 = vsel %vm843, %v1466, 0.0
  %1591 = vadd.xlane.f32.xlu0 %v1590
  %v1592 = vpop.xlane.xlu0 %1591
  %v1593 = vsel %vm843, %v1467, 0.0
  %1594 = vadd.xlane.f32.xlu0 %v1593
  %v1595 = vpop.xlane.xlu0 %1594
  %v1596 = vsel %vm843, %v1468, 0.0
  %1597 = vadd.xlane.f32.xlu0 %v1596
  %v1598 = vpop.xlane.xlu0 %1597
  %v1599 = vsel %vm843, %v1469, 0.0
  %1600 = vadd.xlane.f32.xlu0 %v1599
  %v1601 = vpop.xlane.xlu0 %1600
  %v1602 = vsel %vm843, %v1470, 0.0
  %1603 = vadd.xlane.f32.xlu0 %v1602
  %v1604 = vpop.xlane.xlu0 %1603
  %v1605 = vsel %vm843, %v1471, 0.0
  %1606 = vadd.xlane.f32.xlu0 %v1605
  %v1607 = vpop.xlane.xlu0 %1606
  %v1608 = vsel %vm843, %v1472, 0.0
  %1609 = vadd.xlane.f32.xlu0 %v1608
  %v1610 = vpop.xlane.xlu0 %1609
  %v1611 = vsel %vm843, %v1473, 0.0
  %1612 = vadd.xlane.f32.xlu0 %v1611
  %v1613 = vpop.xlane.xlu0 %1612
  %v1614 = vsel %vm843, %v1474, 0.0
  %1615 = vadd.xlane.f32.xlu0 %v1614
  %v1616 = vpop.xlane.xlu0 %1615
  %v1617 = vsel %vm843, %v1475, 0.0
  %1618 = vadd.xlane.f32.xlu0 %v1617
  %v1619 = vpop.xlane.xlu0 %1618
  %v1620 = vsel %vm843, %v1476, 0.0
  %1621 = vadd.xlane.f32.xlu0 %v1620
  %v1622 = vpop.xlane.xlu0 %1621
  %v1623 = vsel %vm843, %v1477, 0.0
  %1624 = vadd.xlane.f32.xlu0 %v1623
  %v1625 = vpop.xlane.xlu0 %1624
  %v1626 = vsel %vm843, %v1478, 0.0
  %1627 = vadd.xlane.f32.xlu0 %v1626
  %v1628 = vpop.xlane.xlu0 %1627
  %v1629 = vsel %vm843, %v1479, 0.0
  %1630 = vadd.xlane.f32.xlu0 %v1629
  %v1631 = vpop.xlane.xlu0 %1630
  %v1632 = vsel %vm843, %v1480, 0.0
  %1633 = vadd.xlane.f32.xlu0 %v1632
  %v1634 = vpop.xlane.xlu0 %1633
  %v1635 = vsel %vm843, %v1481, 0.0
  %1636 = vadd.xlane.f32.xlu0 %v1635
  %v1637 = vpop.xlane.xlu0 %1636
  %v1638 = vsel %vm843, %v1482, 0.0
  %1639 = vadd.xlane.f32.xlu0 %v1638
  %v1640 = vpop.xlane.xlu0 %1639
  %v1641 = vsel %vm843, %v1483, 0.0
  %1642 = vadd.xlane.f32.xlu0 %v1641
  %v1643 = vpop.xlane.xlu0 %1642
  %v1644 = vsel %vm843, %v1484, 0.0
  %1645 = vadd.xlane.f32.xlu0 %v1644
  %v1646 = vpop.xlane.xlu0 %1645
  %v1647 = vsel %vm843, %v1485, 0.0
  %1648 = vadd.xlane.f32.xlu0 %v1647
  %v1649 = vpop.xlane.xlu0 %1648
  %v1650 = vsel %vm843, %v1486, 0.0
  %1651 = vadd.xlane.f32.xlu0 %v1650
  %v1652 = vpop.xlane.xlu0 %1651
  %v1653 = vsel %vm843, %v1487, 0.0
  %1654 = vadd.xlane.f32.xlu0 %v1653
  %v1655 = vpop.xlane.xlu0 %1654
  %v1656 = vsel %vm843, %v1488, 0.0
  %1657 = vadd.xlane.f32.xlu0 %v1656
  %v1658 = vpop.xlane.xlu0 %1657
  %v1659 = vsel %vm843, %v1489, 0.0
  %1660 = vadd.xlane.f32.xlu0 %v1659
  %v1661 = vpop.xlane.xlu0 %1660
  %v1662 = vsel %vm843, %v1490, 0.0
  %1663 = vadd.xlane.f32.xlu0 %v1662
  %v1664 = vpop.xlane.xlu0 %1663
  %v1665 = vsel %vm843, %v1491, 0.0
  %1666 = vadd.xlane.f32.xlu0 %v1665
  %v1667 = vpop.xlane.xlu0 %1666
  %v1668 = vsel %vm843, %v1492, 0.0
  %1669 = vadd.xlane.f32.xlu0 %v1668
  %v1670 = vpop.xlane.xlu0 %1669
  %v1671 = vsel %vm843, %v1493, 0.0
  %1672 = vadd.xlane.f32.xlu0 %v1671
  %v1673 = vpop.xlane.xlu0 %1672
  %v1674 = vsel %vm843, %v1494, 0.0
  %1675 = vadd.xlane.f32.xlu0 %v1674
  %v1676 = vpop.xlane.xlu0 %1675
  %v1677 = vsel %vm843, %v1495, 0.0
  %1678 = vadd.xlane.f32.xlu0 %v1677
  %v1679 = vpop.xlane.xlu0 %1678
  %v1680 = vsel %vm843, %v1496, 0.0
  %1681 = vadd.xlane.f32.xlu0 %v1680
  %v1682 = vpop.xlane.xlu0 %1681
  %v1683 = vsel %vm843, %v1497, 0.0
  %1684 = vadd.xlane.f32.xlu0 %v1683
  %v1685 = vpop.xlane.xlu0 %1684
  %v1686 = vsel %vm843, %v1498, 0.0
  %1687 = vadd.xlane.f32.xlu0 %v1686
  %v1688 = vpop.xlane.xlu0 %1687
  %v1689 = vsel %vm843, %v1499, 0.0
  %1690 = vadd.xlane.f32.xlu0 %v1689
  %v1691 = vpop.xlane.xlu0 %1690
  %1693 = vrot.lane.b32.xlu0 %v1435, 112
  %v1694 = vpop.permute.xlu0 %1693
  %v1696 = vmul.f32 %v710, %v1694
  %v1697 = vmul.f32 %v711, %v1694
  %v1698 = vmul.f32 %v712, %v1694
  %v1699 = vmul.f32 %v713, %v1694
  %v1700 = vmul.f32 %v714, %v1694
  %v1701 = vmul.f32 %v715, %v1694
  %v1702 = vmul.f32 %v716, %v1694
  %v1703 = vmul.f32 %v717, %v1694
  %v1704 = vmul.f32 %v718, %v1694
  %v1705 = vmul.f32 %v719, %v1694
  %v1706 = vmul.f32 %v720, %v1694
  %v1707 = vmul.f32 %v721, %v1694
  %v1708 = vmul.f32 %v722, %v1694
  %v1709 = vmul.f32 %v723, %v1694
  %v1710 = vmul.f32 %v724, %v1694
  %v1711 = vmul.f32 %v725, %v1694
  %v1712 = vmul.f32 %v726, %v1694
  %v1713 = vmul.f32 %v727, %v1694
  %v1714 = vmul.f32 %v728, %v1694
  %v1715 = vmul.f32 %v729, %v1694
  %v1716 = vmul.f32 %v730, %v1694
  %v1717 = vmul.f32 %v731, %v1694
  %v1718 = vmul.f32 %v732, %v1694
  %v1719 = vmul.f32 %v733, %v1694
  %v1720 = vmul.f32 %v734, %v1694
  %v1721 = vmul.f32 %v735, %v1694
  %v1722 = vmul.f32 %v736, %v1694
  %v1723 = vmul.f32 %v737, %v1694
  %v1724 = vmul.f32 %v738, %v1694
  %v1725 = vmul.f32 %v739, %v1694
  %v1726 = vmul.f32 %v740, %v1694
  %v1727 = vmul.f32 %v741, %v1694
  %v1728 = vmul.f32 %v742, %v1694
  %v1729 = vmul.f32 %v743, %v1694
  %v1730 = vmul.f32 %v744, %v1694
  %v1731 = vmul.f32 %v745, %v1694
  %v1732 = vmul.f32 %v746, %v1694
  %v1733 = vmul.f32 %v747, %v1694
  %v1734 = vmul.f32 %v748, %v1694
  %v1735 = vmul.f32 %v749, %v1694
  %v1736 = vmul.f32 %v750, %v1694
  %v1737 = vmul.f32 %v751, %v1694
  %v1738 = vmul.f32 %v752, %v1694
  %v1739 = vmul.f32 %v753, %v1694
  %v1740 = vmul.f32 %v754, %v1694
  %v1741 = vmul.f32 %v755, %v1694
  %v1742 = vmul.f32 %v756, %v1694
  %v1743 = vmul.f32 %v757, %v1694
  %v1744 = vmul.f32 %v758, %v1694
  %v1745 = vmul.f32 %v759, %v1694
  %v1746 = vmul.f32 %v760, %v1694
  %v1747 = vmul.f32 %v761, %v1694
  %v1748 = vmul.f32 %v762, %v1694
  %v1749 = vmul.f32 %v763, %v1694
  %v1750 = vmul.f32 %v764, %v1694
  %v1751 = vmul.f32 %v765, %v1694
  %v1752 = vmul.f32 %v766, %v1694
  %v1753 = vmul.f32 %v767, %v1694
  %v1754 = vmul.f32 %v768, %v1694
  %v1755 = vmul.f32 %v769, %v1694
  %v1756 = vmul.f32 %v770, %v1694
  %v1757 = vmul.f32 %v771, %v1694
  %v1758 = vmul.f32 %v772, %v1694
  %v1759 = vmul.f32 %v773, %v1694
  %v1760 = vsel %vm843, %v1696, 0.0
  %1761 = vadd.xlane.f32.xlu0 %v1760
  %v1762 = vpop.xlane.xlu0 %1761
  %v1763 = vsel %vm843, %v1697, 0.0
  %1764 = vadd.xlane.f32.xlu0 %v1763
  %v1765 = vpop.xlane.xlu0 %1764
  %v1766 = vsel %vm843, %v1698, 0.0
  %1767 = vadd.xlane.f32.xlu0 %v1766
  %v1768 = vpop.xlane.xlu0 %1767
  %v1769 = vsel %vm843, %v1699, 0.0
  %1770 = vadd.xlane.f32.xlu0 %v1769
  %v1771 = vpop.xlane.xlu0 %1770
  %v1772 = vsel %vm843, %v1700, 0.0
  %1773 = vadd.xlane.f32.xlu0 %v1772
  %v1774 = vpop.xlane.xlu0 %1773
  %v1775 = vsel %vm843, %v1701, 0.0
  %1776 = vadd.xlane.f32.xlu0 %v1775
  %v1777 = vpop.xlane.xlu0 %1776
  %v1778 = vsel %vm843, %v1702, 0.0
  %1779 = vadd.xlane.f32.xlu0 %v1778
  %v1780 = vpop.xlane.xlu0 %1779
  %v1781 = vsel %vm843, %v1703, 0.0
  %1782 = vadd.xlane.f32.xlu0 %v1781
  %v1783 = vpop.xlane.xlu0 %1782
  %v1784 = vsel %vm843, %v1704, 0.0
  %1785 = vadd.xlane.f32.xlu0 %v1784
  %v1786 = vpop.xlane.xlu0 %1785
  %v1787 = vsel %vm843, %v1705, 0.0
  %1788 = vadd.xlane.f32.xlu0 %v1787
  %v1789 = vpop.xlane.xlu0 %1788
  %v1790 = vsel %vm843, %v1706, 0.0
  %1791 = vadd.xlane.f32.xlu0 %v1790
  %v1792 = vpop.xlane.xlu0 %1791
  %v1793 = vsel %vm843, %v1707, 0.0
  %1794 = vadd.xlane.f32.xlu0 %v1793
  %v1795 = vpop.xlane.xlu0 %1794
  %v1796 = vsel %vm843, %v1708, 0.0
  %1797 = vadd.xlane.f32.xlu0 %v1796
  %v1798 = vpop.xlane.xlu0 %1797
  %v1799 = vsel %vm843, %v1709, 0.0
  %1800 = vadd.xlane.f32.xlu0 %v1799
  %v1801 = vpop.xlane.xlu0 %1800
  %v1802 = vsel %vm843, %v1710, 0.0
  %1803 = vadd.xlane.f32.xlu0 %v1802
  %v1804 = vpop.xlane.xlu0 %1803
  %v1805 = vsel %vm843, %v1711, 0.0
  %1806 = vadd.xlane.f32.xlu0 %v1805
  %v1807 = vpop.xlane.xlu0 %1806
  %v1808 = vsel %vm843, %v1712, 0.0
  %1809 = vadd.xlane.f32.xlu0 %v1808
  %v1810 = vpop.xlane.xlu0 %1809
  %v1811 = vsel %vm843, %v1713, 0.0
  %1812 = vadd.xlane.f32.xlu0 %v1811
  %v1813 = vpop.xlane.xlu0 %1812
  %v1814 = vsel %vm843, %v1714, 0.0
  %1815 = vadd.xlane.f32.xlu0 %v1814
  %v1816 = vpop.xlane.xlu0 %1815
  %v1817 = vsel %vm843, %v1715, 0.0
  %1818 = vadd.xlane.f32.xlu0 %v1817
  %v1819 = vpop.xlane.xlu0 %1818
  %v1820 = vsel %vm843, %v1716, 0.0
  %1821 = vadd.xlane.f32.xlu0 %v1820
  %v1822 = vpop.xlane.xlu0 %1821
  %v1823 = vsel %vm843, %v1717, 0.0
  %1824 = vadd.xlane.f32.xlu0 %v1823
  %v1825 = vpop.xlane.xlu0 %1824
  %v1826 = vsel %vm843, %v1718, 0.0
  %1827 = vadd.xlane.f32.xlu0 %v1826
  %v1828 = vpop.xlane.xlu0 %1827
  %v1829 = vsel %vm843, %v1719, 0.0
  %1830 = vadd.xlane.f32.xlu0 %v1829
  %v1831 = vpop.xlane.xlu0 %1830
  %v1832 = vsel %vm843, %v1720, 0.0
  %1833 = vadd.xlane.f32.xlu0 %v1832
  %v1834 = vpop.xlane.xlu0 %1833
  %v1835 = vsel %vm843, %v1721, 0.0
  %1836 = vadd.xlane.f32.xlu0 %v1835
  %v1837 = vpop.xlane.xlu0 %1836
  %v1838 = vsel %vm843, %v1722, 0.0
  %1839 = vadd.xlane.f32.xlu0 %v1838
  %v1840 = vpop.xlane.xlu0 %1839
  %v1841 = vsel %vm843, %v1723, 0.0
  %1842 = vadd.xlane.f32.xlu0 %v1841
  %v1843 = vpop.xlane.xlu0 %1842
  %v1844 = vsel %vm843, %v1724, 0.0
  %1845 = vadd.xlane.f32.xlu0 %v1844
  %v1846 = vpop.xlane.xlu0 %1845
  %v1847 = vsel %vm843, %v1725, 0.0
  %1848 = vadd.xlane.f32.xlu0 %v1847
  %v1849 = vpop.xlane.xlu0 %1848
  %v1850 = vsel %vm843, %v1726, 0.0
  %1851 = vadd.xlane.f32.xlu0 %v1850
  %v1852 = vpop.xlane.xlu0 %1851
  %v1853 = vsel %vm843, %v1727, 0.0
  %1854 = vadd.xlane.f32.xlu0 %v1853
  %v1855 = vpop.xlane.xlu0 %1854
  %v1856 = vsel %vm843, %v1728, 0.0
  %1857 = vadd.xlane.f32.xlu0 %v1856
  %v1858 = vpop.xlane.xlu0 %1857
  %v1859 = vsel %vm843, %v1729, 0.0
  %1860 = vadd.xlane.f32.xlu0 %v1859
  %v1861 = vpop.xlane.xlu0 %1860
  %v1862 = vsel %vm843, %v1730, 0.0
  %1863 = vadd.xlane.f32.xlu0 %v1862
  %v1864 = vpop.xlane.xlu0 %1863
  %v1865 = vsel %vm843, %v1731, 0.0
  %1866 = vadd.xlane.f32.xlu0 %v1865
  %v1867 = vpop.xlane.xlu0 %1866
  %v1868 = vsel %vm843, %v1732, 0.0
  %1869 = vadd.xlane.f32.xlu0 %v1868
  %v1870 = vpop.xlane.xlu0 %1869
  %v1871 = vsel %vm843, %v1733, 0.0
  %1872 = vadd.xlane.f32.xlu0 %v1871
  %v1873 = vpop.xlane.xlu0 %1872
  %v1874 = vsel %vm843, %v1734, 0.0
  %1875 = vadd.xlane.f32.xlu0 %v1874
  %v1876 = vpop.xlane.xlu0 %1875
  %v1877 = vsel %vm843, %v1735, 0.0
  %1878 = vadd.xlane.f32.xlu0 %v1877
  %v1879 = vpop.xlane.xlu0 %1878
  %v1880 = vsel %vm843, %v1736, 0.0
  %1881 = vadd.xlane.f32.xlu0 %v1880
  %v1882 = vpop.xlane.xlu0 %1881
  %v1883 = vsel %vm843, %v1737, 0.0
  %1884 = vadd.xlane.f32.xlu0 %v1883
  %v1885 = vpop.xlane.xlu0 %1884
  %v1886 = vsel %vm843, %v1738, 0.0
  %1887 = vadd.xlane.f32.xlu0 %v1886
  %v1888 = vpop.xlane.xlu0 %1887
  %v1889 = vsel %vm843, %v1739, 0.0
  %1890 = vadd.xlane.f32.xlu0 %v1889
  %v1891 = vpop.xlane.xlu0 %1890
  %v1892 = vsel %vm843, %v1740, 0.0
  %1893 = vadd.xlane.f32.xlu0 %v1892
  %v1894 = vpop.xlane.xlu0 %1893
  %v1895 = vsel %vm843, %v1741, 0.0
  %1896 = vadd.xlane.f32.xlu0 %v1895
  %v1897 = vpop.xlane.xlu0 %1896
  %v1898 = vsel %vm843, %v1742, 0.0
  %1899 = vadd.xlane.f32.xlu0 %v1898
  %v1900 = vpop.xlane.xlu0 %1899
  %v1901 = vsel %vm843, %v1743, 0.0
  %1902 = vadd.xlane.f32.xlu0 %v1901
  %v1903 = vpop.xlane.xlu0 %1902
  %v1904 = vsel %vm843, %v1744, 0.0
  %1905 = vadd.xlane.f32.xlu0 %v1904
  %v1906 = vpop.xlane.xlu0 %1905
  %v1907 = vsel %vm843, %v1745, 0.0
  %1908 = vadd.xlane.f32.xlu0 %v1907
  %v1909 = vpop.xlane.xlu0 %1908
  %v1910 = vsel %vm843, %v1746, 0.0
  %1911 = vadd.xlane.f32.xlu0 %v1910
  %v1912 = vpop.xlane.xlu0 %1911
  %v1913 = vsel %vm843, %v1747, 0.0
  %1914 = vadd.xlane.f32.xlu0 %v1913
  %v1915 = vpop.xlane.xlu0 %1914
  %v1916 = vsel %vm843, %v1748, 0.0
  %1917 = vadd.xlane.f32.xlu0 %v1916
  %v1918 = vpop.xlane.xlu0 %1917
  %v1919 = vsel %vm843, %v1749, 0.0
  %1920 = vadd.xlane.f32.xlu0 %v1919
  %v1921 = vpop.xlane.xlu0 %1920
  %v1922 = vsel %vm843, %v1750, 0.0
  %1923 = vadd.xlane.f32.xlu0 %v1922
  %v1924 = vpop.xlane.xlu0 %1923
  %v1925 = vsel %vm843, %v1751, 0.0
  %1926 = vadd.xlane.f32.xlu0 %v1925
  %v1927 = vpop.xlane.xlu0 %1926
  %v1928 = vsel %vm843, %v1752, 0.0
  %1929 = vadd.xlane.f32.xlu0 %v1928
  %v1930 = vpop.xlane.xlu0 %1929
  %v1931 = vsel %vm843, %v1753, 0.0
  %1932 = vadd.xlane.f32.xlu0 %v1931
  %v1933 = vpop.xlane.xlu0 %1932
  %v1934 = vsel %vm843, %v1754, 0.0
  %1935 = vadd.xlane.f32.xlu0 %v1934
  %v1936 = vpop.xlane.xlu0 %1935
  %v1937 = vsel %vm843, %v1755, 0.0
  %1938 = vadd.xlane.f32.xlu0 %v1937
  %v1939 = vpop.xlane.xlu0 %1938
  %v1940 = vsel %vm843, %v1756, 0.0
  %1941 = vadd.xlane.f32.xlu0 %v1940
  %v1942 = vpop.xlane.xlu0 %1941
  %v1943 = vsel %vm843, %v1757, 0.0
  %1944 = vadd.xlane.f32.xlu0 %v1943
  %v1945 = vpop.xlane.xlu0 %1944
  %v1946 = vsel %vm843, %v1758, 0.0
  %1947 = vadd.xlane.f32.xlu0 %v1946
  %v1948 = vpop.xlane.xlu0 %1947
  %v1949 = vsel %vm843, %v1759, 0.0
  %1950 = vadd.xlane.f32.xlu0 %v1949
  %v1951 = vpop.xlane.xlu0 %1950
  %v1952 = vadd.f32 %v1502, %v1762
  %v1953 = vadd.f32 %v1505, %v1765
  %v1954 = vadd.f32 %v1508, %v1768
  %v1955 = vadd.f32 %v1511, %v1771
  %v1956 = vadd.f32 %v1514, %v1774
  %v1957 = vadd.f32 %v1517, %v1777
  %v1958 = vadd.f32 %v1520, %v1780
  %v1959 = vadd.f32 %v1523, %v1783
  %v1960 = vadd.f32 %v1526, %v1786
  %v1961 = vadd.f32 %v1529, %v1789
  %v1962 = vadd.f32 %v1532, %v1792
  %v1963 = vadd.f32 %v1535, %v1795
  %v1964 = vadd.f32 %v1538, %v1798
  %v1965 = vadd.f32 %v1541, %v1801
  %v1966 = vadd.f32 %v1544, %v1804
  %v1967 = vadd.f32 %v1547, %v1807
  %v1968 = vadd.f32 %v1550, %v1810
  %v1969 = vadd.f32 %v1553, %v1813
  %v1970 = vadd.f32 %v1556, %v1816
  %v1971 = vadd.f32 %v1559, %v1819
  %v1972 = vadd.f32 %v1562, %v1822
  %v1973 = vadd.f32 %v1565, %v1825
  %v1974 = vadd.f32 %v1568, %v1828
  %v1975 = vadd.f32 %v1571, %v1831
  %v1976 = vadd.f32 %v1574, %v1834
  %v1977 = vadd.f32 %v1577, %v1837
  %v1978 = vadd.f32 %v1580, %v1840
  %v1979 = vadd.f32 %v1583, %v1843
  %v1980 = vadd.f32 %v1586, %v1846
  %v1981 = vadd.f32 %v1589, %v1849
  %v1982 = vadd.f32 %v1592, %v1852
  %v1983 = vadd.f32 %v1595, %v1855
  %v1984 = vadd.f32 %v1598, %v1858
  %v1985 = vadd.f32 %v1601, %v1861
  %v1986 = vadd.f32 %v1604, %v1864
  %v1987 = vadd.f32 %v1607, %v1867
  %v1988 = vadd.f32 %v1610, %v1870
  %v1989 = vadd.f32 %v1613, %v1873
  %v1990 = vadd.f32 %v1616, %v1876
  %v1991 = vadd.f32 %v1619, %v1879
  %v1992 = vadd.f32 %v1622, %v1882
  %v1993 = vadd.f32 %v1625, %v1885
  %v1994 = vadd.f32 %v1628, %v1888
  %v1995 = vadd.f32 %v1631, %v1891
  %v1996 = vadd.f32 %v1634, %v1894
  %v1997 = vadd.f32 %v1637, %v1897
  %v1998 = vadd.f32 %v1640, %v1900
  %v1999 = vadd.f32 %v1643, %v1903
  %v2000 = vadd.f32 %v1646, %v1906
  %v2001 = vadd.f32 %v1649, %v1909
  %v2002 = vadd.f32 %v1652, %v1912
  %v2003 = vadd.f32 %v1655, %v1915
  %v2004 = vadd.f32 %v1658, %v1918
  %v2005 = vadd.f32 %v1661, %v1921
  %v2006 = vadd.f32 %v1664, %v1924
  %v2007 = vadd.f32 %v1667, %v1927
  %v2008 = vadd.f32 %v1670, %v1930
  %v2009 = vadd.f32 %v1673, %v1933
  %v2010 = vadd.f32 %v1676, %v1936
  %v2011 = vadd.f32 %v1679, %v1939
  %v2012 = vadd.f32 %v1682, %v1942
  %v2013 = vadd.f32 %v1685, %v1945
  %v2014 = vadd.f32 %v1688, %v1948
  %v2015 = vadd.f32 %v1691, %v1951
  %v2016 = vadd.f32 %v1952, %v1365
  %v2017 = vadd.f32 %v1953, %v1365
  %v2018 = vadd.f32 %v1954, %v1365
  %v2019 = vadd.f32 %v1955, %v1365
  %v2020 = vadd.f32 %v1956, %v1365
  %v2021 = vadd.f32 %v1957, %v1365
  %v2022 = vadd.f32 %v1958, %v1365
  %v2023 = vadd.f32 %v1959, %v1365
  %v2024 = vadd.f32 %v1960, %v1365
  %v2025 = vadd.f32 %v1961, %v1365
  %v2026 = vadd.f32 %v1962, %v1365
  %v2027 = vadd.f32 %v1963, %v1365
  %v2028 = vadd.f32 %v1964, %v1365
  %v2029 = vadd.f32 %v1965, %v1365
  %v2030 = vadd.f32 %v1966, %v1365
  %v2031 = vadd.f32 %v1967, %v1365
  %v2032 = vadd.f32 %v1968, %v1365
  %v2033 = vadd.f32 %v1969, %v1365
  %v2034 = vadd.f32 %v1970, %v1365
  %v2035 = vadd.f32 %v1971, %v1365
  %v2036 = vadd.f32 %v1972, %v1365
  %v2037 = vadd.f32 %v1973, %v1365
  %v2038 = vadd.f32 %v1974, %v1365
  %v2039 = vadd.f32 %v1975, %v1365
  %v2040 = vadd.f32 %v1976, %v1365
  %v2041 = vadd.f32 %v1977, %v1365
  %v2042 = vadd.f32 %v1978, %v1365
  %v2043 = vadd.f32 %v1979, %v1365
  %v2044 = vadd.f32 %v1980, %v1365
  %v2045 = vadd.f32 %v1981, %v1365
  %v2046 = vadd.f32 %v1982, %v1365
  %v2047 = vadd.f32 %v1983, %v1365
  %v2048 = vadd.f32 %v1984, %v1365
  %v2049 = vadd.f32 %v1985, %v1365
  %v2050 = vadd.f32 %v1986, %v1365
  %v2051 = vadd.f32 %v1987, %v1365
  %v2052 = vadd.f32 %v1988, %v1365
  %v2053 = vadd.f32 %v1989, %v1365
  %v2054 = vadd.f32 %v1990, %v1365
  %v2055 = vadd.f32 %v1991, %v1365
  %v2056 = vadd.f32 %v1992, %v1365
  %v2057 = vadd.f32 %v1993, %v1365
  %v2058 = vadd.f32 %v1994, %v1365
  %v2059 = vadd.f32 %v1995, %v1365
  %v2060 = vadd.f32 %v1996, %v1365
  %v2061 = vadd.f32 %v1997, %v1365
  %v2062 = vadd.f32 %v1998, %v1365
  %v2063 = vadd.f32 %v1999, %v1365
  %v2064 = vadd.f32 %v2000, %v1365
  %v2065 = vadd.f32 %v2001, %v1365
  %v2066 = vadd.f32 %v2002, %v1365
  %v2067 = vadd.f32 %v2003, %v1365
  %v2068 = vadd.f32 %v2004, %v1365
  %v2069 = vadd.f32 %v2005, %v1365
  %v2070 = vadd.f32 %v2006, %v1365
  %v2071 = vadd.f32 %v2007, %v1365
  %v2072 = vadd.f32 %v2008, %v1365
  %v2073 = vadd.f32 %v2009, %v1365
  %v2074 = vadd.f32 %v2010, %v1365
  %v2075 = vadd.f32 %v2011, %v1365
  %v2076 = vadd.f32 %v2012, %v1365
  %v2077 = vadd.f32 %v2013, %v1365
  %v2078 = vadd.f32 %v2014, %v1365
  %v2079 = vadd.f32 %v2015, %v1365
  %v2080 = vxor.u32 %v1367, 2147483648
  %v2081 = vxor.u32 %v1368, 2147483648
  %v2082 = vxor.u32 %v1369, 2147483648
  %v2083 = vxor.u32 %v1370, 2147483648
  %v2084 = vxor.u32 %v1371, 2147483648
  %v2085 = vxor.u32 %v1372, 2147483648
  %v2086 = vxor.u32 %v1373, 2147483648
  %v2087 = vxor.u32 %v1374, 2147483648
  %v2088 = vxor.u32 %v1375, 2147483648
  %v2089 = vxor.u32 %v1376, 2147483648
  %v2090 = vxor.u32 %v1377, 2147483648
  %v2091 = vxor.u32 %v1378, 2147483648
  %v2092 = vxor.u32 %v1379, 2147483648
  %v2093 = vxor.u32 %v1380, 2147483648
  %v2094 = vxor.u32 %v1381, 2147483648
  %v2095 = vxor.u32 %v1382, 2147483648
  %v2096 = vxor.u32 %v1383, 2147483648
  %v2097 = vxor.u32 %v1384, 2147483648
  %v2098 = vxor.u32 %v1385, 2147483648
  %v2099 = vxor.u32 %v1386, 2147483648
  %v2100 = vxor.u32 %v1387, 2147483648
  %v2101 = vxor.u32 %v1388, 2147483648
  %v2102 = vxor.u32 %v1389, 2147483648
  %v2103 = vxor.u32 %v1390, 2147483648
  %v2104 = vxor.u32 %v1391, 2147483648
  %v2105 = vxor.u32 %v1392, 2147483648
  %v2106 = vxor.u32 %v1393, 2147483648
  %v2107 = vxor.u32 %v1394, 2147483648
  %v2108 = vxor.u32 %v1395, 2147483648
  %v2109 = vxor.u32 %v1396, 2147483648
  %v2110 = vxor.u32 %v1397, 2147483648
  %v2111 = vxor.u32 %v1398, 2147483648
  %v2112 = vxor.u32 %v1399, 2147483648
  %v2113 = vxor.u32 %v1400, 2147483648
  %v2114 = vxor.u32 %v1401, 2147483648
  %v2115 = vxor.u32 %v1402, 2147483648
  %v2116 = vxor.u32 %v1403, 2147483648
  %v2117 = vxor.u32 %v1404, 2147483648
  %v2118 = vxor.u32 %v1405, 2147483648
  %v2119 = vxor.u32 %v1406, 2147483648
  %v2120 = vxor.u32 %v1407, 2147483648
  %v2121 = vxor.u32 %v1408, 2147483648
  %v2122 = vxor.u32 %v1409, 2147483648
  %v2123 = vxor.u32 %v1410, 2147483648
  %v2124 = vxor.u32 %v1411, 2147483648
  %v2125 = vxor.u32 %v1412, 2147483648
  %v2126 = vxor.u32 %v1413, 2147483648
  %v2127 = vxor.u32 %v1414, 2147483648
  %v2128 = vxor.u32 %v1415, 2147483648
  %v2129 = vxor.u32 %v1416, 2147483648
  %v2130 = vxor.u32 %v1417, 2147483648
  %v2131 = vxor.u32 %v1418, 2147483648
  %v2132 = vxor.u32 %v1419, 2147483648
  %v2133 = vxor.u32 %v1420, 2147483648
  %v2134 = vxor.u32 %v1421, 2147483648
  %v2135 = vxor.u32 %v1422, 2147483648
  %v2136 = vxor.u32 %v1423, 2147483648
  %v2137 = vxor.u32 %v1424, 2147483648
  %v2138 = vxor.u32 %v1425, 2147483648
  %v2139 = vxor.u32 %v1426, 2147483648
  %v2140 = vxor.u32 %v1427, 2147483648
  %v2141 = vxor.u32 %v1428, 2147483648
  %v2142 = vxor.u32 %v1429, 2147483648
  %v2143 = vxor.u32 %v1430, 2147483648
  %v2144 = vmul.f32 %v2080, 1.442695
  %v2145 = vpow.pop %v2144
  %v2146 = vmul.f32 %v2081, 1.442695
  %v2147 = vpow.pop %v2146
  %v2148 = vmul.f32 %v2082, 1.442695
  %v2149 = vpow.pop %v2148
  %v2150 = vmul.f32 %v2083, 1.442695
  %v2151 = vpow.pop %v2150
  %v2152 = vmul.f32 %v2084, 1.442695
  %v2153 = vpow.pop %v2152
  %v2154 = vmul.f32 %v2085, 1.442695
  %v2155 = vpow.pop %v2154
  %v2156 = vmul.f32 %v2086, 1.442695
  %v2157 = vpow.pop %v2156
  %v2158 = vmul.f32 %v2087, 1.442695
  %v2159 = vpow.pop %v2158
  %v2160 = vmul.f32 %v2088, 1.442695
  %v2161 = vpow.pop %v2160
  %v2162 = vmul.f32 %v2089, 1.442695
  %v2163 = vpow.pop %v2162
  %v2164 = vmul.f32 %v2090, 1.442695
  %v2165 = vpow.pop %v2164
  %v2166 = vmul.f32 %v2091, 1.442695
  %v2167 = vpow.pop %v2166
  %v2168 = vmul.f32 %v2092, 1.442695
  %v2169 = vpow.pop %v2168
  %v2170 = vmul.f32 %v2093, 1.442695
  %v2171 = vpow.pop %v2170
  %v2172 = vmul.f32 %v2094, 1.442695
  %v2173 = vpow.pop %v2172
  %v2174 = vmul.f32 %v2095, 1.442695
  %v2175 = vpow.pop %v2174
  %v2176 = vmul.f32 %v2096, 1.442695
  %v2177 = vpow.pop %v2176
  %v2178 = vmul.f32 %v2097, 1.442695
  %v2179 = vpow.pop %v2178
  %v2180 = vmul.f32 %v2098, 1.442695
  %v2181 = vpow.pop %v2180
  %v2182 = vmul.f32 %v2099, 1.442695
  %v2183 = vpow.pop %v2182
  %v2184 = vmul.f32 %v2100, 1.442695
  %v2185 = vpow.pop %v2184
  %v2186 = vmul.f32 %v2101, 1.442695
  %v2187 = vpow.pop %v2186
  %v2188 = vmul.f32 %v2102, 1.442695
  %v2189 = vpow.pop %v2188
  %v2190 = vmul.f32 %v2103, 1.442695
  %v2191 = vpow.pop %v2190
  %v2192 = vmul.f32 %v2104, 1.442695
  %v2193 = vpow.pop %v2192
  %v2194 = vmul.f32 %v2105, 1.442695
  %v2195 = vpow.pop %v2194
  %v2196 = vmul.f32 %v2106, 1.442695
  %v2197 = vpow.pop %v2196
  %v2198 = vmul.f32 %v2107, 1.442695
  %v2199 = vpow.pop %v2198
  %v2200 = vmul.f32 %v2108, 1.442695
  %v2201 = vpow.pop %v2200
  %v2202 = vmul.f32 %v2109, 1.442695
  %v2203 = vpow.pop %v2202
  %v2204 = vmul.f32 %v2110, 1.442695
  %v2205 = vpow.pop %v2204
  %v2206 = vmul.f32 %v2111, 1.442695
  %v2207 = vpow.pop %v2206
  %v2208 = vmul.f32 %v2112, 1.442695
  %v2209 = vpow.pop %v2208
  %v2210 = vmul.f32 %v2113, 1.442695
  %v2211 = vpow.pop %v2210
  %v2212 = vmul.f32 %v2114, 1.442695
  %v2213 = vpow.pop %v2212
  %v2214 = vmul.f32 %v2115, 1.442695
  %v2215 = vpow.pop %v2214
  %v2216 = vmul.f32 %v2116, 1.442695
  %v2217 = vpow.pop %v2216
  %v2218 = vmul.f32 %v2117, 1.442695
  %v2219 = vpow.pop %v2218
  %v2220 = vmul.f32 %v2118, 1.442695
  %v2221 = vpow.pop %v2220
  %v2222 = vmul.f32 %v2119, 1.442695
  %v2223 = vpow.pop %v2222
  %v2224 = vmul.f32 %v2120, 1.442695
  %v2225 = vpow.pop %v2224
  %v2226 = vmul.f32 %v2121, 1.442695
  %v2227 = vpow.pop %v2226
  %v2228 = vmul.f32 %v2122, 1.442695
  %v2229 = vpow.pop %v2228
  %v2230 = vmul.f32 %v2123, 1.442695
  %v2231 = vpow.pop %v2230
  %v2232 = vmul.f32 %v2124, 1.442695
  %v2233 = vpow.pop %v2232
  %v2234 = vmul.f32 %v2125, 1.442695
  %v2235 = vpow.pop %v2234
  %v2236 = vmul.f32 %v2126, 1.442695
  %v2237 = vpow.pop %v2236
  %v2238 = vmul.f32 %v2127, 1.442695
  %v2239 = vpow.pop %v2238
  %v2240 = vmul.f32 %v2128, 1.442695
  %v2241 = vpow.pop %v2240
  %v2242 = vmul.f32 %v2129, 1.442695
  %v2243 = vpow.pop %v2242
  %v2244 = vmul.f32 %v2130, 1.442695
  %v2245 = vpow.pop %v2244
  %v2246 = vmul.f32 %v2131, 1.442695
  %v2247 = vpow.pop %v2246
  %v2248 = vmul.f32 %v2132, 1.442695
  %v2249 = vpow.pop %v2248
  %v2250 = vmul.f32 %v2133, 1.442695
  %v2251 = vpow.pop %v2250
  %v2252 = vmul.f32 %v2134, 1.442695
  %v2253 = vpow.pop %v2252
  %v2254 = vmul.f32 %v2135, 1.442695
  %v2255 = vpow.pop %v2254
  %v2256 = vmul.f32 %v2136, 1.442695
  %v2257 = vpow.pop %v2256
  %v2258 = vmul.f32 %v2137, 1.442695
  %v2259 = vpow.pop %v2258
  %v2260 = vmul.f32 %v2138, 1.442695
  %v2261 = vpow.pop %v2260
  %v2262 = vmul.f32 %v2139, 1.442695
  %v2263 = vpow.pop %v2262
  %v2264 = vmul.f32 %v2140, 1.442695
  %v2265 = vpow.pop %v2264
  %v2266 = vmul.f32 %v2141, 1.442695
  %v2267 = vpow.pop %v2266
  %v2268 = vmul.f32 %v2142, 1.442695
  %v2269 = vpow.pop %v2268
  %v2270 = vmul.f32 %v2143, 1.442695
  %v2271 = vpow.pop %v2270
  %v2272 = vadd.f32 %v2145, 1.0
  %v2273 = vadd.f32 %v2147, 1.0
  %v2274 = vadd.f32 %v2149, 1.0
  %v2275 = vadd.f32 %v2151, 1.0
  %v2276 = vadd.f32 %v2153, 1.0
  %v2277 = vadd.f32 %v2155, 1.0
  %v2278 = vadd.f32 %v2157, 1.0
  %v2279 = vadd.f32 %v2159, 1.0
  %v2280 = vadd.f32 %v2161, 1.0
  %v2281 = vadd.f32 %v2163, 1.0
  %v2282 = vadd.f32 %v2165, 1.0
  %v2283 = vadd.f32 %v2167, 1.0
  %v2284 = vadd.f32 %v2169, 1.0
  %v2285 = vadd.f32 %v2171, 1.0
  %v2286 = vadd.f32 %v2173, 1.0
  %v2287 = vadd.f32 %v2175, 1.0
  %v2288 = vadd.f32 %v2177, 1.0
  %v2289 = vadd.f32 %v2179, 1.0
  %v2290 = vadd.f32 %v2181, 1.0
  %v2291 = vadd.f32 %v2183, 1.0
  %v2292 = vadd.f32 %v2185, 1.0
  %v2293 = vadd.f32 %v2187, 1.0
  %v2294 = vadd.f32 %v2189, 1.0
  %v2295 = vadd.f32 %v2191, 1.0
  %v2296 = vadd.f32 %v2193, 1.0
  %v2297 = vadd.f32 %v2195, 1.0
  %v2298 = vadd.f32 %v2197, 1.0
  %v2299 = vadd.f32 %v2199, 1.0
  %v2300 = vadd.f32 %v2201, 1.0
  %v2301 = vadd.f32 %v2203, 1.0
  %v2302 = vadd.f32 %v2205, 1.0
  %v2303 = vadd.f32 %v2207, 1.0
  %v2304 = vadd.f32 %v2209, 1.0
  %v2305 = vadd.f32 %v2211, 1.0
  %v2306 = vadd.f32 %v2213, 1.0
  %v2307 = vadd.f32 %v2215, 1.0
  %v2308 = vadd.f32 %v2217, 1.0
  %v2309 = vadd.f32 %v2219, 1.0
  %v2310 = vadd.f32 %v2221, 1.0
  %v2311 = vadd.f32 %v2223, 1.0
  %v2312 = vadd.f32 %v2225, 1.0
  %v2313 = vadd.f32 %v2227, 1.0
  %v2314 = vadd.f32 %v2229, 1.0
  %v2315 = vadd.f32 %v2231, 1.0
  %v2316 = vadd.f32 %v2233, 1.0
  %v2317 = vadd.f32 %v2235, 1.0
  %v2318 = vadd.f32 %v2237, 1.0
  %v2319 = vadd.f32 %v2239, 1.0
  %v2320 = vadd.f32 %v2241, 1.0
  %v2321 = vadd.f32 %v2243, 1.0
  %v2322 = vadd.f32 %v2245, 1.0
  %v2323 = vadd.f32 %v2247, 1.0
  %v2324 = vadd.f32 %v2249, 1.0
  %v2325 = vadd.f32 %v2251, 1.0
  %v2326 = vadd.f32 %v2253, 1.0
  %v2327 = vadd.f32 %v2255, 1.0
  %v2328 = vadd.f32 %v2257, 1.0
  %v2329 = vadd.f32 %v2259, 1.0
  %v2330 = vadd.f32 %v2261, 1.0
  %v2331 = vadd.f32 %v2263, 1.0
  %v2332 = vadd.f32 %v2265, 1.0
  %v2333 = vadd.f32 %v2267, 1.0
  %v2334 = vadd.f32 %v2269, 1.0
  %v2335 = vadd.f32 %v2271, 1.0
  %v2336 = vrcp.pop %v2272
  %v2337 = vmul.f32 1.0, %v2336
  %v2338 = vrcp.pop %v2273
  %v2339 = vmul.f32 1.0, %v2338
  %v2340 = vrcp.pop %v2274
  %v2341 = vmul.f32 1.0, %v2340
  %v2342 = vrcp.pop %v2275
  %v2343 = vmul.f32 1.0, %v2342
  %v2344 = vrcp.pop %v2276
  %v2345 = vmul.f32 1.0, %v2344
  %v2346 = vrcp.pop %v2277
  %v2347 = vmul.f32 1.0, %v2346
  %v2348 = vrcp.pop %v2278
  %v2349 = vmul.f32 1.0, %v2348
  %v2350 = vrcp.pop %v2279
  %v2351 = vmul.f32 1.0, %v2350
  %v2352 = vrcp.pop %v2280
  %v2353 = vmul.f32 1.0, %v2352
  %v2354 = vrcp.pop %v2281
  %v2355 = vmul.f32 1.0, %v2354
  %v2356 = vrcp.pop %v2282
  %v2357 = vmul.f32 1.0, %v2356
  %v2358 = vrcp.pop %v2283
  %v2359 = vmul.f32 1.0, %v2358
  %v2360 = vrcp.pop %v2284
  %v2361 = vmul.f32 1.0, %v2360
  %v2362 = vrcp.pop %v2285
  %v2363 = vmul.f32 1.0, %v2362
  %v2364 = vrcp.pop %v2286
  %v2365 = vmul.f32 1.0, %v2364
  %v2366 = vrcp.pop %v2287
  %v2367 = vmul.f32 1.0, %v2366
  %v2368 = vrcp.pop %v2288
  %v2369 = vmul.f32 1.0, %v2368
  %v2370 = vrcp.pop %v2289
  %v2371 = vmul.f32 1.0, %v2370
  %v2372 = vrcp.pop %v2290
  %v2373 = vmul.f32 1.0, %v2372
  %v2374 = vrcp.pop %v2291
  %v2375 = vmul.f32 1.0, %v2374
  %v2376 = vrcp.pop %v2292
  %v2377 = vmul.f32 1.0, %v2376
  %v2378 = vrcp.pop %v2293
  %v2379 = vmul.f32 1.0, %v2378
  %v2380 = vrcp.pop %v2294
  %v2381 = vmul.f32 1.0, %v2380
  %v2382 = vrcp.pop %v2295
  %v2383 = vmul.f32 1.0, %v2382
  %v2384 = vrcp.pop %v2296
  %v2385 = vmul.f32 1.0, %v2384
  %v2386 = vrcp.pop %v2297
  %v2387 = vmul.f32 1.0, %v2386
  %v2388 = vrcp.pop %v2298
  %v2389 = vmul.f32 1.0, %v2388
  %v2390 = vrcp.pop %v2299
  %v2391 = vmul.f32 1.0, %v2390
  %v2392 = vrcp.pop %v2300
  %v2393 = vmul.f32 1.0, %v2392
  %v2394 = vrcp.pop %v2301
  %v2395 = vmul.f32 1.0, %v2394
  %v2396 = vrcp.pop %v2302
  %v2397 = vmul.f32 1.0, %v2396
  %v2398 = vrcp.pop %v2303
  %v2399 = vmul.f32 1.0, %v2398
  %v2400 = vrcp.pop %v2304
  %v2401 = vmul.f32 1.0, %v2400
  %v2402 = vrcp.pop %v2305
  %v2403 = vmul.f32 1.0, %v2402
  %v2404 = vrcp.pop %v2306
  %v2405 = vmul.f32 1.0, %v2404
  %v2406 = vrcp.pop %v2307
  %v2407 = vmul.f32 1.0, %v2406
  %v2408 = vrcp.pop %v2308
  %v2409 = vmul.f32 1.0, %v2408
  %v2410 = vrcp.pop %v2309
  %v2411 = vmul.f32 1.0, %v2410
  %v2412 = vrcp.pop %v2310
  %v2413 = vmul.f32 1.0, %v2412
  %v2414 = vrcp.pop %v2311
  %v2415 = vmul.f32 1.0, %v2414
  %v2416 = vrcp.pop %v2312
  %v2417 = vmul.f32 1.0, %v2416
  %v2418 = vrcp.pop %v2313
  %v2419 = vmul.f32 1.0, %v2418
  %v2420 = vrcp.pop %v2314
  %v2421 = vmul.f32 1.0, %v2420
  %v2422 = vrcp.pop %v2315
  %v2423 = vmul.f32 1.0, %v2422
  %v2424 = vrcp.pop %v2316
  %v2425 = vmul.f32 1.0, %v2424
  %v2426 = vrcp.pop %v2317
  %v2427 = vmul.f32 1.0, %v2426
  %v2428 = vrcp.pop %v2318
  %v2429 = vmul.f32 1.0, %v2428
  %v2430 = vrcp.pop %v2319
  %v2431 = vmul.f32 1.0, %v2430
  %v2432 = vrcp.pop %v2320
  %v2433 = vmul.f32 1.0, %v2432
  %v2434 = vrcp.pop %v2321
  %v2435 = vmul.f32 1.0, %v2434
  %v2436 = vrcp.pop %v2322
  %v2437 = vmul.f32 1.0, %v2436
  %v2438 = vrcp.pop %v2323
  %v2439 = vmul.f32 1.0, %v2438
  %v2440 = vrcp.pop %v2324
  %v2441 = vmul.f32 1.0, %v2440
  %v2442 = vrcp.pop %v2325
  %v2443 = vmul.f32 1.0, %v2442
  %v2444 = vrcp.pop %v2326
  %v2445 = vmul.f32 1.0, %v2444
  %v2446 = vrcp.pop %v2327
  %v2447 = vmul.f32 1.0, %v2446
  %v2448 = vrcp.pop %v2328
  %v2449 = vmul.f32 1.0, %v2448
  %v2450 = vrcp.pop %v2329
  %v2451 = vmul.f32 1.0, %v2450
  %v2452 = vrcp.pop %v2330
  %v2453 = vmul.f32 1.0, %v2452
  %v2454 = vrcp.pop %v2331
  %v2455 = vmul.f32 1.0, %v2454
  %v2456 = vrcp.pop %v2332
  %v2457 = vmul.f32 1.0, %v2456
  %v2458 = vrcp.pop %v2333
  %v2459 = vmul.f32 1.0, %v2458
  %v2460 = vrcp.pop %v2334
  %v2461 = vmul.f32 1.0, %v2460
  %v2462 = vrcp.pop %v2335
  %v2463 = vmul.f32 1.0, %v2462
  %v2464 = vxor.u32 %v2016, 2147483648
  %v2465 = vxor.u32 %v2017, 2147483648
  %v2466 = vxor.u32 %v2018, 2147483648
  %v2467 = vxor.u32 %v2019, 2147483648
  %v2468 = vxor.u32 %v2020, 2147483648
  %v2469 = vxor.u32 %v2021, 2147483648
  %v2470 = vxor.u32 %v2022, 2147483648
  %v2471 = vxor.u32 %v2023, 2147483648
  %v2472 = vxor.u32 %v2024, 2147483648
  %v2473 = vxor.u32 %v2025, 2147483648
  %v2474 = vxor.u32 %v2026, 2147483648
  %v2475 = vxor.u32 %v2027, 2147483648
  %v2476 = vxor.u32 %v2028, 2147483648
  %v2477 = vxor.u32 %v2029, 2147483648
  %v2478 = vxor.u32 %v2030, 2147483648
  %v2479 = vxor.u32 %v2031, 2147483648
  %v2480 = vxor.u32 %v2032, 2147483648
  %v2481 = vxor.u32 %v2033, 2147483648
  %v2482 = vxor.u32 %v2034, 2147483648
  %v2483 = vxor.u32 %v2035, 2147483648
  %v2484 = vxor.u32 %v2036, 2147483648
  %v2485 = vxor.u32 %v2037, 2147483648
  %v2486 = vxor.u32 %v2038, 2147483648
  %v2487 = vxor.u32 %v2039, 2147483648
  %v2488 = vxor.u32 %v2040, 2147483648
  %v2489 = vxor.u32 %v2041, 2147483648
  %v2490 = vxor.u32 %v2042, 2147483648
  %v2491 = vxor.u32 %v2043, 2147483648
  %v2492 = vxor.u32 %v2044, 2147483648
  %v2493 = vxor.u32 %v2045, 2147483648
  %v2494 = vxor.u32 %v2046, 2147483648
  %v2495 = vxor.u32 %v2047, 2147483648
  %v2496 = vxor.u32 %v2048, 2147483648
  %v2497 = vxor.u32 %v2049, 2147483648
  %v2498 = vxor.u32 %v2050, 2147483648
  %v2499 = vxor.u32 %v2051, 2147483648
  %v2500 = vxor.u32 %v2052, 2147483648
  %v2501 = vxor.u32 %v2053, 2147483648
  %v2502 = vxor.u32 %v2054, 2147483648
  %v2503 = vxor.u32 %v2055, 2147483648
  %v2504 = vxor.u32 %v2056, 2147483648
  %v2505 = vxor.u32 %v2057, 2147483648
  %v2506 = vxor.u32 %v2058, 2147483648
  %v2507 = vxor.u32 %v2059, 2147483648
  %v2508 = vxor.u32 %v2060, 2147483648
  %v2509 = vxor.u32 %v2061, 2147483648
  %v2510 = vxor.u32 %v2062, 2147483648
  %v2511 = vxor.u32 %v2063, 2147483648
  %v2512 = vxor.u32 %v2064, 2147483648
  %v2513 = vxor.u32 %v2065, 2147483648
  %v2514 = vxor.u32 %v2066, 2147483648
  %v2515 = vxor.u32 %v2067, 2147483648
  %v2516 = vxor.u32 %v2068, 2147483648
  %v2517 = vxor.u32 %v2069, 2147483648
  %v2518 = vxor.u32 %v2070, 2147483648
  %v2519 = vxor.u32 %v2071, 2147483648
  %v2520 = vxor.u32 %v2072, 2147483648
  %v2521 = vxor.u32 %v2073, 2147483648
  %v2522 = vxor.u32 %v2074, 2147483648
  %v2523 = vxor.u32 %v2075, 2147483648
  %v2524 = vxor.u32 %v2076, 2147483648
  %v2525 = vxor.u32 %v2077, 2147483648
  %v2526 = vxor.u32 %v2078, 2147483648
  %v2527 = vxor.u32 %v2079, 2147483648
  %v2528 = vmul.f32 %v2464, 1.442695
  %v2529 = vpow.pop %v2528
  %v2530 = vmul.f32 %v2465, 1.442695
  %v2531 = vpow.pop %v2530
  %v2532 = vmul.f32 %v2466, 1.442695
  %v2533 = vpow.pop %v2532
  %v2534 = vmul.f32 %v2467, 1.442695
  %v2535 = vpow.pop %v2534
  %v2536 = vmul.f32 %v2468, 1.442695
  %v2537 = vpow.pop %v2536
  %v2538 = vmul.f32 %v2469, 1.442695
  %v2539 = vpow.pop %v2538
  %v2540 = vmul.f32 %v2470, 1.442695
  %v2541 = vpow.pop %v2540
  %v2542 = vmul.f32 %v2471, 1.442695
  %v2543 = vpow.pop %v2542
  %v2544 = vmul.f32 %v2472, 1.442695
  %v2545 = vpow.pop %v2544
  %v2546 = vmul.f32 %v2473, 1.442695
  %v2547 = vpow.pop %v2546
  %v2548 = vmul.f32 %v2474, 1.442695
  %v2549 = vpow.pop %v2548
  %v2550 = vmul.f32 %v2475, 1.442695
  %v2551 = vpow.pop %v2550
  %v2552 = vmul.f32 %v2476, 1.442695
  %v2553 = vpow.pop %v2552
  %v2554 = vmul.f32 %v2477, 1.442695
  %v2555 = vpow.pop %v2554
  %v2556 = vmul.f32 %v2478, 1.442695
  %v2557 = vpow.pop %v2556
  %v2558 = vmul.f32 %v2479, 1.442695
  %v2559 = vpow.pop %v2558
  %v2560 = vmul.f32 %v2480, 1.442695
  %v2561 = vpow.pop %v2560
  %v2562 = vmul.f32 %v2481, 1.442695
  %v2563 = vpow.pop %v2562
  %v2564 = vmul.f32 %v2482, 1.442695
  %v2565 = vpow.pop %v2564
  %v2566 = vmul.f32 %v2483, 1.442695
  %v2567 = vpow.pop %v2566
  %v2568 = vmul.f32 %v2484, 1.442695
  %v2569 = vpow.pop %v2568
  %v2570 = vmul.f32 %v2485, 1.442695
  %v2571 = vpow.pop %v2570
  %v2572 = vmul.f32 %v2486, 1.442695
  %v2573 = vpow.pop %v2572
  %v2574 = vmul.f32 %v2487, 1.442695
  %v2575 = vpow.pop %v2574
  %v2576 = vmul.f32 %v2488, 1.442695
  %v2577 = vpow.pop %v2576
  %v2578 = vmul.f32 %v2489, 1.442695
  %v2579 = vpow.pop %v2578
  %v2580 = vmul.f32 %v2490, 1.442695
  %v2581 = vpow.pop %v2580
  %v2582 = vmul.f32 %v2491, 1.442695
  %v2583 = vpow.pop %v2582
  %v2584 = vmul.f32 %v2492, 1.442695
  %v2585 = vpow.pop %v2584
  %v2586 = vmul.f32 %v2493, 1.442695
  %v2587 = vpow.pop %v2586
  %v2588 = vmul.f32 %v2494, 1.442695
  %v2589 = vpow.pop %v2588
  %v2590 = vmul.f32 %v2495, 1.442695
  %v2591 = vpow.pop %v2590
  %v2592 = vmul.f32 %v2496, 1.442695
  %v2593 = vpow.pop %v2592
  %v2594 = vmul.f32 %v2497, 1.442695
  %v2595 = vpow.pop %v2594
  %v2596 = vmul.f32 %v2498, 1.442695
  %v2597 = vpow.pop %v2596
  %v2598 = vmul.f32 %v2499, 1.442695
  %v2599 = vpow.pop %v2598
  %v2600 = vmul.f32 %v2500, 1.442695
  %v2601 = vpow.pop %v2600
  %v2602 = vmul.f32 %v2501, 1.442695
  %v2603 = vpow.pop %v2602
  %v2604 = vmul.f32 %v2502, 1.442695
  %v2605 = vpow.pop %v2604
  %v2606 = vmul.f32 %v2503, 1.442695
  %v2607 = vpow.pop %v2606
  %v2608 = vmul.f32 %v2504, 1.442695
  %v2609 = vpow.pop %v2608
  %v2610 = vmul.f32 %v2505, 1.442695
  %v2611 = vpow.pop %v2610
  %v2612 = vmul.f32 %v2506, 1.442695
  %v2613 = vpow.pop %v2612
  %v2614 = vmul.f32 %v2507, 1.442695
  %v2615 = vpow.pop %v2614
  %v2616 = vmul.f32 %v2508, 1.442695
  %v2617 = vpow.pop %v2616
  %v2618 = vmul.f32 %v2509, 1.442695
  %v2619 = vpow.pop %v2618
  %v2620 = vmul.f32 %v2510, 1.442695
  %v2621 = vpow.pop %v2620
  %v2622 = vmul.f32 %v2511, 1.442695
  %v2623 = vpow.pop %v2622
  %v2624 = vmul.f32 %v2512, 1.442695
  %v2625 = vpow.pop %v2624
  %v2626 = vmul.f32 %v2513, 1.442695
  %v2627 = vpow.pop %v2626
  %v2628 = vmul.f32 %v2514, 1.442695
  %v2629 = vpow.pop %v2628
  %v2630 = vmul.f32 %v2515, 1.442695
  %v2631 = vpow.pop %v2630
  %v2632 = vmul.f32 %v2516, 1.442695
  %v2633 = vpow.pop %v2632
  %v2634 = vmul.f32 %v2517, 1.442695
  %v2635 = vpow.pop %v2634
  %v2636 = vmul.f32 %v2518, 1.442695
  %v2637 = vpow.pop %v2636
  %v2638 = vmul.f32 %v2519, 1.442695
  %v2639 = vpow.pop %v2638
  %v2640 = vmul.f32 %v2520, 1.442695
  %v2641 = vpow.pop %v2640
  %v2642 = vmul.f32 %v2521, 1.442695
  %v2643 = vpow.pop %v2642
  %v2644 = vmul.f32 %v2522, 1.442695
  %v2645 = vpow.pop %v2644
  %v2646 = vmul.f32 %v2523, 1.442695
  %v2647 = vpow.pop %v2646
  %v2648 = vmul.f32 %v2524, 1.442695
  %v2649 = vpow.pop %v2648
  %v2650 = vmul.f32 %v2525, 1.442695
  %v2651 = vpow.pop %v2650
  %v2652 = vmul.f32 %v2526, 1.442695
  %v2653 = vpow.pop %v2652
  %v2654 = vmul.f32 %v2527, 1.442695
  %v2655 = vpow.pop %v2654
  %v2656 = vadd.f32 %v2529, 1.0
  %v2657 = vadd.f32 %v2531, 1.0
  %v2658 = vadd.f32 %v2533, 1.0
  %v2659 = vadd.f32 %v2535, 1.0
  %v2660 = vadd.f32 %v2537, 1.0
  %v2661 = vadd.f32 %v2539, 1.0
  %v2662 = vadd.f32 %v2541, 1.0
  %v2663 = vadd.f32 %v2543, 1.0
  %v2664 = vadd.f32 %v2545, 1.0
  %v2665 = vadd.f32 %v2547, 1.0
  %v2666 = vadd.f32 %v2549, 1.0
  %v2667 = vadd.f32 %v2551, 1.0
  %v2668 = vadd.f32 %v2553, 1.0
  %v2669 = vadd.f32 %v2555, 1.0
  %v2670 = vadd.f32 %v2557, 1.0
  %v2671 = vadd.f32 %v2559, 1.0
  %v2672 = vadd.f32 %v2561, 1.0
  %v2673 = vadd.f32 %v2563, 1.0
  %v2674 = vadd.f32 %v2565, 1.0
  %v2675 = vadd.f32 %v2567, 1.0
  %v2676 = vadd.f32 %v2569, 1.0
  %v2677 = vadd.f32 %v2571, 1.0
  %v2678 = vadd.f32 %v2573, 1.0
  %v2679 = vadd.f32 %v2575, 1.0
  %v2680 = vadd.f32 %v2577, 1.0
  %v2681 = vadd.f32 %v2579, 1.0
  %v2682 = vadd.f32 %v2581, 1.0
  %v2683 = vadd.f32 %v2583, 1.0
  %v2684 = vadd.f32 %v2585, 1.0
  %v2685 = vadd.f32 %v2587, 1.0
  %v2686 = vadd.f32 %v2589, 1.0
  %v2687 = vadd.f32 %v2591, 1.0
  %v2688 = vadd.f32 %v2593, 1.0
  %v2689 = vadd.f32 %v2595, 1.0
  %v2690 = vadd.f32 %v2597, 1.0
  %v2691 = vadd.f32 %v2599, 1.0
  %v2692 = vadd.f32 %v2601, 1.0
  %v2693 = vadd.f32 %v2603, 1.0
  %v2694 = vadd.f32 %v2605, 1.0
  %v2695 = vadd.f32 %v2607, 1.0
  %v2696 = vadd.f32 %v2609, 1.0
  %v2697 = vadd.f32 %v2611, 1.0
  %v2698 = vadd.f32 %v2613, 1.0
  %v2699 = vadd.f32 %v2615, 1.0
  %v2700 = vadd.f32 %v2617, 1.0
  %v2701 = vadd.f32 %v2619, 1.0
  %v2702 = vadd.f32 %v2621, 1.0
  %v2703 = vadd.f32 %v2623, 1.0
  %v2704 = vadd.f32 %v2625, 1.0
  %v2705 = vadd.f32 %v2627, 1.0
  %v2706 = vadd.f32 %v2629, 1.0
  %v2707 = vadd.f32 %v2631, 1.0
  %v2708 = vadd.f32 %v2633, 1.0
  %v2709 = vadd.f32 %v2635, 1.0
  %v2710 = vadd.f32 %v2637, 1.0
  %v2711 = vadd.f32 %v2639, 1.0
  %v2712 = vadd.f32 %v2641, 1.0
  %v2713 = vadd.f32 %v2643, 1.0
  %v2714 = vadd.f32 %v2645, 1.0
  %v2715 = vadd.f32 %v2647, 1.0
  %v2716 = vadd.f32 %v2649, 1.0
  %v2717 = vadd.f32 %v2651, 1.0
  %v2718 = vadd.f32 %v2653, 1.0
  %v2719 = vadd.f32 %v2655, 1.0
  %v2720 = vrcp.pop %v2656
  %v2721 = vmul.f32 1.0, %v2720
  %v2722 = vrcp.pop %v2657
  %v2723 = vmul.f32 1.0, %v2722
  %v2724 = vrcp.pop %v2658
  %v2725 = vmul.f32 1.0, %v2724
  %v2726 = vrcp.pop %v2659
  %v2727 = vmul.f32 1.0, %v2726
  %v2728 = vrcp.pop %v2660
  %v2729 = vmul.f32 1.0, %v2728
  %v2730 = vrcp.pop %v2661
  %v2731 = vmul.f32 1.0, %v2730
  %v2732 = vrcp.pop %v2662
  %v2733 = vmul.f32 1.0, %v2732
  %v2734 = vrcp.pop %v2663
  %v2735 = vmul.f32 1.0, %v2734
  %v2736 = vrcp.pop %v2664
  %v2737 = vmul.f32 1.0, %v2736
  %v2738 = vrcp.pop %v2665
  %v2739 = vmul.f32 1.0, %v2738
  %v2740 = vrcp.pop %v2666
  %v2741 = vmul.f32 1.0, %v2740
  %v2742 = vrcp.pop %v2667
  %v2743 = vmul.f32 1.0, %v2742
  %v2744 = vrcp.pop %v2668
  %v2745 = vmul.f32 1.0, %v2744
  %v2746 = vrcp.pop %v2669
  %v2747 = vmul.f32 1.0, %v2746
  %v2748 = vrcp.pop %v2670
  %v2749 = vmul.f32 1.0, %v2748
  %v2750 = vrcp.pop %v2671
  %v2751 = vmul.f32 1.0, %v2750
  %v2752 = vrcp.pop %v2672
  %v2753 = vmul.f32 1.0, %v2752
  %v2754 = vrcp.pop %v2673
  %v2755 = vmul.f32 1.0, %v2754
  %v2756 = vrcp.pop %v2674
  %v2757 = vmul.f32 1.0, %v2756
  %v2758 = vrcp.pop %v2675
  %v2759 = vmul.f32 1.0, %v2758
  %v2760 = vrcp.pop %v2676
  %v2761 = vmul.f32 1.0, %v2760
  %v2762 = vrcp.pop %v2677
  %v2763 = vmul.f32 1.0, %v2762
  %v2764 = vrcp.pop %v2678
  %v2765 = vmul.f32 1.0, %v2764
  %v2766 = vrcp.pop %v2679
  %v2767 = vmul.f32 1.0, %v2766
  %v2768 = vrcp.pop %v2680
  %v2769 = vmul.f32 1.0, %v2768
  %v2770 = vrcp.pop %v2681
  %v2771 = vmul.f32 1.0, %v2770
  %v2772 = vrcp.pop %v2682
  %v2773 = vmul.f32 1.0, %v2772
  %v2774 = vrcp.pop %v2683
  %v2775 = vmul.f32 1.0, %v2774
  %v2776 = vrcp.pop %v2684
  %v2777 = vmul.f32 1.0, %v2776
  %v2778 = vrcp.pop %v2685
  %v2779 = vmul.f32 1.0, %v2778
  %v2780 = vrcp.pop %v2686
  %v2781 = vmul.f32 1.0, %v2780
  %v2782 = vrcp.pop %v2687
  %v2783 = vmul.f32 1.0, %v2782
  %v2784 = vrcp.pop %v2688
  %v2785 = vmul.f32 1.0, %v2784
  %v2786 = vrcp.pop %v2689
  %v2787 = vmul.f32 1.0, %v2786
  %v2788 = vrcp.pop %v2690
  %v2789 = vmul.f32 1.0, %v2788
  %v2790 = vrcp.pop %v2691
  %v2791 = vmul.f32 1.0, %v2790
  %v2792 = vrcp.pop %v2692
  %v2793 = vmul.f32 1.0, %v2792
  %v2794 = vrcp.pop %v2693
  %v2795 = vmul.f32 1.0, %v2794
  %v2796 = vrcp.pop %v2694
  %v2797 = vmul.f32 1.0, %v2796
  %v2798 = vrcp.pop %v2695
  %v2799 = vmul.f32 1.0, %v2798
  %v2800 = vrcp.pop %v2696
  %v2801 = vmul.f32 1.0, %v2800
  %v2802 = vrcp.pop %v2697
  %v2803 = vmul.f32 1.0, %v2802
  %v2804 = vrcp.pop %v2698
  %v2805 = vmul.f32 1.0, %v2804
  %v2806 = vrcp.pop %v2699
  %v2807 = vmul.f32 1.0, %v2806
  %v2808 = vrcp.pop %v2700
  %v2809 = vmul.f32 1.0, %v2808
  %v2810 = vrcp.pop %v2701
  %v2811 = vmul.f32 1.0, %v2810
  %v2812 = vrcp.pop %v2702
  %v2813 = vmul.f32 1.0, %v2812
  %v2814 = vrcp.pop %v2703
  %v2815 = vmul.f32 1.0, %v2814
  %v2816 = vrcp.pop %v2704
  %v2817 = vmul.f32 1.0, %v2816
  %v2818 = vrcp.pop %v2705
  %v2819 = vmul.f32 1.0, %v2818
  %v2820 = vrcp.pop %v2706
  %v2821 = vmul.f32 1.0, %v2820
  %v2822 = vrcp.pop %v2707
  %v2823 = vmul.f32 1.0, %v2822
  %v2824 = vrcp.pop %v2708
  %v2825 = vmul.f32 1.0, %v2824
  %v2826 = vrcp.pop %v2709
  %v2827 = vmul.f32 1.0, %v2826
  %v2828 = vrcp.pop %v2710
  %v2829 = vmul.f32 1.0, %v2828
  %v2830 = vrcp.pop %v2711
  %v2831 = vmul.f32 1.0, %v2830
  %v2832 = vrcp.pop %v2712
  %v2833 = vmul.f32 1.0, %v2832
  %v2834 = vrcp.pop %v2713
  %v2835 = vmul.f32 1.0, %v2834
  %v2836 = vrcp.pop %v2714
  %v2837 = vmul.f32 1.0, %v2836
  %v2838 = vrcp.pop %v2715
  %v2839 = vmul.f32 1.0, %v2838
  %v2840 = vrcp.pop %v2716
  %v2841 = vmul.f32 1.0, %v2840
  %v2842 = vrcp.pop %v2717
  %v2843 = vmul.f32 1.0, %v2842
  %v2844 = vrcp.pop %v2718
  %v2845 = vmul.f32 1.0, %v2844
  %v2846 = vrcp.pop %v2719
  %v2847 = vmul.f32 1.0, %v2846
  %2849 = vset.pattern.permute.xlu0 0
  %2850 = vperm.xlu0 %2849, %v2337
  %v2851 = vpop.permute.xlu0 %2850
  %2854 = vset.pattern.permute.xlu0 0
  %2855 = vperm.xlu0 %2854, %v2339
  %v2856 = vpop.permute.xlu0 %2855
  %2859 = vset.pattern.permute.xlu0 0
  %2860 = vperm.xlu0 %2859, %v2341
  %v2861 = vpop.permute.xlu0 %2860
  %2864 = vset.pattern.permute.xlu0 0
  %2865 = vperm.xlu0 %2864, %v2343
  %v2866 = vpop.permute.xlu0 %2865
  %2869 = vset.pattern.permute.xlu0 0
  %2870 = vperm.xlu0 %2869, %v2345
  %v2871 = vpop.permute.xlu0 %2870
  %2874 = vset.pattern.permute.xlu0 0
  %2875 = vperm.xlu0 %2874, %v2347
  %v2876 = vpop.permute.xlu0 %2875
  %2879 = vset.pattern.permute.xlu0 0
  %2880 = vperm.xlu0 %2879, %v2349
  %v2881 = vpop.permute.xlu0 %2880
  %2884 = vset.pattern.permute.xlu0 0
  %2885 = vperm.xlu0 %2884, %v2351
  %v2886 = vpop.permute.xlu0 %2885
  %2889 = vset.pattern.permute.xlu0 0
  %2890 = vperm.xlu0 %2889, %v2353
  %v2891 = vpop.permute.xlu0 %2890
  %2894 = vset.pattern.permute.xlu0 0
  %2895 = vperm.xlu0 %2894, %v2355
  %v2896 = vpop.permute.xlu0 %2895
  %2899 = vset.pattern.permute.xlu0 0
  %2900 = vperm.xlu0 %2899, %v2357
  %v2901 = vpop.permute.xlu0 %2900
  %2904 = vset.pattern.permute.xlu0 0
  %2905 = vperm.xlu0 %2904, %v2359
  %v2906 = vpop.permute.xlu0 %2905
  %2909 = vset.pattern.permute.xlu0 0
  %2910 = vperm.xlu0 %2909, %v2361
  %v2911 = vpop.permute.xlu0 %2910
  %2914 = vset.pattern.permute.xlu0 0
  %2915 = vperm.xlu0 %2914, %v2363
  %v2916 = vpop.permute.xlu0 %2915
  %2919 = vset.pattern.permute.xlu0 0
  %2920 = vperm.xlu0 %2919, %v2365
  %v2921 = vpop.permute.xlu0 %2920
  %2924 = vset.pattern.permute.xlu0 0
  %2925 = vperm.xlu0 %2924, %v2367
  %v2926 = vpop.permute.xlu0 %2925
  %2929 = vset.pattern.permute.xlu0 0
  %2930 = vperm.xlu0 %2929, %v2369
  %v2931 = vpop.permute.xlu0 %2930
  %2934 = vset.pattern.permute.xlu0 0
  %2935 = vperm.xlu0 %2934, %v2371
  %v2936 = vpop.permute.xlu0 %2935
  %2939 = vset.pattern.permute.xlu0 0
  %2940 = vperm.xlu0 %2939, %v2373
  %v2941 = vpop.permute.xlu0 %2940
  %2944 = vset.pattern.permute.xlu0 0
  %2945 = vperm.xlu0 %2944, %v2375
  %v2946 = vpop.permute.xlu0 %2945
  %2949 = vset.pattern.permute.xlu0 0
  %2950 = vperm.xlu0 %2949, %v2377
  %v2951 = vpop.permute.xlu0 %2950
  %2954 = vset.pattern.permute.xlu0 0
  %2955 = vperm.xlu0 %2954, %v2379
  %v2956 = vpop.permute.xlu0 %2955
  %2959 = vset.pattern.permute.xlu0 0
  %2960 = vperm.xlu0 %2959, %v2381
  %v2961 = vpop.permute.xlu0 %2960
  %2964 = vset.pattern.permute.xlu0 0
  %2965 = vperm.xlu0 %2964, %v2383
  %v2966 = vpop.permute.xlu0 %2965
  %2969 = vset.pattern.permute.xlu0 0
  %2970 = vperm.xlu0 %2969, %v2385
  %v2971 = vpop.permute.xlu0 %2970
  %2974 = vset.pattern.permute.xlu0 0
  %2975 = vperm.xlu0 %2974, %v2387
  %v2976 = vpop.permute.xlu0 %2975
  %2979 = vset.pattern.permute.xlu0 0
  %2980 = vperm.xlu0 %2979, %v2389
  %v2981 = vpop.permute.xlu0 %2980
  %2984 = vset.pattern.permute.xlu0 0
  %2985 = vperm.xlu0 %2984, %v2391
  %v2986 = vpop.permute.xlu0 %2985
  %2989 = vset.pattern.permute.xlu0 0
  %2990 = vperm.xlu0 %2989, %v2393
  %v2991 = vpop.permute.xlu0 %2990
  %2994 = vset.pattern.permute.xlu0 0
  %2995 = vperm.xlu0 %2994, %v2395
  %v2996 = vpop.permute.xlu0 %2995
  %2999 = vset.pattern.permute.xlu0 0
  %3000 = vperm.xlu0 %2999, %v2397
  %v3001 = vpop.permute.xlu0 %3000
  %3004 = vset.pattern.permute.xlu0 0
  %3005 = vperm.xlu0 %3004, %v2399
  %v3006 = vpop.permute.xlu0 %3005
  %3009 = vset.pattern.permute.xlu0 0
  %3010 = vperm.xlu0 %3009, %v2401
  %v3011 = vpop.permute.xlu0 %3010
  %3014 = vset.pattern.permute.xlu0 0
  %3015 = vperm.xlu0 %3014, %v2403
  %v3016 = vpop.permute.xlu0 %3015
  %3019 = vset.pattern.permute.xlu0 0
  %3020 = vperm.xlu0 %3019, %v2405
  %v3021 = vpop.permute.xlu0 %3020
  %3024 = vset.pattern.permute.xlu0 0
  %3025 = vperm.xlu0 %3024, %v2407
  %v3026 = vpop.permute.xlu0 %3025
  %3029 = vset.pattern.permute.xlu0 0
  %3030 = vperm.xlu0 %3029, %v2409
  %v3031 = vpop.permute.xlu0 %3030
  %3034 = vset.pattern.permute.xlu0 0
  %3035 = vperm.xlu0 %3034, %v2411
  %v3036 = vpop.permute.xlu0 %3035
  %3039 = vset.pattern.permute.xlu0 0
  %3040 = vperm.xlu0 %3039, %v2413
  %v3041 = vpop.permute.xlu0 %3040
  %3044 = vset.pattern.permute.xlu0 0
  %3045 = vperm.xlu0 %3044, %v2415
  %v3046 = vpop.permute.xlu0 %3045
  %3049 = vset.pattern.permute.xlu0 0
  %3050 = vperm.xlu0 %3049, %v2417
  %v3051 = vpop.permute.xlu0 %3050
  %3054 = vset.pattern.permute.xlu0 0
  %3055 = vperm.xlu0 %3054, %v2419
  %v3056 = vpop.permute.xlu0 %3055
  %3059 = vset.pattern.permute.xlu0 0
  %3060 = vperm.xlu0 %3059, %v2421
  %v3061 = vpop.permute.xlu0 %3060
  %3064 = vset.pattern.permute.xlu0 0
  %3065 = vperm.xlu0 %3064, %v2423
  %v3066 = vpop.permute.xlu0 %3065
  %3069 = vset.pattern.permute.xlu0 0
  %3070 = vperm.xlu0 %3069, %v2425
  %v3071 = vpop.permute.xlu0 %3070
  %3074 = vset.pattern.permute.xlu0 0
  %3075 = vperm.xlu0 %3074, %v2427
  %v3076 = vpop.permute.xlu0 %3075
  %3079 = vset.pattern.permute.xlu0 0
  %3080 = vperm.xlu0 %3079, %v2429
  %v3081 = vpop.permute.xlu0 %3080
  %3084 = vset.pattern.permute.xlu0 0
  %3085 = vperm.xlu0 %3084, %v2431
  %v3086 = vpop.permute.xlu0 %3085
  %3089 = vset.pattern.permute.xlu0 0
  %3090 = vperm.xlu0 %3089, %v2433
  %v3091 = vpop.permute.xlu0 %3090
  %3094 = vset.pattern.permute.xlu0 0
  %3095 = vperm.xlu0 %3094, %v2435
  %v3096 = vpop.permute.xlu0 %3095
  %3099 = vset.pattern.permute.xlu0 0
  %3100 = vperm.xlu0 %3099, %v2437
  %v3101 = vpop.permute.xlu0 %3100
  %3104 = vset.pattern.permute.xlu0 0
  %3105 = vperm.xlu0 %3104, %v2439
  %v3106 = vpop.permute.xlu0 %3105
  %3109 = vset.pattern.permute.xlu0 0
  %3110 = vperm.xlu0 %3109, %v2441
  %v3111 = vpop.permute.xlu0 %3110
  %3114 = vset.pattern.permute.xlu0 0
  %3115 = vperm.xlu0 %3114, %v2443
  %v3116 = vpop.permute.xlu0 %3115
  %3119 = vset.pattern.permute.xlu0 0
  %3120 = vperm.xlu0 %3119, %v2445
  %v3121 = vpop.permute.xlu0 %3120
  %3124 = vset.pattern.permute.xlu0 0
  %3125 = vperm.xlu0 %3124, %v2447
  %v3126 = vpop.permute.xlu0 %3125
  %3129 = vset.pattern.permute.xlu0 0
  %3130 = vperm.xlu0 %3129, %v2449
  %v3131 = vpop.permute.xlu0 %3130
  %3134 = vset.pattern.permute.xlu0 0
  %3135 = vperm.xlu0 %3134, %v2451
  %v3136 = vpop.permute.xlu0 %3135
  %3139 = vset.pattern.permute.xlu0 0
  %3140 = vperm.xlu0 %3139, %v2453
  %v3141 = vpop.permute.xlu0 %3140
  %3144 = vset.pattern.permute.xlu0 0
  %3145 = vperm.xlu0 %3144, %v2455
  %v3146 = vpop.permute.xlu0 %3145
  %3149 = vset.pattern.permute.xlu0 0
  %3150 = vperm.xlu0 %3149, %v2457
  %v3151 = vpop.permute.xlu0 %3150
  %3154 = vset.pattern.permute.xlu0 0
  %3155 = vperm.xlu0 %3154, %v2459
  %v3156 = vpop.permute.xlu0 %3155
  %3159 = vset.pattern.permute.xlu0 0
  %3160 = vperm.xlu0 %3159, %v2461
  %v3161 = vpop.permute.xlu0 %3160
  %3164 = vset.pattern.permute.xlu0 0
  %3165 = vperm.xlu0 %3164, %v2463
  %v3166 = vpop.permute.xlu0 %3165
  %v3168 = vmul.f32 %v392, %v2851
  %v3169 = vmul.f32 %v395, %v2856
  %v3170 = vmul.f32 %v400, %v2861
  %v3171 = vmul.f32 %v403, %v2866
  %v3172 = vmul.f32 %v408, %v2871
  %v3173 = vmul.f32 %v411, %v2876
  %v3174 = vmul.f32 %v416, %v2881
  %v3175 = vmul.f32 %v419, %v2886
  %v3176 = vmul.f32 %v424, %v2891
  %v3177 = vmul.f32 %v427, %v2896
  %v3178 = vmul.f32 %v432, %v2901
  %v3179 = vmul.f32 %v435, %v2906
  %v3180 = vmul.f32 %v440, %v2911
  %v3181 = vmul.f32 %v443, %v2916
  %v3182 = vmul.f32 %v448, %v2921
  %v3183 = vmul.f32 %v451, %v2926
  %v3184 = vmul.f32 %v456, %v2931
  %v3185 = vmul.f32 %v459, %v2936
  %v3186 = vmul.f32 %v464, %v2941
  %v3187 = vmul.f32 %v467, %v2946
  %v3188 = vmul.f32 %v472, %v2951
  %v3189 = vmul.f32 %v475, %v2956
  %v3190 = vmul.f32 %v480, %v2961
  %v3191 = vmul.f32 %v483, %v2966
  %v3192 = vmul.f32 %v488, %v2971
  %v3193 = vmul.f32 %v491, %v2976
  %v3194 = vmul.f32 %v496, %v2981
  %v3195 = vmul.f32 %v499, %v2986
  %v3196 = vmul.f32 %v504, %v2991
  %v3197 = vmul.f32 %v507, %v2996
  %v3198 = vmul.f32 %v512, %v3001
  %v3199 = vmul.f32 %v515, %v3006
  %v3200 = vmul.f32 %v520, %v3011
  %v3201 = vmul.f32 %v523, %v3016
  %v3202 = vmul.f32 %v528, %v3021
  %v3203 = vmul.f32 %v531, %v3026
  %v3204 = vmul.f32 %v536, %v3031
  %v3205 = vmul.f32 %v539, %v3036
  %v3206 = vmul.f32 %v544, %v3041
  %v3207 = vmul.f32 %v547, %v3046
  %v3208 = vmul.f32 %v552, %v3051
  %v3209 = vmul.f32 %v555, %v3056
  %v3210 = vmul.f32 %v560, %v3061
  %v3211 = vmul.f32 %v563, %v3066
  %v3212 = vmul.f32 %v568, %v3071
  %v3213 = vmul.f32 %v571, %v3076
  %v3214 = vmul.f32 %v576, %v3081
  %v3215 = vmul.f32 %v579, %v3086
  %v3216 = vmul.f32 %v584, %v3091
  %v3217 = vmul.f32 %v587, %v3096
  %v3218 = vmul.f32 %v592, %v3101
  %v3219 = vmul.f32 %v595, %v3106
  %v3220 = vmul.f32 %v600, %v3111
  %v3221 = vmul.f32 %v603, %v3116
  %v3222 = vmul.f32 %v608, %v3121
  %v3223 = vmul.f32 %v611, %v3126
  %v3224 = vmul.f32 %v616, %v3131
  %v3225 = vmul.f32 %v619, %v3136
  %v3226 = vmul.f32 %v624, %v3141
  %v3227 = vmul.f32 %v627, %v3146
  %v3228 = vmul.f32 %v632, %v3151
  %v3229 = vmul.f32 %v635, %v3156
  %v3230 = vmul.f32 %v640, %v3161
  %v3231 = vmul.f32 %v643, %v3166
  %3233 = vset.pattern.permute.xlu0 1
  %3234 = vperm.xlu0 %3233, %v2721
  %v3235 = vpop.permute.xlu0 %3234
  %3238 = vset.pattern.permute.xlu0 1
  %3239 = vperm.xlu0 %3238, %v2723
  %v3240 = vpop.permute.xlu0 %3239
  %3243 = vset.pattern.permute.xlu0 1
  %3244 = vperm.xlu0 %3243, %v2725
  %v3245 = vpop.permute.xlu0 %3244
  %3248 = vset.pattern.permute.xlu0 1
  %3249 = vperm.xlu0 %3248, %v2727
  %v3250 = vpop.permute.xlu0 %3249
  %3253 = vset.pattern.permute.xlu0 1
  %3254 = vperm.xlu0 %3253, %v2729
  %v3255 = vpop.permute.xlu0 %3254
  %3258 = vset.pattern.permute.xlu0 1
  %3259 = vperm.xlu0 %3258, %v2731
  %v3260 = vpop.permute.xlu0 %3259
  %3263 = vset.pattern.permute.xlu0 1
  %3264 = vperm.xlu0 %3263, %v2733
  %v3265 = vpop.permute.xlu0 %3264
  %3268 = vset.pattern.permute.xlu0 1
  %3269 = vperm.xlu0 %3268, %v2735
  %v3270 = vpop.permute.xlu0 %3269
  %3273 = vset.pattern.permute.xlu0 1
  %3274 = vperm.xlu0 %3273, %v2737
  %v3275 = vpop.permute.xlu0 %3274
  %3278 = vset.pattern.permute.xlu0 1
  %3279 = vperm.xlu0 %3278, %v2739
  %v3280 = vpop.permute.xlu0 %3279
  %3283 = vset.pattern.permute.xlu0 1
  %3284 = vperm.xlu0 %3283, %v2741
  %v3285 = vpop.permute.xlu0 %3284
  %3288 = vset.pattern.permute.xlu0 1
  %3289 = vperm.xlu0 %3288, %v2743
  %v3290 = vpop.permute.xlu0 %3289
  %3293 = vset.pattern.permute.xlu0 1
  %3294 = vperm.xlu0 %3293, %v2745
  %v3295 = vpop.permute.xlu0 %3294
  %3298 = vset.pattern.permute.xlu0 1
  %3299 = vperm.xlu0 %3298, %v2747
  %v3300 = vpop.permute.xlu0 %3299
  %3303 = vset.pattern.permute.xlu0 1
  %3304 = vperm.xlu0 %3303, %v2749
  %v3305 = vpop.permute.xlu0 %3304
  %3308 = vset.pattern.permute.xlu0 1
  %3309 = vperm.xlu0 %3308, %v2751
  %v3310 = vpop.permute.xlu0 %3309
  %3313 = vset.pattern.permute.xlu0 1
  %3314 = vperm.xlu0 %3313, %v2753
  %v3315 = vpop.permute.xlu0 %3314
  %3318 = vset.pattern.permute.xlu0 1
  %3319 = vperm.xlu0 %3318, %v2755
  %v3320 = vpop.permute.xlu0 %3319
  %3323 = vset.pattern.permute.xlu0 1
  %3324 = vperm.xlu0 %3323, %v2757
  %v3325 = vpop.permute.xlu0 %3324
  %3328 = vset.pattern.permute.xlu0 1
  %3329 = vperm.xlu0 %3328, %v2759
  %v3330 = vpop.permute.xlu0 %3329
  %3333 = vset.pattern.permute.xlu0 1
  %3334 = vperm.xlu0 %3333, %v2761
  %v3335 = vpop.permute.xlu0 %3334
  %3338 = vset.pattern.permute.xlu0 1
  %3339 = vperm.xlu0 %3338, %v2763
  %v3340 = vpop.permute.xlu0 %3339
  %3343 = vset.pattern.permute.xlu0 1
  %3344 = vperm.xlu0 %3343, %v2765
  %v3345 = vpop.permute.xlu0 %3344
  %3348 = vset.pattern.permute.xlu0 1
  %3349 = vperm.xlu0 %3348, %v2767
  %v3350 = vpop.permute.xlu0 %3349
  %3353 = vset.pattern.permute.xlu0 1
  %3354 = vperm.xlu0 %3353, %v2769
  %v3355 = vpop.permute.xlu0 %3354
  %3358 = vset.pattern.permute.xlu0 1
  %3359 = vperm.xlu0 %3358, %v2771
  %v3360 = vpop.permute.xlu0 %3359
  %3363 = vset.pattern.permute.xlu0 1
  %3364 = vperm.xlu0 %3363, %v2773
  %v3365 = vpop.permute.xlu0 %3364
  %3368 = vset.pattern.permute.xlu0 1
  %3369 = vperm.xlu0 %3368, %v2775
  %v3370 = vpop.permute.xlu0 %3369
  %3373 = vset.pattern.permute.xlu0 1
  %3374 = vperm.xlu0 %3373, %v2777
  %v3375 = vpop.permute.xlu0 %3374
  %3378 = vset.pattern.permute.xlu0 1
  %3379 = vperm.xlu0 %3378, %v2779
  %v3380 = vpop.permute.xlu0 %3379
  %3383 = vset.pattern.permute.xlu0 1
  %3384 = vperm.xlu0 %3383, %v2781
  %v3385 = vpop.permute.xlu0 %3384
  %3388 = vset.pattern.permute.xlu0 1
  %3389 = vperm.xlu0 %3388, %v2783
  %v3390 = vpop.permute.xlu0 %3389
  %3393 = vset.pattern.permute.xlu0 1
  %3394 = vperm.xlu0 %3393, %v2785
  %v3395 = vpop.permute.xlu0 %3394
  %3398 = vset.pattern.permute.xlu0 1
  %3399 = vperm.xlu0 %3398, %v2787
  %v3400 = vpop.permute.xlu0 %3399
  %3403 = vset.pattern.permute.xlu0 1
  %3404 = vperm.xlu0 %3403, %v2789
  %v3405 = vpop.permute.xlu0 %3404
  %3408 = vset.pattern.permute.xlu0 1
  %3409 = vperm.xlu0 %3408, %v2791
  %v3410 = vpop.permute.xlu0 %3409
  %3413 = vset.pattern.permute.xlu0 1
  %3414 = vperm.xlu0 %3413, %v2793
  %v3415 = vpop.permute.xlu0 %3414
  %3418 = vset.pattern.permute.xlu0 1
  %3419 = vperm.xlu0 %3418, %v2795
  %v3420 = vpop.permute.xlu0 %3419
  %3423 = vset.pattern.permute.xlu0 1
  %3424 = vperm.xlu0 %3423, %v2797
  %v3425 = vpop.permute.xlu0 %3424
  %3428 = vset.pattern.permute.xlu0 1
  %3429 = vperm.xlu0 %3428, %v2799
  %v3430 = vpop.permute.xlu0 %3429
  %3433 = vset.pattern.permute.xlu0 1
  %3434 = vperm.xlu0 %3433, %v2801
  %v3435 = vpop.permute.xlu0 %3434
  %3438 = vset.pattern.permute.xlu0 1
  %3439 = vperm.xlu0 %3438, %v2803
  %v3440 = vpop.permute.xlu0 %3439
  %3443 = vset.pattern.permute.xlu0 1
  %3444 = vperm.xlu0 %3443, %v2805
  %v3445 = vpop.permute.xlu0 %3444
  %3448 = vset.pattern.permute.xlu0 1
  %3449 = vperm.xlu0 %3448, %v2807
  %v3450 = vpop.permute.xlu0 %3449
  %3453 = vset.pattern.permute.xlu0 1
  %3454 = vperm.xlu0 %3453, %v2809
  %v3455 = vpop.permute.xlu0 %3454
  %3458 = vset.pattern.permute.xlu0 1
  %3459 = vperm.xlu0 %3458, %v2811
  %v3460 = vpop.permute.xlu0 %3459
  %3463 = vset.pattern.permute.xlu0 1
  %3464 = vperm.xlu0 %3463, %v2813
  %v3465 = vpop.permute.xlu0 %3464
  %3468 = vset.pattern.permute.xlu0 1
  %3469 = vperm.xlu0 %3468, %v2815
  %v3470 = vpop.permute.xlu0 %3469
  %3473 = vset.pattern.permute.xlu0 1
  %3474 = vperm.xlu0 %3473, %v2817
  %v3475 = vpop.permute.xlu0 %3474
  %3478 = vset.pattern.permute.xlu0 1
  %3479 = vperm.xlu0 %3478, %v2819
  %v3480 = vpop.permute.xlu0 %3479
  %3483 = vset.pattern.permute.xlu0 1
  %3484 = vperm.xlu0 %3483, %v2821
  %v3485 = vpop.permute.xlu0 %3484
  %3488 = vset.pattern.permute.xlu0 1
  %3489 = vperm.xlu0 %3488, %v2823
  %v3490 = vpop.permute.xlu0 %3489
  %3493 = vset.pattern.permute.xlu0 1
  %3494 = vperm.xlu0 %3493, %v2825
  %v3495 = vpop.permute.xlu0 %3494
  %3498 = vset.pattern.permute.xlu0 1
  %3499 = vperm.xlu0 %3498, %v2827
  %v3500 = vpop.permute.xlu0 %3499
  %3503 = vset.pattern.permute.xlu0 1
  %3504 = vperm.xlu0 %3503, %v2829
  %v3505 = vpop.permute.xlu0 %3504
  %3508 = vset.pattern.permute.xlu0 1
  %3509 = vperm.xlu0 %3508, %v2831
  %v3510 = vpop.permute.xlu0 %3509
  %3513 = vset.pattern.permute.xlu0 1
  %3514 = vperm.xlu0 %3513, %v2833
  %v3515 = vpop.permute.xlu0 %3514
  %3518 = vset.pattern.permute.xlu0 1
  %3519 = vperm.xlu0 %3518, %v2835
  %v3520 = vpop.permute.xlu0 %3519
  %3523 = vset.pattern.permute.xlu0 1
  %3524 = vperm.xlu0 %3523, %v2837
  %v3525 = vpop.permute.xlu0 %3524
  %3528 = vset.pattern.permute.xlu0 1
  %3529 = vperm.xlu0 %3528, %v2839
  %v3530 = vpop.permute.xlu0 %3529
  %3533 = vset.pattern.permute.xlu0 1
  %3534 = vperm.xlu0 %3533, %v2841
  %v3535 = vpop.permute.xlu0 %3534
  %3538 = vset.pattern.permute.xlu0 1
  %3539 = vperm.xlu0 %3538, %v2843
  %v3540 = vpop.permute.xlu0 %3539
  %3543 = vset.pattern.permute.xlu0 1
  %3544 = vperm.xlu0 %3543, %v2845
  %v3545 = vpop.permute.xlu0 %3544
  %3548 = vset.pattern.permute.xlu0 1
  %3549 = vperm.xlu0 %3548, %v2847
  %v3550 = vpop.permute.xlu0 %3549
  %v3552 = vmul.f32 %v710, %v3235
  %v3553 = vmul.f32 %v711, %v3240
  %v3554 = vmul.f32 %v712, %v3245
  %v3555 = vmul.f32 %v713, %v3250
  %v3556 = vmul.f32 %v714, %v3255
  %v3557 = vmul.f32 %v715, %v3260
  %v3558 = vmul.f32 %v716, %v3265
  %v3559 = vmul.f32 %v717, %v3270
  %v3560 = vmul.f32 %v718, %v3275
  %v3561 = vmul.f32 %v719, %v3280
  %v3562 = vmul.f32 %v720, %v3285
  %v3563 = vmul.f32 %v721, %v3290
  %v3564 = vmul.f32 %v722, %v3295
  %v3565 = vmul.f32 %v723, %v3300
  %v3566 = vmul.f32 %v724, %v3305
  %v3567 = vmul.f32 %v725, %v3310
  %v3568 = vmul.f32 %v726, %v3315
  %v3569 = vmul.f32 %v727, %v3320
  %v3570 = vmul.f32 %v728, %v3325
  %v3571 = vmul.f32 %v729, %v3330
  %v3572 = vmul.f32 %v730, %v3335
  %v3573 = vmul.f32 %v731, %v3340
  %v3574 = vmul.f32 %v732, %v3345
  %v3575 = vmul.f32 %v733, %v3350
  %v3576 = vmul.f32 %v734, %v3355
  %v3577 = vmul.f32 %v735, %v3360
  %v3578 = vmul.f32 %v736, %v3365
  %v3579 = vmul.f32 %v737, %v3370
  %v3580 = vmul.f32 %v738, %v3375
  %v3581 = vmul.f32 %v739, %v3380
  %v3582 = vmul.f32 %v740, %v3385
  %v3583 = vmul.f32 %v741, %v3390
  %v3584 = vmul.f32 %v742, %v3395
  %v3585 = vmul.f32 %v743, %v3400
  %v3586 = vmul.f32 %v744, %v3405
  %v3587 = vmul.f32 %v745, %v3410
  %v3588 = vmul.f32 %v746, %v3415
  %v3589 = vmul.f32 %v747, %v3420
  %v3590 = vmul.f32 %v748, %v3425
  %v3591 = vmul.f32 %v749, %v3430
  %v3592 = vmul.f32 %v750, %v3435
  %v3593 = vmul.f32 %v751, %v3440
  %v3594 = vmul.f32 %v752, %v3445
  %v3595 = vmul.f32 %v753, %v3450
  %v3596 = vmul.f32 %v754, %v3455
  %v3597 = vmul.f32 %v755, %v3460
  %v3598 = vmul.f32 %v756, %v3465
  %v3599 = vmul.f32 %v757, %v3470
  %v3600 = vmul.f32 %v758, %v3475
  %v3601 = vmul.f32 %v759, %v3480
  %v3602 = vmul.f32 %v760, %v3485
  %v3603 = vmul.f32 %v761, %v3490
  %v3604 = vmul.f32 %v762, %v3495
  %v3605 = vmul.f32 %v763, %v3500
  %v3606 = vmul.f32 %v764, %v3505
  %v3607 = vmul.f32 %v765, %v3510
  %v3608 = vmul.f32 %v766, %v3515
  %v3609 = vmul.f32 %v767, %v3520
  %v3610 = vmul.f32 %v768, %v3525
  %v3611 = vmul.f32 %v769, %v3530
  %v3612 = vmul.f32 %v770, %v3535
  %v3613 = vmul.f32 %v771, %v3540
  %v3614 = vmul.f32 %v772, %v3545
  %v3615 = vmul.f32 %v773, %v3550
  %v3616 = vadd.f32 %v3168, %v3552
  %v3617 = vadd.f32 %v3169, %v3553
  %v3618 = vadd.f32 %v3170, %v3554
  %v3619 = vadd.f32 %v3171, %v3555
  %v3620 = vadd.f32 %v3172, %v3556
  %v3621 = vadd.f32 %v3173, %v3557
  %v3622 = vadd.f32 %v3174, %v3558
  %v3623 = vadd.f32 %v3175, %v3559
  %v3624 = vadd.f32 %v3176, %v3560
  %v3625 = vadd.f32 %v3177, %v3561
  %v3626 = vadd.f32 %v3178, %v3562
  %v3627 = vadd.f32 %v3179, %v3563
  %v3628 = vadd.f32 %v3180, %v3564
  %v3629 = vadd.f32 %v3181, %v3565
  %v3630 = vadd.f32 %v3182, %v3566
  %v3631 = vadd.f32 %v3183, %v3567
  %v3632 = vadd.f32 %v3184, %v3568
  %v3633 = vadd.f32 %v3185, %v3569
  %v3634 = vadd.f32 %v3186, %v3570
  %v3635 = vadd.f32 %v3187, %v3571
  %v3636 = vadd.f32 %v3188, %v3572
  %v3637 = vadd.f32 %v3189, %v3573
  %v3638 = vadd.f32 %v3190, %v3574
  %v3639 = vadd.f32 %v3191, %v3575
  %v3640 = vadd.f32 %v3192, %v3576
  %v3641 = vadd.f32 %v3193, %v3577
  %v3642 = vadd.f32 %v3194, %v3578
  %v3643 = vadd.f32 %v3195, %v3579
  %v3644 = vadd.f32 %v3196, %v3580
  %v3645 = vadd.f32 %v3197, %v3581
  %v3646 = vadd.f32 %v3198, %v3582
  %v3647 = vadd.f32 %v3199, %v3583
  %v3648 = vadd.f32 %v3200, %v3584
  %v3649 = vadd.f32 %v3201, %v3585
  %v3650 = vadd.f32 %v3202, %v3586
  %v3651 = vadd.f32 %v3203, %v3587
  %v3652 = vadd.f32 %v3204, %v3588
  %v3653 = vadd.f32 %v3205, %v3589
  %v3654 = vadd.f32 %v3206, %v3590
  %v3655 = vadd.f32 %v3207, %v3591
  %v3656 = vadd.f32 %v3208, %v3592
  %v3657 = vadd.f32 %v3209, %v3593
  %v3658 = vadd.f32 %v3210, %v3594
  %v3659 = vadd.f32 %v3211, %v3595
  %v3660 = vadd.f32 %v3212, %v3596
  %v3661 = vadd.f32 %v3213, %v3597
  %v3662 = vadd.f32 %v3214, %v3598
  %v3663 = vadd.f32 %v3215, %v3599
  %v3664 = vadd.f32 %v3216, %v3600
  %v3665 = vadd.f32 %v3217, %v3601
  %v3666 = vadd.f32 %v3218, %v3602
  %v3667 = vadd.f32 %v3219, %v3603
  %v3668 = vadd.f32 %v3220, %v3604
  %v3669 = vadd.f32 %v3221, %v3605
  %v3670 = vadd.f32 %v3222, %v3606
  %v3671 = vadd.f32 %v3223, %v3607
  %v3672 = vadd.f32 %v3224, %v3608
  %v3673 = vadd.f32 %v3225, %v3609
  %v3674 = vadd.f32 %v3226, %v3610
  %v3675 = vadd.f32 %v3227, %v3611
  %v3676 = vadd.f32 %v3228, %v3612
  %v3677 = vadd.f32 %v3229, %v3613
  %v3678 = vadd.f32 %v3230, %v3614
  %v3679 = vadd.f32 %v3231, %v3615
  %3680 = vst.msk [vmem:[%s6] sm:$0xff] %vm843, %v3616
  %3681 = vst.msk [vmem:[%s6 + $0x8] sm:$0xff] %vm843, %v3617
  %3682 = vst.msk [vmem:[%s6 + $0x10] sm:$0xff] %vm843, %v3618
  %3683 = vst.msk [vmem:[%s6 + $0x18] sm:$0xff] %vm843, %v3619
  %3684 = vst.msk [vmem:[%s6 + $0x20] sm:$0xff] %vm843, %v3620
  %3685 = vst.msk [vmem:[%s6 + $0x28] sm:$0xff] %vm843, %v3621
  %3686 = vst.msk [vmem:[%s6 + $0x30] sm:$0xff] %vm843, %v3622
  %3687 = vst.msk [vmem:[%s6 + $0x38] sm:$0xff] %vm843, %v3623
  %3688 = vst.msk [vmem:[%s6 + $0x40] sm:$0xff] %vm843, %v3624
  %3689 = vst.msk [vmem:[%s6 + $0x48] sm:$0xff] %vm843, %v3625
  %3690 = vst.msk [vmem:[%s6 + $0x50] sm:$0xff] %vm843, %v3626
  %3691 = vst.msk [vmem:[%s6 + $0x58] sm:$0xff] %vm843, %v3627
  %3692 = vst.msk [vmem:[%s6 + $0x60] sm:$0xff] %vm843, %v3628
  %3693 = vst.msk [vmem:[%s6 + $0x68] sm:$0xff] %vm843, %v3629
  %3694 = vst.msk [vmem:[%s6 + $0x70] sm:$0xff] %vm843, %v3630
  %3695 = vst.msk [vmem:[%s6 + $0x78] sm:$0xff] %vm843, %v3631
  %3696 = vst.msk [vmem:[%s6 + $0x80] sm:$0xff] %vm843, %v3632
  %3697 = vst.msk [vmem:[%s6 + $0x88] sm:$0xff] %vm843, %v3633
  %3698 = vst.msk [vmem:[%s6 + $0x90] sm:$0xff] %vm843, %v3634
  %3699 = vst.msk [vmem:[%s6 + $0x98] sm:$0xff] %vm843, %v3635
  %3700 = vst.msk [vmem:[%s6 + $0xa0] sm:$0xff] %vm843, %v3636
  %3701 = vst.msk [vmem:[%s6 + $0xa8] sm:$0xff] %vm843, %v3637
  %3702 = vst.msk [vmem:[%s6 + $0xb0] sm:$0xff] %vm843, %v3638
  %3703 = vst.msk [vmem:[%s6 + $0xb8] sm:$0xff] %vm843, %v3639
  %3704 = vst.msk [vmem:[%s6 + $0xc0] sm:$0xff] %vm843, %v3640
  %3705 = vst.msk [vmem:[%s6 + $0xc8] sm:$0xff] %vm843, %v3641
  %3706 = vst.msk [vmem:[%s6 + $0xd0] sm:$0xff] %vm843, %v3642
  %3707 = vst.msk [vmem:[%s6 + $0xd8] sm:$0xff] %vm843, %v3643
  %3708 = vst.msk [vmem:[%s6 + $0xe0] sm:$0xff] %vm843, %v3644
  %3709 = vst.msk [vmem:[%s6 + $0xe8] sm:$0xff] %vm843, %v3645
  %3710 = vst.msk [vmem:[%s6 + $0xf0] sm:$0xff] %vm843, %v3646
  %3711 = vst.msk [vmem:[%s6 + $0xf8] sm:$0xff] %vm843, %v3647
  %3712 = vst.msk [vmem:[%s6 + $0x100] sm:$0xff] %vm843, %v3648
  %3713 = vst.msk [vmem:[%s6 + $0x108] sm:$0xff] %vm843, %v3649
  %3714 = vst.msk [vmem:[%s6 + $0x110] sm:$0xff] %vm843, %v3650
  %3715 = vst.msk [vmem:[%s6 + $0x118] sm:$0xff] %vm843, %v3651
  %3716 = vst.msk [vmem:[%s6 + $0x120] sm:$0xff] %vm843, %v3652
  %3717 = vst.msk [vmem:[%s6 + $0x128] sm:$0xff] %vm843, %v3653
  %3718 = vst.msk [vmem:[%s6 + $0x130] sm:$0xff] %vm843, %v3654
  %3719 = vst.msk [vmem:[%s6 + $0x138] sm:$0xff] %vm843, %v3655
  %3720 = vst.msk [vmem:[%s6 + $0x140] sm:$0xff] %vm843, %v3656
  %3721 = vst.msk [vmem:[%s6 + $0x148] sm:$0xff] %vm843, %v3657
  %3722 = vst.msk [vmem:[%s6 + $0x150] sm:$0xff] %vm843, %v3658
  %3723 = vst.msk [vmem:[%s6 + $0x158] sm:$0xff] %vm843, %v3659
  %3724 = vst.msk [vmem:[%s6 + $0x160] sm:$0xff] %vm843, %v3660
  %3725 = vst.msk [vmem:[%s6 + $0x168] sm:$0xff] %vm843, %v3661
  %3726 = vst.msk [vmem:[%s6 + $0x170] sm:$0xff] %vm843, %v3662
  %3727 = vst.msk [vmem:[%s6 + $0x178] sm:$0xff] %vm843, %v3663
  %3728 = vst.msk [vmem:[%s6 + $0x180] sm:$0xff] %vm843, %v3664
  %3729 = vst.msk [vmem:[%s6 + $0x188] sm:$0xff] %vm843, %v3665
  %3730 = vst.msk [vmem:[%s6 + $0x190] sm:$0xff] %vm843, %v3666
  %3731 = vst.msk [vmem:[%s6 + $0x198] sm:$0xff] %vm843, %v3667
  %3732 = vst.msk [vmem:[%s6 + $0x1a0] sm:$0xff] %vm843, %v3668
  %3733 = vst.msk [vmem:[%s6 + $0x1a8] sm:$0xff] %vm843, %v3669
  %3734 = vst.msk [vmem:[%s6 + $0x1b0] sm:$0xff] %vm843, %v3670
  %3735 = vst.msk [vmem:[%s6 + $0x1b8] sm:$0xff] %vm843, %v3671
  %3736 = vst.msk [vmem:[%s6 + $0x1c0] sm:$0xff] %vm843, %v3672
  %3737 = vst.msk [vmem:[%s6 + $0x1c8] sm:$0xff] %vm843, %v3673
  %3738 = vst.msk [vmem:[%s6 + $0x1d0] sm:$0xff] %vm843, %v3674
  %3739 = vst.msk [vmem:[%s6 + $0x1d8] sm:$0xff] %vm843, %v3675
  %3740 = vst.msk [vmem:[%s6 + $0x1e0] sm:$0xff] %vm843, %v3676
  %3741 = vst.msk [vmem:[%s6 + $0x1e8] sm:$0xff] %vm843, %v3677
  %3742 = vst.msk [vmem:[%s6 + $0x1f0] sm:$0xff] %vm843, %v3678
  %3743 = vst.msk [vmem:[%s6 + $0x1f8] sm:$0xff] %vm843, %v3679
  // Predicated region
  $region26: #{review_kd_forward.10} parent=0 // pred_check
    _
  $region27: #{review_kd_forward.10} parent=0 // pred_check_branch
    %3745 = sbr.rel (0) target = $region29
  $region28: #{review_kd_forward.10} parent=0 // pred_region
    _
  $region29: #{review_kd_forward.10} parent=0 // pred_fallthru
    _
  // Predicated region
  $region30: #{review_kd_forward.10} parent=0 // pred_check
    _
  $region31: #{review_kd_forward.10} parent=0 // pred_check_branch
    %3747 = sbr.rel (0) target = $region33
  $region32: #{review_kd_forward.10} parent=0 // pred_region
    _
  $region33: #{review_kd_forward.10} parent=0 // pred_fallthru
    _

// kernel: review_kd_forward.11
$region0: #{review_kd_forward.11}
  #allocation0 [shape = 'u32[]', space=smem, size = 0x4, offset = 0x4, fixed_abs, tag = 'smem constant byte address 0x4 - core index']
  #allocation1 [shape = 'u32[144,128]{1,0:T(1,128)}', space=vmem, size = 0x12000, scoped, tag = 'internal scratch']
  %s0 = inlined_call_operand.vmem [shape: f32[2,362,16], index: 0, kind: input, shape index: {}]
  %s1 = inlined_call_operand.vmem [shape: bf16[9,16,8], index: 1, kind: input, shape index: {}]
  %s2 = inlined_call_operand.vmem [shape: f32[1,8], index: 2, kind: input, shape index: {}]
  %s3 = inlined_call_operand.vmem [shape: f32[2,324,8], index: 3, kind: output, shape index: {}]
  %s4 = sld [smem:[#allocation0]]
  $region45: #{review_kd_forward.11} parent=0
    _
  %s6 = ssub.s32 1, %s4
  %s7 = scalar_select 0, %s6, %s4
  loop: start=0, step=1, limit=4
  $region2: #{review_kd_forward.11} parent=0 // loop_pre_header
    _
  $region3: #{review_kd_forward.11} parent=0 // loop_header
    %s9 = sphi 0, %s13
    %p10 = scmp.ge.s32.totalorder %s9, 4
    %s19 = sphi 0, %s21
    %s22 = sphi 0, %s19
    %s23 = sphi 0, %s22
    %s39 = sphi 0, %s23
    %s43 = sphi 0, %s43
    %s45 = sphi 0, %s43
    %s46 = sphi 0, %s45
    %s60 = sphi 0, %s46
    %s64 = sphi 0, %s64
    %s66 = sphi 0, %s64
    %s67 = sphi 0, %s66
    %s81 = sphi 0, %s67
    %s87 = sphi 0, %s89
    %s90 = sphi 0, %s87
    %s91 = sphi 0, %s90
    %s107 = sphi 0, %s91
  $region4: #{review_kd_forward.11} parent=0 // loop_header_branch
    %12 = sbr.rel (%p10) target = $region8
  $region5: #{review_kd_forward.11} parent=0 // loop_body
    %s14 = ssub.s32 %s9, 1
    %s15 = ssub.s32 %s9, 2
    %s16 = sadd.s32 %s9, 1
    %s17 = ssub.s32 %s9, %s16
    %p18 = scmp.eq.s32.totalorder %s17, 0
    %s20 = sadd.s32 %s19, 1
    %s21 = scalar_select %p18, %s19, %s20
    %p24 = pneg %p18
    %p25 = scmp.eq.s32.totalorder %s9, 1
    %p26 = por %p24, %p25
    %p27 = scmp.ne.s32.totalorder %s19, %s22
    %p28 = scmp.eq.s32.totalorder %s9, 0
    %p29 = por %p27, %p28
    %p30 = scmp.ne.s32.totalorder %s19, %s22
    %p31 = scmp.eq.s32.totalorder %s14, 1
    %p32 = por %p30, %p31
    %p33 = scmp.ne.s32.totalorder %s22, %s23
    %p34 = scmp.eq.s32.totalorder %s14, 0
    %p35 = por %p33, %p34
    %p36 = scmp.ne.s32.totalorder %s22, %s23
    %p37 = scmp.eq.s32.totalorder %s15, 1
    %p38 = por %p36, %p37
    %p40 = scmp.ne.s32.totalorder %s23, %s39
    %p41 = scmp.eq.s32.totalorder %s15, 0
    %p42 = por %p40, %p41
    %s44 = sadd.s32 %s43, 1
    %p47 = scmp.eq.s32.totalorder %s9, 1
    %p48 = scmp.ne.s32.totalorder %s43, %s45
    %p49 = scmp.eq.s32.totalorder %s9, 0
    %p50 = por %p48, %p49
    %p51 = scmp.ne.s32.totalorder %s43, %s45
    %p52 = scmp.eq.s32.totalorder %s14, 1
    %p53 = por %p51, %p52
    %p54 = scmp.ne.s32.totalorder %s45, %s46
    %p55 = scmp.eq.s32.totalorder %s14, 0
    %p56 = por %p54, %p55
    %p57 = scmp.ne.s32.totalorder %s45, %s46
    %p58 = scmp.eq.s32.totalorder %s15, 1
    %p59 = por %p57, %p58
    %p61 = scmp.ne.s32.totalorder %s46, %s60
    %p62 = scmp.eq.s32.totalorder %s15, 0
    %p63 = por %p61, %p62
    %s65 = sadd.s32 %s64, 1
    %p68 = scmp.eq.s32.totalorder %s9, 1
    %p69 = scmp.ne.s32.totalorder %s64, %s66
    %p70 = scmp.eq.s32.totalorder %s9, 0
    %p71 = por %p69, %p70
    %p72 = scmp.ne.s32.totalorder %s64, %s66
    %p73 = scmp.eq.s32.totalorder %s14, 1
    %p74 = por %p72, %p73
    %p75 = scmp.ne.s32.totalorder %s66, %s67
    %p76 = scmp.eq.s32.totalorder %s14, 0
    %p77 = por %p75, %p76
    %p78 = scmp.ne.s32.totalorder %s66, %s67
    %p79 = scmp.eq.s32.totalorder %s15, 1
    %p80 = por %p78, %p79
    %p82 = scmp.ne.s32.totalorder %s67, %s81
    %p83 = scmp.eq.s32.totalorder %s15, 0
    %p84 = por %p82, %p83
    %s85 = ssub.s32 %s9, %s16
    %p86 = scmp.eq.s32.totalorder %s85, 0
    %s88 = sadd.s32 %s87, 1
    %s89 = scalar_select %p86, %s87, %s88
    %p92 = pneg %p86
    %p93 = scmp.eq.s32.totalorder %s9, 1
    %p94 = por %p92, %p93
    %p95 = scmp.ne.s32.totalorder %s87, %s90
    %p96 = scmp.eq.s32.totalorder %s9, 0
    %p97 = por %p95, %p96
    %p98 = scmp.ne.s32.totalorder %s87, %s90
    %p99 = scmp.eq.s32.totalorder %s14, 1
    %p100 = por %p98, %p99
    %p101 = scmp.ne.s32.totalorder %s90, %s91
    %p102 = scmp.eq.s32.totalorder %s14, 0
    %p103 = por %p101, %p102
    %p104 = scmp.ne.s32.totalorder %s90, %s91
    %p105 = scmp.eq.s32.totalorder %s15, 1
    %p106 = por %p104, %p105
    %p108 = scmp.ne.s32.totalorder %s91, %s107
    %p109 = scmp.eq.s32.totalorder %s15, 0
    %p110 = por %p108, %p109
    %p111 = scmp.le.s32.totalorder 1, %s9
    %p112 = scmp.lt.s32.totalorder %s9, 3
    %p113 = pnand %p111, %p112
    %p114 = pneg %p113
    // Predicated region
    $region9: #{review_kd_forward.11} parent=5 // pred_check
      _
    $region10: #{review_kd_forward.11} parent=5 // pred_check_branch
      %116 = sbr.rel (%p113) target = $region12
    $region11: #{review_kd_forward.11} parent=5 // pred_region
      %s117 = ssub.s32 %s9, 1
      // Predicated region
      $region13: #{review_kd_forward.11} parent=11 // pred_check
        %p118 = pneg %p56
      $region14: #{review_kd_forward.11} parent=11 // pred_check_branch
        %120 = sbr.rel (%p118) target = $region16
      $region15: #{review_kd_forward.11} parent=11 // pred_region
        _
      $region16: #{review_kd_forward.11} parent=11 // pred_fallthru
        _
      // Predicated region
      $region17: #{review_kd_forward.11} parent=11 // pred_check
        %p121 = pneg %p77
      $region18: #{review_kd_forward.11} parent=11 // pred_check_branch
        %123 = sbr.rel (%p121) target = $region20
      $region19: #{review_kd_forward.11} parent=11 // pred_region
        _
      $region20: #{review_kd_forward.11} parent=11 // pred_fallthru
        _
    $region12: #{review_kd_forward.11} parent=5 // pred_fallthru
      _
    %p124 = scmp.lt.s32.totalorder %s9, 2
    // Predicated region
    $region21: #{review_kd_forward.11} parent=5 // pred_check
      %p125 = pneg %p124
    $region22: #{review_kd_forward.11} parent=5 // pred_check_branch
      %127 = sbr.rel (%p125) target = $region24
    $region23: #{review_kd_forward.11} parent=5 // pred_region
      // Predicated region
      $region25: #{review_kd_forward.11} parent=23 // pred_check
        %p128 = pneg %p29
      $region26: #{review_kd_forward.11} parent=23 // pred_check_branch
        %130 = sbr.rel (%p128) target = $region28
      $region27: #{review_kd_forward.11} parent=23 // pred_region
        %p131 = scmp.lt.s32.totalorder %s9, 1
        %s132 = scalar_select %p131, %s9, 1
        %s133 = smul.addr %s132, 46
        %s134 = smul.addr %s133, 8
        %s135 = scalar_lea.vmem %s0, %s134
      $region28: #{review_kd_forward.11} parent=23 // pred_fallthru
        _
    $region24: #{review_kd_forward.11} parent=5 // pred_fallthru
      _
    %p136 = scmp.le.s32.totalorder 1, %s9
    %p137 = scmp.lt.s32.totalorder %s9, 3
    %p138 = pnand %p136, %p137
    %p139 = pneg %p138
    // Predicated region
    $region29: #{review_kd_forward.11} parent=5 // pred_check
      _
    $region30: #{review_kd_forward.11} parent=5 // pred_check_branch
      %141 = sbr.rel (%p138) target = $region32
    $region31: #{review_kd_forward.11} parent=5 // pred_region
      %s142 = ssub.s32 %s9, 1
      %p143 = scmp.lt.s32.totalorder %s14, 1
      %s144 = scalar_select %p143, %s14, 1
      %s145 = smul.addr %s144, 46
      %s146 = smul.addr %s145, 8
      %s147 = scalar_lea.vmem %s0, %s146
      %p148 = pneg %p35
      %p149 = pneg %p32
      %p150 = pneg %p56
      %p151 = pneg %p53
      %p152 = pneg %p77
      %p153 = pneg %p74
      %p154 = pneg %p103
      %p155 = pneg %p100
      %p156 = scmp.lt.s32.totalorder %s14, 1
      %s157 = scalar_select %p156, %s14, 1
      %s158 = smul.addr %s157, 41
      %s159 = smul.addr %s158, 8
      %s160 = scalar_lea.vmem %s3, %s159
      %p161 = scmp.lt.s32.totalorder %s14, 1
      %s162 = scalar_select %p161, %s14, 1
      %s163 = smul.addr %s162, 46
      %s164 = smul.addr %s163, 8
      %s165 = scalar_lea.vmem %s0, %s164
      %p166 = scmp.lt.s32.totalorder %s14, 1
      %s167 = scalar_select %p166, %s14, 1
      %s168 = smul.addr %s167, 41
      %s169 = smul.addr %s168, 8
      %s170 = scalar_lea.vmem %s3, %s169
      %v172 = vld [vmem:[%s165] sm:$0xff]
      %v173 = vld [vmem:[%s165 + $0x8] sm:$0xff]
      %v174 = vld [vmem:[%s165 + $0x10] sm:$0xff]
      %v175 = vld [vmem:[%s165 + $0x18] sm:$0xff]
      %v176 = vld [vmem:[%s165 + $0x20] sm:$0xff]
      %v177 = vld [vmem:[%s165 + $0x28] sm:$0xff]
      %v178 = vld [vmem:[%s165 + $0x30] sm:$0xff]
      %v179 = vld [vmem:[%s165 + $0x38] sm:$0xff]
      %v180 = vld [vmem:[%s165 + $0x40] sm:$0xff]
      %v181 = vld [vmem:[%s165 + $0x48] sm:$0xff]
      %v182 = vld [vmem:[%s165 + $0x50] sm:$0xff]
      %v183 = vld [vmem:[%s165 + $0x58] sm:$0xff]
      %v184 = vld [vmem:[%s165 + $0x60] sm:$0xff]
      %v185 = vld [vmem:[%s165 + $0x68] sm:$0xff]
      %v186 = vld [vmem:[%s165 + $0x70] sm:$0xff]
      %v187 = vld [vmem:[%s165 + $0x78] sm:$0xff]
      %v188 = vld [vmem:[%s165 + $0x80] sm:$0xff]
      %v189 = vld [vmem:[%s165 + $0x88] sm:$0xff]
      %v190 = vld [vmem:[%s165 + $0x90] sm:$0xff]
      %v191 = vld [vmem:[%s165 + $0x98] sm:$0xff]
      %v192 = vld [vmem:[%s165 + $0xa0] sm:$0xff]
      %v193 = vld [vmem:[%s165 + $0xa8] sm:$0xff]
      %v194 = vld [vmem:[%s165 + $0xb0] sm:$0xff]
      %v195 = vld [vmem:[%s165 + $0xb8] sm:$0xff]
      %v196 = vld [vmem:[%s165 + $0xc0] sm:$0xff]
      %v197 = vld [vmem:[%s165 + $0xc8] sm:$0xff]
      %v198 = vld [vmem:[%s165 + $0xd0] sm:$0xff]
      %v199 = vld [vmem:[%s165 + $0xd8] sm:$0xff]
      %v200 = vld [vmem:[%s165 + $0xe0] sm:$0xff]
      %v201 = vld [vmem:[%s165 + $0xe8] sm:$0xff]
      %v202 = vld [vmem:[%s165 + $0xf0] sm:$0xff]
      %v203 = vld [vmem:[%s165 + $0xf8] sm:$0xff]
      %v204 = vld [vmem:[%s165 + $0x100] sm:$0xff]
      %v205 = vld [vmem:[%s165 + $0x108] sm:$0xff]
      %v206 = vld [vmem:[%s165 + $0x110] sm:$0xff]
      %v207 = vld [vmem:[%s165 + $0x118] sm:$0xff]
      %v208 = vld [vmem:[%s165 + $0x120] sm:$0xff]
      %v209 = vld [vmem:[%s165 + $0x128] sm:$0xff]
      %v210 = vld [vmem:[%s165 + $0x130] sm:$0xff]
      %v211 = vld [vmem:[%s165 + $0x138] sm:$0xff]
      %v212 = vld [vmem:[%s165 + $0x140] sm:$0xf]
      %v213 = vpack.c.bf16 %v173, %v172
      %v214 = vpack.c.bf16 %v175, %v174
      %v215 = vpack.c.bf16 %v177, %v176
      %v216 = vpack.c.bf16 %v179, %v178
      %v217 = vpack.c.bf16 %v181, %v180
      %v218 = vpack.c.bf16 %v183, %v182
      %v219 = vpack.c.bf16 %v185, %v184
      %v220 = vpack.c.bf16 %v187, %v186
      %v221 = vpack.c.bf16 %v189, %v188
      %v222 = vpack.c.bf16 %v191, %v190
      %v223 = vpack.c.bf16 %v193, %v192
      %v224 = vpack.c.bf16 %v195, %v194
      %v225 = vpack.c.bf16 %v197, %v196
      %v226 = vpack.c.bf16 %v199, %v198
      %v227 = vpack.c.bf16 %v201, %v200
      %v228 = vpack.c.bf16 %v203, %v202
      %v229 = vpack.c.bf16 %v205, %v204
      %v230 = vpack.c.bf16 %v207, %v206
      %v231 = vpack.c.bf16 %v209, %v208
      %v232 = vpack.c.bf16 %v211, %v210
      %v233 = vpack.c.bf16 %v212, %v212
      %v234 = vld [vmem:[%s1] sm:$0xf]
      %v235 = vld [vmem:[%s1 + $0x4] sm:$0xf]
      %v236 = vld [vmem:[%s165 + $0x1] sm:$0xff]
      %v237 = vld [vmem:[%s165 + $0x9] sm:$0xff]
      %v238 = vld [vmem:[%s165 + $0x11] sm:$0xff]
      %v239 = vld [vmem:[%s165 + $0x19] sm:$0xff]
      %v240 = vld [vmem:[%s165 + $0x21] sm:$0xff]
      %v241 = vld [vmem:[%s165 + $0x29] sm:$0xff]
      %v242 = vld [vmem:[%s165 + $0x31] sm:$0xff]
      %v243 = vld [vmem:[%s165 + $0x39] sm:$0xff]
      %v244 = vld [vmem:[%s165 + $0x41] sm:$0xff]
      %v245 = vld [vmem:[%s165 + $0x49] sm:$0xff]
      %v246 = vld [vmem:[%s165 + $0x51] sm:$0xff]
      %v247 = vld [vmem:[%s165 + $0x59] sm:$0xff]
      %v248 = vld [vmem:[%s165 + $0x61] sm:$0xff]
      %v249 = vld [vmem:[%s165 + $0x69] sm:$0xff]
      %v250 = vld [vmem:[%s165 + $0x71] sm:$0xff]
      %v251 = vld [vmem:[%s165 + $0x79] sm:$0xff]
      %v252 = vld [vmem:[%s165 + $0x81] sm:$0xff]
      %v253 = vld [vmem:[%s165 + $0x89] sm:$0xff]
      %v254 = vld [vmem:[%s165 + $0x91] sm:$0xff]
      %v255 = vld [vmem:[%s165 + $0x99] sm:$0xff]
      %v256 = vld [vmem:[%s165 + $0xa1] sm:$0xff]
      %v257 = vld [vmem:[%s165 + $0xa9] sm:$0xff]
      %v258 = vld [vmem:[%s165 + $0xb1] sm:$0xff]
      %v259 = vld [vmem:[%s165 + $0xb9] sm:$0xff]
      %v260 = vld [vmem:[%s165 + $0xc1] sm:$0xff]
      %v261 = vld [vmem:[%s165 + $0xc9] sm:$0xff]
      %v262 = vld [vmem:[%s165 + $0xd1] sm:$0xff]
      %v263 = vld [vmem:[%s165 + $0xd9] sm:$0xff]
      %v264 = vld [vmem:[%s165 + $0xe1] sm:$0xff]
      %v265 = vld [vmem:[%s165 + $0xe9] sm:$0xff]
      %v266 = vld [vmem:[%s165 + $0xf1] sm:$0xff]
      %v267 = vld [vmem:[%s165 + $0xf9] sm:$0xff]
      %v268 = vld [vmem:[%s165 + $0x101] sm:$0xff]
      %v269 = vld [vmem:[%s165 + $0x109] sm:$0xff]
      %v270 = vld [vmem:[%s165 + $0x111] sm:$0xff]
      %v271 = vld [vmem:[%s165 + $0x119] sm:$0xff]
      %v272 = vld [vmem:[%s165 + $0x121] sm:$0xff]
      %v273 = vld [vmem:[%s165 + $0x129] sm:$0xff]
      %v274 = vld [vmem:[%s165 + $0x131] sm:$0xff]
      %v275 = vld [vmem:[%s165 + $0x139] sm:$0xff]
      %v276 = vld [vmem:[%s165 + $0x141] sm:$0xf]
      %v277 = vpack.c.bf16 %v237, %v236
      %v278 = vpack.c.bf16 %v239, %v238
      %v279 = vpack.c.bf16 %v241, %v240
      %v280 = vpack.c.bf16 %v243, %v242
      %v281 = vpack.c.bf16 %v245, %v244
      %v282 = vpack.c.bf16 %v247, %v246
      %v283 = vpack.c.bf16 %v249, %v248
      %v284 = vpack.c.bf16 %v251, %v250
      %v285 = vpack.c.bf16 %v253, %v252
      %v286 = vpack.c.bf16 %v255, %v254
      %v287 = vpack.c.bf16 %v257, %v256
      %v288 = vpack.c.bf16 %v259, %v258
      %v289 = vpack.c.bf16 %v261, %v260
      %v290 = vpack.c.bf16 %v263, %v262
      %v291 = vpack.c.bf16 %v265, %v264
      %v292 = vpack.c.bf16 %v267, %v266
      %v293 = vpack.c.bf16 %v269, %v268
      %v294 = vpack.c.bf16 %v271, %v270
      %v295 = vpack.c.bf16 %v273, %v272
      %v296 = vpack.c.bf16 %v275, %v274
      %v297 = vpack.c.bf16 %v276, %v276
      %s298 = scalar_lea.vmem %s1, 8
      %v299 = vld [vmem:[%s298] sm:$0xf]
      %v300 = vld [vmem:[%s298 + $0x4] sm:$0xf]
      %v303 = vunpack.c.l.b16 %v299
      %v304 = vunpack.c.l.b16 %v300
      %v305 = vpack.c.b16 %v304, %v303
      %vm307 = vcmask 130048
      %v309 = vsel %vm307, %v277, 0
      %v312 = vsel %vm307, %v278, 0
      %v315 = vsel %vm307, %v279, 0
      %v318 = vsel %vm307, %v280, 0
      %v321 = vsel %vm307, %v281, 0
      %v324 = vsel %vm307, %v282, 0
      %v327 = vsel %vm307, %v283, 0
      %v330 = vsel %vm307, %v284, 0
      %v333 = vsel %vm307, %v285, 0
      %v336 = vsel %vm307, %v286, 0
      %v339 = vsel %vm307, %v287, 0
      %v342 = vsel %vm307, %v288, 0
      %v345 = vsel %vm307, %v289, 0
      %v348 = vsel %vm307, %v290, 0
      %v351 = vsel %vm307, %v291, 0
      %v354 = vsel %vm307, %v292, 0
      %v357 = vsel %vm307, %v293, 0
      %v360 = vsel %vm307, %v294, 0
      %v363 = vsel %vm307, %v295, 0
      %v366 = vsel %vm307, %v296, 0
      %v369 = vsel %vm307, %v297, 0
      %371 = vmatprep.subr.bf16.mxu0 0
      %372 = vmatpush1.bf16.msra.mxu0 %v305
      %373 = vmatprep.subr.bf16.mxu0 0
      %374 = vmatpush1.bf16.msra.mxu0 0
      %375 = vmatprep.subr.bf16.mxu0 0
      %376 = vmatpush1.bf16.msra.mxu0 0
      %377 = vmatprep.subr.bf16.mxu0 0
      %378 = vmatpush1.bf16.msra.mxu0 0
      %379 = vmatprep.subr.bf16.mxu0 0
      %380 = vmatpush1.bf16.msra.mxu0 0
      %381 = vmatprep.subr.bf16.mxu0 0
      %382 = vmatpush1.bf16.msra.mxu0 0
      %383 = vmatprep.subr.bf16.mxu0 0
      %384 = vmatpush1.bf16.msra.mxu0 0
      %385 = vmatprep.subr.bf16.mxu0 0
      %386 = vmatpush1.bf16.msra.mxu0 0
      %387 = vmatprep.subr.bf16.mxu0 0
      %388 = vmatpush1.bf16.msra.mxu0 0
      %389 = vmatprep.subr.bf16.mxu0 0
      %390 = vmatpush1.bf16.msra.mxu0 0
      %391 = vmatprep.subr.bf16.mxu0 0
      %392 = vmatpush1.bf16.msra.mxu0 0
      %393 = vmatprep.subr.bf16.mxu0 0
      %394 = vmatpush1.bf16.msra.mxu0 0
      %395 = vmatprep.subr.bf16.mxu0 0
      %396 = vmatpush1.bf16.msra.mxu0 0
      %397 = vmatprep.subr.bf16.mxu0 0
      %398 = vmatpush1.bf16.msra.mxu0 0
      %399 = vmatprep.subr.bf16.mxu0 0
      %400 = vmatpush1.bf16.msra.mxu0 0
      %401 = vmatprep.subr.bf16.mxu0 0
      %402 = vmatpush1.bf16.msra.mxu0 0
      %403 = vmatprep.mubr.bf16.mxu0 0
      %404 = vmatmul.mubr.bf16.gmra.mrb[0].mxu0 %v309
      %v405 = vpop.f32.mrb[0].mxu0
      %v406 = vadd.f32 0.0, %v405
      %v407 = vpop.f32.mrb[0].mxu0
      %v408 = vpop.f32.mrb[0].mxu0
      %v409 = vadd.f32 0.0, %v408
      %v410 = vpop.f32.mrb[0].mxu0
      %411 = vmatprep.mubr.bf16.mxu0 0
      %412 = vmatmul.mubr.bf16.gmra.mrb[0].mxu0 %v312
      %v413 = vpop.f32.mrb[0].mxu0
      %v414 = vadd.f32 0.0, %v413
      %v415 = vpop.f32.mrb[0].mxu0
      %v416 = vpop.f32.mrb[0].mxu0
      %v417 = vadd.f32 0.0, %v416
      %v418 = vpop.f32.mrb[0].mxu0
      %419 = vmatprep.mubr.bf16.mxu0 0
      %420 = vmatmul.mubr.bf16.gmra.mrb[0].mxu0 %v315
      %v421 = vpop.f32.mrb[0].mxu0
      %v422 = vadd.f32 0.0, %v421
      %v423 = vpop.f32.mrb[0].mxu0
      %v424 = vpop.f32.mrb[0].mxu0
      %v425 = vadd.f32 0.0, %v424
      %v426 = vpop.f32.mrb[0].mxu0
      %427 = vmatprep.mubr.bf16.mxu0 0
      %428 = vmatmul.mubr.bf16.gmra.mrb[0].mxu0 %v318
      %v429 = vpop.f32.mrb[0].mxu0
      %v430 = vadd.f32 0.0, %v429
      %v431 = vpop.f32.mrb[0].mxu0
      %v432 = vpop.f32.mrb[0].mxu0
      %v433 = vadd.f32 0.0, %v432
      %v434 = vpop.f32.mrb[0].mxu0
      %435 = vmatprep.mubr.bf16.mxu0 0
      %436 = vmatmul.mubr.bf16.gmra.mrb[0].mxu0 %v321
      %v437 = vpop.f32.mrb[0].mxu0
      %v438 = vadd.f32 0.0, %v437
      %v439 = vpop.f32.mrb[0].mxu0
      %v440 = vpop.f32.mrb[0].mxu0
      %v441 = vadd.f32 0.0, %v440
      %v442 = vpop.f32.mrb[0].mxu0
      %443 = vmatprep.mubr.bf16.mxu0 0
      %444 = vmatmul.mubr.bf16.gmra.mrb[0].mxu0 %v324
      %v445 = vpop.f32.mrb[0].mxu0
      %v446 = vadd.f32 0.0, %v445
      %v447 = vpop.f32.mrb[0].mxu0
      %v448 = vpop.f32.mrb[0].mxu0
      %v449 = vadd.f32 0.0, %v448
      %v450 = vpop.f32.mrb[0].mxu0
      %451 = vmatprep.mubr.bf16.mxu0 0
      %452 = vmatmul.mubr.bf16.gmra.mrb[0].mxu0 %v327
      %v453 = vpop.f32.mrb[0].mxu0
      %v454 = vadd.f32 0.0, %v453
      %v455 = vpop.f32.mrb[0].mxu0
      %v456 = vpop.f32.mrb[0].mxu0
      %v457 = vadd.f32 0.0, %v456
      %v458 = vpop.f32.mrb[0].mxu0
      %459 = vmatprep.mubr.bf16.mxu0 0
      %460 = vmatmul.mubr.bf16.gmra.mrb[0].mxu0 %v330
      %v461 = vpop.f32.mrb[0].mxu0
      %v462 = vadd.f32 0.0, %v461
      %v463 = vpop.f32.mrb[0].mxu0
      %v464 = vpop.f32.mrb[0].mxu0
      %v465 = vadd.f32 0.0, %v464
      %v466 = vpop.f32.mrb[0].mxu0
      %467 = vmatprep.mubr.bf16.mxu0 0
      %468 = vmatmul.mubr.bf16.gmra.mrb[0].mxu0 %v333
      %v469 = vpop.f32.mrb[0].mxu0
      %v470 = vadd.f32 0.0, %v469
      %v471 = vpop.f32.mrb[0].mxu0
      %v472 = vpop.f32.mrb[0].mxu0
      %v473 = vadd.f32 0.0, %v472
      %v474 = vpop.f32.mrb[0].mxu0
      %475 = vmatprep.mubr.bf16.mxu0 0
      %476 = vmatmul.mubr.bf16.gmra.mrb[0].mxu0 %v336
      %v477 = vpop.f32.mrb[0].mxu0
      %v478 = vadd.f32 0.0, %v477
      %v479 = vpop.f32.mrb[0].mxu0
      %v480 = vpop.f32.mrb[0].mxu0
      %v481 = vadd.f32 0.0, %v480
      %v482 = vpop.f32.mrb[0].mxu0
      %483 = vmatprep.mubr.bf16.mxu0 0
      %484 = vmatmul.mubr.bf16.gmra.mrb[0].mxu0 %v339
      %v485 = vpop.f32.mrb[0].mxu0
      %v486 = vadd.f32 0.0, %v485
      %v487 = vpop.f32.mrb[0].mxu0
      %v488 = vpop.f32.mrb[0].mxu0
      %v489 = vadd.f32 0.0, %v488
      %v490 = vpop.f32.mrb[0].mxu0
      %491 = vmatprep.mubr.bf16.mxu0 0
      %492 = vmatmul.mubr.bf16.gmra.mrb[0].mxu0 %v342
      %v493 = vpop.f32.mrb[0].mxu0
      %v494 = vadd.f32 0.0, %v493
      %v495 = vpop.f32.mrb[0].mxu0
      %v496 = vpop.f32.mrb[0].mxu0
      %v497 = vadd.f32 0.0, %v496
      %v498 = vpop.f32.mrb[0].mxu0
      %499 = vmatprep.mubr.bf16.mxu0 0
      %500 = vmatmul.mubr.bf16.gmra.mrb[0].mxu0 %v345
      %v501 = vpop.f32.mrb[0].mxu0
      %v502 = vadd.f32 0.0, %v501
      %v503 = vpop.f32.mrb[0].mxu0
      %v504 = vpop.f32.mrb[0].mxu0
      %v505 = vadd.f32 0.0, %v504
      %v506 = vpop.f32.mrb[0].mxu0
      %507 = vmatprep.mubr.bf16.mxu0 0
      %508 = vmatmul.mubr.bf16.gmra.mrb[0].mxu0 %v348
      %v509 = vpop.f32.mrb[0].mxu0
      %v510 = vadd.f32 0.0, %v509
      %v511 = vpop.f32.mrb[0].mxu0
      %v512 = vpop.f32.mrb[0].mxu0
      %v513 = vadd.f32 0.0, %v512
      %v514 = vpop.f32.mrb[0].mxu0
      %515 = vmatprep.mubr.bf16.mxu0 0
      %516 = vmatmul.mubr.bf16.gmra.mrb[0].mxu0 %v351
      %v517 = vpop.f32.mrb[0].mxu0
      %v518 = vadd.f32 0.0, %v517
      %v519 = vpop.f32.mrb[0].mxu0
      %v520 = vpop.f32.mrb[0].mxu0
      %v521 = vadd.f32 0.0, %v520
      %v522 = vpop.f32.mrb[0].mxu0
      %523 = vmatprep.mubr.bf16.mxu0 0
      %524 = vmatmul.mubr.bf16.gmra.mrb[0].mxu0 %v354
      %v525 = vpop.f32.mrb[0].mxu0
      %v526 = vadd.f32 0.0, %v525
      %v527 = vpop.f32.mrb[0].mxu0
      %v528 = vpop.f32.mrb[0].mxu0
      %v529 = vadd.f32 0.0, %v528
      %v530 = vpop.f32.mrb[0].mxu0
      %531 = vmatprep.mubr.bf16.mxu0 0
      %532 = vmatmul.mubr.bf16.gmra.mrb[0].mxu0 %v357
      %v533 = vpop.f32.mrb[0].mxu0
      %v534 = vadd.f32 0.0, %v533
      %v535 = vpop.f32.mrb[0].mxu0
      %v536 = vpop.f32.mrb[0].mxu0
      %v537 = vadd.f32 0.0, %v536
      %v538 = vpop.f32.mrb[0].mxu0
      %539 = vmatprep.mubr.bf16.mxu0 0
      %540 = vmatmul.mubr.bf16.gmra.mrb[0].mxu0 %v360
      %v541 = vpop.f32.mrb[0].mxu0
      %v542 = vadd.f32 0.0, %v541
      %v543 = vpop.f32.mrb[0].mxu0
      %v544 = vpop.f32.mrb[0].mxu0
      %v545 = vadd.f32 0.0, %v544
      %v546 = vpop.f32.mrb[0].mxu0
      %547 = vmatprep.mubr.bf16.mxu0 0
      %548 = vmatmul.mubr.bf16.gmra.mrb[0].mxu0 %v363
      %v549 = vpop.f32.mrb[0].mxu0
      %v550 = vadd.f32 0.0, %v549
      %v551 = vpop.f32.mrb[0].mxu0
      %v552 = vpop.f32.mrb[0].mxu0
      %v553 = vadd.f32 0.0, %v552
      %v554 = vpop.f32.mrb[0].mxu0
      %555 = vmatprep.mubr.bf16.mxu0 0
      %556 = vmatmul.mubr.bf16.gmra.mrb[0].mxu0 %v366
      %v557 = vpop.f32.mrb[0].mxu0
      %v558 = vadd.f32 0.0, %v557
      %v559 = vpop.f32.mrb[0].mxu0
      %v560 = vpop.f32.mrb[0].mxu0
      %v561 = vadd.f32 0.0, %v560
      %v562 = vpop.f32.mrb[0].mxu0
      %563 = vmatprep.mubr.bf16.mxu0 0
      %564 = vmatmul.mubr.bf16.gmra.mrb[0].mxu0 %v369
      %v565 = vpop.f32.mrb[0].mxu0
      %v566 = vadd.f32 0.0, %v565
      %v567 = vpop.f32.mrb[0].mxu0
      %v568 = vpop.f32.mrb[0].mxu0
      %v569 = vpop.f32.mrb[0].mxu0
      %570 = vdwg.mxu0
      %v573 = vunpack.c.l.b16 %v234
      %v574 = vunpack.c.l.b16 %v235
      %v575 = vpack.c.b16 %v574, %v573
      %v578 = vsel %vm307, %v213, 0
      %v581 = vsel %vm307, %v214, 0
      %v584 = vsel %vm307, %v215, 0
      %v587 = vsel %vm307, %v216, 0
      %v590 = vsel %vm307, %v217, 0
      %v593 = vsel %vm307, %v218, 0
      %v596 = vsel %vm307, %v219, 0
      %v599 = vsel %vm307, %v220, 0
      %v602 = vsel %vm307, %v221, 0
      %v605 = vsel %vm307, %v222, 0
      %v608 = vsel %vm307, %v223, 0
      %v611 = vsel %vm307, %v224, 0
      %v614 = vsel %vm307, %v225, 0
      %v617 = vsel %vm307, %v226, 0
      %v620 = vsel %vm307, %v227, 0
      %v623 = vsel %vm307, %v228, 0
      %v626 = vsel %vm307, %v229, 0
      %v629 = vsel %vm307, %v230, 0
      %v632 = vsel %vm307, %v231, 0
      %v635 = vsel %vm307, %v232, 0
      %v638 = vsel %vm307, %v233, 0
      %640 = vmatprep.subr.bf16.mxu0 0
      %641 = vmatpush1.bf16.msra.mxu0 %v575
      %642 = vmatprep.subr.bf16.mxu0 0
      %643 = vmatpush1.bf16.msra.mxu0 0
      %644 = vmatprep.subr.bf16.mxu0 0
      %645 = vmatpush1.bf16.msra.mxu0 0
      %646 = vmatprep.subr.bf16.mxu0 0
      %647 = vmatpush1.bf16.msra.mxu0 0
      %648 = vmatprep.subr.bf16.mxu0 0
      %649 = vmatpush1.bf16.msra.mxu0 0
      %650 = vmatprep.subr.bf16.mxu0 0
      %651 = vmatpush1.bf16.msra.mxu0 0
      %652 = vmatprep.subr.bf16.mxu0 0
      %653 = vmatpush1.bf16.msra.mxu0 0
      %654 = vmatprep.subr.bf16.mxu0 0
      %655 = vmatpush1.bf16.msra.mxu0 0
      %656 = vmatprep.subr.bf16.mxu0 0
      %657 = vmatpush1.bf16.msra.mxu0 0
      %658 = vmatprep.subr.bf16.mxu0 0
      %659 = vmatpush1.bf16.msra.mxu0 0
      %660 = vmatprep.subr.bf16.mxu0 0
      %661 = vmatpush1.bf16.msra.mxu0 0
      %662 = vmatprep.subr.bf16.mxu0 0
      %663 = vmatpush1.bf16.msra.mxu0 0
      %664 = vmatprep.subr.bf16.mxu0 0
      %665 = vmatpush1.bf16.msra.mxu0 0
      %666 = vmatprep.subr.bf16.mxu0 0
      %667 = vmatpush1.bf16.msra.mxu0 0
      %668 = vmatprep.subr.bf16.mxu0 0
      %669 = vmatpush1.bf16.msra.mxu0 0
      %670 = vmatprep.subr.bf16.mxu0 0
      %671 = vmatpush1.bf16.msra.mxu0 0
      %672 = vmatprep.mubr.bf16.mxu0 0
      %673 = vmatmul.mubr.bf16.gmra.mrb[0].mxu0 %v578
      %v674 = vpop.f32.mrb[0].mxu0
      %v675 = vadd.f32 %v406, %v674
      %v676 = vpop.f32.mrb[0].mxu0
      %v677 = vpop.f32.mrb[0].mxu0
      %v678 = vadd.f32 %v409, %v677
      %v679 = vpop.f32.mrb[0].mxu0
      %680 = vmatprep.mubr.bf16.mxu0 0
      %681 = vmatmul.mubr.bf16.gmra.mrb[0].mxu0 %v581
      %v682 = vpop.f32.mrb[0].mxu0
      %v683 = vadd.f32 %v414, %v682
      %v684 = vpop.f32.mrb[0].mxu0
      %v685 = vpop.f32.mrb[0].mxu0
      %v686 = vadd.f32 %v417, %v685
      %v687 = vpop.f32.mrb[0].mxu0
      %688 = vmatprep.mubr.bf16.mxu0 0
      %689 = vmatmul.mubr.bf16.gmra.mrb[0].mxu0 %v584
      %v690 = vpop.f32.mrb[0].mxu0
      %v691 = vadd.f32 %v422, %v690
      %v692 = vpop.f32.mrb[0].mxu0
      %v693 = vpop.f32.mrb[0].mxu0
      %v694 = vadd.f32 %v425, %v693
      %v695 = vpop.f32.mrb[0].mxu0
      %696 = vmatprep.mubr.bf16.mxu0 0
      %697 = vmatmul.mubr.bf16.gmra.mrb[0].mxu0 %v587
      %v698 = vpop.f32.mrb[0].mxu0
      %v699 = vadd.f32 %v430, %v698
      %v700 = vpop.f32.mrb[0].mxu0
      %v701 = vpop.f32.mrb[0].mxu0
      %v702 = vadd.f32 %v433, %v701
      %v703 = vpop.f32.mrb[0].mxu0
      %704 = vmatprep.mubr.bf16.mxu0 0
      %705 = vmatmul.mubr.bf16.gmra.mrb[0].mxu0 %v590
      %v706 = vpop.f32.mrb[0].mxu0
      %v707 = vadd.f32 %v438, %v706
      %v708 = vpop.f32.mrb[0].mxu0
      %v709 = vpop.f32.mrb[0].mxu0
      %v710 = vadd.f32 %v441, %v709
      %v711 = vpop.f32.mrb[0].mxu0
      %712 = vmatprep.mubr.bf16.mxu0 0
      %713 = vmatmul.mubr.bf16.gmra.mrb[0].mxu0 %v593
      %v714 = vpop.f32.mrb[0].mxu0
      %v715 = vadd.f32 %v446, %v714
      %v716 = vpop.f32.mrb[0].mxu0
      %v717 = vpop.f32.mrb[0].mxu0
      %v718 = vadd.f32 %v449, %v717
      %v719 = vpop.f32.mrb[0].mxu0
      %720 = vmatprep.mubr.bf16.mxu0 0
      %721 = vmatmul.mubr.bf16.gmra.mrb[0].mxu0 %v596
      %v722 = vpop.f32.mrb[0].mxu0
      %v723 = vadd.f32 %v454, %v722
      %v724 = vpop.f32.mrb[0].mxu0
      %v725 = vpop.f32.mrb[0].mxu0
      %v726 = vadd.f32 %v457, %v725
      %v727 = vpop.f32.mrb[0].mxu0
      %728 = vmatprep.mubr.bf16.mxu0 0
      %729 = vmatmul.mubr.bf16.gmra.mrb[0].mxu0 %v599
      %v730 = vpop.f32.mrb[0].mxu0
      %v731 = vadd.f32 %v462, %v730
      %v732 = vpop.f32.mrb[0].mxu0
      %v733 = vpop.f32.mrb[0].mxu0
      %v734 = vadd.f32 %v465, %v733
      %v735 = vpop.f32.mrb[0].mxu0
      %736 = vmatprep.mubr.bf16.mxu0 0
      %737 = vmatmul.mubr.bf16.gmra.mrb[0].mxu0 %v602
      %v738 = vpop.f32.mrb[0].mxu0
      %v739 = vadd.f32 %v470, %v738
      %v740 = vpop.f32.mrb[0].mxu0
      %v741 = vpop.f32.mrb[0].mxu0
      %v742 = vadd.f32 %v473, %v741
      %v743 = vpop.f32.mrb[0].mxu0
      %744 = vmatprep.mubr.bf16.mxu0 0
      %745 = vmatmul.mubr.bf16.gmra.mrb[0].mxu0 %v605
      %v746 = vpop.f32.mrb[0].mxu0
      %v747 = vadd.f32 %v478, %v746
      %v748 = vpop.f32.mrb[0].mxu0
      %v749 = vpop.f32.mrb[0].mxu0
      %v750 = vadd.f32 %v481, %v749
      %v751 = vpop.f32.mrb[0].mxu0
      %752 = vmatprep.mubr.bf16.mxu0 0
      %753 = vmatmul.mubr.bf16.gmra.mrb[0].mxu0 %v608
      %v754 = vpop.f32.mrb[0].mxu0
      %v755 = vadd.f32 %v486, %v754
      %v756 = vpop.f32.mrb[0].mxu0
      %v757 = vpop.f32.mrb[0].mxu0
      %v758 = vadd.f32 %v489, %v757
      %v759 = vpop.f32.mrb[0].mxu0
      %760 = vmatprep.mubr.bf16.mxu0 0
      %761 = vmatmul.mubr.bf16.gmra.mrb[0].mxu0 %v611
      %v762 = vpop.f32.mrb[0].mxu0
      %v763 = vadd.f32 %v494, %v762
      %v764 = vpop.f32.mrb[0].mxu0
      %v765 = vpop.f32.mrb[0].mxu0
      %v766 = vadd.f32 %v497, %v765
      %v767 = vpop.f32.mrb[0].mxu0
      %768 = vmatprep.mubr.bf16.mxu0 0
      %769 = vmatmul.mubr.bf16.gmra.mrb[0].mxu0 %v614
      %v770 = vpop.f32.mrb[0].mxu0
      %v771 = vadd.f32 %v502, %v770
      %v772 = vpop.f32.mrb[0].mxu0
      %v773 = vpop.f32.mrb[0].mxu0
      %v774 = vadd.f32 %v505, %v773
      %v775 = vpop.f32.mrb[0].mxu0
      %776 = vmatprep.mubr.bf16.mxu0 0
      %777 = vmatmul.mubr.bf16.gmra.mrb[0].mxu0 %v617
      %v778 = vpop.f32.mrb[0].mxu0
      %v779 = vadd.f32 %v510, %v778
      %v780 = vpop.f32.mrb[0].mxu0
      %v781 = vpop.f32.mrb[0].mxu0
      %v782 = vadd.f32 %v513, %v781
      %v783 = vpop.f32.mrb[0].mxu0
      %784 = vmatprep.mubr.bf16.mxu0 0
      %785 = vmatmul.mubr.bf16.gmra.mrb[0].mxu0 %v620
      %v786 = vpop.f32.mrb[0].mxu0
      %v787 = vadd.f32 %v518, %v786
      %v788 = vpop.f32.mrb[0].mxu0
      %v789 = vpop.f32.mrb[0].mxu0
      %v790 = vadd.f32 %v521, %v789
      %v791 = vpop.f32.mrb[0].mxu0
      %792 = vmatprep.mubr.bf16.mxu0 0
      %793 = vmatmul.mubr.bf16.gmra.mrb[0].mxu0 %v623
      %v794 = vpop.f32.mrb[0].mxu0
      %v795 = vadd.f32 %v526, %v794
      %v796 = vpop.f32.mrb[0].mxu0
      %v797 = vpop.f32.mrb[0].mxu0
      %v798 = vadd.f32 %v529, %v797
      %v799 = vpop.f32.mrb[0].mxu0
      %800 = vmatprep.mubr.bf16.mxu0 0
      %801 = vmatmul.mubr.bf16.gmra.mrb[0].mxu0 %v626
      %v802 = vpop.f32.mrb[0].mxu0
      %v803 = vadd.f32 %v534, %v802
      %v804 = vpop.f32.mrb[0].mxu0
      %v805 = vpop.f32.mrb[0].mxu0
      %v806 = vadd.f32 %v537, %v805
      %v807 = vpop.f32.mrb[0].mxu0
      %808 = vmatprep.mubr.bf16.mxu0 0
      %809 = vmatmul.mubr.bf16.gmra.mrb[0].mxu0 %v629
      %v810 = vpop.f32.mrb[0].mxu0
      %v811 = vadd.f32 %v542, %v810
      %v812 = vpop.f32.mrb[0].mxu0
      %v813 = vpop.f32.mrb[0].mxu0
      %v814 = vadd.f32 %v545, %v813
      %v815 = vpop.f32.mrb[0].mxu0
      %816 = vmatprep.mubr.bf16.mxu0 0
      %817 = vmatmul.mubr.bf16.gmra.mrb[0].mxu0 %v632
      %v818 = vpop.f32.mrb[0].mxu0
      %v819 = vadd.f32 %v550, %v818
      %v820 = vpop.f32.mrb[0].mxu0
      %v821 = vpop.f32.mrb[0].mxu0
      %v822 = vadd.f32 %v553, %v821
      %v823 = vpop.f32.mrb[0].mxu0
      %824 = vmatprep.mubr.bf16.mxu0 0
      %825 = vmatmul.mubr.bf16.gmra.mrb[0].mxu0 %v635
      %v826 = vpop.f32.mrb[0].mxu0
      %v827 = vadd.f32 %v558, %v826
      %v828 = vpop.f32.mrb[0].mxu0
      %v829 = vpop.f32.mrb[0].mxu0
      %v830 = vadd.f32 %v561, %v829
      %v831 = vpop.f32.mrb[0].mxu0
      %832 = vmatprep.mubr.bf16.mxu0 0
      %833 = vmatmul.mubr.bf16.gmra.mrb[0].mxu0 %v638
      %v834 = vpop.f32.mrb[0].mxu0
      %v835 = vadd.f32 %v566, %v834
      %v836 = vpop.f32.mrb[0].mxu0
      %v837 = vpop.f32.mrb[0].mxu0
      %v838 = vpop.f32.mrb[0].mxu0
      %839 = vdwg.mxu0
      %v840 = vld [vmem:[%s165 + $0x2] sm:$0xff]
      %v841 = vld [vmem:[%s165 + $0xa] sm:$0xff]
      %v842 = vld [vmem:[%s165 + $0x12] sm:$0xff]
      %v843 = vld [vmem:[%s165 + $0x1a] sm:$0xff]
      %v844 = vld [vmem:[%s165 + $0x22] sm:$0xff]
      %v845 = vld [vmem:[%s165 + $0x2a] sm:$0xff]
      %v846 = vld [vmem:[%s165 + $0x32] sm:$0xff]
      %v847 = vld [vmem:[%s165 + $0x3a] sm:$0xff]
      %v848 = vld [vmem:[%s165 + $0x42] sm:$0xff]
      %v849 = vld [vmem:[%s165 + $0x4a] sm:$0xff]
      %v850 = vld [vmem:[%s165 + $0x52] sm:$0xff]
      %v851 = vld [vmem:[%s165 + $0x5a] sm:$0xff]
      %v852 = vld [vmem:[%s165 + $0x62] sm:$0xff]
      %v853 = vld [vmem:[%s165 + $0x6a] sm:$0xff]
      %v854 = vld [vmem:[%s165 + $0x72] sm:$0xff]
      %v855 = vld [vmem:[%s165 + $0x7a] sm:$0xff]
      %v856 = vld [vmem:[%s165 + $0x82] sm:$0xff]
      %v857 = vld [vmem:[%s165 + $0x8a] sm:$0xff]
      %v858 = vld [vmem:[%s165 + $0x92] sm:$0xff]
      %v859 = vld [vmem:[%s165 + $0x9a] sm:$0xff]
      %v860 = vld [vmem:[%s165 + $0xa2] sm:$0xff]
      %v861 = vld [vmem:[%s165 + $0xaa] sm:$0xff]
      %v862 = vld [vmem:[%s165 + $0xb2] sm:$0xff]
      %v863 = vld [vmem:[%s165 + $0xba] sm:$0xff]
      %v864 = vld [vmem:[%s165 + $0xc2] sm:$0xff]
      %v865 = vld [vmem:[%s165 + $0xca] sm:$0xff]
      %v866 = vld [vmem:[%s165 + $0xd2] sm:$0xff]
      %v867 = vld [vmem:[%s165 + $0xda] sm:$0xff]
      %v868 = vld [vmem:[%s165 + $0xe2] sm:$0xff]
      %v869 = vld [vmem:[%s165 + $0xea] sm:$0xff]
      %v870 = vld [vmem:[%s165 + $0xf2] sm:$0xff]
      %v871 = vld [vmem:[%s165 + $0xfa] sm:$0xff]
      %v872 = vld [vmem:[%s165 + $0x102] sm:$0xff]
      %v873 = vld [vmem:[%s165 + $0x10a] sm:$0xff]
      %v874 = vld [vmem:[%s165 + $0x112] sm:$0xff]
      %v875 = vld [vmem:[%s165 + $0x11a] sm:$0xff]
      %v876 = vld [vmem:[%s165 + $0x122] sm:$0xff]
      %v877 = vld [vmem:[%s165 + $0x12a] sm:$0xff]
      %v878 = vld [vmem:[%s165 + $0x132] sm:$0xff]
      %v879 = vld [vmem:[%s165 + $0x13a] sm:$0xff]
      %v880 = vld [vmem:[%s165 + $0x142] sm:$0xf]
      %v881 = vpack.c.bf16 %v841, %v840
      %v882 = vpack.c.bf16 %v843, %v842
      %v883 = vpack.c.bf16 %v845, %v844
      %v884 = vpack.c.bf16 %v847, %v846
      %v885 = vpack.c.bf16 %v849, %v848
      %v886 = vpack.c.bf16 %v851, %v850
      %v887 = vpack.c.bf16 %v853, %v852
      %v888 = vpack.c.bf16 %v855, %v854
      %v889 = vpack.c.bf16 %v857, %v856
      %v890 = vpack.c.bf16 %v859, %v858
      %v891 = vpack.c.bf16 %v861, %v860
      %v892 = vpack.c.bf16 %v863, %v862
      %v893 = vpack.c.bf16 %v865, %v864
      %v894 = vpack.c.bf16 %v867, %v866
      %v895 = vpack.c.bf16 %v869, %v868
      %v896 = vpack.c.bf16 %v871, %v870
      %v897 = vpack.c.bf16 %v873, %v872
      %v898 = vpack.c.bf16 %v875, %v874
      %v899 = vpack.c.bf16 %v877, %v876
      %v900 = vpack.c.bf16 %v879, %v878
      %v901 = vpack.c.bf16 %v880, %v880
      %s902 = scalar_lea.vmem %s1, 16
      %v903 = vld [vmem:[%s902] sm:$0xf]
      %v904 = vld [vmem:[%s902 + $0x4] sm:$0xf]
      %v907 = vunpack.c.l.b16 %v903
      %v908 = vunpack.c.l.b16 %v904
      %v909 = vpack.c.b16 %v908, %v907
      %v912 = vsel %vm307, %v881, 0
      %v915 = vsel %vm307, %v882, 0
      %v918 = vsel %vm307, %v883, 0
      %v921 = vsel %vm307, %v884, 0
      %v924 = vsel %vm307, %v885, 0
      %v927 = vsel %vm307, %v886, 0
      %v930 = vsel %vm307, %v887, 0
      %v933 = vsel %vm307, %v888, 0
      %v936 = vsel %vm307, %v889, 0
      %v939 = vsel %vm307, %v890, 0
      %v942 = vsel %vm307, %v891, 0
      %v945 = vsel %vm307, %v892, 0
      %v948 = vsel %vm307, %v893, 0
      %v951 = vsel %vm307, %v894, 0
      %v954 = vsel %vm307, %v895, 0
      %v957 = vsel %vm307, %v896, 0
      %v960 = vsel %vm307, %v897, 0
      %v963 = vsel %vm307, %v898, 0
      %v966 = vsel %vm307, %v899, 0
      %v969 = vsel %vm307, %v900, 0
      %v972 = vsel %vm307, %v901, 0
      %974 = vmatprep.subr.bf16.mxu0 0
      %975 = vmatpush1.bf16.msra.mxu0 %v909
      %976 = vmatprep.subr.bf16.mxu0 0
      %977 = vmatpush1.bf16.msra.mxu0 0
      %978 = vmatprep.subr.bf16.mxu0 0
      %979 = vmatpush1.bf16.msra.mxu0 0
      %980 = vmatprep.subr.bf16.mxu0 0
      %981 = vmatpush1.bf16.msra.mxu0 0
      %982 = vmatprep.subr.bf16.mxu0 0
      %983 = vmatpush1.bf16.msra.mxu0 0
      %984 = vmatprep.subr.bf16.mxu0 0
      %985 = vmatpush1.bf16.msra.mxu0 0
      %986 = vmatprep.subr.bf16.mxu0 0
      %987 = vmatpush1.bf16.msra.mxu0 0
      %988 = vmatprep.subr.bf16.mxu0 0
      %989 = vmatpush1.bf16.msra.mxu0 0
      %990 = vmatprep.subr.bf16.mxu0 0
      %991 = vmatpush1.bf16.msra.mxu0 0
      %992 = vmatprep.subr.bf16.mxu0 0
      %993 = vmatpush1.bf16.msra.mxu0 0
      %994 = vmatprep.subr.bf16.mxu0 0
      %995 = vmatpush1.bf16.msra.mxu0 0
      %996 = vmatprep.subr.bf16.mxu0 0
      %997 = vmatpush1.bf16.msra.mxu0 0
      %998 = vmatprep.subr.bf16.mxu0 0
      %999 = vmatpush1.bf16.msra.mxu0 0
      %1000 = vmatprep.subr.bf16.mxu0 0
      %1001 = vmatpush1.bf16.msra.mxu0 0
      %1002 = vmatprep.subr.bf16.mxu0 0
      %1003 = vmatpush1.bf16.msra.mxu0 0
      %1004 = vmatprep.subr.bf16.mxu0 0
      %1005 = vmatpush1.bf16.msra.mxu0 0
      %1006 = vmatprep.mubr.bf16.mxu0 0
      %1007 = vmatmul.mubr.bf16.gmra.mrb[0].mxu0 %v912
      %v1008 = vpop.f32.mrb[0].mxu0
      %v1009 = vadd.f32 0.0, %v1008
      %v1010 = vpop.f32.mrb[0].mxu0
      %v1011 = vpop.f32.mrb[0].mxu0
      %v1012 = vadd.f32 0.0, %v1011
      %v1013 = vpop.f32.mrb[0].mxu0
      %1014 = vmatprep.mubr.bf16.mxu0 0
      %1015 = vmatmul.mubr.bf16.gmra.mrb[0].mxu0 %v915
      %v1016 = vpop.f32.mrb[0].mxu0
      %v1017 = vadd.f32 0.0, %v1016
      %v1018 = vpop.f32.mrb[0].mxu0
      %v1019 = vpop.f32.mrb[0].mxu0
      %v1020 = vadd.f32 0.0, %v1019
      %v1021 = vpop.f32.mrb[0].mxu0
      %1022 = vmatprep.mubr.bf16.mxu0 0
      %1023 = vmatmul.mubr.bf16.gmra.mrb[0].mxu0 %v918
      %v1024 = vpop.f32.mrb[0].mxu0
      %v1025 = vadd.f32 0.0, %v1024
      %v1026 = vpop.f32.mrb[0].mxu0
      %v1027 = vpop.f32.mrb[0].mxu0
      %v1028 = vadd.f32 0.0, %v1027
      %v1029 = vpop.f32.mrb[0].mxu0
      %1030 = vmatprep.mubr.bf16.mxu0 0
      %1031 = vmatmul.mubr.bf16.gmra.mrb[0].mxu0 %v921
      %v1032 = vpop.f32.mrb[0].mxu0
      %v1033 = vadd.f32 0.0, %v1032
      %v1034 = vpop.f32.mrb[0].mxu0
      %v1035 = vpop.f32.mrb[0].mxu0
      %v1036 = vadd.f32 0.0, %v1035
      %v1037 = vpop.f32.mrb[0].mxu0
      %1038 = vmatprep.mubr.bf16.mxu0 0
      %1039 = vmatmul.mubr.bf16.gmra.mrb[0].mxu0 %v924
      %v1040 = vpop.f32.mrb[0].mxu0
      %v1041 = vadd.f32 0.0, %v1040
      %v1042 = vpop.f32.mrb[0].mxu0
      %v1043 = vpop.f32.mrb[0].mxu0
      %v1044 = vadd.f32 0.0, %v1043
      %v1045 = vpop.f32.mrb[0].mxu0
      %1046 = vmatprep.mubr.bf16.mxu0 0
      %1047 = vmatmul.mubr.bf16.gmra.mrb[0].mxu0 %v927
      %v1048 = vpop.f32.mrb[0].mxu0
      %v1049 = vadd.f32 0.0, %v1048
      %v1050 = vpop.f32.mrb[0].mxu0
      %v1051 = vpop.f32.mrb[0].mxu0
      %v1052 = vadd.f32 0.0, %v1051
      %v1053 = vpop.f32.mrb[0].mxu0
      %1054 = vmatprep.mubr.bf16.mxu0 0
      %1055 = vmatmul.mubr.bf16.gmra.mrb[0].mxu0 %v930
      %v1056 = vpop.f32.mrb[0].mxu0
      %v1057 = vadd.f32 0.0, %v1056
      %v1058 = vpop.f32.mrb[0].mxu0
      %v1059 = vpop.f32.mrb[0].mxu0
      %v1060 = vadd.f32 0.0, %v1059
      %v1061 = vpop.f32.mrb[0].mxu0
      %1062 = vmatprep.mubr.bf16.mxu0 0
      %1063 = vmatmul.mubr.bf16.gmra.mrb[0].mxu0 %v933
      %v1064 = vpop.f32.mrb[0].mxu0
      %v1065 = vadd.f32 0.0, %v1064
      %v1066 = vpop.f32.mrb[0].mxu0
      %v1067 = vpop.f32.mrb[0].mxu0
      %v1068 = vadd.f32 0.0, %v1067
      %v1069 = vpop.f32.mrb[0].mxu0
      %1070 = vmatprep.mubr.bf16.mxu0 0
      %1071 = vmatmul.mubr.bf16.gmra.mrb[0].mxu0 %v936
      %v1072 = vpop.f32.mrb[0].mxu0
      %v1073 = vadd.f32 0.0, %v1072
      %v1074 = vpop.f32.mrb[0].mxu0
      %v1075 = vpop.f32.mrb[0].mxu0
      %v1076 = vadd.f32 0.0, %v1075
      %v1077 = vpop.f32.mrb[0].mxu0
      %1078 = vmatprep.mubr.bf16.mxu0 0
      %1079 = vmatmul.mubr.bf16.gmra.mrb[0].mxu0 %v939
      %v1080 = vpop.f32.mrb[0].mxu0
      %v1081 = vadd.f32 0.0, %v1080
      %v1082 = vpop.f32.mrb[0].mxu0
      %v1083 = vpop.f32.mrb[0].mxu0
      %v1084 = vadd.f32 0.0, %v1083
      %v1085 = vpop.f32.mrb[0].mxu0
      %1086 = vmatprep.mubr.bf16.mxu0 0
      %1087 = vmatmul.mubr.bf16.gmra.mrb[0].mxu0 %v942
      %v1088 = vpop.f32.mrb[0].mxu0
      %v1089 = vadd.f32 0.0, %v1088
      %v1090 = vpop.f32.mrb[0].mxu0
      %v1091 = vpop.f32.mrb[0].mxu0
      %v1092 = vadd.f32 0.0, %v1091
      %v1093 = vpop.f32.mrb[0].mxu0
      %1094 = vmatprep.mubr.bf16.mxu0 0
      %1095 = vmatmul.mubr.bf16.gmra.mrb[0].mxu0 %v945
      %v1096 = vpop.f32.mrb[0].mxu0
      %v1097 = vadd.f32 0.0, %v1096
      %v1098 = vpop.f32.mrb[0].mxu0
      %v1099 = vpop.f32.mrb[0].mxu0
      %v1100 = vadd.f32 0.0, %v1099
      %v1101 = vpop.f32.mrb[0].mxu0
      %1102 = vmatprep.mubr.bf16.mxu0 0
      %1103 = vmatmul.mubr.bf16.gmra.mrb[0].mxu0 %v948
      %v1104 = vpop.f32.mrb[0].mxu0
      %v1105 = vadd.f32 0.0, %v1104
      %v1106 = vpop.f32.mrb[0].mxu0
      %v1107 = vpop.f32.mrb[0].mxu0
      %v1108 = vadd.f32 0.0, %v1107
      %v1109 = vpop.f32.mrb[0].mxu0
      %1110 = vmatprep.mubr.bf16.mxu0 0
      %1111 = vmatmul.mubr.bf16.gmra.mrb[0].mxu0 %v951
      %v1112 = vpop.f32.mrb[0].mxu0
      %v1113 = vadd.f32 0.0, %v1112
      %v1114 = vpop.f32.mrb[0].mxu0
      %v1115 = vpop.f32.mrb[0].mxu0
      %v1116 = vadd.f32 0.0, %v1115
      %v1117 = vpop.f32.mrb[0].mxu0
      %1118 = vmatprep.mubr.bf16.mxu0 0
      %1119 = vmatmul.mubr.bf16.gmra.mrb[0].mxu0 %v954
      %v1120 = vpop.f32.mrb[0].mxu0
      %v1121 = vadd.f32 0.0, %v1120
      %v1122 = vpop.f32.mrb[0].mxu0
      %v1123 = vpop.f32.mrb[0].mxu0
      %v1124 = vadd.f32 0.0, %v1123
      %v1125 = vpop.f32.mrb[0].mxu0
      %1126 = vmatprep.mubr.bf16.mxu0 0
      %1127 = vmatmul.mubr.bf16.gmra.mrb[0].mxu0 %v957
      %v1128 = vpop.f32.mrb[0].mxu0
      %v1129 = vadd.f32 0.0, %v1128
      %v1130 = vpop.f32.mrb[0].mxu0
      %v1131 = vpop.f32.mrb[0].mxu0
      %v1132 = vadd.f32 0.0, %v1131
      %v1133 = vpop.f32.mrb[0].mxu0
      %1134 = vmatprep.mubr.bf16.mxu0 0
      %1135 = vmatmul.mubr.bf16.gmra.mrb[0].mxu0 %v960
      %v1136 = vpop.f32.mrb[0].mxu0
      %v1137 = vadd.f32 0.0, %v1136
      %v1138 = vpop.f32.mrb[0].mxu0
      %v1139 = vpop.f32.mrb[0].mxu0
      %v1140 = vadd.f32 0.0, %v1139
      %v1141 = vpop.f32.mrb[0].mxu0
      %1142 = vmatprep.mubr.bf16.mxu0 0
      %1143 = vmatmul.mubr.bf16.gmra.mrb[0].mxu0 %v963
      %v1144 = vpop.f32.mrb[0].mxu0
      %v1145 = vadd.f32 0.0, %v1144
      %v1146 = vpop.f32.mrb[0].mxu0
      %v1147 = vpop.f32.mrb[0].mxu0
      %v1148 = vadd.f32 0.0, %v1147
      %v1149 = vpop.f32.mrb[0].mxu0
      %1150 = vmatprep.mubr.bf16.mxu0 0
      %1151 = vmatmul.mubr.bf16.gmra.mrb[0].mxu0 %v966
      %v1152 = vpop.f32.mrb[0].mxu0
      %v1153 = vadd.f32 0.0, %v1152
      %v1154 = vpop.f32.mrb[0].mxu0
      %v1155 = vpop.f32.mrb[0].mxu0
      %v1156 = vadd.f32 0.0, %v1155
      %v1157 = vpop.f32.mrb[0].mxu0
      %1158 = vmatprep.mubr.bf16.mxu0 0
      %1159 = vmatmul.mubr.bf16.gmra.mrb[0].mxu0 %v969
      %v1160 = vpop.f32.mrb[0].mxu0
      %v1161 = vadd.f32 0.0, %v1160
      %v1162 = vpop.f32.mrb[0].mxu0
      %v1163 = vpop.f32.mrb[0].mxu0
      %v1164 = vadd.f32 0.0, %v1163
      %v1165 = vpop.f32.mrb[0].mxu0
      %1166 = vmatprep.mubr.bf16.mxu0 0
      %1167 = vmatmul.mubr.bf16.gmra.mrb[0].mxu0 %v972
      %v1168 = vpop.f32.mrb[0].mxu0
      %v1169 = vadd.f32 0.0, %v1168
      %v1170 = vpop.f32.mrb[0].mxu0
      %v1171 = vpop.f32.mrb[0].mxu0
      %v1172 = vpop.f32.mrb[0].mxu0
      %1173 = vdwg.mxu0
      %v1174 = vadd.f32 %v675, %v1009
      %v1175 = vadd.f32 %v678, %v1012
      %v1176 = vadd.f32 %v683, %v1017
      %v1177 = vadd.f32 %v686, %v1020
      %v1178 = vadd.f32 %v691, %v1025
      %v1179 = vadd.f32 %v694, %v1028
      %v1180 = vadd.f32 %v699, %v1033
      %v1181 = vadd.f32 %v702, %v1036
      %v1182 = vadd.f32 %v707, %v1041
      %v1183 = vadd.f32 %v710, %v1044
      %v1184 = vadd.f32 %v715, %v1049
      %v1185 = vadd.f32 %v718, %v1052
      %v1186 = vadd.f32 %v723, %v1057
      %v1187 = vadd.f32 %v726, %v1060
      %v1188 = vadd.f32 %v731, %v1065
      %v1189 = vadd.f32 %v734, %v1068
      %v1190 = vadd.f32 %v739, %v1073
      %v1191 = vadd.f32 %v742, %v1076
      %v1192 = vadd.f32 %v747, %v1081
      %v1193 = vadd.f32 %v750, %v1084
      %v1194 = vadd.f32 %v755, %v1089
      %v1195 = vadd.f32 %v758, %v1092
      %v1196 = vadd.f32 %v763, %v1097
      %v1197 = vadd.f32 %v766, %v1100
      %v1198 = vadd.f32 %v771, %v1105
      %v1199 = vadd.f32 %v774, %v1108
      %v1200 = vadd.f32 %v779, %v1113
      %v1201 = vadd.f32 %v782, %v1116
      %v1202 = vadd.f32 %v787, %v1121
      %v1203 = vadd.f32 %v790, %v1124
      %v1204 = vadd.f32 %v795, %v1129
      %v1205 = vadd.f32 %v798, %v1132
      %v1206 = vadd.f32 %v803, %v1137
      %v1207 = vadd.f32 %v806, %v1140
      %v1208 = vadd.f32 %v811, %v1145
      %v1209 = vadd.f32 %v814, %v1148
      %v1210 = vadd.f32 %v819, %v1153
      %v1211 = vadd.f32 %v822, %v1156
      %v1212 = vadd.f32 %v827, %v1161
      %v1213 = vadd.f32 %v830, %v1164
      %v1214 = vadd.f32 %v835, %v1169
      %v1215 = vld [vmem:[%s165 + $0x12] sm:$0xff]
      %v1216 = vld [vmem:[%s165 + $0x1a] sm:$0xff]
      %v1217 = vld [vmem:[%s165 + $0x22] sm:$0xff]
      %v1218 = vld [vmem:[%s165 + $0x2a] sm:$0xff]
      %v1219 = vld [vmem:[%s165 + $0x32] sm:$0xff]
      %v1220 = vld [vmem:[%s165 + $0x3a] sm:$0xff]
      %v1221 = vld [vmem:[%s165 + $0x42] sm:$0xff]
      %v1222 = vld [vmem:[%s165 + $0x4a] sm:$0xff]
      %v1223 = vld [vmem:[%s165 + $0x52] sm:$0xff]
      %v1224 = vld [vmem:[%s165 + $0x5a] sm:$0xff]
      %v1225 = vld [vmem:[%s165 + $0x62] sm:$0xff]
      %v1226 = vld [vmem:[%s165 + $0x6a] sm:$0xff]
      %v1227 = vld [vmem:[%s165 + $0x72] sm:$0xff]
      %v1228 = vld [vmem:[%s165 + $0x7a] sm:$0xff]
      %v1229 = vld [vmem:[%s165 + $0x82] sm:$0xff]
      %v1230 = vld [vmem:[%s165 + $0x8a] sm:$0xff]
      %v1231 = vld [vmem:[%s165 + $0x92] sm:$0xff]
      %v1232 = vld [vmem:[%s165 + $0x9a] sm:$0xff]
      %v1233 = vld [vmem:[%s165 + $0xa2] sm:$0xff]
      %v1234 = vld [vmem:[%s165 + $0xaa] sm:$0xff]
      %v1235 = vld [vmem:[%s165 + $0xb2] sm:$0xff]
      %v1236 = vld [vmem:[%s165 + $0xba] sm:$0xff]
      %v1237 = vld [vmem:[%s165 + $0xc2] sm:$0xff]
      %v1238 = vld [vmem:[%s165 + $0xca] sm:$0xff]
      %v1239 = vld [vmem:[%s165 + $0xd2] sm:$0xff]
      %v1240 = vld [vmem:[%s165 + $0xda] sm:$0xff]
      %v1241 = vld [vmem:[%s165 + $0xe2] sm:$0xff]
      %v1242 = vld [vmem:[%s165 + $0xea] sm:$0xff]
      %v1243 = vld [vmem:[%s165 + $0xf2] sm:$0xff]
      %v1244 = vld [vmem:[%s165 + $0xfa] sm:$0xff]
      %v1245 = vld [vmem:[%s165 + $0x102] sm:$0xff]
      %v1246 = vld [vmem:[%s165 + $0x10a] sm:$0xff]
      %v1247 = vld [vmem:[%s165 + $0x112] sm:$0xff]
      %v1248 = vld [vmem:[%s165 + $0x11a] sm:$0xff]
      %v1249 = vld [vmem:[%s165 + $0x122] sm:$0xff]
      %v1250 = vld [vmem:[%s165 + $0x12a] sm:$0xff]
      %v1251 = vld [vmem:[%s165 + $0x132] sm:$0xff]
      %v1252 = vld [vmem:[%s165 + $0x13a] sm:$0xff]
      %v1253 = vld [vmem:[%s165 + $0x142] sm:$0xff]
      %v1254 = vld [vmem:[%s165 + $0x14a] sm:$0xff]
      %v1255 = vld [vmem:[%s165 + $0x152] sm:$0xf]
      %v1256 = vpack.c.bf16 %v1216, %v1215
      %v1257 = vpack.c.bf16 %v1218, %v1217
      %v1258 = vpack.c.bf16 %v1220, %v1219
      %v1259 = vpack.c.bf16 %v1222, %v1221
      %v1260 = vpack.c.bf16 %v1224, %v1223
      %v1261 = vpack.c.bf16 %v1226, %v1225
      %v1262 = vpack.c.bf16 %v1228, %v1227
      %v1263 = vpack.c.bf16 %v1230, %v1229
      %v1264 = vpack.c.bf16 %v1232, %v1231
      %v1265 = vpack.c.bf16 %v1234, %v1233
      %v1266 = vpack.c.bf16 %v1236, %v1235
      %v1267 = vpack.c.bf16 %v1238, %v1237
      %v1268 = vpack.c.bf16 %v1240, %v1239
      %v1269 = vpack.c.bf16 %v1242, %v1241
      %v1270 = vpack.c.bf16 %v1244, %v1243
      %v1271 = vpack.c.bf16 %v1246, %v1245
      %v1272 = vpack.c.bf16 %v1248, %v1247
      %v1273 = vpack.c.bf16 %v1250, %v1249
      %v1274 = vpack.c.bf16 %v1252, %v1251
      %v1275 = vpack.c.bf16 %v1254, %v1253
      %v1276 = vpack.c.bf16 %v1255, %v1255
      %s1277 = scalar_lea.vmem %s1, 24
      %v1278 = vld [vmem:[%s1277] sm:$0xf]
      %v1279 = vld [vmem:[%s1277 + $0x4] sm:$0xf]
      %v1282 = vunpack.c.l.b16 %v1278
      %v1283 = vunpack.c.l.b16 %v1279
      %v1284 = vpack.c.b16 %v1283, %v1282
      %v1287 = vsel %vm307, %v1256, 0
      %v1290 = vsel %vm307, %v1257, 0
      %v1293 = vsel %vm307, %v1258, 0
      %v1296 = vsel %vm307, %v1259, 0
      %v1299 = vsel %vm307, %v1260, 0
      %v1302 = vsel %vm307, %v1261, 0
      %v1305 = vsel %vm307, %v1262, 0
      %v1308 = vsel %vm307, %v1263, 0
      %v1311 = vsel %vm307, %v1264, 0
      %v1314 = vsel %vm307, %v1265, 0
      %v1317 = vsel %vm307, %v1266, 0
      %v1320 = vsel %vm307, %v1267, 0
      %v1323 = vsel %vm307, %v1268, 0
      %v1326 = vsel %vm307, %v1269, 0
      %v1329 = vsel %vm307, %v1270, 0
      %v1332 = vsel %vm307, %v1271, 0
      %v1335 = vsel %vm307, %v1272, 0
      %v1338 = vsel %vm307, %v1273, 0
      %v1341 = vsel %vm307, %v1274, 0
      %v1344 = vsel %vm307, %v1275, 0
      %v1347 = vsel %vm307, %v1276, 0
      %1349 = vmatprep.subr.bf16.mxu0 0
      %1350 = vmatpush1.bf16.msra.mxu0 %v1284
      %1351 = vmatprep.subr.bf16.mxu0 0
      %1352 = vmatpush1.bf16.msra.mxu0 0
      %1353 = vmatprep.subr.bf16.mxu0 0
      %1354 = vmatpush1.bf16.msra.mxu0 0
      %1355 = vmatprep.subr.bf16.mxu0 0
      %1356 = vmatpush1.bf16.msra.mxu0 0
      %1357 = vmatprep.subr.bf16.mxu0 0
      %1358 = vmatpush1.bf16.msra.mxu0 0
      %1359 = vmatprep.subr.bf16.mxu0 0
      %1360 = vmatpush1.bf16.msra.mxu0 0
      %1361 = vmatprep.subr.bf16.mxu0 0
      %1362 = vmatpush1.bf16.msra.mxu0 0
      %1363 = vmatprep.subr.bf16.mxu0 0
      %1364 = vmatpush1.bf16.msra.mxu0 0
      %1365 = vmatprep.subr.bf16.mxu0 0
      %1366 = vmatpush1.bf16.msra.mxu0 0
      %1367 = vmatprep.subr.bf16.mxu0 0
      %1368 = vmatpush1.bf16.msra.mxu0 0
      %1369 = vmatprep.subr.bf16.mxu0 0
      %1370 = vmatpush1.bf16.msra.mxu0 0
      %1371 = vmatprep.subr.bf16.mxu0 0
      %1372 = vmatpush1.bf16.msra.mxu0 0
      %1373 = vmatprep.subr.bf16.mxu0 0
      %1374 = vmatpush1.bf16.msra.mxu0 0
      %1375 = vmatprep.subr.bf16.mxu0 0
      %1376 = vmatpush1.bf16.msra.mxu0 0
      %1377 = vmatprep.subr.bf16.mxu0 0
      %1378 = vmatpush1.bf16.msra.mxu0 0
      %1379 = vmatprep.subr.bf16.mxu0 0
      %1380 = vmatpush1.bf16.msra.mxu0 0
      %1381 = vmatprep.mubr.bf16.mxu0 0
      %1382 = vmatmul.mubr.bf16.gmra.mrb[0].mxu0 %v1287
      %v1383 = vpop.f32.mrb[0].mxu0
      %v1384 = vadd.f32 0.0, %v1383
      %v1385 = vpop.f32.mrb[0].mxu0
      %v1386 = vpop.f32.mrb[0].mxu0
      %v1387 = vadd.f32 0.0, %v1386
      %v1388 = vpop.f32.mrb[0].mxu0
      %1389 = vmatprep.mubr.bf16.mxu0 0
      %1390 = vmatmul.mubr.bf16.gmra.mrb[0].mxu0 %v1290
      %v1391 = vpop.f32.mrb[0].mxu0
      %v1392 = vadd.f32 0.0, %v1391
      %v1393 = vpop.f32.mrb[0].mxu0
      %v1394 = vpop.f32.mrb[0].mxu0
      %v1395 = vadd.f32 0.0, %v1394
      %v1396 = vpop.f32.mrb[0].mxu0
      %1397 = vmatprep.mubr.bf16.mxu0 0
      %1398 = vmatmul.mubr.bf16.gmra.mrb[0].mxu0 %v1293
      %v1399 = vpop.f32.mrb[0].mxu0
      %v1400 = vadd.f32 0.0, %v1399
      %v1401 = vpop.f32.mrb[0].mxu0
      %v1402 = vpop.f32.mrb[0].mxu0
      %v1403 = vadd.f32 0.0, %v1402
      %v1404 = vpop.f32.mrb[0].mxu0
      %1405 = vmatprep.mubr.bf16.mxu0 0
      %1406 = vmatmul.mubr.bf16.gmra.mrb[0].mxu0 %v1296
      %v1407 = vpop.f32.mrb[0].mxu0
      %v1408 = vadd.f32 0.0, %v1407
      %v1409 = vpop.f32.mrb[0].mxu0
      %v1410 = vpop.f32.mrb[0].mxu0
      %v1411 = vadd.f32 0.0, %v1410
      %v1412 = vpop.f32.mrb[0].mxu0
      %1413 = vmatprep.mubr.bf16.mxu0 0
      %1414 = vmatmul.mubr.bf16.gmra.mrb[0].mxu0 %v1299
      %v1415 = vpop.f32.mrb[0].mxu0
      %v1416 = vadd.f32 0.0, %v1415
      %v1417 = vpop.f32.mrb[0].mxu0
      %v1418 = vpop.f32.mrb[0].mxu0
      %v1419 = vadd.f32 0.0, %v1418
      %v1420 = vpop.f32.mrb[0].mxu0
      %1421 = vmatprep.mubr.bf16.mxu0 0
      %1422 = vmatmul.mubr.bf16.gmra.mrb[0].mxu0 %v1302
      %v1423 = vpop.f32.mrb[0].mxu0
      %v1424 = vadd.f32 0.0, %v1423
      %v1425 = vpop.f32.mrb[0].mxu0
      %v1426 = vpop.f32.mrb[0].mxu0
      %v1427 = vadd.f32 0.0, %v1426
      %v1428 = vpop.f32.mrb[0].mxu0
      %1429 = vmatprep.mubr.bf16.mxu0 0
      %1430 = vmatmul.mubr.bf16.gmra.mrb[0].mxu0 %v1305
      %v1431 = vpop.f32.mrb[0].mxu0
      %v1432 = vadd.f32 0.0, %v1431
      %v1433 = vpop.f32.mrb[0].mxu0
      %v1434 = vpop.f32.mrb[0].mxu0
      %v1435 = vadd.f32 0.0, %v1434
      %v1436 = vpop.f32.mrb[0].mxu0
      %1437 = vmatprep.mubr.bf16.mxu0 0
      %1438 = vmatmul.mubr.bf16.gmra.mrb[0].mxu0 %v1308
      %v1439 = vpop.f32.mrb[0].mxu0
      %v1440 = vadd.f32 0.0, %v1439
      %v1441 = vpop.f32.mrb[0].mxu0
      %v1442 = vpop.f32.mrb[0].mxu0
      %v1443 = vadd.f32 0.0, %v1442
      %v1444 = vpop.f32.mrb[0].mxu0
      %1445 = vmatprep.mubr.bf16.mxu0 0
      %1446 = vmatmul.mubr.bf16.gmra.mrb[0].mxu0 %v1311
      %v1447 = vpop.f32.mrb[0].mxu0
      %v1448 = vadd.f32 0.0, %v1447
      %v1449 = vpop.f32.mrb[0].mxu0
      %v1450 = vpop.f32.mrb[0].mxu0
      %v1451 = vadd.f32 0.0, %v1450
      %v1452 = vpop.f32.mrb[0].mxu0
      %1453 = vmatprep.mubr.bf16.mxu0 0
      %1454 = vmatmul.mubr.bf16.gmra.mrb[0].mxu0 %v1314
      %v1455 = vpop.f32.mrb[0].mxu0
      %v1456 = vadd.f32 0.0, %v1455
      %v1457 = vpop.f32.mrb[0].mxu0
      %v1458 = vpop.f32.mrb[0].mxu0
      %v1459 = vadd.f32 0.0, %v1458
      %v1460 = vpop.f32.mrb[0].mxu0
      %1461 = vmatprep.mubr.bf16.mxu0 0
      %1462 = vmatmul.mubr.bf16.gmra.mrb[0].mxu0 %v1317
      %v1463 = vpop.f32.mrb[0].mxu0
      %v1464 = vadd.f32 0.0, %v1463
      %v1465 = vpop.f32.mrb[0].mxu0
      %v1466 = vpop.f32.mrb[0].mxu0
      %v1467 = vadd.f32 0.0, %v1466
      %v1468 = vpop.f32.mrb[0].mxu0
      %1469 = vmatprep.mubr.bf16.mxu0 0
      %1470 = vmatmul.mubr.bf16.gmra.mrb[0].mxu0 %v1320
      %v1471 = vpop.f32.mrb[0].mxu0
      %v1472 = vadd.f32 0.0, %v1471
      %v1473 = vpop.f32.mrb[0].mxu0
      %v1474 = vpop.f32.mrb[0].mxu0
      %v1475 = vadd.f32 0.0, %v1474
      %v1476 = vpop.f32.mrb[0].mxu0
      %1477 = vmatprep.mubr.bf16.mxu0 0
      %1478 = vmatmul.mubr.bf16.gmra.mrb[0].mxu0 %v1323
      %v1479 = vpop.f32.mrb[0].mxu0
      %v1480 = vadd.f32 0.0, %v1479
      %v1481 = vpop.f32.mrb[0].mxu0
      %v1482 = vpop.f32.mrb[0].mxu0
      %v1483 = vadd.f32 0.0, %v1482
      %v1484 = vpop.f32.mrb[0].mxu0
      %1485 = vmatprep.mubr.bf16.mxu0 0
      %1486 = vmatmul.mubr.bf16.gmra.mrb[0].mxu0 %v1326
      %v1487 = vpop.f32.mrb[0].mxu0
      %v1488 = vadd.f32 0.0, %v1487
      %v1489 = vpop.f32.mrb[0].mxu0
      %v1490 = vpop.f32.mrb[0].mxu0
      %v1491 = vadd.f32 0.0, %v1490
      %v1492 = vpop.f32.mrb[0].mxu0
      %1493 = vmatprep.mubr.bf16.mxu0 0
      %1494 = vmatmul.mubr.bf16.gmra.mrb[0].mxu0 %v1329
      %v1495 = vpop.f32.mrb[0].mxu0
      %v1496 = vadd.f32 0.0, %v1495
      %v1497 = vpop.f32.mrb[0].mxu0
      %v1498 = vpop.f32.mrb[0].mxu0
      %v1499 = vadd.f32 0.0, %v1498
      %v1500 = vpop.f32.mrb[0].mxu0
      %1501 = vmatprep.mubr.bf16.mxu0 0
      %1502 = vmatmul.mubr.bf16.gmra.mrb[0].mxu0 %v1332
      %v1503 = vpop.f32.mrb[0].mxu0
      %v1504 = vadd.f32 0.0, %v1503
      %v1505 = vpop.f32.mrb[0].mxu0
      %v1506 = vpop.f32.mrb[0].mxu0
      %v1507 = vadd.f32 0.0, %v1506
      %v1508 = vpop.f32.mrb[0].mxu0
      %1509 = vmatprep.mubr.bf16.mxu0 0
      %1510 = vmatmul.mubr.bf16.gmra.mrb[0].mxu0 %v1335
      %v1511 = vpop.f32.mrb[0].mxu0
      %v1512 = vadd.f32 0.0, %v1511
      %v1513 = vpop.f32.mrb[0].mxu0
      %v1514 = vpop.f32.mrb[0].mxu0
      %v1515 = vadd.f32 0.0, %v1514
      %v1516 = vpop.f32.mrb[0].mxu0
      %1517 = vmatprep.mubr.bf16.mxu0 0
      %1518 = vmatmul.mubr.bf16.gmra.mrb[0].mxu0 %v1338
      %v1519 = vpop.f32.mrb[0].mxu0
      %v1520 = vadd.f32 0.0, %v1519
      %v1521 = vpop.f32.mrb[0].mxu0
      %v1522 = vpop.f32.mrb[0].mxu0
      %v1523 = vadd.f32 0.0, %v1522
      %v1524 = vpop.f32.mrb[0].mxu0
      %1525 = vmatprep.mubr.bf16.mxu0 0
      %1526 = vmatmul.mubr.bf16.gmra.mrb[0].mxu0 %v1341
      %v1527 = vpop.f32.mrb[0].mxu0
      %v1528 = vadd.f32 0.0, %v1527
      %v1529 = vpop.f32.mrb[0].mxu0
      %v1530 = vpop.f32.mrb[0].mxu0
      %v1531 = vadd.f32 0.0, %v1530
      %v1532 = vpop.f32.mrb[0].mxu0
      %1533 = vmatprep.mubr.bf16.mxu0 0
      %1534 = vmatmul.mubr.bf16.gmra.mrb[0].mxu0 %v1344
      %v1535 = vpop.f32.mrb[0].mxu0
      %v1536 = vadd.f32 0.0, %v1535
      %v1537 = vpop.f32.mrb[0].mxu0
      %v1538 = vpop.f32.mrb[0].mxu0
      %v1539 = vadd.f32 0.0, %v1538
      %v1540 = vpop.f32.mrb[0].mxu0
      %1541 = vmatprep.mubr.bf16.mxu0 0
      %1542 = vmatmul.mubr.bf16.gmra.mrb[0].mxu0 %v1347
      %v1543 = vpop.f32.mrb[0].mxu0
      %v1544 = vadd.f32 0.0, %v1543
      %v1545 = vpop.f32.mrb[0].mxu0
      %v1546 = vpop.f32.mrb[0].mxu0
      %v1547 = vpop.f32.mrb[0].mxu0
      %1548 = vdwg.mxu0
      %v1549 = vadd.f32 %v1174, %v1384
      %v1550 = vadd.f32 %v1175, %v1387
      %v1551 = vadd.f32 %v1176, %v1392
      %v1552 = vadd.f32 %v1177, %v1395
      %v1553 = vadd.f32 %v1178, %v1400
      %v1554 = vadd.f32 %v1179, %v1403
      %v1555 = vadd.f32 %v1180, %v1408
      %v1556 = vadd.f32 %v1181, %v1411
      %v1557 = vadd.f32 %v1182, %v1416
      %v1558 = vadd.f32 %v1183, %v1419
      %v1559 = vadd.f32 %v1184, %v1424
      %v1560 = vadd.f32 %v1185, %v1427
      %v1561 = vadd.f32 %v1186, %v1432
      %v1562 = vadd.f32 %v1187, %v1435
      %v1563 = vadd.f32 %v1188, %v1440
      %v1564 = vadd.f32 %v1189, %v1443
      %v1565 = vadd.f32 %v1190, %v1448
      %v1566 = vadd.f32 %v1191, %v1451
      %v1567 = vadd.f32 %v1192, %v1456
      %v1568 = vadd.f32 %v1193, %v1459
      %v1569 = vadd.f32 %v1194, %v1464
      %v1570 = vadd.f32 %v1195, %v1467
      %v1571 = vadd.f32 %v1196, %v1472
      %v1572 = vadd.f32 %v1197, %v1475
      %v1573 = vadd.f32 %v1198, %v1480
      %v1574 = vadd.f32 %v1199, %v1483
      %v1575 = vadd.f32 %v1200, %v1488
      %v1576 = vadd.f32 %v1201, %v1491
      %v1577 = vadd.f32 %v1202, %v1496
      %v1578 = vadd.f32 %v1203, %v1499
      %v1579 = vadd.f32 %v1204, %v1504
      %v1580 = vadd.f32 %v1205, %v1507
      %v1581 = vadd.f32 %v1206, %v1512
      %v1582 = vadd.f32 %v1207, %v1515
      %v1583 = vadd.f32 %v1208, %v1520
      %v1584 = vadd.f32 %v1209, %v1523
      %v1585 = vadd.f32 %v1210, %v1528
      %v1586 = vadd.f32 %v1211, %v1531
      %v1587 = vadd.f32 %v1212, %v1536
      %v1588 = vadd.f32 %v1213, %v1539
      %v1589 = vadd.f32 %v1214, %v1544
      %v1590 = vld [vmem:[%s165 + $0x13] sm:$0xff]
      %v1591 = vld [vmem:[%s165 + $0x1b] sm:$0xff]
      %v1592 = vld [vmem:[%s165 + $0x23] sm:$0xff]
      %v1593 = vld [vmem:[%s165 + $0x2b] sm:$0xff]
      %v1594 = vld [vmem:[%s165 + $0x33] sm:$0xff]
      %v1595 = vld [vmem:[%s165 + $0x3b] sm:$0xff]
      %v1596 = vld [vmem:[%s165 + $0x43] sm:$0xff]
      %v1597 = vld [vmem:[%s165 + $0x4b] sm:$0xff]
      %v1598 = vld [vmem:[%s165 + $0x53] sm:$0xff]
      %v1599 = vld [vmem:[%s165 + $0x5b] sm:$0xff]
      %v1600 = vld [vmem:[%s165 + $0x63] sm:$0xff]
      %v1601 = vld [vmem:[%s165 + $0x6b] sm:$0xff]
      %v1602 = vld [vmem:[%s165 + $0x73] sm:$0xff]
      %v1603 = vld [vmem:[%s165 + $0x7b] sm:$0xff]
      %v1604 = vld [vmem:[%s165 + $0x83] sm:$0xff]
      %v1605 = vld [vmem:[%s165 + $0x8b] sm:$0xff]
      %v1606 = vld [vmem:[%s165 + $0x93] sm:$0xff]
      %v1607 = vld [vmem:[%s165 + $0x9b] sm:$0xff]
      %v1608 = vld [vmem:[%s165 + $0xa3] sm:$0xff]
      %v1609 = vld [vmem:[%s165 + $0xab] sm:$0xff]
      %v1610 = vld [vmem:[%s165 + $0xb3] sm:$0xff]
      %v1611 = vld [vmem:[%s165 + $0xbb] sm:$0xff]
      %v1612 = vld [vmem:[%s165 + $0xc3] sm:$0xff]
      %v1613 = vld [vmem:[%s165 + $0xcb] sm:$0xff]
      %v1614 = vld [vmem:[%s165 + $0xd3] sm:$0xff]
      %v1615 = vld [vmem:[%s165 + $0xdb] sm:$0xff]
      %v1616 = vld [vmem:[%s165 + $0xe3] sm:$0xff]
      %v1617 = vld [vmem:[%s165 + $0xeb] sm:$0xff]
      %v1618 = vld [vmem:[%s165 + $0xf3] sm:$0xff]
      %v1619 = vld [vmem:[%s165 + $0xfb] sm:$0xff]
      %v1620 = vld [vmem:[%s165 + $0x103] sm:$0xff]
      %v1621 = vld [vmem:[%s165 + $0x10b] sm:$0xff]
      %v1622 = vld [vmem:[%s165 + $0x113] sm:$0xff]
      %v1623 = vld [vmem:[%s165 + $0x11b] sm:$0xff]
      %v1624 = vld [vmem:[%s165 + $0x123] sm:$0xff]
      %v1625 = vld [vmem:[%s165 + $0x12b] sm:$0xff]
      %v1626 = vld [vmem:[%s165 + $0x133] sm:$0xff]
      %v1627 = vld [vmem:[%s165 + $0x13b] sm:$0xff]
      %v1628 = vld [vmem:[%s165 + $0x143] sm:$0xff]
      %v1629 = vld [vmem:[%s165 + $0x14b] sm:$0xff]
      %v1630 = vld [vmem:[%s165 + $0x153] sm:$0xf]
      %v1631 = vpack.c.bf16 %v1591, %v1590
      %v1632 = vpack.c.bf16 %v1593, %v1592
      %v1633 = vpack.c.bf16 %v1595, %v1594
      %v1634 = vpack.c.bf16 %v1597, %v1596
      %v1635 = vpack.c.bf16 %v1599, %v1598
      %v1636 = vpack.c.bf16 %v1601, %v1600
      %v1637 = vpack.c.bf16 %v1603, %v1602
      %v1638 = vpack.c.bf16 %v1605, %v1604
      %v1639 = vpack.c.bf16 %v1607, %v1606
      %v1640 = vpack.c.bf16 %v1609, %v1608
      %v1641 = vpack.c.bf16 %v1611, %v1610
      %v1642 = vpack.c.bf16 %v1613, %v1612
      %v1643 = vpack.c.bf16 %v1615, %v1614
      %v1644 = vpack.c.bf16 %v1617, %v1616
      %v1645 = vpack.c.bf16 %v1619, %v1618
      %v1646 = vpack.c.bf16 %v1621, %v1620
      %v1647 = vpack.c.bf16 %v1623, %v1622
      %v1648 = vpack.c.bf16 %v1625, %v1624
      %v1649 = vpack.c.bf16 %v1627, %v1626
      %v1650 = vpack.c.bf16 %v1629, %v1628
      %v1651 = vpack.c.bf16 %v1630, %v1630
      %s1652 = scalar_lea.vmem %s1, 32
      %v1653 = vld [vmem:[%s1652] sm:$0xf]
      %v1654 = vld [vmem:[%s1652 + $0x4] sm:$0xf]
      %v1657 = vunpack.c.l.b16 %v1653
      %v1658 = vunpack.c.l.b16 %v1654
      %v1659 = vpack.c.b16 %v1658, %v1657
      %v1662 = vsel %vm307, %v1631, 0
      %v1665 = vsel %vm307, %v1632, 0
      %v1668 = vsel %vm307, %v1633, 0
      %v1671 = vsel %vm307, %v1634, 0
      %v1674 = vsel %vm307, %v1635, 0
      %v1677 = vsel %vm307, %v1636, 0
      %v1680 = vsel %vm307, %v1637, 0
      %v1683 = vsel %vm307, %v1638, 0
      %v1686 = vsel %vm307, %v1639, 0
      %v1689 = vsel %vm307, %v1640, 0
      %v1692 = vsel %vm307, %v1641, 0
      %v1695 = vsel %vm307, %v1642, 0
      %v1698 = vsel %vm307, %v1643, 0
      %v1701 = vsel %vm307, %v1644, 0
      %v1704 = vsel %vm307, %v1645, 0
      %v1707 = vsel %vm307, %v1646, 0
      %v1710 = vsel %vm307, %v1647, 0
      %v1713 = vsel %vm307, %v1648, 0
      %v1716 = vsel %vm307, %v1649, 0
      %v1719 = vsel %vm307, %v1650, 0
      %v1722 = vsel %vm307, %v1651, 0
      %1724 = vmatprep.subr.bf16.mxu0 0
      %1725 = vmatpush1.bf16.msra.mxu0 %v1659
      %1726 = vmatprep.subr.bf16.mxu0 0
      %1727 = vmatpush1.bf16.msra.mxu0 0
      %1728 = vmatprep.subr.bf16.mxu0 0
      %1729 = vmatpush1.bf16.msra.mxu0 0
      %1730 = vmatprep.subr.bf16.mxu0 0
      %1731 = vmatpush1.bf16.msra.mxu0 0
      %1732 = vmatprep.subr.bf16.mxu0 0
      %1733 = vmatpush1.bf16.msra.mxu0 0
      %1734 = vmatprep.subr.bf16.mxu0 0
      %1735 = vmatpush1.bf16.msra.mxu0 0
      %1736 = vmatprep.subr.bf16.mxu0 0
      %1737 = vmatpush1.bf16.msra.mxu0 0
      %1738 = vmatprep.subr.bf16.mxu0 0
      %1739 = vmatpush1.bf16.msra.mxu0 0
      %1740 = vmatprep.subr.bf16.mxu0 0
      %1741 = vmatpush1.bf16.msra.mxu0 0
      %1742 = vmatprep.subr.bf16.mxu0 0
      %1743 = vmatpush1.bf16.msra.mxu0 0
      %1744 = vmatprep.subr.bf16.mxu0 0
      %1745 = vmatpush1.bf16.msra.mxu0 0
      %1746 = vmatprep.subr.bf16.mxu0 0
      %1747 = vmatpush1.bf16.msra.mxu0 0
      %1748 = vmatprep.subr.bf16.mxu0 0
      %1749 = vmatpush1.bf16.msra.mxu0 0
      %1750 = vmatprep.subr.bf16.mxu0 0
      %1751 = vmatpush1.bf16.msra.mxu0 0
      %1752 = vmatprep.subr.bf16.mxu0 0
      %1753 = vmatpush1.bf16.msra.mxu0 0
      %1754 = vmatprep.subr.bf16.mxu0 0
      %1755 = vmatpush1.bf16.msra.mxu0 0
      %1756 = vmatprep.mubr.bf16.mxu0 0
      %1757 = vmatmul.mubr.bf16.gmra.mrb[0].mxu0 %v1662
      %v1758 = vpop.f32.mrb[0].mxu0
      %v1759 = vadd.f32 0.0, %v1758
      %v1760 = vpop.f32.mrb[0].mxu0
      %v1761 = vpop.f32.mrb[0].mxu0
      %v1762 = vadd.f32 0.0, %v1761
      %v1763 = vpop.f32.mrb[0].mxu0
      %1764 = vmatprep.mubr.bf16.mxu0 0
      %1765 = vmatmul.mubr.bf16.gmra.mrb[0].mxu0 %v1665
      %v1766 = vpop.f32.mrb[0].mxu0
      %v1767 = vadd.f32 0.0, %v1766
      %v1768 = vpop.f32.mrb[0].mxu0
      %v1769 = vpop.f32.mrb[0].mxu0
      %v1770 = vadd.f32 0.0, %v1769
      %v1771 = vpop.f32.mrb[0].mxu0
      %1772 = vmatprep.mubr.bf16.mxu0 0
      %1773 = vmatmul.mubr.bf16.gmra.mrb[0].mxu0 %v1668
      %v1774 = vpop.f32.mrb[0].mxu0
      %v1775 = vadd.f32 0.0, %v1774
      %v1776 = vpop.f32.mrb[0].mxu0
      %v1777 = vpop.f32.mrb[0].mxu0
      %v1778 = vadd.f32 0.0, %v1777
      %v1779 = vpop.f32.mrb[0].mxu0
      %1780 = vmatprep.mubr.bf16.mxu0 0
      %1781 = vmatmul.mubr.bf16.gmra.mrb[0].mxu0 %v1671
      %v1782 = vpop.f32.mrb[0].mxu0
      %v1783 = vadd.f32 0.0, %v1782
      %v1784 = vpop.f32.mrb[0].mxu0
      %v1785 = vpop.f32.mrb[0].mxu0
      %v1786 = vadd.f32 0.0, %v1785
      %v1787 = vpop.f32.mrb[0].mxu0
      %1788 = vmatprep.mubr.bf16.mxu0 0
      %1789 = vmatmul.mubr.bf16.gmra.mrb[0].mxu0 %v1674
      %v1790 = vpop.f32.mrb[0].mxu0
      %v1791 = vadd.f32 0.0, %v1790
      %v1792 = vpop.f32.mrb[0].mxu0
      %v1793 = vpop.f32.mrb[0].mxu0
      %v1794 = vadd.f32 0.0, %v1793
      %v1795 = vpop.f32.mrb[0].mxu0
      %1796 = vmatprep.mubr.bf16.mxu0 0
      %1797 = vmatmul.mubr.bf16.gmra.mrb[0].mxu0 %v1677
      %v1798 = vpop.f32.mrb[0].mxu0
      %v1799 = vadd.f32 0.0, %v1798
      %v1800 = vpop.f32.mrb[0].mxu0
      %v1801 = vpop.f32.mrb[0].mxu0
      %v1802 = vadd.f32 0.0, %v1801
      %v1803 = vpop.f32.mrb[0].mxu0
      %1804 = vmatprep.mubr.bf16.mxu0 0
      %1805 = vmatmul.mubr.bf16.gmra.mrb[0].mxu0 %v1680
      %v1806 = vpop.f32.mrb[0].mxu0
      %v1807 = vadd.f32 0.0, %v1806
      %v1808 = vpop.f32.mrb[0].mxu0
      %v1809 = vpop.f32.mrb[0].mxu0
      %v1810 = vadd.f32 0.0, %v1809
      %v1811 = vpop.f32.mrb[0].mxu0
      %1812 = vmatprep.mubr.bf16.mxu0 0
      %1813 = vmatmul.mubr.bf16.gmra.mrb[0].mxu0 %v1683
      %v1814 = vpop.f32.mrb[0].mxu0
      %v1815 = vadd.f32 0.0, %v1814
      %v1816 = vpop.f32.mrb[0].mxu0
      %v1817 = vpop.f32.mrb[0].mxu0
      %v1818 = vadd.f32 0.0, %v1817
      %v1819 = vpop.f32.mrb[0].mxu0
      %1820 = vmatprep.mubr.bf16.mxu0 0
      %1821 = vmatmul.mubr.bf16.gmra.mrb[0].mxu0 %v1686
      %v1822 = vpop.f32.mrb[0].mxu0
      %v1823 = vadd.f32 0.0, %v1822
      %v1824 = vpop.f32.mrb[0].mxu0
      %v1825 = vpop.f32.mrb[0].mxu0
      %v1826 = vadd.f32 0.0, %v1825
      %v1827 = vpop.f32.mrb[0].mxu0
      %1828 = vmatprep.mubr.bf16.mxu0 0
      %1829 = vmatmul.mubr.bf16.gmra.mrb[0].mxu0 %v1689
      %v1830 = vpop.f32.mrb[0].mxu0
      %v1831 = vadd.f32 0.0, %v1830
      %v1832 = vpop.f32.mrb[0].mxu0
      %v1833 = vpop.f32.mrb[0].mxu0
      %v1834 = vadd.f32 0.0, %v1833
      %v1835 = vpop.f32.mrb[0].mxu0
      %1836 = vmatprep.mubr.bf16.mxu0 0
      %1837 = vmatmul.mubr.bf16.gmra.mrb[0].mxu0 %v1692
      %v1838 = vpop.f32.mrb[0].mxu0
      %v1839 = vadd.f32 0.0, %v1838
      %v1840 = vpop.f32.mrb[0].mxu0
      %v1841 = vpop.f32.mrb[0].mxu0
      %v1842 = vadd.f32 0.0, %v1841
      %v1843 = vpop.f32.mrb[0].mxu0
      %1844 = vmatprep.mubr.bf16.mxu0 0
      %1845 = vmatmul.mubr.bf16.gmra.mrb[0].mxu0 %v1695
      %v1846 = vpop.f32.mrb[0].mxu0
      %v1847 = vadd.f32 0.0, %v1846
      %v1848 = vpop.f32.mrb[0].mxu0
      %v1849 = vpop.f32.mrb[0].mxu0
      %v1850 = vadd.f32 0.0, %v1849
      %v1851 = vpop.f32.mrb[0].mxu0
      %1852 = vmatprep.mubr.bf16.mxu0 0
      %1853 = vmatmul.mubr.bf16.gmra.mrb[0].mxu0 %v1698
      %v1854 = vpop.f32.mrb[0].mxu0
      %v1855 = vadd.f32 0.0, %v1854
      %v1856 = vpop.f32.mrb[0].mxu0
      %v1857 = vpop.f32.mrb[0].mxu0
      %v1858 = vadd.f32 0.0, %v1857
      %v1859 = vpop.f32.mrb[0].mxu0
      %1860 = vmatprep.mubr.bf16.mxu0 0
      %1861 = vmatmul.mubr.bf16.gmra.mrb[0].mxu0 %v1701
      %v1862 = vpop.f32.mrb[0].mxu0
      %v1863 = vadd.f32 0.0, %v1862
      %v1864 = vpop.f32.mrb[0].mxu0
      %v1865 = vpop.f32.mrb[0].mxu0
      %v1866 = vadd.f32 0.0, %v1865
      %v1867 = vpop.f32.mrb[0].mxu0
      %1868 = vmatprep.mubr.bf16.mxu0 0
      %1869 = vmatmul.mubr.bf16.gmra.mrb[0].mxu0 %v1704
      %v1870 = vpop.f32.mrb[0].mxu0
      %v1871 = vadd.f32 0.0, %v1870
      %v1872 = vpop.f32.mrb[0].mxu0
      %v1873 = vpop.f32.mrb[0].mxu0
      %v1874 = vadd.f32 0.0, %v1873
      %v1875 = vpop.f32.mrb[0].mxu0
      %1876 = vmatprep.mubr.bf16.mxu0 0
      %1877 = vmatmul.mubr.bf16.gmra.mrb[0].mxu0 %v1707
      %v1878 = vpop.f32.mrb[0].mxu0
      %v1879 = vadd.f32 0.0, %v1878
      %v1880 = vpop.f32.mrb[0].mxu0
      %v1881 = vpop.f32.mrb[0].mxu0
      %v1882 = vadd.f32 0.0, %v1881
      %v1883 = vpop.f32.mrb[0].mxu0
      %1884 = vmatprep.mubr.bf16.mxu0 0
      %1885 = vmatmul.mubr.bf16.gmra.mrb[0].mxu0 %v1710
      %v1886 = vpop.f32.mrb[0].mxu0
      %v1887 = vadd.f32 0.0, %v1886
      %v1888 = vpop.f32.mrb[0].mxu0
      %v1889 = vpop.f32.mrb[0].mxu0
      %v1890 = vadd.f32 0.0, %v1889
      %v1891 = vpop.f32.mrb[0].mxu0
      %1892 = vmatprep.mubr.bf16.mxu0 0
      %1893 = vmatmul.mubr.bf16.gmra.mrb[0].mxu0 %v1713
      %v1894 = vpop.f32.mrb[0].mxu0
      %v1895 = vadd.f32 0.0, %v1894
      %v1896 = vpop.f32.mrb[0].mxu0
      %v1897 = vpop.f32.mrb[0].mxu0
      %v1898 = vadd.f32 0.0, %v1897
      %v1899 = vpop.f32.mrb[0].mxu0
      %1900 = vmatprep.mubr.bf16.mxu0 0
      %1901 = vmatmul.mubr.bf16.gmra.mrb[0].mxu0 %v1716
      %v1902 = vpop.f32.mrb[0].mxu0
      %v1903 = vadd.f32 0.0, %v1902
      %v1904 = vpop.f32.mrb[0].mxu0
      %v1905 = vpop.f32.mrb[0].mxu0
      %v1906 = vadd.f32 0.0, %v1905
      %v1907 = vpop.f32.mrb[0].mxu0
      %1908 = vmatprep.mubr.bf16.mxu0 0
      %1909 = vmatmul.mubr.bf16.gmra.mrb[0].mxu0 %v1719
      %v1910 = vpop.f32.mrb[0].mxu0
      %v1911 = vadd.f32 0.0, %v1910
      %v1912 = vpop.f32.mrb[0].mxu0
      %v1913 = vpop.f32.mrb[0].mxu0
      %v1914 = vadd.f32 0.0, %v1913
      %v1915 = vpop.f32.mrb[0].mxu0
      %1916 = vmatprep.mubr.bf16.mxu0 0
      %1917 = vmatmul.mubr.bf16.gmra.mrb[0].mxu0 %v1722
      %v1918 = vpop.f32.mrb[0].mxu0
      %v1919 = vadd.f32 0.0, %v1918
      %v1920 = vpop.f32.mrb[0].mxu0
      %v1921 = vpop.f32.mrb[0].mxu0
      %v1922 = vpop.f32.mrb[0].mxu0
      %1923 = vdwg.mxu0
      %v1924 = vadd.f32 %v1549, %v1759
      %v1925 = vadd.f32 %v1550, %v1762
      %v1926 = vadd.f32 %v1551, %v1767
      %v1927 = vadd.f32 %v1552, %v1770
      %v1928 = vadd.f32 %v1553, %v1775
      %v1929 = vadd.f32 %v1554, %v1778
      %v1930 = vadd.f32 %v1555, %v1783
      %v1931 = vadd.f32 %v1556, %v1786
      %v1932 = vadd.f32 %v1557, %v1791
      %v1933 = vadd.f32 %v1558, %v1794
      %v1934 = vadd.f32 %v1559, %v1799
      %v1935 = vadd.f32 %v1560, %v1802
      %v1936 = vadd.f32 %v1561, %v1807
      %v1937 = vadd.f32 %v1562, %v1810
      %v1938 = vadd.f32 %v1563, %v1815
      %v1939 = vadd.f32 %v1564, %v1818
      %v1940 = vadd.f32 %v1565, %v1823
      %v1941 = vadd.f32 %v1566, %v1826
      %v1942 = vadd.f32 %v1567, %v1831
      %v1943 = vadd.f32 %v1568, %v1834
      %v1944 = vadd.f32 %v1569, %v1839
      %v1945 = vadd.f32 %v1570, %v1842
      %v1946 = vadd.f32 %v1571, %v1847
      %v1947 = vadd.f32 %v1572, %v1850
      %v1948 = vadd.f32 %v1573, %v1855
      %v1949 = vadd.f32 %v1574, %v1858
      %v1950 = vadd.f32 %v1575, %v1863
      %v1951 = vadd.f32 %v1576, %v1866
      %v1952 = vadd.f32 %v1577, %v1871
      %v1953 = vadd.f32 %v1578, %v1874
      %v1954 = vadd.f32 %v1579, %v1879
      %v1955 = vadd.f32 %v1580, %v1882
      %v1956 = vadd.f32 %v1581, %v1887
      %v1957 = vadd.f32 %v1582, %v1890
      %v1958 = vadd.f32 %v1583, %v1895
      %v1959 = vadd.f32 %v1584, %v1898
      %v1960 = vadd.f32 %v1585, %v1903
      %v1961 = vadd.f32 %v1586, %v1906
      %v1962 = vadd.f32 %v1587, %v1911
      %v1963 = vadd.f32 %v1588, %v1914
      %v1964 = vadd.f32 %v1589, %v1919
      %v1965 = vld [vmem:[%s165 + $0x14] sm:$0xff]
      %v1966 = vld [vmem:[%s165 + $0x1c] sm:$0xff]
      %v1967 = vld [vmem:[%s165 + $0x24] sm:$0xff]
      %v1968 = vld [vmem:[%s165 + $0x2c] sm:$0xff]
      %v1969 = vld [vmem:[%s165 + $0x34] sm:$0xff]
      %v1970 = vld [vmem:[%s165 + $0x3c] sm:$0xff]
      %v1971 = vld [vmem:[%s165 + $0x44] sm:$0xff]
      %v1972 = vld [vmem:[%s165 + $0x4c] sm:$0xff]
      %v1973 = vld [vmem:[%s165 + $0x54] sm:$0xff]
      %v1974 = vld [vmem:[%s165 + $0x5c] sm:$0xff]
      %v1975 = vld [vmem:[%s165 + $0x64] sm:$0xff]
      %v1976 = vld [vmem:[%s165 + $0x6c] sm:$0xff]
      %v1977 = vld [vmem:[%s165 + $0x74] sm:$0xff]
      %v1978 = vld [vmem:[%s165 + $0x7c] sm:$0xff]
      %v1979 = vld [vmem:[%s165 + $0x84] sm:$0xff]
      %v1980 = vld [vmem:[%s165 + $0x8c] sm:$0xff]
      %v1981 = vld [vmem:[%s165 + $0x94] sm:$0xff]
      %v1982 = vld [vmem:[%s165 + $0x9c] sm:$0xff]
      %v1983 = vld [vmem:[%s165 + $0xa4] sm:$0xff]
      %v1984 = vld [vmem:[%s165 + $0xac] sm:$0xff]
      %v1985 = vld [vmem:[%s165 + $0xb4] sm:$0xff]
      %v1986 = vld [vmem:[%s165 + $0xbc] sm:$0xff]
      %v1987 = vld [vmem:[%s165 + $0xc4] sm:$0xff]
      %v1988 = vld [vmem:[%s165 + $0xcc] sm:$0xff]
      %v1989 = vld [vmem:[%s165 + $0xd4] sm:$0xff]
      %v1990 = vld [vmem:[%s165 + $0xdc] sm:$0xff]
      %v1991 = vld [vmem:[%s165 + $0xe4] sm:$0xff]
      %v1992 = vld [vmem:[%s165 + $0xec] sm:$0xff]
      %v1993 = vld [vmem:[%s165 + $0xf4] sm:$0xff]
      %v1994 = vld [vmem:[%s165 + $0xfc] sm:$0xff]
      %v1995 = vld [vmem:[%s165 + $0x104] sm:$0xff]
      %v1996 = vld [vmem:[%s165 + $0x10c] sm:$0xff]
      %v1997 = vld [vmem:[%s165 + $0x114] sm:$0xff]
      %v1998 = vld [vmem:[%s165 + $0x11c] sm:$0xff]
      %v1999 = vld [vmem:[%s165 + $0x124] sm:$0xff]
      %v2000 = vld [vmem:[%s165 + $0x12c] sm:$0xff]
      %v2001 = vld [vmem:[%s165 + $0x134] sm:$0xff]
      %v2002 = vld [vmem:[%s165 + $0x13c] sm:$0xff]
      %v2003 = vld [vmem:[%s165 + $0x144] sm:$0xff]
      %v2004 = vld [vmem:[%s165 + $0x14c] sm:$0xff]
      %v2005 = vld [vmem:[%s165 + $0x154] sm:$0xf]
      %v2006 = vpack.c.bf16 %v1966, %v1965
      %v2007 = vpack.c.bf16 %v1968, %v1967
      %v2008 = vpack.c.bf16 %v1970, %v1969
      %v2009 = vpack.c.bf16 %v1972, %v1971
      %v2010 = vpack.c.bf16 %v1974, %v1973
      %v2011 = vpack.c.bf16 %v1976, %v1975
      %v2012 = vpack.c.bf16 %v1978, %v1977
      %v2013 = vpack.c.bf16 %v1980, %v1979
      %v2014 = vpack.c.bf16 %v1982, %v1981
      %v2015 = vpack.c.bf16 %v1984, %v1983
      %v2016 = vpack.c.bf16 %v1986, %v1985
      %v2017 = vpack.c.bf16 %v1988, %v1987
      %v2018 = vpack.c.bf16 %v1990, %v1989
      %v2019 = vpack.c.bf16 %v1992, %v1991
      %v2020 = vpack.c.bf16 %v1994, %v1993
      %v2021 = vpack.c.bf16 %v1996, %v1995
      %v2022 = vpack.c.bf16 %v1998, %v1997
      %v2023 = vpack.c.bf16 %v2000, %v1999
      %v2024 = vpack.c.bf16 %v2002, %v2001
      %v2025 = vpack.c.bf16 %v2004, %v2003
      %v2026 = vpack.c.bf16 %v2005, %v2005
      %s2027 = scalar_lea.vmem %s1, 40
      %v2028 = vld [vmem:[%s2027] sm:$0xf]
      %v2029 = vld [vmem:[%s2027 + $0x4] sm:$0xf]
      %v2032 = vunpack.c.l.b16 %v2028
      %v2033 = vunpack.c.l.b16 %v2029
      %v2034 = vpack.c.b16 %v2033, %v2032
      %v2037 = vsel %vm307, %v2006, 0
      %v2040 = vsel %vm307, %v2007, 0
      %v2043 = vsel %vm307, %v2008, 0
      %v2046 = vsel %vm307, %v2009, 0
      %v2049 = vsel %vm307, %v2010, 0
      %v2052 = vsel %vm307, %v2011, 0
      %v2055 = vsel %vm307, %v2012, 0
      %v2058 = vsel %vm307, %v2013, 0
      %v2061 = vsel %vm307, %v2014, 0
      %v2064 = vsel %vm307, %v2015, 0
      %v2067 = vsel %vm307, %v2016, 0
      %v2070 = vsel %vm307, %v2017, 0
      %v2073 = vsel %vm307, %v2018, 0
      %v2076 = vsel %vm307, %v2019, 0
      %v2079 = vsel %vm307, %v2020, 0
      %v2082 = vsel %vm307, %v2021, 0
      %v2085 = vsel %vm307, %v2022, 0
      %v2088 = vsel %vm307, %v2023, 0
      %v2091 = vsel %vm307, %v2024, 0
      %v2094 = vsel %vm307, %v2025, 0
      %v2097 = vsel %vm307, %v2026, 0
      %2099 = vmatprep.subr.bf16.mxu0 0
      %2100 = vmatpush1.bf16.msra.mxu0 %v2034
      %2101 = vmatprep.subr.bf16.mxu0 0
      %2102 = vmatpush1.bf16.msra.mxu0 0
      %2103 = vmatprep.subr.bf16.mxu0 0
      %2104 = vmatpush1.bf16.msra.mxu0 0
      %2105 = vmatprep.subr.bf16.mxu0 0
      %2106 = vmatpush1.bf16.msra.mxu0 0
      %2107 = vmatprep.subr.bf16.mxu0 0
      %2108 = vmatpush1.bf16.msra.mxu0 0
      %2109 = vmatprep.subr.bf16.mxu0 0
      %2110 = vmatpush1.bf16.msra.mxu0 0
      %2111 = vmatprep.subr.bf16.mxu0 0
      %2112 = vmatpush1.bf16.msra.mxu0 0
      %2113 = vmatprep.subr.bf16.mxu0 0
      %2114 = vmatpush1.bf16.msra.mxu0 0
      %2115 = vmatprep.subr.bf16.mxu0 0
      %2116 = vmatpush1.bf16.msra.mxu0 0
      %2117 = vmatprep.subr.bf16.mxu0 0
      %2118 = vmatpush1.bf16.msra.mxu0 0
      %2119 = vmatprep.subr.bf16.mxu0 0
      %2120 = vmatpush1.bf16.msra.mxu0 0
      %2121 = vmatprep.subr.bf16.mxu0 0
      %2122 = vmatpush1.bf16.msra.mxu0 0
      %2123 = vmatprep.subr.bf16.mxu0 0
      %2124 = vmatpush1.bf16.msra.mxu0 0
      %2125 = vmatprep.subr.bf16.mxu0 0
      %2126 = vmatpush1.bf16.msra.mxu0 0
      %2127 = vmatprep.subr.bf16.mxu0 0
      %2128 = vmatpush1.bf16.msra.mxu0 0
      %2129 = vmatprep.subr.bf16.mxu0 0
      %2130 = vmatpush1.bf16.msra.mxu0 0
      %2131 = vmatprep.mubr.bf16.mxu0 0
      %2132 = vmatmul.mubr.bf16.gmra.mrb[0].mxu0 %v2037
      %v2133 = vpop.f32.mrb[0].mxu0
      %v2134 = vadd.f32 0.0, %v2133
      %v2135 = vpop.f32.mrb[0].mxu0
      %v2136 = vpop.f32.mrb[0].mxu0
      %v2137 = vadd.f32 0.0, %v2136
      %v2138 = vpop.f32.mrb[0].mxu0
      %2139 = vmatprep.mubr.bf16.mxu0 0
      %2140 = vmatmul.mubr.bf16.gmra.mrb[0].mxu0 %v2040
      %v2141 = vpop.f32.mrb[0].mxu0
      %v2142 = vadd.f32 0.0, %v2141
      %v2143 = vpop.f32.mrb[0].mxu0
      %v2144 = vpop.f32.mrb[0].mxu0
      %v2145 = vadd.f32 0.0, %v2144
      %v2146 = vpop.f32.mrb[0].mxu0
      %2147 = vmatprep.mubr.bf16.mxu0 0
      %2148 = vmatmul.mubr.bf16.gmra.mrb[0].mxu0 %v2043
      %v2149 = vpop.f32.mrb[0].mxu0
      %v2150 = vadd.f32 0.0, %v2149
      %v2151 = vpop.f32.mrb[0].mxu0
      %v2152 = vpop.f32.mrb[0].mxu0
      %v2153 = vadd.f32 0.0, %v2152
      %v2154 = vpop.f32.mrb[0].mxu0
      %2155 = vmatprep.mubr.bf16.mxu0 0
      %2156 = vmatmul.mubr.bf16.gmra.mrb[0].mxu0 %v2046
      %v2157 = vpop.f32.mrb[0].mxu0
      %v2158 = vadd.f32 0.0, %v2157
      %v2159 = vpop.f32.mrb[0].mxu0
      %v2160 = vpop.f32.mrb[0].mxu0
      %v2161 = vadd.f32 0.0, %v2160
      %v2162 = vpop.f32.mrb[0].mxu0
      %2163 = vmatprep.mubr.bf16.mxu0 0
      %2164 = vmatmul.mubr.bf16.gmra.mrb[0].mxu0 %v2049
      %v2165 = vpop.f32.mrb[0].mxu0
      %v2166 = vadd.f32 0.0, %v2165
      %v2167 = vpop.f32.mrb[0].mxu0
      %v2168 = vpop.f32.mrb[0].mxu0
      %v2169 = vadd.f32 0.0, %v2168
      %v2170 = vpop.f32.mrb[0].mxu0
      %2171 = vmatprep.mubr.bf16.mxu0 0
      %2172 = vmatmul.mubr.bf16.gmra.mrb[0].mxu0 %v2052
      %v2173 = vpop.f32.mrb[0].mxu0
      %v2174 = vadd.f32 0.0, %v2173
      %v2175 = vpop.f32.mrb[0].mxu0
      %v2176 = vpop.f32.mrb[0].mxu0
      %v2177 = vadd.f32 0.0, %v2176
      %v2178 = vpop.f32.mrb[0].mxu0
      %2179 = vmatprep.mubr.bf16.mxu0 0
      %2180 = vmatmul.mubr.bf16.gmra.mrb[0].mxu0 %v2055
      %v2181 = vpop.f32.mrb[0].mxu0
      %v2182 = vadd.f32 0.0, %v2181
      %v2183 = vpop.f32.mrb[0].mxu0
      %v2184 = vpop.f32.mrb[0].mxu0
      %v2185 = vadd.f32 0.0, %v2184
      %v2186 = vpop.f32.mrb[0].mxu0
      %2187 = vmatprep.mubr.bf16.mxu0 0
      %2188 = vmatmul.mubr.bf16.gmra.mrb[0].mxu0 %v2058
      %v2189 = vpop.f32.mrb[0].mxu0
      %v2190 = vadd.f32 0.0, %v2189
      %v2191 = vpop.f32.mrb[0].mxu0
      %v2192 = vpop.f32.mrb[0].mxu0
      %v2193 = vadd.f32 0.0, %v2192
      %v2194 = vpop.f32.mrb[0].mxu0
      %2195 = vmatprep.mubr.bf16.mxu0 0
      %2196 = vmatmul.mubr.bf16.gmra.mrb[0].mxu0 %v2061
      %v2197 = vpop.f32.mrb[0].mxu0
      %v2198 = vadd.f32 0.0, %v2197
      %v2199 = vpop.f32.mrb[0].mxu0
      %v2200 = vpop.f32.mrb[0].mxu0
      %v2201 = vadd.f32 0.0, %v2200
      %v2202 = vpop.f32.mrb[0].mxu0
      %2203 = vmatprep.mubr.bf16.mxu0 0
      %2204 = vmatmul.mubr.bf16.gmra.mrb[0].mxu0 %v2064
      %v2205 = vpop.f32.mrb[0].mxu0
      %v2206 = vadd.f32 0.0, %v2205
      %v2207 = vpop.f32.mrb[0].mxu0
      %v2208 = vpop.f32.mrb[0].mxu0
      %v2209 = vadd.f32 0.0, %v2208
      %v2210 = vpop.f32.mrb[0].mxu0
      %2211 = vmatprep.mubr.bf16.mxu0 0
      %2212 = vmatmul.mubr.bf16.gmra.mrb[0].mxu0 %v2067
      %v2213 = vpop.f32.mrb[0].mxu0
      %v2214 = vadd.f32 0.0, %v2213
      %v2215 = vpop.f32.mrb[0].mxu0
      %v2216 = vpop.f32.mrb[0].mxu0
      %v2217 = vadd.f32 0.0, %v2216
      %v2218 = vpop.f32.mrb[0].mxu0
      %2219 = vmatprep.mubr.bf16.mxu0 0
      %2220 = vmatmul.mubr.bf16.gmra.mrb[0].mxu0 %v2070
      %v2221 = vpop.f32.mrb[0].mxu0
      %v2222 = vadd.f32 0.0, %v2221
      %v2223 = vpop.f32.mrb[0].mxu0
      %v2224 = vpop.f32.mrb[0].mxu0
      %v2225 = vadd.f32 0.0, %v2224
      %v2226 = vpop.f32.mrb[0].mxu0
      %2227 = vmatprep.mubr.bf16.mxu0 0
      %2228 = vmatmul.mubr.bf16.gmra.mrb[0].mxu0 %v2073
      %v2229 = vpop.f32.mrb[0].mxu0
      %v2230 = vadd.f32 0.0, %v2229
      %v2231 = vpop.f32.mrb[0].mxu0
      %v2232 = vpop.f32.mrb[0].mxu0
      %v2233 = vadd.f32 0.0, %v2232
      %v2234 = vpop.f32.mrb[0].mxu0
      %2235 = vmatprep.mubr.bf16.mxu0 0
      %2236 = vmatmul.mubr.bf16.gmra.mrb[0].mxu0 %v2076
      %v2237 = vpop.f32.mrb[0].mxu0
      %v2238 = vadd.f32 0.0, %v2237
      %v2239 = vpop.f32.mrb[0].mxu0
      %v2240 = vpop.f32.mrb[0].mxu0
      %v2241 = vadd.f32 0.0, %v2240
      %v2242 = vpop.f32.mrb[0].mxu0
      %2243 = vmatprep.mubr.bf16.mxu0 0
      %2244 = vmatmul.mubr.bf16.gmra.mrb[0].mxu0 %v2079
      %v2245 = vpop.f32.mrb[0].mxu0
      %v2246 = vadd.f32 0.0, %v2245
      %v2247 = vpop.f32.mrb[0].mxu0
      %v2248 = vpop.f32.mrb[0].mxu0
      %v2249 = vadd.f32 0.0, %v2248
      %v2250 = vpop.f32.mrb[0].mxu0
      %2251 = vmatprep.mubr.bf16.mxu0 0
      %2252 = vmatmul.mubr.bf16.gmra.mrb[0].mxu0 %v2082
      %v2253 = vpop.f32.mrb[0].mxu0
      %v2254 = vadd.f32 0.0, %v2253
      %v2255 = vpop.f32.mrb[0].mxu0
      %v2256 = vpop.f32.mrb[0].mxu0
      %v2257 = vadd.f32 0.0, %v2256
      %v2258 = vpop.f32.mrb[0].mxu0
      %2259 = vmatprep.mubr.bf16.mxu0 0
      %2260 = vmatmul.mubr.bf16.gmra.mrb[0].mxu0 %v2085
      %v2261 = vpop.f32.mrb[0].mxu0
      %v2262 = vadd.f32 0.0, %v2261
      %v2263 = vpop.f32.mrb[0].mxu0
      %v2264 = vpop.f32.mrb[0].mxu0
      %v2265 = vadd.f32 0.0, %v2264
      %v2266 = vpop.f32.mrb[0].mxu0
      %2267 = vmatprep.mubr.bf16.mxu0 0
      %2268 = vmatmul.mubr.bf16.gmra.mrb[0].mxu0 %v2088
      %v2269 = vpop.f32.mrb[0].mxu0
      %v2270 = vadd.f32 0.0, %v2269
      %v2271 = vpop.f32.mrb[0].mxu0
      %v2272 = vpop.f32.mrb[0].mxu0
      %v2273 = vadd.f32 0.0, %v2272
      %v2274 = vpop.f32.mrb[0].mxu0
      %2275 = vmatprep.mubr.bf16.mxu0 0
      %2276 = vmatmul.mubr.bf16.gmra.mrb[0].mxu0 %v2091
      %v2277 = vpop.f32.mrb[0].mxu0
      %v2278 = vadd.f32 0.0, %v2277
      %v2279 = vpop.f32.mrb[0].mxu0
      %v2280 = vpop.f32.mrb[0].mxu0
      %v2281 = vadd.f32 0.0, %v2280
      %v2282 = vpop.f32.mrb[0].mxu0
      %2283 = vmatprep.mubr.bf16.mxu0 0
      %2284 = vmatmul.mubr.bf16.gmra.mrb[0].mxu0 %v2094
      %v2285 = vpop.f32.mrb[0].mxu0
      %v2286 = vadd.f32 0.0, %v2285
      %v2287 = vpop.f32.mrb[0].mxu0
      %v2288 = vpop.f32.mrb[0].mxu0
      %v2289 = vadd.f32 0.0, %v2288
      %v2290 = vpop.f32.mrb[0].mxu0
      %2291 = vmatprep.mubr.bf16.mxu0 0
      %2292 = vmatmul.mubr.bf16.gmra.mrb[0].mxu0 %v2097
      %v2293 = vpop.f32.mrb[0].mxu0
      %v2294 = vadd.f32 0.0, %v2293
      %v2295 = vpop.f32.mrb[0].mxu0
      %v2296 = vpop.f32.mrb[0].mxu0
      %v2297 = vpop.f32.mrb[0].mxu0
      %2298 = vdwg.mxu0
      %v2299 = vadd.f32 %v1924, %v2134
      %v2300 = vadd.f32 %v1925, %v2137
      %v2301 = vadd.f32 %v1926, %v2142
      %v2302 = vadd.f32 %v1927, %v2145
      %v2303 = vadd.f32 %v1928, %v2150
      %v2304 = vadd.f32 %v1929, %v2153
      %v2305 = vadd.f32 %v1930, %v2158
      %v2306 = vadd.f32 %v1931, %v2161
      %v2307 = vadd.f32 %v1932, %v2166
      %v2308 = vadd.f32 %v1933, %v2169
      %v2309 = vadd.f32 %v1934, %v2174
      %v2310 = vadd.f32 %v1935, %v2177
      %v2311 = vadd.f32 %v1936, %v2182
      %v2312 = vadd.f32 %v1937, %v2185
      %v2313 = vadd.f32 %v1938, %v2190
      %v2314 = vadd.f32 %v1939, %v2193
      %v2315 = vadd.f32 %v1940, %v2198
      %v2316 = vadd.f32 %v1941, %v2201
      %v2317 = vadd.f32 %v1942, %v2206
      %v2318 = vadd.f32 %v1943, %v2209
      %v2319 = vadd.f32 %v1944, %v2214
      %v2320 = vadd.f32 %v1945, %v2217
      %v2321 = vadd.f32 %v1946, %v2222
      %v2322 = vadd.f32 %v1947, %v2225
      %v2323 = vadd.f32 %v1948, %v2230
      %v2324 = vadd.f32 %v1949, %v2233
      %v2325 = vadd.f32 %v1950, %v2238
      %v2326 = vadd.f32 %v1951, %v2241
      %v2327 = vadd.f32 %v1952, %v2246
      %v2328 = vadd.f32 %v1953, %v2249
      %v2329 = vadd.f32 %v1954, %v2254
      %v2330 = vadd.f32 %v1955, %v2257
      %v2331 = vadd.f32 %v1956, %v2262
      %v2332 = vadd.f32 %v1957, %v2265
      %v2333 = vadd.f32 %v1958, %v2270
      %v2334 = vadd.f32 %v1959, %v2273
      %v2335 = vadd.f32 %v1960, %v2278
      %v2336 = vadd.f32 %v1961, %v2281
      %v2337 = vadd.f32 %v1962, %v2286
      %v2338 = vadd.f32 %v1963, %v2289
      %v2339 = vadd.f32 %v1964, %v2294
      %v2340 = vld [vmem:[%s165 + $0x24] sm:$0xff]
      %v2341 = vld [vmem:[%s165 + $0x2c] sm:$0xff]
      %v2342 = vld [vmem:[%s165 + $0x34] sm:$0xff]
      %v2343 = vld [vmem:[%s165 + $0x3c] sm:$0xff]
      %v2344 = vld [vmem:[%s165 + $0x44] sm:$0xff]
      %v2345 = vld [vmem:[%s165 + $0x4c] sm:$0xff]
      %v2346 = vld [vmem:[%s165 + $0x54] sm:$0xff]
      %v2347 = vld [vmem:[%s165 + $0x5c] sm:$0xff]
      %v2348 = vld [vmem:[%s165 + $0x64] sm:$0xff]
      %v2349 = vld [vmem:[%s165 + $0x6c] sm:$0xff]
      %v2350 = vld [vmem:[%s165 + $0x74] sm:$0xff]
      %v2351 = vld [vmem:[%s165 + $0x7c] sm:$0xff]
      %v2352 = vld [vmem:[%s165 + $0x84] sm:$0xff]
      %v2353 = vld [vmem:[%s165 + $0x8c] sm:$0xff]
      %v2354 = vld [vmem:[%s165 + $0x94] sm:$0xff]
      %v2355 = vld [vmem:[%s165 + $0x9c] sm:$0xff]
      %v2356 = vld [vmem:[%s165 + $0xa4] sm:$0xff]
      %v2357 = vld [vmem:[%s165 + $0xac] sm:$0xff]
      %v2358 = vld [vmem:[%s165 + $0xb4] sm:$0xff]
      %v2359 = vld [vmem:[%s165 + $0xbc] sm:$0xff]
      %v2360 = vld [vmem:[%s165 + $0xc4] sm:$0xff]
      %v2361 = vld [vmem:[%s165 + $0xcc] sm:$0xff]
      %v2362 = vld [vmem:[%s165 + $0xd4] sm:$0xff]
      %v2363 = vld [vmem:[%s165 + $0xdc] sm:$0xff]
      %v2364 = vld [vmem:[%s165 + $0xe4] sm:$0xff]
      %v2365 = vld [vmem:[%s165 + $0xec] sm:$0xff]
      %v2366 = vld [vmem:[%s165 + $0xf4] sm:$0xff]
      %v2367 = vld [vmem:[%s165 + $0xfc] sm:$0xff]
      %v2368 = vld [vmem:[%s165 + $0x104] sm:$0xff]
      %v2369 = vld [vmem:[%s165 + $0x10c] sm:$0xff]
      %v2370 = vld [vmem:[%s165 + $0x114] sm:$0xff]
      %v2371 = vld [vmem:[%s165 + $0x11c] sm:$0xff]
      %v2372 = vld [vmem:[%s165 + $0x124] sm:$0xff]
      %v2373 = vld [vmem:[%s165 + $0x12c] sm:$0xff]
      %v2374 = vld [vmem:[%s165 + $0x134] sm:$0xff]
      %v2375 = vld [vmem:[%s165 + $0x13c] sm:$0xff]
      %v2376 = vld [vmem:[%s165 + $0x144] sm:$0xff]
      %v2377 = vld [vmem:[%s165 + $0x14c] sm:$0xff]
      %v2378 = vld [vmem:[%s165 + $0x154] sm:$0xff]
      %v2379 = vld [vmem:[%s165 + $0x15c] sm:$0xff]
      %v2380 = vld [vmem:[%s165 + $0x164] sm:$0xf]
      %v2381 = vpack.c.bf16 %v2341, %v2340
      %v2382 = vpack.c.bf16 %v2343, %v2342
      %v2383 = vpack.c.bf16 %v2345, %v2344
      %v2384 = vpack.c.bf16 %v2347, %v2346
      %v2385 = vpack.c.bf16 %v2349, %v2348
      %v2386 = vpack.c.bf16 %v2351, %v2350
      %v2387 = vpack.c.bf16 %v2353, %v2352
      %v2388 = vpack.c.bf16 %v2355, %v2354
      %v2389 = vpack.c.bf16 %v2357, %v2356
      %v2390 = vpack.c.bf16 %v2359, %v2358
      %v2391 = vpack.c.bf16 %v2361, %v2360
      %v2392 = vpack.c.bf16 %v2363, %v2362
      %v2393 = vpack.c.bf16 %v2365, %v2364
      %v2394 = vpack.c.bf16 %v2367, %v2366
      %v2395 = vpack.c.bf16 %v2369, %v2368
      %v2396 = vpack.c.bf16 %v2371, %v2370
      %v2397 = vpack.c.bf16 %v2373, %v2372
      %v2398 = vpack.c.bf16 %v2375, %v2374
      %v2399 = vpack.c.bf16 %v2377, %v2376
      %v2400 = vpack.c.bf16 %v2379, %v2378
      %v2401 = vpack.c.bf16 %v2380, %v2380
      %s2402 = scalar_lea.vmem %s1, 48
      %v2403 = vld [vmem:[%s2402] sm:$0xf]
      %v2404 = vld [vmem:[%s2402 + $0x4] sm:$0xf]
      %v2407 = vunpack.c.l.b16 %v2403
      %v2408 = vunpack.c.l.b16 %v2404
      %v2409 = vpack.c.b16 %v2408, %v2407
      %v2412 = vsel %vm307, %v2381, 0
      %v2415 = vsel %vm307, %v2382, 0
      %v2418 = vsel %vm307, %v2383, 0
      %v2421 = vsel %vm307, %v2384, 0
      %v2424 = vsel %vm307, %v2385, 0
      %v2427 = vsel %vm307, %v2386, 0
      %v2430 = vsel %vm307, %v2387, 0
      %v2433 = vsel %vm307, %v2388, 0
      %v2436 = vsel %vm307, %v2389, 0
      %v2439 = vsel %vm307, %v2390, 0
      %v2442 = vsel %vm307, %v2391, 0
      %v2445 = vsel %vm307, %v2392, 0
      %v2448 = vsel %vm307, %v2393, 0
      %v2451 = vsel %vm307, %v2394, 0
      %v2454 = vsel %vm307, %v2395, 0
      %v2457 = vsel %vm307, %v2396, 0
      %v2460 = vsel %vm307, %v2397, 0
      %v2463 = vsel %vm307, %v2398, 0
      %v2466 = vsel %vm307, %v2399, 0
      %v2469 = vsel %vm307, %v2400, 0
      %v2472 = vsel %vm307, %v2401, 0
      %2474 = vmatprep.subr.bf16.mxu0 0
      %2475 = vmatpush1.bf16.msra.mxu0 %v2409
      %2476 = vmatprep.subr.bf16.mxu0 0
      %2477 = vmatpush1.bf16.msra.mxu0 0
      %2478 = vmatprep.subr.bf16.mxu0 0
      %2479 = vmatpush1.bf16.msra.mxu0 0
      %2480 = vmatprep.subr.bf16.mxu0 0
      %2481 = vmatpush1.bf16.msra.mxu0 0
      %2482 = vmatprep.subr.bf16.mxu0 0
      %2483 = vmatpush1.bf16.msra.mxu0 0
      %2484 = vmatprep.subr.bf16.mxu0 0
      %2485 = vmatpush1.bf16.msra.mxu0 0
      %2486 = vmatprep.subr.bf16.mxu0 0
      %2487 = vmatpush1.bf16.msra.mxu0 0
      %2488 = vmatprep.subr.bf16.mxu0 0
      %2489 = vmatpush1.bf16.msra.mxu0 0
      %2490 = vmatprep.subr.bf16.mxu0 0
      %2491 = vmatpush1.bf16.msra.mxu0 0
      %2492 = vmatprep.subr.bf16.mxu0 0
      %2493 = vmatpush1.bf16.msra.mxu0 0
      %2494 = vmatprep.subr.bf16.mxu0 0
      %2495 = vmatpush1.bf16.msra.mxu0 0
      %2496 = vmatprep.subr.bf16.mxu0 0
      %2497 = vmatpush1.bf16.msra.mxu0 0
      %2498 = vmatprep.subr.bf16.mxu0 0
      %2499 = vmatpush1.bf16.msra.mxu0 0
      %2500 = vmatprep.subr.bf16.mxu0 0
      %2501 = vmatpush1.bf16.msra.mxu0 0
      %2502 = vmatprep.subr.bf16.mxu0 0
      %2503 = vmatpush1.bf16.msra.mxu0 0
      %2504 = vmatprep.subr.bf16.mxu0 0
      %2505 = vmatpush1.bf16.msra.mxu0 0
      %2506 = vmatprep.mubr.bf16.mxu0 0
      %2507 = vmatmul.mubr.bf16.gmra.mrb[0].mxu0 %v2412
      %v2508 = vpop.f32.mrb[0].mxu0
      %v2509 = vadd.f32 0.0, %v2508
      %v2510 = vpop.f32.mrb[0].mxu0
      %v2511 = vpop.f32.mrb[0].mxu0
      %v2512 = vadd.f32 0.0, %v2511
      %v2513 = vpop.f32.mrb[0].mxu0
      %2514 = vmatprep.mubr.bf16.mxu0 0
      %2515 = vmatmul.mubr.bf16.gmra.mrb[0].mxu0 %v2415
      %v2516 = vpop.f32.mrb[0].mxu0
      %v2517 = vadd.f32 0.0, %v2516
      %v2518 = vpop.f32.mrb[0].mxu0
      %v2519 = vpop.f32.mrb[0].mxu0
      %v2520 = vadd.f32 0.0, %v2519
      %v2521 = vpop.f32.mrb[0].mxu0
      %2522 = vmatprep.mubr.bf16.mxu0 0
      %2523 = vmatmul.mubr.bf16.gmra.mrb[0].mxu0 %v2418
      %v2524 = vpop.f32.mrb[0].mxu0
      %v2525 = vadd.f32 0.0, %v2524
      %v2526 = vpop.f32.mrb[0].mxu0
      %v2527 = vpop.f32.mrb[0].mxu0
      %v2528 = vadd.f32 0.0, %v2527
      %v2529 = vpop.f32.mrb[0].mxu0
      %2530 = vmatprep.mubr.bf16.mxu0 0
      %2531 = vmatmul.mubr.bf16.gmra.mrb[0].mxu0 %v2421
      %v2532 = vpop.f32.mrb[0].mxu0
      %v2533 = vadd.f32 0.0, %v2532
      %v2534 = vpop.f32.mrb[0].mxu0
      %v2535 = vpop.f32.mrb[0].mxu0
      %v2536 = vadd.f32 0.0, %v2535
      %v2537 = vpop.f32.mrb[0].mxu0
      %2538 = vmatprep.mubr.bf16.mxu0 0
      %2539 = vmatmul.mubr.bf16.gmra.mrb[0].mxu0 %v2424
      %v2540 = vpop.f32.mrb[0].mxu0
      %v2541 = vadd.f32 0.0, %v2540
      %v2542 = vpop.f32.mrb[0].mxu0
      %v2543 = vpop.f32.mrb[0].mxu0
      %v2544 = vadd.f32 0.0, %v2543
      %v2545 = vpop.f32.mrb[0].mxu0
      %2546 = vmatprep.mubr.bf16.mxu0 0
      %2547 = vmatmul.mubr.bf16.gmra.mrb[0].mxu0 %v2427
      %v2548 = vpop.f32.mrb[0].mxu0
      %v2549 = vadd.f32 0.0, %v2548
      %v2550 = vpop.f32.mrb[0].mxu0
      %v2551 = vpop.f32.mrb[0].mxu0
      %v2552 = vadd.f32 0.0, %v2551
      %v2553 = vpop.f32.mrb[0].mxu0
      %2554 = vmatprep.mubr.bf16.mxu0 0
      %2555 = vmatmul.mubr.bf16.gmra.mrb[0].mxu0 %v2430
      %v2556 = vpop.f32.mrb[0].mxu0
      %v2557 = vadd.f32 0.0, %v2556
      %v2558 = vpop.f32.mrb[0].mxu0
      %v2559 = vpop.f32.mrb[0].mxu0
      %v2560 = vadd.f32 0.0, %v2559
      %v2561 = vpop.f32.mrb[0].mxu0
      %2562 = vmatprep.mubr.bf16.mxu0 0
      %2563 = vmatmul.mubr.bf16.gmra.mrb[0].mxu0 %v2433
      %v2564 = vpop.f32.mrb[0].mxu0
      %v2565 = vadd.f32 0.0, %v2564
      %v2566 = vpop.f32.mrb[0].mxu0
      %v2567 = vpop.f32.mrb[0].mxu0
      %v2568 = vadd.f32 0.0, %v2567
      %v2569 = vpop.f32.mrb[0].mxu0
      %2570 = vmatprep.mubr.bf16.mxu0 0
      %2571 = vmatmul.mubr.bf16.gmra.mrb[0].mxu0 %v2436
      %v2572 = vpop.f32.mrb[0].mxu0
      %v2573 = vadd.f32 0.0, %v2572
      %v2574 = vpop.f32.mrb[0].mxu0
      %v2575 = vpop.f32.mrb[0].mxu0
      %v2576 = vadd.f32 0.0, %v2575
      %v2577 = vpop.f32.mrb[0].mxu0
      %2578 = vmatprep.mubr.bf16.mxu0 0
      %2579 = vmatmul.mubr.bf16.gmra.mrb[0].mxu0 %v2439
      %v2580 = vpop.f32.mrb[0].mxu0
      %v2581 = vadd.f32 0.0, %v2580
      %v2582 = vpop.f32.mrb[0].mxu0
      %v2583 = vpop.f32.mrb[0].mxu0
      %v2584 = vadd.f32 0.0, %v2583
      %v2585 = vpop.f32.mrb[0].mxu0
      %2586 = vmatprep.mubr.bf16.mxu0 0
      %2587 = vmatmul.mubr.bf16.gmra.mrb[0].mxu0 %v2442
      %v2588 = vpop.f32.mrb[0].mxu0
      %v2589 = vadd.f32 0.0, %v2588
      %v2590 = vpop.f32.mrb[0].mxu0
      %v2591 = vpop.f32.mrb[0].mxu0
      %v2592 = vadd.f32 0.0, %v2591
      %v2593 = vpop.f32.mrb[0].mxu0
      %2594 = vmatprep.mubr.bf16.mxu0 0
      %2595 = vmatmul.mubr.bf16.gmra.mrb[0].mxu0 %v2445
      %v2596 = vpop.f32.mrb[0].mxu0
      %v2597 = vadd.f32 0.0, %v2596
      %v2598 = vpop.f32.mrb[0].mxu0
      %v2599 = vpop.f32.mrb[0].mxu0
      %v2600 = vadd.f32 0.0, %v2599
      %v2601 = vpop.f32.mrb[0].mxu0
      %2602 = vmatprep.mubr.bf16.mxu0 0
      %2603 = vmatmul.mubr.bf16.gmra.mrb[0].mxu0 %v2448
      %v2604 = vpop.f32.mrb[0].mxu0
      %v2605 = vadd.f32 0.0, %v2604
      %v2606 = vpop.f32.mrb[0].mxu0
      %v2607 = vpop.f32.mrb[0].mxu0
      %v2608 = vadd.f32 0.0, %v2607
      %v2609 = vpop.f32.mrb[0].mxu0
      %2610 = vmatprep.mubr.bf16.mxu0 0
      %2611 = vmatmul.mubr.bf16.gmra.mrb[0].mxu0 %v2451
      %v2612 = vpop.f32.mrb[0].mxu0
      %v2613 = vadd.f32 0.0, %v2612
      %v2614 = vpop.f32.mrb[0].mxu0
      %v2615 = vpop.f32.mrb[0].mxu0
      %v2616 = vadd.f32 0.0, %v2615
      %v2617 = vpop.f32.mrb[0].mxu0
      %2618 = vmatprep.mubr.bf16.mxu0 0
      %2619 = vmatmul.mubr.bf16.gmra.mrb[0].mxu0 %v2454
      %v2620 = vpop.f32.mrb[0].mxu0
      %v2621 = vadd.f32 0.0, %v2620
      %v2622 = vpop.f32.mrb[0].mxu0
      %v2623 = vpop.f32.mrb[0].mxu0
      %v2624 = vadd.f32 0.0, %v2623
      %v2625 = vpop.f32.mrb[0].mxu0
      %2626 = vmatprep.mubr.bf16.mxu0 0
      %2627 = vmatmul.mubr.bf16.gmra.mrb[0].mxu0 %v2457
      %v2628 = vpop.f32.mrb[0].mxu0
      %v2629 = vadd.f32 0.0, %v2628
      %v2630 = vpop.f32.mrb[0].mxu0
      %v2631 = vpop.f32.mrb[0].mxu0
      %v2632 = vadd.f32 0.0, %v2631
      %v2633 = vpop.f32.mrb[0].mxu0
      %2634 = vmatprep.mubr.bf16.mxu0 0
      %2635 = vmatmul.mubr.bf16.gmra.mrb[0].mxu0 %v2460
      %v2636 = vpop.f32.mrb[0].mxu0
      %v2637 = vadd.f32 0.0, %v2636
      %v2638 = vpop.f32.mrb[0].mxu0
      %v2639 = vpop.f32.mrb[0].mxu0
      %v2640 = vadd.f32 0.0, %v2639
      %v2641 = vpop.f32.mrb[0].mxu0
      %2642 = vmatprep.mubr.bf16.mxu0 0
      %2643 = vmatmul.mubr.bf16.gmra.mrb[0].mxu0 %v2463
      %v2644 = vpop.f32.mrb[0].mxu0
      %v2645 = vadd.f32 0.0, %v2644
      %v2646 = vpop.f32.mrb[0].mxu0
      %v2647 = vpop.f32.mrb[0].mxu0
      %v2648 = vadd.f32 0.0, %v2647
      %v2649 = vpop.f32.mrb[0].mxu0
      %2650 = vmatprep.mubr.bf16.mxu0 0
      %2651 = vmatmul.mubr.bf16.gmra.mrb[0].mxu0 %v2466
      %v2652 = vpop.f32.mrb[0].mxu0
      %v2653 = vadd.f32 0.0, %v2652
      %v2654 = vpop.f32.mrb[0].mxu0
      %v2655 = vpop.f32.mrb[0].mxu0
      %v2656 = vadd.f32 0.0, %v2655
      %v2657 = vpop.f32.mrb[0].mxu0
      %2658 = vmatprep.mubr.bf16.mxu0 0
      %2659 = vmatmul.mubr.bf16.gmra.mrb[0].mxu0 %v2469
      %v2660 = vpop.f32.mrb[0].mxu0
      %v2661 = vadd.f32 0.0, %v2660
      %v2662 = vpop.f32.mrb[0].mxu0
      %v2663 = vpop.f32.mrb[0].mxu0
      %v2664 = vadd.f32 0.0, %v2663
      %v2665 = vpop.f32.mrb[0].mxu0
      %2666 = vmatprep.mubr.bf16.mxu0 0
      %2667 = vmatmul.mubr.bf16.gmra.mrb[0].mxu0 %v2472
      %v2668 = vpop.f32.mrb[0].mxu0
      %v2669 = vadd.f32 0.0, %v2668
      %v2670 = vpop.f32.mrb[0].mxu0
      %v2671 = vpop.f32.mrb[0].mxu0
      %v2672 = vpop.f32.mrb[0].mxu0
      %2673 = vdwg.mxu0
      %v2674 = vadd.f32 %v2299, %v2509
      %v2675 = vadd.f32 %v2300, %v2512
      %v2676 = vadd.f32 %v2301, %v2517
      %v2677 = vadd.f32 %v2302, %v2520
      %v2678 = vadd.f32 %v2303, %v2525
      %v2679 = vadd.f32 %v2304, %v2528
      %v2680 = vadd.f32 %v2305, %v2533
      %v2681 = vadd.f32 %v2306, %v2536
      %v2682 = vadd.f32 %v2307, %v2541
      %v2683 = vadd.f32 %v2308, %v2544
      %v2684 = vadd.f32 %v2309, %v2549
      %v2685 = vadd.f32 %v2310, %v2552
      %v2686 = vadd.f32 %v2311, %v2557
      %v2687 = vadd.f32 %v2312, %v2560
      %v2688 = vadd.f32 %v2313, %v2565
      %v2689 = vadd.f32 %v2314, %v2568
      %v2690 = vadd.f32 %v2315, %v2573
      %v2691 = vadd.f32 %v2316, %v2576
      %v2692 = vadd.f32 %v2317, %v2581
      %v2693 = vadd.f32 %v2318, %v2584
      %v2694 = vadd.f32 %v2319, %v2589
      %v2695 = vadd.f32 %v2320, %v2592
      %v2696 = vadd.f32 %v2321, %v2597
      %v2697 = vadd.f32 %v2322, %v2600
      %v2698 = vadd.f32 %v2323, %v2605
      %v2699 = vadd.f32 %v2324, %v2608
      %v2700 = vadd.f32 %v2325, %v2613
      %v2701 = vadd.f32 %v2326, %v2616
      %v2702 = vadd.f32 %v2327, %v2621
      %v2703 = vadd.f32 %v2328, %v2624
      %v2704 = vadd.f32 %v2329, %v2629
      %v2705 = vadd.f32 %v2330, %v2632
      %v2706 = vadd.f32 %v2331, %v2637
      %v2707 = vadd.f32 %v2332, %v2640
      %v2708 = vadd.f32 %v2333, %v2645
      %v2709 = vadd.f32 %v2334, %v2648
      %v2710 = vadd.f32 %v2335, %v2653
      %v2711 = vadd.f32 %v2336, %v2656
      %v2712 = vadd.f32 %v2337, %v2661
      %v2713 = vadd.f32 %v2338, %v2664
      %v2714 = vadd.f32 %v2339, %v2669
      %v2715 = vld [vmem:[%s165 + $0x25] sm:$0xff]
      %v2716 = vld [vmem:[%s165 + $0x2d] sm:$0xff]
      %v2717 = vld [vmem:[%s165 + $0x35] sm:$0xff]
      %v2718 = vld [vmem:[%s165 + $0x3d] sm:$0xff]
      %v2719 = vld [vmem:[%s165 + $0x45] sm:$0xff]
      %v2720 = vld [vmem:[%s165 + $0x4d] sm:$0xff]
      %v2721 = vld [vmem:[%s165 + $0x55] sm:$0xff]
      %v2722 = vld [vmem:[%s165 + $0x5d] sm:$0xff]
      %v2723 = vld [vmem:[%s165 + $0x65] sm:$0xff]
      %v2724 = vld [vmem:[%s165 + $0x6d] sm:$0xff]
      %v2725 = vld [vmem:[%s165 + $0x75] sm:$0xff]
      %v2726 = vld [vmem:[%s165 + $0x7d] sm:$0xff]
      %v2727 = vld [vmem:[%s165 + $0x85] sm:$0xff]
      %v2728 = vld [vmem:[%s165 + $0x8d] sm:$0xff]
      %v2729 = vld [vmem:[%s165 + $0x95] sm:$0xff]
      %v2730 = vld [vmem:[%s165 + $0x9d] sm:$0xff]
      %v2731 = vld [vmem:[%s165 + $0xa5] sm:$0xff]
      %v2732 = vld [vmem:[%s165 + $0xad] sm:$0xff]
      %v2733 = vld [vmem:[%s165 + $0xb5] sm:$0xff]
      %v2734 = vld [vmem:[%s165 + $0xbd] sm:$0xff]
      %v2735 = vld [vmem:[%s165 + $0xc5] sm:$0xff]
      %v2736 = vld [vmem:[%s165 + $0xcd] sm:$0xff]
      %v2737 = vld [vmem:[%s165 + $0xd5] sm:$0xff]
      %v2738 = vld [vmem:[%s165 + $0xdd] sm:$0xff]
      %v2739 = vld [vmem:[%s165 + $0xe5] sm:$0xff]
      %v2740 = vld [vmem:[%s165 + $0xed] sm:$0xff]
      %v2741 = vld [vmem:[%s165 + $0xf5] sm:$0xff]
      %v2742 = vld [vmem:[%s165 + $0xfd] sm:$0xff]
      %v2743 = vld [vmem:[%s165 + $0x105] sm:$0xff]
      %v2744 = vld [vmem:[%s165 + $0x10d] sm:$0xff]
      %v2745 = vld [vmem:[%s165 + $0x115] sm:$0xff]
      %v2746 = vld [vmem:[%s165 + $0x11d] sm:$0xff]
      %v2747 = vld [vmem:[%s165 + $0x125] sm:$0xff]
      %v2748 = vld [vmem:[%s165 + $0x12d] sm:$0xff]
      %v2749 = vld [vmem:[%s165 + $0x135] sm:$0xff]
      %v2750 = vld [vmem:[%s165 + $0x13d] sm:$0xff]
      %v2751 = vld [vmem:[%s165 + $0x145] sm:$0xff]
      %v2752 = vld [vmem:[%s165 + $0x14d] sm:$0xff]
      %v2753 = vld [vmem:[%s165 + $0x155] sm:$0xff]
      %v2754 = vld [vmem:[%s165 + $0x15d] sm:$0xff]
      %v2755 = vld [vmem:[%s165 + $0x165] sm:$0xf]
      %v2756 = vpack.c.bf16 %v2716, %v2715
      %v2757 = vpack.c.bf16 %v2718, %v2717
      %v2758 = vpack.c.bf16 %v2720, %v2719
      %v2759 = vpack.c.bf16 %v2722, %v2721
      %v2760 = vpack.c.bf16 %v2724, %v2723
      %v2761 = vpack.c.bf16 %v2726, %v2725
      %v2762 = vpack.c.bf16 %v2728, %v2727
      %v2763 = vpack.c.bf16 %v2730, %v2729
      %v2764 = vpack.c.bf16 %v2732, %v2731
      %v2765 = vpack.c.bf16 %v2734, %v2733
      %v2766 = vpack.c.bf16 %v2736, %v2735
      %v2767 = vpack.c.bf16 %v2738, %v2737
      %v2768 = vpack.c.bf16 %v2740, %v2739
      %v2769 = vpack.c.bf16 %v2742, %v2741
      %v2770 = vpack.c.bf16 %v2744, %v2743
      %v2771 = vpack.c.bf16 %v2746, %v2745
      %v2772 = vpack.c.bf16 %v2748, %v2747
      %v2773 = vpack.c.bf16 %v2750, %v2749
      %v2774 = vpack.c.bf16 %v2752, %v2751
      %v2775 = vpack.c.bf16 %v2754, %v2753
      %v2776 = vpack.c.bf16 %v2755, %v2755
      %s2777 = scalar_lea.vmem %s1, 56
      %v2778 = vld [vmem:[%s2777] sm:$0xf]
      %v2779 = vld [vmem:[%s2777 + $0x4] sm:$0xf]
      %v2782 = vunpack.c.l.b16 %v2778
      %v2783 = vunpack.c.l.b16 %v2779
      %v2784 = vpack.c.b16 %v2783, %v2782
      %v2787 = vsel %vm307, %v2756, 0
      %v2790 = vsel %vm307, %v2757, 0
      %v2793 = vsel %vm307, %v2758, 0
      %v2796 = vsel %vm307, %v2759, 0
      %v2799 = vsel %vm307, %v2760, 0
      %v2802 = vsel %vm307, %v2761, 0
      %v2805 = vsel %vm307, %v2762, 0
      %v2808 = vsel %vm307, %v2763, 0
      %v2811 = vsel %vm307, %v2764, 0
      %v2814 = vsel %vm307, %v2765, 0
      %v2817 = vsel %vm307, %v2766, 0
      %v2820 = vsel %vm307, %v2767, 0
      %v2823 = vsel %vm307, %v2768, 0
      %v2826 = vsel %vm307, %v2769, 0
      %v2829 = vsel %vm307, %v2770, 0
      %v2832 = vsel %vm307, %v2771, 0
      %v2835 = vsel %vm307, %v2772, 0
      %v2838 = vsel %vm307, %v2773, 0
      %v2841 = vsel %vm307, %v2774, 0
      %v2844 = vsel %vm307, %v2775, 0
      %v2847 = vsel %vm307, %v2776, 0
      %2849 = vmatprep.subr.bf16.mxu0 0
      %2850 = vmatpush1.bf16.msra.mxu0 %v2784
      %2851 = vmatprep.subr.bf16.mxu0 0
      %2852 = vmatpush1.bf16.msra.mxu0 0
      %2853 = vmatprep.subr.bf16.mxu0 0
      %2854 = vmatpush1.bf16.msra.mxu0 0
      %2855 = vmatprep.subr.bf16.mxu0 0
      %2856 = vmatpush1.bf16.msra.mxu0 0
      %2857 = vmatprep.subr.bf16.mxu0 0
      %2858 = vmatpush1.bf16.msra.mxu0 0
      %2859 = vmatprep.subr.bf16.mxu0 0
      %2860 = vmatpush1.bf16.msra.mxu0 0
      %2861 = vmatprep.subr.bf16.mxu0 0
      %2862 = vmatpush1.bf16.msra.mxu0 0
      %2863 = vmatprep.subr.bf16.mxu0 0
      %2864 = vmatpush1.bf16.msra.mxu0 0
      %2865 = vmatprep.subr.bf16.mxu0 0
      %2866 = vmatpush1.bf16.msra.mxu0 0
      %2867 = vmatprep.subr.bf16.mxu0 0
      %2868 = vmatpush1.bf16.msra.mxu0 0
      %2869 = vmatprep.subr.bf16.mxu0 0
      %2870 = vmatpush1.bf16.msra.mxu0 0
      %2871 = vmatprep.subr.bf16.mxu0 0
      %2872 = vmatpush1.bf16.msra.mxu0 0
      %2873 = vmatprep.subr.bf16.mxu0 0
      %2874 = vmatpush1.bf16.msra.mxu0 0
      %2875 = vmatprep.subr.bf16.mxu0 0
      %2876 = vmatpush1.bf16.msra.mxu0 0
      %2877 = vmatprep.subr.bf16.mxu0 0
      %2878 = vmatpush1.bf16.msra.mxu0 0
      %2879 = vmatprep.subr.bf16.mxu0 0
      %2880 = vmatpush1.bf16.msra.mxu0 0
      %2881 = vmatprep.mubr.bf16.mxu0 0
      %2882 = vmatmul.mubr.bf16.gmra.mrb[0].mxu0 %v2787
      %v2883 = vpop.f32.mrb[0].mxu0
      %v2884 = vadd.f32 0.0, %v2883
      %v2885 = vpop.f32.mrb[0].mxu0
      %v2886 = vpop.f32.mrb[0].mxu0
      %v2887 = vadd.f32 0.0, %v2886
      %v2888 = vpop.f32.mrb[0].mxu0
      %2889 = vmatprep.mubr.bf16.mxu0 0
      %2890 = vmatmul.mubr.bf16.gmra.mrb[0].mxu0 %v2790
      %v2891 = vpop.f32.mrb[0].mxu0
      %v2892 = vadd.f32 0.0, %v2891
      %v2893 = vpop.f32.mrb[0].mxu0
      %v2894 = vpop.f32.mrb[0].mxu0
      %v2895 = vadd.f32 0.0, %v2894
      %v2896 = vpop.f32.mrb[0].mxu0
      %2897 = vmatprep.mubr.bf16.mxu0 0
      %2898 = vmatmul.mubr.bf16.gmra.mrb[0].mxu0 %v2793
      %v2899 = vpop.f32.mrb[0].mxu0
      %v2900 = vadd.f32 0.0, %v2899
      %v2901 = vpop.f32.mrb[0].mxu0
      %v2902 = vpop.f32.mrb[0].mxu0
      %v2903 = vadd.f32 0.0, %v2902
      %v2904 = vpop.f32.mrb[0].mxu0
      %2905 = vmatprep.mubr.bf16.mxu0 0
      %2906 = vmatmul.mubr.bf16.gmra.mrb[0].mxu0 %v2796
      %v2907 = vpop.f32.mrb[0].mxu0
      %v2908 = vadd.f32 0.0, %v2907
      %v2909 = vpop.f32.mrb[0].mxu0
      %v2910 = vpop.f32.mrb[0].mxu0
      %v2911 = vadd.f32 0.0, %v2910
      %v2912 = vpop.f32.mrb[0].mxu0
      %2913 = vmatprep.mubr.bf16.mxu0 0
      %2914 = vmatmul.mubr.bf16.gmra.mrb[0].mxu0 %v2799
      %v2915 = vpop.f32.mrb[0].mxu0
      %v2916 = vadd.f32 0.0, %v2915
      %v2917 = vpop.f32.mrb[0].mxu0
      %v2918 = vpop.f32.mrb[0].mxu0
      %v2919 = vadd.f32 0.0, %v2918
      %v2920 = vpop.f32.mrb[0].mxu0
      %2921 = vmatprep.mubr.bf16.mxu0 0
      %2922 = vmatmul.mubr.bf16.gmra.mrb[0].mxu0 %v2802
      %v2923 = vpop.f32.mrb[0].mxu0
      %v2924 = vadd.f32 0.0, %v2923
      %v2925 = vpop.f32.mrb[0].mxu0
      %v2926 = vpop.f32.mrb[0].mxu0
      %v2927 = vadd.f32 0.0, %v2926
      %v2928 = vpop.f32.mrb[0].mxu0
      %2929 = vmatprep.mubr.bf16.mxu0 0
      %2930 = vmatmul.mubr.bf16.gmra.mrb[0].mxu0 %v2805
      %v2931 = vpop.f32.mrb[0].mxu0
      %v2932 = vadd.f32 0.0, %v2931
      %v2933 = vpop.f32.mrb[0].mxu0
      %v2934 = vpop.f32.mrb[0].mxu0
      %v2935 = vadd.f32 0.0, %v2934
      %v2936 = vpop.f32.mrb[0].mxu0
      %2937 = vmatprep.mubr.bf16.mxu0 0
      %2938 = vmatmul.mubr.bf16.gmra.mrb[0].mxu0 %v2808
      %v2939 = vpop.f32.mrb[0].mxu0
      %v2940 = vadd.f32 0.0, %v2939
      %v2941 = vpop.f32.mrb[0].mxu0
      %v2942 = vpop.f32.mrb[0].mxu0
      %v2943 = vadd.f32 0.0, %v2942
      %v2944 = vpop.f32.mrb[0].mxu0
      %2945 = vmatprep.mubr.bf16.mxu0 0
      %2946 = vmatmul.mubr.bf16.gmra.mrb[0].mxu0 %v2811
      %v2947 = vpop.f32.mrb[0].mxu0
      %v2948 = vadd.f32 0.0, %v2947
      %v2949 = vpop.f32.mrb[0].mxu0
      %v2950 = vpop.f32.mrb[0].mxu0
      %v2951 = vadd.f32 0.0, %v2950
      %v2952 = vpop.f32.mrb[0].mxu0
      %2953 = vmatprep.mubr.bf16.mxu0 0
      %2954 = vmatmul.mubr.bf16.gmra.mrb[0].mxu0 %v2814
      %v2955 = vpop.f32.mrb[0].mxu0
      %v2956 = vadd.f32 0.0, %v2955
      %v2957 = vpop.f32.mrb[0].mxu0
      %v2958 = vpop.f32.mrb[0].mxu0
      %v2959 = vadd.f32 0.0, %v2958
      %v2960 = vpop.f32.mrb[0].mxu0
      %2961 = vmatprep.mubr.bf16.mxu0 0
      %2962 = vmatmul.mubr.bf16.gmra.mrb[0].mxu0 %v2817
      %v2963 = vpop.f32.mrb[0].mxu0
      %v2964 = vadd.f32 0.0, %v2963
      %v2965 = vpop.f32.mrb[0].mxu0
      %v2966 = vpop.f32.mrb[0].mxu0
      %v2967 = vadd.f32 0.0, %v2966
      %v2968 = vpop.f32.mrb[0].mxu0
      %2969 = vmatprep.mubr.bf16.mxu0 0
      %2970 = vmatmul.mubr.bf16.gmra.mrb[0].mxu0 %v2820
      %v2971 = vpop.f32.mrb[0].mxu0
      %v2972 = vadd.f32 0.0, %v2971
      %v2973 = vpop.f32.mrb[0].mxu0
      %v2974 = vpop.f32.mrb[0].mxu0
      %v2975 = vadd.f32 0.0, %v2974
      %v2976 = vpop.f32.mrb[0].mxu0
      %2977 = vmatprep.mubr.bf16.mxu0 0
      %2978 = vmatmul.mubr.bf16.gmra.mrb[0].mxu0 %v2823
      %v2979 = vpop.f32.mrb[0].mxu0
      %v2980 = vadd.f32 0.0, %v2979
      %v2981 = vpop.f32.mrb[0].mxu0
      %v2982 = vpop.f32.mrb[0].mxu0
      %v2983 = vadd.f32 0.0, %v2982
      %v2984 = vpop.f32.mrb[0].mxu0
      %2985 = vmatprep.mubr.bf16.mxu0 0
      %2986 = vmatmul.mubr.bf16.gmra.mrb[0].mxu0 %v2826
      %v2987 = vpop.f32.mrb[0].mxu0
      %v2988 = vadd.f32 0.0, %v2987
      %v2989 = vpop.f32.mrb[0].mxu0
      %v2990 = vpop.f32.mrb[0].mxu0
      %v2991 = vadd.f32 0.0, %v2990
      %v2992 = vpop.f32.mrb[0].mxu0
      %2993 = vmatprep.mubr.bf16.mxu0 0
      %2994 = vmatmul.mubr.bf16.gmra.mrb[0].mxu0 %v2829
      %v2995 = vpop.f32.mrb[0].mxu0
      %v2996 = vadd.f32 0.0, %v2995
      %v2997 = vpop.f32.mrb[0].mxu0
      %v2998 = vpop.f32.mrb[0].mxu0
      %v2999 = vadd.f32 0.0, %v2998
      %v3000 = vpop.f32.mrb[0].mxu0
      %3001 = vmatprep.mubr.bf16.mxu0 0
      %3002 = vmatmul.mubr.bf16.gmra.mrb[0].mxu0 %v2832
      %v3003 = vpop.f32.mrb[0].mxu0
      %v3004 = vadd.f32 0.0, %v3003
      %v3005 = vpop.f32.mrb[0].mxu0
      %v3006 = vpop.f32.mrb[0].mxu0
      %v3007 = vadd.f32 0.0, %v3006
      %v3008 = vpop.f32.mrb[0].mxu0
      %3009 = vmatprep.mubr.bf16.mxu0 0
      %3010 = vmatmul.mubr.bf16.gmra.mrb[0].mxu0 %v2835
      %v3011 = vpop.f32.mrb[0].mxu0
      %v3012 = vadd.f32 0.0, %v3011
      %v3013 = vpop.f32.mrb[0].mxu0
      %v3014 = vpop.f32.mrb[0].mxu0
      %v3015 = vadd.f32 0.0, %v3014
      %v3016 = vpop.f32.mrb[0].mxu0
      %3017 = vmatprep.mubr.bf16.mxu0 0
      %3018 = vmatmul.mubr.bf16.gmra.mrb[0].mxu0 %v2838
      %v3019 = vpop.f32.mrb[0].mxu0
      %v3020 = vadd.f32 0.0, %v3019
      %v3021 = vpop.f32.mrb[0].mxu0
      %v3022 = vpop.f32.mrb[0].mxu0
      %v3023 = vadd.f32 0.0, %v3022
      %v3024 = vpop.f32.mrb[0].mxu0
      %3025 = vmatprep.mubr.bf16.mxu0 0
      %3026 = vmatmul.mubr.bf16.gmra.mrb[0].mxu0 %v2841
      %v3027 = vpop.f32.mrb[0].mxu0
      %v3028 = vadd.f32 0.0, %v3027
      %v3029 = vpop.f32.mrb[0].mxu0
      %v3030 = vpop.f32.mrb[0].mxu0
      %v3031 = vadd.f32 0.0, %v3030
      %v3032 = vpop.f32.mrb[0].mxu0
      %3033 = vmatprep.mubr.bf16.mxu0 0
      %3034 = vmatmul.mubr.bf16.gmra.mrb[0].mxu0 %v2844
      %v3035 = vpop.f32.mrb[0].mxu0
      %v3036 = vadd.f32 0.0, %v3035
      %v3037 = vpop.f32.mrb[0].mxu0
      %v3038 = vpop.f32.mrb[0].mxu0
      %v3039 = vadd.f32 0.0, %v3038
      %v3040 = vpop.f32.mrb[0].mxu0
      %3041 = vmatprep.mubr.bf16.mxu0 0
      %3042 = vmatmul.mubr.bf16.gmra.mrb[0].mxu0 %v2847
      %v3043 = vpop.f32.mrb[0].mxu0
      %v3044 = vadd.f32 0.0, %v3043
      %v3045 = vpop.f32.mrb[0].mxu0
      %v3046 = vpop.f32.mrb[0].mxu0
      %v3047 = vpop.f32.mrb[0].mxu0
      %3048 = vdwg.mxu0
      %v3049 = vadd.f32 %v2674, %v2884
      %v3050 = vadd.f32 %v2675, %v2887
      %v3051 = vadd.f32 %v2676, %v2892
      %v3052 = vadd.f32 %v2677, %v2895
      %v3053 = vadd.f32 %v2678, %v2900
      %v3054 = vadd.f32 %v2679, %v2903
      %v3055 = vadd.f32 %v2680, %v2908
      %v3056 = vadd.f32 %v2681, %v2911
      %v3057 = vadd.f32 %v2682, %v2916
      %v3058 = vadd.f32 %v2683, %v2919
      %v3059 = vadd.f32 %v2684, %v2924
      %v3060 = vadd.f32 %v2685, %v2927
      %v3061 = vadd.f32 %v2686, %v2932
      %v3062 = vadd.f32 %v2687, %v2935
      %v3063 = vadd.f32 %v2688, %v2940
      %v3064 = vadd.f32 %v2689, %v2943
      %v3065 = vadd.f32 %v2690, %v2948
      %v3066 = vadd.f32 %v2691, %v2951
      %v3067 = vadd.f32 %v2692, %v2956
      %v3068 = vadd.f32 %v2693, %v2959
      %v3069 = vadd.f32 %v2694, %v2964
      %v3070 = vadd.f32 %v2695, %v2967
      %v3071 = vadd.f32 %v2696, %v2972
      %v3072 = vadd.f32 %v2697, %v2975
      %v3073 = vadd.f32 %v2698, %v2980
      %v3074 = vadd.f32 %v2699, %v2983
      %v3075 = vadd.f32 %v2700, %v2988
      %v3076 = vadd.f32 %v2701, %v2991
      %v3077 = vadd.f32 %v2702, %v2996
      %v3078 = vadd.f32 %v2703, %v2999
      %v3079 = vadd.f32 %v2704, %v3004
      %v3080 = vadd.f32 %v2705, %v3007
      %v3081 = vadd.f32 %v2706, %v3012
      %v3082 = vadd.f32 %v2707, %v3015
      %v3083 = vadd.f32 %v2708, %v3020
      %v3084 = vadd.f32 %v2709, %v3023
      %v3085 = vadd.f32 %v2710, %v3028
      %v3086 = vadd.f32 %v2711, %v3031
      %v3087 = vadd.f32 %v2712, %v3036
      %v3088 = vadd.f32 %v2713, %v3039
      %v3089 = vadd.f32 %v2714, %v3044
      %v3090 = vld [vmem:[%s165 + $0x26] sm:$0xff]
      %v3091 = vld [vmem:[%s165 + $0x2e] sm:$0xff]
      %v3092 = vld [vmem:[%s165 + $0x36] sm:$0xff]
      %v3093 = vld [vmem:[%s165 + $0x3e] sm:$0xff]
      %v3094 = vld [vmem:[%s165 + $0x46] sm:$0xff]
      %v3095 = vld [vmem:[%s165 + $0x4e] sm:$0xff]
      %v3096 = vld [vmem:[%s165 + $0x56] sm:$0xff]
      %v3097 = vld [vmem:[%s165 + $0x5e] sm:$0xff]
      %v3098 = vld [vmem:[%s165 + $0x66] sm:$0xff]
      %v3099 = vld [vmem:[%s165 + $0x6e] sm:$0xff]
      %v3100 = vld [vmem:[%s165 + $0x76] sm:$0xff]
      %v3101 = vld [vmem:[%s165 + $0x7e] sm:$0xff]
      %v3102 = vld [vmem:[%s165 + $0x86] sm:$0xff]
      %v3103 = vld [vmem:[%s165 + $0x8e] sm:$0xff]
      %v3104 = vld [vmem:[%s165 + $0x96] sm:$0xff]
      %v3105 = vld [vmem:[%s165 + $0x9e] sm:$0xff]
      %v3106 = vld [vmem:[%s165 + $0xa6] sm:$0xff]
      %v3107 = vld [vmem:[%s165 + $0xae] sm:$0xff]
      %v3108 = vld [vmem:[%s165 + $0xb6] sm:$0xff]
      %v3109 = vld [vmem:[%s165 + $0xbe] sm:$0xff]
      %v3110 = vld [vmem:[%s165 + $0xc6] sm:$0xff]
      %v3111 = vld [vmem:[%s165 + $0xce] sm:$0xff]
      %v3112 = vld [vmem:[%s165 + $0xd6] sm:$0xff]
      %v3113 = vld [vmem:[%s165 + $0xde] sm:$0xff]
      %v3114 = vld [vmem:[%s165 + $0xe6] sm:$0xff]
      %v3115 = vld [vmem:[%s165 + $0xee] sm:$0xff]
      %v3116 = vld [vmem:[%s165 + $0xf6] sm:$0xff]
      %v3117 = vld [vmem:[%s165 + $0xfe] sm:$0xff]
      %v3118 = vld [vmem:[%s165 + $0x106] sm:$0xff]
      %v3119 = vld [vmem:[%s165 + $0x10e] sm:$0xff]
      %v3120 = vld [vmem:[%s165 + $0x116] sm:$0xff]
      %v3121 = vld [vmem:[%s165 + $0x11e] sm:$0xff]
      %v3122 = vld [vmem:[%s165 + $0x126] sm:$0xff]
      %v3123 = vld [vmem:[%s165 + $0x12e] sm:$0xff]
      %v3124 = vld [vmem:[%s165 + $0x136] sm:$0xff]
      %v3125 = vld [vmem:[%s165 + $0x13e] sm:$0xff]
      %v3126 = vld [vmem:[%s165 + $0x146] sm:$0xff]
      %v3127 = vld [vmem:[%s165 + $0x14e] sm:$0xff]
      %v3128 = vld [vmem:[%s165 + $0x156] sm:$0xff]
      %v3129 = vld [vmem:[%s165 + $0x15e] sm:$0xff]
      %v3130 = vld [vmem:[%s165 + $0x166] sm:$0xf]
      %v3131 = vpack.c.bf16 %v3091, %v3090
      %v3132 = vpack.c.bf16 %v3093, %v3092
      %v3133 = vpack.c.bf16 %v3095, %v3094
      %v3134 = vpack.c.bf16 %v3097, %v3096
      %v3135 = vpack.c.bf16 %v3099, %v3098
      %v3136 = vpack.c.bf16 %v3101, %v3100
      %v3137 = vpack.c.bf16 %v3103, %v3102
      %v3138 = vpack.c.bf16 %v3105, %v3104
      %v3139 = vpack.c.bf16 %v3107, %v3106
      %v3140 = vpack.c.bf16 %v3109, %v3108
      %v3141 = vpack.c.bf16 %v3111, %v3110
      %v3142 = vpack.c.bf16 %v3113, %v3112
      %v3143 = vpack.c.bf16 %v3115, %v3114
      %v3144 = vpack.c.bf16 %v3117, %v3116
      %v3145 = vpack.c.bf16 %v3119, %v3118
      %v3146 = vpack.c.bf16 %v3121, %v3120
      %v3147 = vpack.c.bf16 %v3123, %v3122
      %v3148 = vpack.c.bf16 %v3125, %v3124
      %v3149 = vpack.c.bf16 %v3127, %v3126
      %v3150 = vpack.c.bf16 %v3129, %v3128
      %v3151 = vpack.c.bf16 %v3130, %v3130
      %s3152 = scalar_lea.vmem %s1, 64
      %v3153 = vld [vmem:[%s3152] sm:$0xf]
      %v3154 = vld [vmem:[%s3152 + $0x4] sm:$0xf]
      %v3157 = vunpack.c.l.b16 %v3153
      %v3158 = vunpack.c.l.b16 %v3154
      %v3159 = vpack.c.b16 %v3158, %v3157
      %v3162 = vsel %vm307, %v3131, 0
      %v3165 = vsel %vm307, %v3132, 0
      %v3168 = vsel %vm307, %v3133, 0
      %v3171 = vsel %vm307, %v3134, 0
      %v3174 = vsel %vm307, %v3135, 0
      %v3177 = vsel %vm307, %v3136, 0
      %v3180 = vsel %vm307, %v3137, 0
      %v3183 = vsel %vm307, %v3138, 0
      %v3186 = vsel %vm307, %v3139, 0
      %v3189 = vsel %vm307, %v3140, 0
      %v3192 = vsel %vm307, %v3141, 0
      %v3195 = vsel %vm307, %v3142, 0
      %v3198 = vsel %vm307, %v3143, 0
      %v3201 = vsel %vm307, %v3144, 0
      %v3204 = vsel %vm307, %v3145, 0
      %v3207 = vsel %vm307, %v3146, 0
      %v3210 = vsel %vm307, %v3147, 0
      %v3213 = vsel %vm307, %v3148, 0
      %v3216 = vsel %vm307, %v3149, 0
      %v3219 = vsel %vm307, %v3150, 0
      %v3222 = vsel %vm307, %v3151, 0
      %3224 = vmatprep.subr.bf16.mxu0 0
      %3225 = vmatpush1.bf16.msra.mxu0 %v3159
      %3226 = vmatprep.subr.bf16.mxu0 0
      %3227 = vmatpush1.bf16.msra.mxu0 0
      %3228 = vmatprep.subr.bf16.mxu0 0
      %3229 = vmatpush1.bf16.msra.mxu0 0
      %3230 = vmatprep.subr.bf16.mxu0 0
      %3231 = vmatpush1.bf16.msra.mxu0 0
      %3232 = vmatprep.subr.bf16.mxu0 0
      %3233 = vmatpush1.bf16.msra.mxu0 0
      %3234 = vmatprep.subr.bf16.mxu0 0
      %3235 = vmatpush1.bf16.msra.mxu0 0
      %3236 = vmatprep.subr.bf16.mxu0 0
      %3237 = vmatpush1.bf16.msra.mxu0 0
      %3238 = vmatprep.subr.bf16.mxu0 0
      %3239 = vmatpush1.bf16.msra.mxu0 0
      %3240 = vmatprep.subr.bf16.mxu0 0
      %3241 = vmatpush1.bf16.msra.mxu0 0
      %3242 = vmatprep.subr.bf16.mxu0 0
      %3243 = vmatpush1.bf16.msra.mxu0 0
      %3244 = vmatprep.subr.bf16.mxu0 0
      %3245 = vmatpush1.bf16.msra.mxu0 0
      %3246 = vmatprep.subr.bf16.mxu0 0
      %3247 = vmatpush1.bf16.msra.mxu0 0
      %3248 = vmatprep.subr.bf16.mxu0 0
      %3249 = vmatpush1.bf16.msra.mxu0 0
      %3250 = vmatprep.subr.bf16.mxu0 0
      %3251 = vmatpush1.bf16.msra.mxu0 0
      %3252 = vmatprep.subr.bf16.mxu0 0
      %3253 = vmatpush1.bf16.msra.mxu0 0
      %3254 = vmatprep.subr.bf16.mxu0 0
      %3255 = vmatpush1.bf16.msra.mxu0 0
      %3256 = vmatprep.mubr.bf16.mxu0 0
      %3257 = vmatmul.mubr.bf16.gmra.mrb[0].mxu0 %v3162
      %v3258 = vpop.f32.mrb[0].mxu0
      %v3259 = vadd.f32 0.0, %v3258
      %v3260 = vpop.f32.mrb[0].mxu0
      %v3261 = vpop.f32.mrb[0].mxu0
      %v3262 = vadd.f32 0.0, %v3261
      %v3263 = vpop.f32.mrb[0].mxu0
      %3264 = vmatprep.mubr.bf16.mxu0 0
      %3265 = vmatmul.mubr.bf16.gmra.mrb[0].mxu0 %v3165
      %v3266 = vpop.f32.mrb[0].mxu0
      %v3267 = vadd.f32 0.0, %v3266
      %v3268 = vpop.f32.mrb[0].mxu0
      %v3269 = vpop.f32.mrb[0].mxu0
      %v3270 = vadd.f32 0.0, %v3269
      %v3271 = vpop.f32.mrb[0].mxu0
      %3272 = vmatprep.mubr.bf16.mxu0 0
      %3273 = vmatmul.mubr.bf16.gmra.mrb[0].mxu0 %v3168
      %v3274 = vpop.f32.mrb[0].mxu0
      %v3275 = vadd.f32 0.0, %v3274
      %v3276 = vpop.f32.mrb[0].mxu0
      %v3277 = vpop.f32.mrb[0].mxu0
      %v3278 = vadd.f32 0.0, %v3277
      %v3279 = vpop.f32.mrb[0].mxu0
      %3280 = vmatprep.mubr.bf16.mxu0 0
      %3281 = vmatmul.mubr.bf16.gmra.mrb[0].mxu0 %v3171
      %v3282 = vpop.f32.mrb[0].mxu0
      %v3283 = vadd.f32 0.0, %v3282
      %v3284 = vpop.f32.mrb[0].mxu0
      %v3285 = vpop.f32.mrb[0].mxu0
      %v3286 = vadd.f32 0.0, %v3285
      %v3287 = vpop.f32.mrb[0].mxu0
      %3288 = vmatprep.mubr.bf16.mxu0 0
      %3289 = vmatmul.mubr.bf16.gmra.mrb[0].mxu0 %v3174
      %v3290 = vpop.f32.mrb[0].mxu0
      %v3291 = vadd.f32 0.0, %v3290
      %v3292 = vpop.f32.mrb[0].mxu0
      %v3293 = vpop.f32.mrb[0].mxu0
      %v3294 = vadd.f32 0.0, %v3293
      %v3295 = vpop.f32.mrb[0].mxu0
      %3296 = vmatprep.mubr.bf16.mxu0 0
      %3297 = vmatmul.mubr.bf16.gmra.mrb[0].mxu0 %v3177
      %v3298 = vpop.f32.mrb[0].mxu0
      %v3299 = vadd.f32 0.0, %v3298
      %v3300 = vpop.f32.mrb[0].mxu0
      %v3301 = vpop.f32.mrb[0].mxu0
      %v3302 = vadd.f32 0.0, %v3301
      %v3303 = vpop.f32.mrb[0].mxu0
      %3304 = vmatprep.mubr.bf16.mxu0 0
      %3305 = vmatmul.mubr.bf16.gmra.mrb[0].mxu0 %v3180
      %v3306 = vpop.f32.mrb[0].mxu0
      %v3307 = vadd.f32 0.0, %v3306
      %v3308 = vpop.f32.mrb[0].mxu0
      %v3309 = vpop.f32.mrb[0].mxu0
      %v3310 = vadd.f32 0.0, %v3309
      %v3311 = vpop.f32.mrb[0].mxu0
      %3312 = vmatprep.mubr.bf16.mxu0 0
      %3313 = vmatmul.mubr.bf16.gmra.mrb[0].mxu0 %v3183
      %v3314 = vpop.f32.mrb[0].mxu0
      %v3315 = vadd.f32 0.0, %v3314
      %v3316 = vpop.f32.mrb[0].mxu0
      %v3317 = vpop.f32.mrb[0].mxu0
      %v3318 = vadd.f32 0.0, %v3317
      %v3319 = vpop.f32.mrb[0].mxu0
      %3320 = vmatprep.mubr.bf16.mxu0 0
      %3321 = vmatmul.mubr.bf16.gmra.mrb[0].mxu0 %v3186
      %v3322 = vpop.f32.mrb[0].mxu0
      %v3323 = vadd.f32 0.0, %v3322
      %v3324 = vpop.f32.mrb[0].mxu0
      %v3325 = vpop.f32.mrb[0].mxu0
      %v3326 = vadd.f32 0.0, %v3325
      %v3327 = vpop.f32.mrb[0].mxu0
      %3328 = vmatprep.mubr.bf16.mxu0 0
      %3329 = vmatmul.mubr.bf16.gmra.mrb[0].mxu0 %v3189
      %v3330 = vpop.f32.mrb[0].mxu0
      %v3331 = vadd.f32 0.0, %v3330
      %v3332 = vpop.f32.mrb[0].mxu0
      %v3333 = vpop.f32.mrb[0].mxu0
      %v3334 = vadd.f32 0.0, %v3333
      %v3335 = vpop.f32.mrb[0].mxu0
      %3336 = vmatprep.mubr.bf16.mxu0 0
      %3337 = vmatmul.mubr.bf16.gmra.mrb[0].mxu0 %v3192
      %v3338 = vpop.f32.mrb[0].mxu0
      %v3339 = vadd.f32 0.0, %v3338
      %v3340 = vpop.f32.mrb[0].mxu0
      %v3341 = vpop.f32.mrb[0].mxu0
      %v3342 = vadd.f32 0.0, %v3341
      %v3343 = vpop.f32.mrb[0].mxu0
      %3344 = vmatprep.mubr.bf16.mxu0 0
      %3345 = vmatmul.mubr.bf16.gmra.mrb[0].mxu0 %v3195
      %v3346 = vpop.f32.mrb[0].mxu0
      %v3347 = vadd.f32 0.0, %v3346
      %v3348 = vpop.f32.mrb[0].mxu0
      %v3349 = vpop.f32.mrb[0].mxu0
      %v3350 = vadd.f32 0.0, %v3349
      %v3351 = vpop.f32.mrb[0].mxu0
      %3352 = vmatprep.mubr.bf16.mxu0 0
      %3353 = vmatmul.mubr.bf16.gmra.mrb[0].mxu0 %v3198
      %v3354 = vpop.f32.mrb[0].mxu0
      %v3355 = vadd.f32 0.0, %v3354
      %v3356 = vpop.f32.mrb[0].mxu0
      %v3357 = vpop.f32.mrb[0].mxu0
      %v3358 = vadd.f32 0.0, %v3357
      %v3359 = vpop.f32.mrb[0].mxu0
      %3360 = vmatprep.mubr.bf16.mxu0 0
      %3361 = vmatmul.mubr.bf16.gmra.mrb[0].mxu0 %v3201
      %v3362 = vpop.f32.mrb[0].mxu0
      %v3363 = vadd.f32 0.0, %v3362
      %v3364 = vpop.f32.mrb[0].mxu0
      %v3365 = vpop.f32.mrb[0].mxu0
      %v3366 = vadd.f32 0.0, %v3365
      %v3367 = vpop.f32.mrb[0].mxu0
      %3368 = vmatprep.mubr.bf16.mxu0 0
      %3369 = vmatmul.mubr.bf16.gmra.mrb[0].mxu0 %v3204
      %v3370 = vpop.f32.mrb[0].mxu0
      %v3371 = vadd.f32 0.0, %v3370
      %v3372 = vpop.f32.mrb[0].mxu0
      %v3373 = vpop.f32.mrb[0].mxu0
      %v3374 = vadd.f32 0.0, %v3373
      %v3375 = vpop.f32.mrb[0].mxu0
      %3376 = vmatprep.mubr.bf16.mxu0 0
      %3377 = vmatmul.mubr.bf16.gmra.mrb[0].mxu0 %v3207
      %v3378 = vpop.f32.mrb[0].mxu0
      %v3379 = vadd.f32 0.0, %v3378
      %v3380 = vpop.f32.mrb[0].mxu0
      %v3381 = vpop.f32.mrb[0].mxu0
      %v3382 = vadd.f32 0.0, %v3381
      %v3383 = vpop.f32.mrb[0].mxu0
      %3384 = vmatprep.mubr.bf16.mxu0 0
      %3385 = vmatmul.mubr.bf16.gmra.mrb[0].mxu0 %v3210
      %v3386 = vpop.f32.mrb[0].mxu0
      %v3387 = vadd.f32 0.0, %v3386
      %v3388 = vpop.f32.mrb[0].mxu0
      %v3389 = vpop.f32.mrb[0].mxu0
      %v3390 = vadd.f32 0.0, %v3389
      %v3391 = vpop.f32.mrb[0].mxu0
      %3392 = vmatprep.mubr.bf16.mxu0 0
      %3393 = vmatmul.mubr.bf16.gmra.mrb[0].mxu0 %v3213
      %v3394 = vpop.f32.mrb[0].mxu0
      %v3395 = vadd.f32 0.0, %v3394
      %v3396 = vpop.f32.mrb[0].mxu0
      %v3397 = vpop.f32.mrb[0].mxu0
      %v3398 = vadd.f32 0.0, %v3397
      %v3399 = vpop.f32.mrb[0].mxu0
      %3400 = vmatprep.mubr.bf16.mxu0 0
      %3401 = vmatmul.mubr.bf16.gmra.mrb[0].mxu0 %v3216
      %v3402 = vpop.f32.mrb[0].mxu0
      %v3403 = vadd.f32 0.0, %v3402
      %v3404 = vpop.f32.mrb[0].mxu0
      %v3405 = vpop.f32.mrb[0].mxu0
      %v3406 = vadd.f32 0.0, %v3405
      %v3407 = vpop.f32.mrb[0].mxu0
      %3408 = vmatprep.mubr.bf16.mxu0 0
      %3409 = vmatmul.mubr.bf16.gmra.mrb[0].mxu0 %v3219
      %v3410 = vpop.f32.mrb[0].mxu0
      %v3411 = vadd.f32 0.0, %v3410
      %v3412 = vpop.f32.mrb[0].mxu0
      %v3413 = vpop.f32.mrb[0].mxu0
      %v3414 = vadd.f32 0.0, %v3413
      %v3415 = vpop.f32.mrb[0].mxu0
      %3416 = vmatprep.mubr.bf16.mxu0 0
      %3417 = vmatmul.mubr.bf16.gmra.mrb[0].mxu0 %v3222
      %v3418 = vpop.f32.mrb[0].mxu0
      %v3419 = vadd.f32 0.0, %v3418
      %v3420 = vpop.f32.mrb[0].mxu0
      %v3421 = vpop.f32.mrb[0].mxu0
      %v3422 = vpop.f32.mrb[0].mxu0
      %3423 = vdwg.mxu0
      %v3424 = vadd.f32 %v3049, %v3259
      %v3425 = vadd.f32 %v3050, %v3262
      %v3426 = vadd.f32 %v3051, %v3267
      %v3427 = vadd.f32 %v3052, %v3270
      %v3428 = vadd.f32 %v3053, %v3275
      %v3429 = vadd.f32 %v3054, %v3278
      %v3430 = vadd.f32 %v3055, %v3283
      %v3431 = vadd.f32 %v3056, %v3286
      %v3432 = vadd.f32 %v3057, %v3291
      %v3433 = vadd.f32 %v3058, %v3294
      %v3434 = vadd.f32 %v3059, %v3299
      %v3435 = vadd.f32 %v3060, %v3302
      %v3436 = vadd.f32 %v3061, %v3307
      %v3437 = vadd.f32 %v3062, %v3310
      %v3438 = vadd.f32 %v3063, %v3315
      %v3439 = vadd.f32 %v3064, %v3318
      %v3440 = vadd.f32 %v3065, %v3323
      %v3441 = vadd.f32 %v3066, %v3326
      %v3442 = vadd.f32 %v3067, %v3331
      %v3443 = vadd.f32 %v3068, %v3334
      %v3444 = vadd.f32 %v3069, %v3339
      %v3445 = vadd.f32 %v3070, %v3342
      %v3446 = vadd.f32 %v3071, %v3347
      %v3447 = vadd.f32 %v3072, %v3350
      %v3448 = vadd.f32 %v3073, %v3355
      %v3449 = vadd.f32 %v3074, %v3358
      %v3450 = vadd.f32 %v3075, %v3363
      %v3451 = vadd.f32 %v3076, %v3366
      %v3452 = vadd.f32 %v3077, %v3371
      %v3453 = vadd.f32 %v3078, %v3374
      %v3454 = vadd.f32 %v3079, %v3379
      %v3455 = vadd.f32 %v3080, %v3382
      %v3456 = vadd.f32 %v3081, %v3387
      %v3457 = vadd.f32 %v3082, %v3390
      %v3458 = vadd.f32 %v3083, %v3395
      %v3459 = vadd.f32 %v3084, %v3398
      %v3460 = vadd.f32 %v3085, %v3403
      %v3461 = vadd.f32 %v3086, %v3406
      %v3462 = vadd.f32 %v3087, %v3411
      %v3463 = vadd.f32 %v3088, %v3414
      %v3464 = vadd.f32 %v3089, %v3419
      %v3465 = vld [vmem:[%s2] sm:$0x1]
      %v3467 = vlaneseq
      %v3468 = vshrl.u32 %v3467, 7
      %v3469 = vsub.s32 0, %v3468
      %v3470 = vrot.slane %v3465, %v3469
      %v3472 = vadd.f32 %v3424, %v3470
      %v3473 = vadd.f32 %v3425, %v3470
      %v3474 = vadd.f32 %v3426, %v3470
      %v3475 = vadd.f32 %v3427, %v3470
      %v3476 = vadd.f32 %v3428, %v3470
      %v3477 = vadd.f32 %v3429, %v3470
      %v3478 = vadd.f32 %v3430, %v3470
      %v3479 = vadd.f32 %v3431, %v3470
      %v3480 = vadd.f32 %v3432, %v3470
      %v3481 = vadd.f32 %v3433, %v3470
      %v3482 = vadd.f32 %v3434, %v3470
      %v3483 = vadd.f32 %v3435, %v3470
      %v3484 = vadd.f32 %v3436, %v3470
      %v3485 = vadd.f32 %v3437, %v3470
      %v3486 = vadd.f32 %v3438, %v3470
      %v3487 = vadd.f32 %v3439, %v3470
      %v3488 = vadd.f32 %v3440, %v3470
      %v3489 = vadd.f32 %v3441, %v3470
      %v3490 = vadd.f32 %v3442, %v3470
      %v3491 = vadd.f32 %v3443, %v3470
      %v3492 = vadd.f32 %v3444, %v3470
      %v3493 = vadd.f32 %v3445, %v3470
      %v3494 = vadd.f32 %v3446, %v3470
      %v3495 = vadd.f32 %v3447, %v3470
      %v3496 = vadd.f32 %v3448, %v3470
      %v3497 = vadd.f32 %v3449, %v3470
      %v3498 = vadd.f32 %v3450, %v3470
      %v3499 = vadd.f32 %v3451, %v3470
      %v3500 = vadd.f32 %v3452, %v3470
      %v3501 = vadd.f32 %v3453, %v3470
      %v3502 = vadd.f32 %v3454, %v3470
      %v3503 = vadd.f32 %v3455, %v3470
      %v3504 = vadd.f32 %v3456, %v3470
      %v3505 = vadd.f32 %v3457, %v3470
      %v3506 = vadd.f32 %v3458, %v3470
      %v3507 = vadd.f32 %v3459, %v3470
      %v3508 = vadd.f32 %v3460, %v3470
      %v3509 = vadd.f32 %v3461, %v3470
      %v3510 = vadd.f32 %v3462, %v3470
      %v3511 = vadd.f32 %v3463, %v3470
      %v3512 = vadd.f32 %v3464, %v3470
      %vm3513 = vcmask 64512
      %3514 = vst.msk [vmem:[%s170] sm:$0xff] %vm3513, %v3472
      %3515 = vst.msk [vmem:[%s170 + $0x8] sm:$0xff] %vm3513, %v3473
      %3516 = vst.msk [vmem:[%s170 + $0x10] sm:$0xff] %vm3513, %v3474
      %3517 = vst.msk [vmem:[%s170 + $0x18] sm:$0xff] %vm3513, %v3475
      %3518 = vst.msk [vmem:[%s170 + $0x20] sm:$0xff] %vm3513, %v3476
      %3519 = vst.msk [vmem:[%s170 + $0x28] sm:$0xff] %vm3513, %v3477
      %3520 = vst.msk [vmem:[%s170 + $0x30] sm:$0xff] %vm3513, %v3478
      %3521 = vst.msk [vmem:[%s170 + $0x38] sm:$0xff] %vm3513, %v3479
      %3522 = vst.msk [vmem:[%s170 + $0x40] sm:$0xff] %vm3513, %v3480
      %3523 = vst.msk [vmem:[%s170 + $0x48] sm:$0xff] %vm3513, %v3481
      %3524 = vst.msk [vmem:[%s170 + $0x50] sm:$0xff] %vm3513, %v3482
      %3525 = vst.msk [vmem:[%s170 + $0x58] sm:$0xff] %vm3513, %v3483
      %3526 = vst.msk [vmem:[%s170 + $0x60] sm:$0xff] %vm3513, %v3484
      %3527 = vst.msk [vmem:[%s170 + $0x68] sm:$0xff] %vm3513, %v3485
      %3528 = vst.msk [vmem:[%s170 + $0x70] sm:$0xff] %vm3513, %v3486
      %3529 = vst.msk [vmem:[%s170 + $0x78] sm:$0xff] %vm3513, %v3487
      %3530 = vst.msk [vmem:[%s170 + $0x80] sm:$0xff] %vm3513, %v3488
      %3531 = vst.msk [vmem:[%s170 + $0x88] sm:$0xff] %vm3513, %v3489
      %3532 = vst.msk [vmem:[%s170 + $0x90] sm:$0xff] %vm3513, %v3490
      %3533 = vst.msk [vmem:[%s170 + $0x98] sm:$0xff] %vm3513, %v3491
      %3534 = vst.msk [vmem:[%s170 + $0xa0] sm:$0xff] %vm3513, %v3492
      %3535 = vst.msk [vmem:[%s170 + $0xa8] sm:$0xff] %vm3513, %v3493
      %3536 = vst.msk [vmem:[%s170 + $0xb0] sm:$0xff] %vm3513, %v3494
      %3537 = vst.msk [vmem:[%s170 + $0xb8] sm:$0xff] %vm3513, %v3495
      %3538 = vst.msk [vmem:[%s170 + $0xc0] sm:$0xff] %vm3513, %v3496
      %3539 = vst.msk [vmem:[%s170 + $0xc8] sm:$0xff] %vm3513, %v3497
      %3540 = vst.msk [vmem:[%s170 + $0xd0] sm:$0xff] %vm3513, %v3498
      %3541 = vst.msk [vmem:[%s170 + $0xd8] sm:$0xff] %vm3513, %v3499
      %3542 = vst.msk [vmem:[%s170 + $0xe0] sm:$0xff] %vm3513, %v3500
      %3543 = vst.msk [vmem:[%s170 + $0xe8] sm:$0xff] %vm3513, %v3501
      %3544 = vst.msk [vmem:[%s170 + $0xf0] sm:$0xff] %vm3513, %v3502
      %3545 = vst.msk [vmem:[%s170 + $0xf8] sm:$0xff] %vm3513, %v3503
      %3546 = vst.msk [vmem:[%s170 + $0x100] sm:$0xff] %vm3513, %v3504
      %3547 = vst.msk [vmem:[%s170 + $0x108] sm:$0xff] %vm3513, %v3505
      %3548 = vst.msk [vmem:[%s170 + $0x110] sm:$0xff] %vm3513, %v3506
      %3549 = vst.msk [vmem:[%s170 + $0x118] sm:$0xff] %vm3513, %v3507
      %3550 = vst.msk [vmem:[%s170 + $0x120] sm:$0xff] %vm3513, %v3508
      %3551 = vst.msk [vmem:[%s170 + $0x128] sm:$0xff] %vm3513, %v3509
      %3552 = vst.msk [vmem:[%s170 + $0x130] sm:$0xff] %vm3513, %v3510
      %3553 = vst.msk [vmem:[%s170 + $0x138] sm:$0xff] %vm3513, %v3511
      %vm3554 = vcmask 60416
      %3555 = vst.msk [vmem:[%s170 + $0x140] sm:$0xf] %vm3554, %v3512
      %p3556 = scmp.lt.s32.totalorder %s14, 1
      %s3557 = scalar_select %p3556, %s14, 1
      %s3558 = smul.addr %s3557, 41
      %s3559 = smul.addr %s3558, 8
      %s3560 = scalar_lea.vmem %s3, %s3559
      // Predicated region
      $region33: #{review_kd_forward.11} parent=31 // pred_check
        %p3561 = pneg %p100
      $region34: #{review_kd_forward.11} parent=31 // pred_check_branch
        %3563 = sbr.rel (%p3561) target = $region36
      $region35: #{review_kd_forward.11} parent=31 // pred_region
        _
      $region36: #{review_kd_forward.11} parent=31 // pred_fallthru
        _
    $region32: #{review_kd_forward.11} parent=5 // pred_fallthru
      _
    %p3564 = scmp.le.s32.totalorder 2, %s9
    // Predicated region
    $region37: #{review_kd_forward.11} parent=5 // pred_check
      %p3565 = pneg %p3564
    $region38: #{review_kd_forward.11} parent=5 // pred_check_branch
      %3567 = sbr.rel (%p3565) target = $region40
    $region39: #{review_kd_forward.11} parent=5 // pred_region
      %s3568 = ssub.s32 %s9, 2
      // Predicated region
      $region41: #{review_kd_forward.11} parent=39 // pred_check
        %p3569 = pneg %p106
      $region42: #{review_kd_forward.11} parent=39 // pred_check_branch
        %3571 = sbr.rel (%p3569) target = $region44
      $region43: #{review_kd_forward.11} parent=39 // pred_region
        %p3572 = scmp.lt.s32.totalorder %s15, 1
        %s3573 = scalar_select %p3572, %s15, 1
        %s3574 = smul.addr %s3573, 41
        %s3575 = smul.addr %s3574, 8
        %s3576 = scalar_lea.vmem %s3, %s3575
      $region44: #{review_kd_forward.11} parent=39 // pred_fallthru
        _
    $region40: #{review_kd_forward.11} parent=5 // pred_fallthru
      _
  $region6: #{review_kd_forward.11} parent=0 // loop_footer
    %s13 = sadd.s32 1, %s9
  $region7: #{review_kd_forward.11} parent=0 // loop_footer_branch
    %8 = sbr.rel target = $region3
  $region8: #{review_kd_forward.11} parent=0 // loop_exit
    _

// kernel: review_kd_forward.9
$region0: #{review_kd_forward.9}
  #allocation0 [shape = 'u32[]', space=smem, size = 0x4, offset = 0x4, fixed_abs, tag = 'smem constant byte address 0x4 - core index']
  #allocation1 [shape = 'u32[144,128]{1,0:T(1,128)}', space=vmem, size = 0x12000, scoped, tag = 'internal scratch']
  %s0 = inlined_call_operand.vmem [shape: f32[2,122,16], index: 0, kind: input, shape index: {}]
  %s1 = inlined_call_operand.vmem [shape: bf16[9,16,16], index: 1, kind: input, shape index: {}]
  %s2 = inlined_call_operand.vmem [shape: f32[1,16], index: 2, kind: input, shape index: {}]
  %s3 = inlined_call_operand.vmem [shape: f32[2,100,16], index: 3, kind: output, shape index: {}]
  %s4 = sld [smem:[#allocation0]]
  $region45: #{review_kd_forward.9} parent=0
    _
  %s6 = ssub.s32 1, %s4
  %s7 = scalar_select 0, %s6, %s4
  loop: start=0, step=1, limit=4
  $region2: #{review_kd_forward.9} parent=0 // loop_pre_header
    _
  $region3: #{review_kd_forward.9} parent=0 // loop_header
    %s9 = sphi 0, %s13
    %p10 = scmp.ge.s32.totalorder %s9, 4
    %s19 = sphi 0, %s21
    %s22 = sphi 0, %s19
    %s23 = sphi 0, %s22
    %s39 = sphi 0, %s23
    %s43 = sphi 0, %s43
    %s45 = sphi 0, %s43
    %s46 = sphi 0, %s45
    %s60 = sphi 0, %s46
    %s64 = sphi 0, %s64
    %s66 = sphi 0, %s64
    %s67 = sphi 0, %s66
    %s81 = sphi 0, %s67
    %s87 = sphi 0, %s89
    %s90 = sphi 0, %s87
    %s91 = sphi 0, %s90
    %s107 = sphi 0, %s91
  $region4: #{review_kd_forward.9} parent=0 // loop_header_branch
    %12 = sbr.rel (%p10) target = $region8
  $region5: #{review_kd_forward.9} parent=0 // loop_body
    %s14 = ssub.s32 %s9, 1
    %s15 = ssub.s32 %s9, 2
    %s16 = sadd.s32 %s9, 1
    %s17 = ssub.s32 %s9, %s16
    %p18 = scmp.eq.s32.totalorder %s17, 0
    %s20 = sadd.s32 %s19, 1
    %s21 = scalar_select %p18, %s19, %s20
    %p24 = pneg %p18
    %p25 = scmp.eq.s32.totalorder %s9, 1
    %p26 = por %p24, %p25
    %p27 = scmp.ne.s32.totalorder %s19, %s22
    %p28 = scmp.eq.s32.totalorder %s9, 0
    %p29 = por %p27, %p28
    %p30 = scmp.ne.s32.totalorder %s19, %s22
    %p31 = scmp.eq.s32.totalorder %s14, 1
    %p32 = por %p30, %p31
    %p33 = scmp.ne.s32.totalorder %s22, %s23
    %p34 = scmp.eq.s32.totalorder %s14, 0
    %p35 = por %p33, %p34
    %p36 = scmp.ne.s32.totalorder %s22, %s23
    %p37 = scmp.eq.s32.totalorder %s15, 1
    %p38 = por %p36, %p37
    %p40 = scmp.ne.s32.totalorder %s23, %s39
    %p41 = scmp.eq.s32.totalorder %s15, 0
    %p42 = por %p40, %p41
    %s44 = sadd.s32 %s43, 1
    %p47 = scmp.eq.s32.totalorder %s9, 1
    %p48 = scmp.ne.s32.totalorder %s43, %s45
    %p49 = scmp.eq.s32.totalorder %s9, 0
    %p50 = por %p48, %p49
    %p51 = scmp.ne.s32.totalorder %s43, %s45
    %p52 = scmp.eq.s32.totalorder %s14, 1
    %p53 = por %p51, %p52
    %p54 = scmp.ne.s32.totalorder %s45, %s46
    %p55 = scmp.eq.s32.totalorder %s14, 0
    %p56 = por %p54, %p55
    %p57 = scmp.ne.s32.totalorder %s45, %s46
    %p58 = scmp.eq.s32.totalorder %s15, 1
    %p59 = por %p57, %p58
    %p61 = scmp.ne.s32.totalorder %s46, %s60
    %p62 = scmp.eq.s32.totalorder %s15, 0
    %p63 = por %p61, %p62
    %s65 = sadd.s32 %s64, 1
    %p68 = scmp.eq.s32.totalorder %s9, 1
    %p69 = scmp.ne.s32.totalorder %s64, %s66
    %p70 = scmp.eq.s32.totalorder %s9, 0
    %p71 = por %p69, %p70
    %p72 = scmp.ne.s32.totalorder %s64, %s66
    %p73 = scmp.eq.s32.totalorder %s14, 1
    %p74 = por %p72, %p73
    %p75 = scmp.ne.s32.totalorder %s66, %s67
    %p76 = scmp.eq.s32.totalorder %s14, 0
    %p77 = por %p75, %p76
    %p78 = scmp.ne.s32.totalorder %s66, %s67
    %p79 = scmp.eq.s32.totalorder %s15, 1
    %p80 = por %p78, %p79
    %p82 = scmp.ne.s32.totalorder %s67, %s81
    %p83 = scmp.eq.s32.totalorder %s15, 0
    %p84 = por %p82, %p83
    %s85 = ssub.s32 %s9, %s16
    %p86 = scmp.eq.s32.totalorder %s85, 0
    %s88 = sadd.s32 %s87, 1
    %s89 = scalar_select %p86, %s87, %s88
    %p92 = pneg %p86
    %p93 = scmp.eq.s32.totalorder %s9, 1
    %p94 = por %p92, %p93
    %p95 = scmp.ne.s32.totalorder %s87, %s90
    %p96 = scmp.eq.s32.totalorder %s9, 0
    %p97 = por %p95, %p96
    %p98 = scmp.ne.s32.totalorder %s87, %s90
    %p99 = scmp.eq.s32.totalorder %s14, 1
    %p100 = por %p98, %p99
    %p101 = scmp.ne.s32.totalorder %s90, %s91
    %p102 = scmp.eq.s32.totalorder %s14, 0
    %p103 = por %p101, %p102
    %p104 = scmp.ne.s32.totalorder %s90, %s91
    %p105 = scmp.eq.s32.totalorder %s15, 1
    %p106 = por %p104, %p105
    %p108 = scmp.ne.s32.totalorder %s91, %s107
    %p109 = scmp.eq.s32.totalorder %s15, 0
    %p110 = por %p108, %p109
    %p111 = scmp.le.s32.totalorder 1, %s9
    %p112 = scmp.lt.s32.totalorder %s9, 3
    %p113 = pnand %p111, %p112
    %p114 = pneg %p113
    // Predicated region
    $region9: #{review_kd_forward.9} parent=5 // pred_check
      _
    $region10: #{review_kd_forward.9} parent=5 // pred_check_branch
      %116 = sbr.rel (%p113) target = $region12
    $region11: #{review_kd_forward.9} parent=5 // pred_region
      %s117 = ssub.s32 %s9, 1
      // Predicated region
      $region13: #{review_kd_forward.9} parent=11 // pred_check
        %p118 = pneg %p56
      $region14: #{review_kd_forward.9} parent=11 // pred_check_branch
        %120 = sbr.rel (%p118) target = $region16
      $region15: #{review_kd_forward.9} parent=11 // pred_region
        _
      $region16: #{review_kd_forward.9} parent=11 // pred_fallthru
        _
      // Predicated region
      $region17: #{review_kd_forward.9} parent=11 // pred_check
        %p121 = pneg %p77
      $region18: #{review_kd_forward.9} parent=11 // pred_check_branch
        %123 = sbr.rel (%p121) target = $region20
      $region19: #{review_kd_forward.9} parent=11 // pred_region
        _
      $region20: #{review_kd_forward.9} parent=11 // pred_fallthru
        _
    $region12: #{review_kd_forward.9} parent=5 // pred_fallthru
      _
    %p124 = scmp.lt.s32.totalorder %s9, 2
    // Predicated region
    $region21: #{review_kd_forward.9} parent=5 // pred_check
      %p125 = pneg %p124
    $region22: #{review_kd_forward.9} parent=5 // pred_check_branch
      %127 = sbr.rel (%p125) target = $region24
    $region23: #{review_kd_forward.9} parent=5 // pred_region
      // Predicated region
      $region25: #{review_kd_forward.9} parent=23 // pred_check
        %p128 = pneg %p29
      $region26: #{review_kd_forward.9} parent=23 // pred_check_branch
        %130 = sbr.rel (%p128) target = $region28
      $region27: #{review_kd_forward.9} parent=23 // pred_region
        %p131 = scmp.lt.s32.totalorder %s9, 1
        %s132 = scalar_select %p131, %s9, 1
        %s133 = smul.addr %s132, 16
        %s134 = smul.addr %s133, 8
        %s135 = scalar_lea.vmem %s0, %s134
      $region28: #{review_kd_forward.9} parent=23 // pred_fallthru
        _
    $region24: #{review_kd_forward.9} parent=5 // pred_fallthru
      _
    %p136 = scmp.le.s32.totalorder 1, %s9
    %p137 = scmp.lt.s32.totalorder %s9, 3
    %p138 = pnand %p136, %p137
    %p139 = pneg %p138
    // Predicated region
    $region29: #{review_kd_forward.9} parent=5 // pred_check
      _
    $region30: #{review_kd_forward.9} parent=5 // pred_check_branch
      %141 = sbr.rel (%p138) target = $region32
    $region31: #{review_kd_forward.9} parent=5 // pred_region
      %s142 = ssub.s32 %s9, 1
      %p143 = scmp.lt.s32.totalorder %s14, 1
      %s144 = scalar_select %p143, %s14, 1
      %s145 = smul.addr %s144, 16
      %s146 = smul.addr %s145, 8
      %s147 = scalar_lea.vmem %s0, %s146
      %p148 = pneg %p35
      %p149 = pneg %p32
      %p150 = pneg %p56
      %p151 = pneg %p53
      %p152 = pneg %p77
      %p153 = pneg %p74
      %p154 = pneg %p103
      %p155 = pneg %p100
      %p156 = scmp.lt.s32.totalorder %s14, 1
      %s157 = scalar_select %p156, %s14, 1
      %s158 = smul.addr %s157, 13
      %s159 = smul.addr %s158, 8
      %s160 = scalar_lea.vmem %s3, %s159
      %p161 = scmp.lt.s32.totalorder %s14, 1
      %s162 = scalar_select %p161, %s14, 1
      %s163 = smul.addr %s162, 16
      %s164 = smul.addr %s163, 8
      %s165 = scalar_lea.vmem %s0, %s164
      %p166 = scmp.lt.s32.totalorder %s14, 1
      %s167 = scalar_select %p166, %s14, 1
      %s168 = smul.addr %s167, 13
      %s169 = smul.addr %s168, 8
      %s170 = scalar_lea.vmem %s3, %s169
      %v172 = vld [vmem:[%s165] sm:$0xff]
      %v173 = vld [vmem:[%s165 + $0x8] sm:$0xff]
      %v174 = vld [vmem:[%s165 + $0x10] sm:$0xff]
      %v175 = vld [vmem:[%s165 + $0x18] sm:$0xff]
      %v176 = vld [vmem:[%s165 + $0x20] sm:$0xff]
      %v177 = vld [vmem:[%s165 + $0x28] sm:$0xff]
      %v178 = vld [vmem:[%s165 + $0x30] sm:$0xff]
      %v179 = vld [vmem:[%s165 + $0x38] sm:$0xff]
      %v180 = vld [vmem:[%s165 + $0x40] sm:$0xff]
      %v181 = vld [vmem:[%s165 + $0x48] sm:$0xff]
      %v182 = vld [vmem:[%s165 + $0x50] sm:$0xff]
      %v183 = vld [vmem:[%s165 + $0x58] sm:$0xff]
      %v184 = vld [vmem:[%s165 + $0x60] sm:$0xf]
      %v185 = vpack.c.bf16 %v173, %v172
      %v186 = vpack.c.bf16 %v175, %v174
      %v187 = vpack.c.bf16 %v177, %v176
      %v188 = vpack.c.bf16 %v179, %v178
      %v189 = vpack.c.bf16 %v181, %v180
      %v190 = vpack.c.bf16 %v183, %v182
      %v191 = vpack.c.bf16 %v184, %v184
      %v192 = vld [vmem:[%s1] sm:$0xf]
      %v193 = vld [vmem:[%s1 + $0x4] sm:$0xf]
      %v194 = vld [vmem:[%s165 + $0x1] sm:$0xff]
      %v195 = vld [vmem:[%s165 + $0x9] sm:$0xff]
      %v196 = vld [vmem:[%s165 + $0x11] sm:$0xff]
      %v197 = vld [vmem:[%s165 + $0x19] sm:$0xff]
      %v198 = vld [vmem:[%s165 + $0x21] sm:$0xff]
      %v199 = vld [vmem:[%s165 + $0x29] sm:$0xff]
      %v200 = vld [vmem:[%s165 + $0x31] sm:$0xff]
      %v201 = vld [vmem:[%s165 + $0x39] sm:$0xff]
      %v202 = vld [vmem:[%s165 + $0x41] sm:$0xff]
      %v203 = vld [vmem:[%s165 + $0x49] sm:$0xff]
      %v204 = vld [vmem:[%s165 + $0x51] sm:$0xff]
      %v205 = vld [vmem:[%s165 + $0x59] sm:$0xff]
      %v206 = vld [vmem:[%s165 + $0x61] sm:$0xf]
      %v207 = vpack.c.bf16 %v195, %v194
      %v208 = vpack.c.bf16 %v197, %v196
      %v209 = vpack.c.bf16 %v199, %v198
      %v210 = vpack.c.bf16 %v201, %v200
      %v211 = vpack.c.bf16 %v203, %v202
      %v212 = vpack.c.bf16 %v205, %v204
      %v213 = vpack.c.bf16 %v206, %v206
      %s214 = scalar_lea.vmem %s1, 8
      %v215 = vld [vmem:[%s214] sm:$0xf]
      %v216 = vld [vmem:[%s214 + $0x4] sm:$0xf]
      %v219 = vunpack.c.l.b16 %v215
      %v220 = vunpack.c.l.b16 %v216
      %v221 = vpack.c.b16 %v220, %v219
      %vm223 = vcmask 130048
      %v225 = vsel %vm223, %v207, 0
      %v228 = vsel %vm223, %v208, 0
      %v231 = vsel %vm223, %v209, 0
      %v234 = vsel %vm223, %v210, 0
      %v237 = vsel %vm223, %v211, 0
      %v240 = vsel %vm223, %v212, 0
      %v243 = vsel %vm223, %v213, 0
      %245 = vmatprep.subr.bf16.mxu0 0
      %246 = vmatpush1.bf16.msra.mxu0 %v221
      %247 = vmatprep.subr.bf16.mxu0 0
      %248 = vmatpush1.bf16.msra.mxu0 0
      %249 = vmatprep.subr.bf16.mxu0 0
      %250 = vmatpush1.bf16.msra.mxu0 0
      %251 = vmatprep.subr.bf16.mxu0 0
      %252 = vmatpush1.bf16.msra.mxu0 0
      %253 = vmatprep.subr.bf16.mxu0 0
      %254 = vmatpush1.bf16.msra.mxu0 0
      %255 = vmatprep.subr.bf16.mxu0 0
      %256 = vmatpush1.bf16.msra.mxu0 0
      %257 = vmatprep.subr.bf16.mxu0 0
      %258 = vmatpush1.bf16.msra.mxu0 0
      %259 = vmatprep.subr.bf16.mxu0 0
      %260 = vmatpush1.bf16.msra.mxu0 0
      %261 = vmatprep.subr.bf16.mxu0 0
      %262 = vmatpush1.bf16.msra.mxu0 0
      %263 = vmatprep.subr.bf16.mxu0 0
      %264 = vmatpush1.bf16.msra.mxu0 0
      %265 = vmatprep.subr.bf16.mxu0 0
      %266 = vmatpush1.bf16.msra.mxu0 0
      %267 = vmatprep.subr.bf16.mxu0 0
      %268 = vmatpush1.bf16.msra.mxu0 0
      %269 = vmatprep.subr.bf16.mxu0 0
      %270 = vmatpush1.bf16.msra.mxu0 0
      %271 = vmatprep.subr.bf16.mxu0 0
      %272 = vmatpush1.bf16.msra.mxu0 0
      %273 = vmatprep.subr.bf16.mxu0 0
      %274 = vmatpush1.bf16.msra.mxu0 0
      %275 = vmatprep.subr.bf16.mxu0 0
      %276 = vmatpush1.bf16.msra.mxu0 0
      %277 = vmatprep.mubr.bf16.mxu0 0
      %278 = vmatmul.mubr.bf16.gmra.mrb[0].mxu0 %v225
      %v279 = vpop.f32.mrb[0].mxu0
      %v280 = vadd.f32 0.0, %v279
      %v281 = vpop.f32.mrb[0].mxu0
      %v282 = vpop.f32.mrb[0].mxu0
      %v283 = vadd.f32 0.0, %v282
      %v284 = vpop.f32.mrb[0].mxu0
      %285 = vmatprep.mubr.bf16.mxu0 0
      %286 = vmatmul.mubr.bf16.gmra.mrb[0].mxu0 %v228
      %v287 = vpop.f32.mrb[0].mxu0
      %v288 = vadd.f32 0.0, %v287
      %v289 = vpop.f32.mrb[0].mxu0
      %v290 = vpop.f32.mrb[0].mxu0
      %v291 = vadd.f32 0.0, %v290
      %v292 = vpop.f32.mrb[0].mxu0
      %293 = vmatprep.mubr.bf16.mxu0 0
      %294 = vmatmul.mubr.bf16.gmra.mrb[0].mxu0 %v231
      %v295 = vpop.f32.mrb[0].mxu0
      %v296 = vadd.f32 0.0, %v295
      %v297 = vpop.f32.mrb[0].mxu0
      %v298 = vpop.f32.mrb[0].mxu0
      %v299 = vadd.f32 0.0, %v298
      %v300 = vpop.f32.mrb[0].mxu0
      %301 = vmatprep.mubr.bf16.mxu0 0
      %302 = vmatmul.mubr.bf16.gmra.mrb[0].mxu0 %v234
      %v303 = vpop.f32.mrb[0].mxu0
      %v304 = vadd.f32 0.0, %v303
      %v305 = vpop.f32.mrb[0].mxu0
      %v306 = vpop.f32.mrb[0].mxu0
      %v307 = vadd.f32 0.0, %v306
      %v308 = vpop.f32.mrb[0].mxu0
      %309 = vmatprep.mubr.bf16.mxu0 0
      %310 = vmatmul.mubr.bf16.gmra.mrb[0].mxu0 %v237
      %v311 = vpop.f32.mrb[0].mxu0
      %v312 = vadd.f32 0.0, %v311
      %v313 = vpop.f32.mrb[0].mxu0
      %v314 = vpop.f32.mrb[0].mxu0
      %v315 = vadd.f32 0.0, %v314
      %v316 = vpop.f32.mrb[0].mxu0
      %317 = vmatprep.mubr.bf16.mxu0 0
      %318 = vmatmul.mubr.bf16.gmra.mrb[0].mxu0 %v240
      %v319 = vpop.f32.mrb[0].mxu0
      %v320 = vadd.f32 0.0, %v319
      %v321 = vpop.f32.mrb[0].mxu0
      %v322 = vpop.f32.mrb[0].mxu0
      %v323 = vadd.f32 0.0, %v322
      %v324 = vpop.f32.mrb[0].mxu0
      %325 = vmatprep.mubr.bf16.mxu0 0
      %326 = vmatmul.mubr.bf16.gmra.mrb[0].mxu0 %v243
      %v327 = vpop.f32.mrb[0].mxu0
      %v328 = vadd.f32 0.0, %v327
      %v329 = vpop.f32.mrb[0].mxu0
      %v330 = vpop.f32.mrb[0].mxu0
      %v331 = vpop.f32.mrb[0].mxu0
      %332 = vdwg.mxu0
      %v335 = vunpack.c.l.b16 %v192
      %v336 = vunpack.c.l.b16 %v193
      %v337 = vpack.c.b16 %v336, %v335
      %v340 = vsel %vm223, %v185, 0
      %v343 = vsel %vm223, %v186, 0
      %v346 = vsel %vm223, %v187, 0
      %v349 = vsel %vm223, %v188, 0
      %v352 = vsel %vm223, %v189, 0
      %v355 = vsel %vm223, %v190, 0
      %v358 = vsel %vm223, %v191, 0
      %360 = vmatprep.subr.bf16.mxu0 0
      %361 = vmatpush1.bf16.msra.mxu0 %v337
      %362 = vmatprep.subr.bf16.mxu0 0
      %363 = vmatpush1.bf16.msra.mxu0 0
      %364 = vmatprep.subr.bf16.mxu0 0
      %365 = vmatpush1.bf16.msra.mxu0 0
      %366 = vmatprep.subr.bf16.mxu0 0
      %367 = vmatpush1.bf16.msra.mxu0 0
      %368 = vmatprep.subr.bf16.mxu0 0
      %369 = vmatpush1.bf16.msra.mxu0 0
      %370 = vmatprep.subr.bf16.mxu0 0
      %371 = vmatpush1.bf16.msra.mxu0 0
      %372 = vmatprep.subr.bf16.mxu0 0
      %373 = vmatpush1.bf16.msra.mxu0 0
      %374 = vmatprep.subr.bf16.mxu0 0
      %375 = vmatpush1.bf16.msra.mxu0 0
      %376 = vmatprep.subr.bf16.mxu0 0
      %377 = vmatpush1.bf16.msra.mxu0 0
      %378 = vmatprep.subr.bf16.mxu0 0
      %379 = vmatpush1.bf16.msra.mxu0 0
      %380 = vmatprep.subr.bf16.mxu0 0
      %381 = vmatpush1.bf16.msra.mxu0 0
      %382 = vmatprep.subr.bf16.mxu0 0
      %383 = vmatpush1.bf16.msra.mxu0 0
      %384 = vmatprep.subr.bf16.mxu0 0
      %385 = vmatpush1.bf16.msra.mxu0 0
      %386 = vmatprep.subr.bf16.mxu0 0
      %387 = vmatpush1.bf16.msra.mxu0 0
      %388 = vmatprep.subr.bf16.mxu0 0
      %389 = vmatpush1.bf16.msra.mxu0 0
      %390 = vmatprep.subr.bf16.mxu0 0
      %391 = vmatpush1.bf16.msra.mxu0 0
      %392 = vmatprep.mubr.bf16.mxu0 0
      %393 = vmatmul.mubr.bf16.gmra.mrb[0].mxu0 %v340
      %v394 = vpop.f32.mrb[0].mxu0
      %v395 = vadd.f32 %v280, %v394
      %v396 = vpop.f32.mrb[0].mxu0
      %v397 = vpop.f32.mrb[0].mxu0
      %v398 = vadd.f32 %v283, %v397
      %v399 = vpop.f32.mrb[0].mxu0
      %400 = vmatprep.mubr.bf16.mxu0 0
      %401 = vmatmul.mubr.bf16.gmra.mrb[0].mxu0 %v343
      %v402 = vpop.f32.mrb[0].mxu0
      %v403 = vadd.f32 %v288, %v402
      %v404 = vpop.f32.mrb[0].mxu0
      %v405 = vpop.f32.mrb[0].mxu0
      %v406 = vadd.f32 %v291, %v405
      %v407 = vpop.f32.mrb[0].mxu0
      %408 = vmatprep.mubr.bf16.mxu0 0
      %409 = vmatmul.mubr.bf16.gmra.mrb[0].mxu0 %v346
      %v410 = vpop.f32.mrb[0].mxu0
      %v411 = vadd.f32 %v296, %v410
      %v412 = vpop.f32.mrb[0].mxu0
      %v413 = vpop.f32.mrb[0].mxu0
      %v414 = vadd.f32 %v299, %v413
      %v415 = vpop.f32.mrb[0].mxu0
      %416 = vmatprep.mubr.bf16.mxu0 0
      %417 = vmatmul.mubr.bf16.gmra.mrb[0].mxu0 %v349
      %v418 = vpop.f32.mrb[0].mxu0
      %v419 = vadd.f32 %v304, %v418
      %v420 = vpop.f32.mrb[0].mxu0
      %v421 = vpop.f32.mrb[0].mxu0
      %v422 = vadd.f32 %v307, %v421
      %v423 = vpop.f32.mrb[0].mxu0
      %424 = vmatprep.mubr.bf16.mxu0 0
      %425 = vmatmul.mubr.bf16.gmra.mrb[0].mxu0 %v352
      %v426 = vpop.f32.mrb[0].mxu0
      %v427 = vadd.f32 %v312, %v426
      %v428 = vpop.f32.mrb[0].mxu0
      %v429 = vpop.f32.mrb[0].mxu0
      %v430 = vadd.f32 %v315, %v429
      %v431 = vpop.f32.mrb[0].mxu0
      %432 = vmatprep.mubr.bf16.mxu0 0
      %433 = vmatmul.mubr.bf16.gmra.mrb[0].mxu0 %v355
      %v434 = vpop.f32.mrb[0].mxu0
      %v435 = vadd.f32 %v320, %v434
      %v436 = vpop.f32.mrb[0].mxu0
      %v437 = vpop.f32.mrb[0].mxu0
      %v438 = vadd.f32 %v323, %v437
      %v439 = vpop.f32.mrb[0].mxu0
      %440 = vmatprep.mubr.bf16.mxu0 0
      %441 = vmatmul.mubr.bf16.gmra.mrb[0].mxu0 %v358
      %v442 = vpop.f32.mrb[0].mxu0
      %v443 = vadd.f32 %v328, %v442
      %v444 = vpop.f32.mrb[0].mxu0
      %v445 = vpop.f32.mrb[0].mxu0
      %v446 = vpop.f32.mrb[0].mxu0
      %447 = vdwg.mxu0
      %v448 = vld [vmem:[%s165 + $0x2] sm:$0xff]
      %v449 = vld [vmem:[%s165 + $0xa] sm:$0xff]
      %v450 = vld [vmem:[%s165 + $0x12] sm:$0xff]
      %v451 = vld [vmem:[%s165 + $0x1a] sm:$0xff]
      %v452 = vld [vmem:[%s165 + $0x22] sm:$0xff]
      %v453 = vld [vmem:[%s165 + $0x2a] sm:$0xff]
      %v454 = vld [vmem:[%s165 + $0x32] sm:$0xff]
      %v455 = vld [vmem:[%s165 + $0x3a] sm:$0xff]
      %v456 = vld [vmem:[%s165 + $0x42] sm:$0xff]
      %v457 = vld [vmem:[%s165 + $0x4a] sm:$0xff]
      %v458 = vld [vmem:[%s165 + $0x52] sm:$0xff]
      %v459 = vld [vmem:[%s165 + $0x5a] sm:$0xff]
      %v460 = vld [vmem:[%s165 + $0x62] sm:$0xf]
      %v461 = vpack.c.bf16 %v449, %v448
      %v462 = vpack.c.bf16 %v451, %v450
      %v463 = vpack.c.bf16 %v453, %v452
      %v464 = vpack.c.bf16 %v455, %v454
      %v465 = vpack.c.bf16 %v457, %v456
      %v466 = vpack.c.bf16 %v459, %v458
      %v467 = vpack.c.bf16 %v460, %v460
      %s468 = scalar_lea.vmem %s1, 16
      %v469 = vld [vmem:[%s468] sm:$0xf]
      %v470 = vld [vmem:[%s468 + $0x4] sm:$0xf]
      %v473 = vunpack.c.l.b16 %v469
      %v474 = vunpack.c.l.b16 %v470
      %v475 = vpack.c.b16 %v474, %v473
      %v478 = vsel %vm223, %v461, 0
      %v481 = vsel %vm223, %v462, 0
      %v484 = vsel %vm223, %v463, 0
      %v487 = vsel %vm223, %v464, 0
      %v490 = vsel %vm223, %v465, 0
      %v493 = vsel %vm223, %v466, 0
      %v496 = vsel %vm223, %v467, 0
      %498 = vmatprep.subr.bf16.mxu0 0
      %499 = vmatpush1.bf16.msra.mxu0 %v475
      %500 = vmatprep.subr.bf16.mxu0 0
      %501 = vmatpush1.bf16.msra.mxu0 0
      %502 = vmatprep.subr.bf16.mxu0 0
      %503 = vmatpush1.bf16.msra.mxu0 0
      %504 = vmatprep.subr.bf16.mxu0 0
      %505 = vmatpush1.bf16.msra.mxu0 0
      %506 = vmatprep.subr.bf16.mxu0 0
      %507 = vmatpush1.bf16.msra.mxu0 0
      %508 = vmatprep.subr.bf16.mxu0 0
      %509 = vmatpush1.bf16.msra.mxu0 0
      %510 = vmatprep.subr.bf16.mxu0 0
      %511 = vmatpush1.bf16.msra.mxu0 0
      %512 = vmatprep.subr.bf16.mxu0 0
      %513 = vmatpush1.bf16.msra.mxu0 0
      %514 = vmatprep.subr.bf16.mxu0 0
      %515 = vmatpush1.bf16.msra.mxu0 0
      %516 = vmatprep.subr.bf16.mxu0 0
      %517 = vmatpush1.bf16.msra.mxu0 0
      %518 = vmatprep.subr.bf16.mxu0 0
      %519 = vmatpush1.bf16.msra.mxu0 0
      %520 = vmatprep.subr.bf16.mxu0 0
      %521 = vmatpush1.bf16.msra.mxu0 0
      %522 = vmatprep.subr.bf16.mxu0 0
      %523 = vmatpush1.bf16.msra.mxu0 0
      %524 = vmatprep.subr.bf16.mxu0 0
      %525 = vmatpush1.bf16.msra.mxu0 0
      %526 = vmatprep.subr.bf16.mxu0 0
      %527 = vmatpush1.bf16.msra.mxu0 0
      %528 = vmatprep.subr.bf16.mxu0 0
      %529 = vmatpush1.bf16.msra.mxu0 0
      %530 = vmatprep.mubr.bf16.mxu0 0
      %531 = vmatmul.mubr.bf16.gmra.mrb[0].mxu0 %v478
      %v532 = vpop.f32.mrb[0].mxu0
      %v533 = vadd.f32 0.0, %v532
      %v534 = vpop.f32.mrb[0].mxu0
      %v535 = vpop.f32.mrb[0].mxu0
      %v536 = vadd.f32 0.0, %v535
      %v537 = vpop.f32.mrb[0].mxu0
      %538 = vmatprep.mubr.bf16.mxu0 0
      %539 = vmatmul.mubr.bf16.gmra.mrb[0].mxu0 %v481
      %v540 = vpop.f32.mrb[0].mxu0
      %v541 = vadd.f32 0.0, %v540
      %v542 = vpop.f32.mrb[0].mxu0
      %v543 = vpop.f32.mrb[0].mxu0
      %v544 = vadd.f32 0.0, %v543
      %v545 = vpop.f32.mrb[0].mxu0
      %546 = vmatprep.mubr.bf16.mxu0 0
      %547 = vmatmul.mubr.bf16.gmra.mrb[0].mxu0 %v484
      %v548 = vpop.f32.mrb[0].mxu0
      %v549 = vadd.f32 0.0, %v548
      %v550 = vpop.f32.mrb[0].mxu0
      %v551 = vpop.f32.mrb[0].mxu0
      %v552 = vadd.f32 0.0, %v551
      %v553 = vpop.f32.mrb[0].mxu0
      %554 = vmatprep.mubr.bf16.mxu0 0
      %555 = vmatmul.mubr.bf16.gmra.mrb[0].mxu0 %v487
      %v556 = vpop.f32.mrb[0].mxu0
      %v557 = vadd.f32 0.0, %v556
      %v558 = vpop.f32.mrb[0].mxu0
      %v559 = vpop.f32.mrb[0].mxu0
      %v560 = vadd.f32 0.0, %v559
      %v561 = vpop.f32.mrb[0].mxu0
      %562 = vmatprep.mubr.bf16.mxu0 0
      %563 = vmatmul.mubr.bf16.gmra.mrb[0].mxu0 %v490
      %v564 = vpop.f32.mrb[0].mxu0
      %v565 = vadd.f32 0.0, %v564
      %v566 = vpop.f32.mrb[0].mxu0
      %v567 = vpop.f32.mrb[0].mxu0
      %v568 = vadd.f32 0.0, %v567
      %v569 = vpop.f32.mrb[0].mxu0
      %570 = vmatprep.mubr.bf16.mxu0 0
      %571 = vmatmul.mubr.bf16.gmra.mrb[0].mxu0 %v493
      %v572 = vpop.f32.mrb[0].mxu0
      %v573 = vadd.f32 0.0, %v572
      %v574 = vpop.f32.mrb[0].mxu0
      %v575 = vpop.f32.mrb[0].mxu0
      %v576 = vadd.f32 0.0, %v575
      %v577 = vpop.f32.mrb[0].mxu0
      %578 = vmatprep.mubr.bf16.mxu0 0
      %579 = vmatmul.mubr.bf16.gmra.mrb[0].mxu0 %v496
      %v580 = vpop.f32.mrb[0].mxu0
      %v581 = vadd.f32 0.0, %v580
      %v582 = vpop.f32.mrb[0].mxu0
      %v583 = vpop.f32.mrb[0].mxu0
      %v584 = vpop.f32.mrb[0].mxu0
      %585 = vdwg.mxu0
      %v586 = vadd.f32 %v395, %v533
      %v587 = vadd.f32 %v398, %v536
      %v588 = vadd.f32 %v403, %v541
      %v589 = vadd.f32 %v406, %v544
      %v590 = vadd.f32 %v411, %v549
      %v591 = vadd.f32 %v414, %v552
      %v592 = vadd.f32 %v419, %v557
      %v593 = vadd.f32 %v422, %v560
      %v594 = vadd.f32 %v427, %v565
      %v595 = vadd.f32 %v430, %v568
      %v596 = vadd.f32 %v435, %v573
      %v597 = vadd.f32 %v438, %v576
      %v598 = vadd.f32 %v443, %v581
      %v599 = vld [vmem:[%s165 + $0xa] sm:$0xff]
      %v600 = vld [vmem:[%s165 + $0x12] sm:$0xff]
      %v601 = vld [vmem:[%s165 + $0x1a] sm:$0xff]
      %v602 = vld [vmem:[%s165 + $0x22] sm:$0xff]
      %v603 = vld [vmem:[%s165 + $0x2a] sm:$0xff]
      %v604 = vld [vmem:[%s165 + $0x32] sm:$0xff]
      %v605 = vld [vmem:[%s165 + $0x3a] sm:$0xff]
      %v606 = vld [vmem:[%s165 + $0x42] sm:$0xff]
      %v607 = vld [vmem:[%s165 + $0x4a] sm:$0xff]
      %v608 = vld [vmem:[%s165 + $0x52] sm:$0xff]
      %v609 = vld [vmem:[%s165 + $0x5a] sm:$0xff]
      %v610 = vld [vmem:[%s165 + $0x62] sm:$0xff]
      %v611 = vld [vmem:[%s165 + $0x6a] sm:$0xf]
      %v612 = vpack.c.bf16 %v600, %v599
      %v613 = vpack.c.bf16 %v602, %v601
      %v614 = vpack.c.bf16 %v604, %v603
      %v615 = vpack.c.bf16 %v606, %v605
      %v616 = vpack.c.bf16 %v608, %v607
      %v617 = vpack.c.bf16 %v610, %v609
      %v618 = vpack.c.bf16 %v611, %v611
      %s619 = scalar_lea.vmem %s1, 24
      %v620 = vld [vmem:[%s619] sm:$0xf]
      %v621 = vld [vmem:[%s619 + $0x4] sm:$0xf]
      %v624 = vunpack.c.l.b16 %v620
      %v625 = vunpack.c.l.b16 %v621
      %v626 = vpack.c.b16 %v625, %v624
      %v629 = vsel %vm223, %v612, 0
      %v632 = vsel %vm223, %v613, 0
      %v635 = vsel %vm223, %v614, 0
      %v638 = vsel %vm223, %v615, 0
      %v641 = vsel %vm223, %v616, 0
      %v644 = vsel %vm223, %v617, 0
      %v647 = vsel %vm223, %v618, 0
      %649 = vmatprep.subr.bf16.mxu0 0
      %650 = vmatpush1.bf16.msra.mxu0 %v626
      %651 = vmatprep.subr.bf16.mxu0 0
      %652 = vmatpush1.bf16.msra.mxu0 0
      %653 = vmatprep.subr.bf16.mxu0 0
      %654 = vmatpush1.bf16.msra.mxu0 0
      %655 = vmatprep.subr.bf16.mxu0 0
      %656 = vmatpush1.bf16.msra.mxu0 0
      %657 = vmatprep.subr.bf16.mxu0 0
      %658 = vmatpush1.bf16.msra.mxu0 0
      %659 = vmatprep.subr.bf16.mxu0 0
      %660 = vmatpush1.bf16.msra.mxu0 0
      %661 = vmatprep.subr.bf16.mxu0 0
      %662 = vmatpush1.bf16.msra.mxu0 0
      %663 = vmatprep.subr.bf16.mxu0 0
      %664 = vmatpush1.bf16.msra.mxu0 0
      %665 = vmatprep.subr.bf16.mxu0 0
      %666 = vmatpush1.bf16.msra.mxu0 0
      %667 = vmatprep.subr.bf16.mxu0 0
      %668 = vmatpush1.bf16.msra.mxu0 0
      %669 = vmatprep.subr.bf16.mxu0 0
      %670 = vmatpush1.bf16.msra.mxu0 0
      %671 = vmatprep.subr.bf16.mxu0 0
      %672 = vmatpush1.bf16.msra.mxu0 0
      %673 = vmatprep.subr.bf16.mxu0 0
      %674 = vmatpush1.bf16.msra.mxu0 0
      %675 = vmatprep.subr.bf16.mxu0 0
      %676 = vmatpush1.bf16.msra.mxu0 0
      %677 = vmatprep.subr.bf16.mxu0 0
      %678 = vmatpush1.bf16.msra.mxu0 0
      %679 = vmatprep.subr.bf16.mxu0 0
      %680 = vmatpush1.bf16.msra.mxu0 0
      %681 = vmatprep.mubr.bf16.mxu0 0
      %682 = vmatmul.mubr.bf16.gmra.mrb[0].mxu0 %v629
      %v683 = vpop.f32.mrb[0].mxu0
      %v684 = vadd.f32 0.0, %v683
      %v685 = vpop.f32.mrb[0].mxu0
      %v686 = vpop.f32.mrb[0].mxu0
      %v687 = vadd.f32 0.0, %v686
      %v688 = vpop.f32.mrb[0].mxu0
      %689 = vmatprep.mubr.bf16.mxu0 0
      %690 = vmatmul.mubr.bf16.gmra.mrb[0].mxu0 %v632
      %v691 = vpop.f32.mrb[0].mxu0
      %v692 = vadd.f32 0.0, %v691
      %v693 = vpop.f32.mrb[0].mxu0
      %v694 = vpop.f32.mrb[0].mxu0
      %v695 = vadd.f32 0.0, %v694
      %v696 = vpop.f32.mrb[0].mxu0
      %697 = vmatprep.mubr.bf16.mxu0 0
      %698 = vmatmul.mubr.bf16.gmra.mrb[0].mxu0 %v635
      %v699 = vpop.f32.mrb[0].mxu0
      %v700 = vadd.f32 0.0, %v699
      %v701 = vpop.f32.mrb[0].mxu0
      %v702 = vpop.f32.mrb[0].mxu0
      %v703 = vadd.f32 0.0, %v702
      %v704 = vpop.f32.mrb[0].mxu0
      %705 = vmatprep.mubr.bf16.mxu0 0
      %706 = vmatmul.mubr.bf16.gmra.mrb[0].mxu0 %v638
      %v707 = vpop.f32.mrb[0].mxu0
      %v708 = vadd.f32 0.0, %v707
      %v709 = vpop.f32.mrb[0].mxu0
      %v710 = vpop.f32.mrb[0].mxu0
      %v711 = vadd.f32 0.0, %v710
      %v712 = vpop.f32.mrb[0].mxu0
      %713 = vmatprep.mubr.bf16.mxu0 0
      %714 = vmatmul.mubr.bf16.gmra.mrb[0].mxu0 %v641
      %v715 = vpop.f32.mrb[0].mxu0
      %v716 = vadd.f32 0.0, %v715
      %v717 = vpop.f32.mrb[0].mxu0
      %v718 = vpop.f32.mrb[0].mxu0
      %v719 = vadd.f32 0.0, %v718
      %v720 = vpop.f32.mrb[0].mxu0
      %721 = vmatprep.mubr.bf16.mxu0 0
      %722 = vmatmul.mubr.bf16.gmra.mrb[0].mxu0 %v644
      %v723 = vpop.f32.mrb[0].mxu0
      %v724 = vadd.f32 0.0, %v723
      %v725 = vpop.f32.mrb[0].mxu0
      %v726 = vpop.f32.mrb[0].mxu0
      %v727 = vadd.f32 0.0, %v726
      %v728 = vpop.f32.mrb[0].mxu0
      %729 = vmatprep.mubr.bf16.mxu0 0
      %730 = vmatmul.mubr.bf16.gmra.mrb[0].mxu0 %v647
      %v731 = vpop.f32.mrb[0].mxu0
      %v732 = vadd.f32 0.0, %v731
      %v733 = vpop.f32.mrb[0].mxu0
      %v734 = vpop.f32.mrb[0].mxu0
      %v735 = vpop.f32.mrb[0].mxu0
      %736 = vdwg.mxu0
      %v737 = vadd.f32 %v586, %v684
      %v738 = vadd.f32 %v587, %v687
      %v739 = vadd.f32 %v588, %v692
      %v740 = vadd.f32 %v589, %v695
      %v741 = vadd.f32 %v590, %v700
      %v742 = vadd.f32 %v591, %v703
      %v743 = vadd.f32 %v592, %v708
      %v744 = vadd.f32 %v593, %v711
      %v745 = vadd.f32 %v594, %v716
      %v746 = vadd.f32 %v595, %v719
      %v747 = vadd.f32 %v596, %v724
      %v748 = vadd.f32 %v597, %v727
      %v749 = vadd.f32 %v598, %v732
      %v750 = vld [vmem:[%s165 + $0xb] sm:$0xff]
      %v751 = vld [vmem:[%s165 + $0x13] sm:$0xff]
      %v752 = vld [vmem:[%s165 + $0x1b] sm:$0xff]
      %v753 = vld [vmem:[%s165 + $0x23] sm:$0xff]
      %v754 = vld [vmem:[%s165 + $0x2b] sm:$0xff]
      %v755 = vld [vmem:[%s165 + $0x33] sm:$0xff]
      %v756 = vld [vmem:[%s165 + $0x3b] sm:$0xff]
      %v757 = vld [vmem:[%s165 + $0x43] sm:$0xff]
      %v758 = vld [vmem:[%s165 + $0x4b] sm:$0xff]
      %v759 = vld [vmem:[%s165 + $0x53] sm:$0xff]
      %v760 = vld [vmem:[%s165 + $0x5b] sm:$0xff]
      %v761 = vld [vmem:[%s165 + $0x63] sm:$0xff]
      %v762 = vld [vmem:[%s165 + $0x6b] sm:$0xf]
      %v763 = vpack.c.bf16 %v751, %v750
      %v764 = vpack.c.bf16 %v753, %v752
      %v765 = vpack.c.bf16 %v755, %v754
      %v766 = vpack.c.bf16 %v757, %v756
      %v767 = vpack.c.bf16 %v759, %v758
      %v768 = vpack.c.bf16 %v761, %v760
      %v769 = vpack.c.bf16 %v762, %v762
      %s770 = scalar_lea.vmem %s1, 32
      %v771 = vld [vmem:[%s770] sm:$0xf]
      %v772 = vld [vmem:[%s770 + $0x4] sm:$0xf]
      %v775 = vunpack.c.l.b16 %v771
      %v776 = vunpack.c.l.b16 %v772
      %v777 = vpack.c.b16 %v776, %v775
      %v780 = vsel %vm223, %v763, 0
      %v783 = vsel %vm223, %v764, 0
      %v786 = vsel %vm223, %v765, 0
      %v789 = vsel %vm223, %v766, 0
      %v792 = vsel %vm223, %v767, 0
      %v795 = vsel %vm223, %v768, 0
      %v798 = vsel %vm223, %v769, 0
      %800 = vmatprep.subr.bf16.mxu0 0
      %801 = vmatpush1.bf16.msra.mxu0 %v777
      %802 = vmatprep.subr.bf16.mxu0 0
      %803 = vmatpush1.bf16.msra.mxu0 0
      %804 = vmatprep.subr.bf16.mxu0 0
      %805 = vmatpush1.bf16.msra.mxu0 0
      %806 = vmatprep.subr.bf16.mxu0 0
      %807 = vmatpush1.bf16.msra.mxu0 0
      %808 = vmatprep.subr.bf16.mxu0 0
      %809 = vmatpush1.bf16.msra.mxu0 0
      %810 = vmatprep.subr.bf16.mxu0 0
      %811 = vmatpush1.bf16.msra.mxu0 0
      %812 = vmatprep.subr.bf16.mxu0 0
      %813 = vmatpush1.bf16.msra.mxu0 0
      %814 = vmatprep.subr.bf16.mxu0 0
      %815 = vmatpush1.bf16.msra.mxu0 0
      %816 = vmatprep.subr.bf16.mxu0 0
      %817 = vmatpush1.bf16.msra.mxu0 0
      %818 = vmatprep.subr.bf16.mxu0 0
      %819 = vmatpush1.bf16.msra.mxu0 0
      %820 = vmatprep.subr.bf16.mxu0 0
      %821 = vmatpush1.bf16.msra.mxu0 0
      %822 = vmatprep.subr.bf16.mxu0 0
      %823 = vmatpush1.bf16.msra.mxu0 0
      %824 = vmatprep.subr.bf16.mxu0 0
      %825 = vmatpush1.bf16.msra.mxu0 0
      %826 = vmatprep.subr.bf16.mxu0 0
      %827 = vmatpush1.bf16.msra.mxu0 0
      %828 = vmatprep.subr.bf16.mxu0 0
      %829 = vmatpush1.bf16.msra.mxu0 0
      %830 = vmatprep.subr.bf16.mxu0 0
      %831 = vmatpush1.bf16.msra.mxu0 0
      %832 = vmatprep.mubr.bf16.mxu0 0
      %833 = vmatmul.mubr.bf16.gmra.mrb[0].mxu0 %v780
      %v834 = vpop.f32.mrb[0].mxu0
      %v835 = vadd.f32 0.0, %v834
      %v836 = vpop.f32.mrb[0].mxu0
      %v837 = vpop.f32.mrb[0].mxu0
      %v838 = vadd.f32 0.0, %v837
      %v839 = vpop.f32.mrb[0].mxu0
      %840 = vmatprep.mubr.bf16.mxu0 0
      %841 = vmatmul.mubr.bf16.gmra.mrb[0].mxu0 %v783
      %v842 = vpop.f32.mrb[0].mxu0
      %v843 = vadd.f32 0.0, %v842
      %v844 = vpop.f32.mrb[0].mxu0
      %v845 = vpop.f32.mrb[0].mxu0
      %v846 = vadd.f32 0.0, %v845
      %v847 = vpop.f32.mrb[0].mxu0
      %848 = vmatprep.mubr.bf16.mxu0 0
      %849 = vmatmul.mubr.bf16.gmra.mrb[0].mxu0 %v786
      %v850 = vpop.f32.mrb[0].mxu0
      %v851 = vadd.f32 0.0, %v850
      %v852 = vpop.f32.mrb[0].mxu0
      %v853 = vpop.f32.mrb[0].mxu0
      %v854 = vadd.f32 0.0, %v853
      %v855 = vpop.f32.mrb[0].mxu0
      %856 = vmatprep.mubr.bf16.mxu0 0
      %857 = vmatmul.mubr.bf16.gmra.mrb[0].mxu0 %v789
      %v858 = vpop.f32.mrb[0].mxu0
      %v859 = vadd.f32 0.0, %v858
      %v860 = vpop.f32.mrb[0].mxu0
      %v861 = vpop.f32.mrb[0].mxu0
      %v862 = vadd.f32 0.0, %v861
      %v863 = vpop.f32.mrb[0].mxu0
      %864 = vmatprep.mubr.bf16.mxu0 0
      %865 = vmatmul.mubr.bf16.gmra.mrb[0].mxu0 %v792
      %v866 = vpop.f32.mrb[0].mxu0
      %v867 = vadd.f32 0.0, %v866
      %v868 = vpop.f32.mrb[0].mxu0
      %v869 = vpop.f32.mrb[0].mxu0
      %v870 = vadd.f32 0.0, %v869
      %v871 = vpop.f32.mrb[0].mxu0
      %872 = vmatprep.mubr.bf16.mxu0 0
      %873 = vmatmul.mubr.bf16.gmra.mrb[0].mxu0 %v795
      %v874 = vpop.f32.mrb[0].mxu0
      %v875 = vadd.f32 0.0, %v874
      %v876 = vpop.f32.mrb[0].mxu0
      %v877 = vpop.f32.mrb[0].mxu0
      %v878 = vadd.f32 0.0, %v877
      %v879 = vpop.f32.mrb[0].mxu0
      %880 = vmatprep.mubr.bf16.mxu0 0
      %881 = vmatmul.mubr.bf16.gmra.mrb[0].mxu0 %v798
      %v882 = vpop.f32.mrb[0].mxu0
      %v883 = vadd.f32 0.0, %v882
      %v884 = vpop.f32.mrb[0].mxu0
      %v885 = vpop.f32.mrb[0].mxu0
      %v886 = vpop.f32.mrb[0].mxu0
      %887 = vdwg.mxu0
      %v888 = vadd.f32 %v737, %v835
      %v889 = vadd.f32 %v738, %v838
      %v890 = vadd.f32 %v739, %v843
      %v891 = vadd.f32 %v740, %v846
      %v892 = vadd.f32 %v741, %v851
      %v893 = vadd.f32 %v742, %v854
      %v894 = vadd.f32 %v743, %v859
      %v895 = vadd.f32 %v744, %v862
      %v896 = vadd.f32 %v745, %v867
      %v897 = vadd.f32 %v746, %v870
      %v898 = vadd.f32 %v747, %v875
      %v899 = vadd.f32 %v748, %v878
      %v900 = vadd.f32 %v749, %v883
      %v901 = vld [vmem:[%s165 + $0xc] sm:$0xff]
      %v902 = vld [vmem:[%s165 + $0x14] sm:$0xff]
      %v903 = vld [vmem:[%s165 + $0x1c] sm:$0xff]
      %v904 = vld [vmem:[%s165 + $0x24] sm:$0xff]
      %v905 = vld [vmem:[%s165 + $0x2c] sm:$0xff]
      %v906 = vld [vmem:[%s165 + $0x34] sm:$0xff]
      %v907 = vld [vmem:[%s165 + $0x3c] sm:$0xff]
      %v908 = vld [vmem:[%s165 + $0x44] sm:$0xff]
      %v909 = vld [vmem:[%s165 + $0x4c] sm:$0xff]
      %v910 = vld [vmem:[%s165 + $0x54] sm:$0xff]
      %v911 = vld [vmem:[%s165 + $0x5c] sm:$0xff]
      %v912 = vld [vmem:[%s165 + $0x64] sm:$0xff]
      %v913 = vld [vmem:[%s165 + $0x6c] sm:$0xf]
      %v914 = vpack.c.bf16 %v902, %v901
      %v915 = vpack.c.bf16 %v904, %v903
      %v916 = vpack.c.bf16 %v906, %v905
      %v917 = vpack.c.bf16 %v908, %v907
      %v918 = vpack.c.bf16 %v910, %v909
      %v919 = vpack.c.bf16 %v912, %v911
      %v920 = vpack.c.bf16 %v913, %v913
      %s921 = scalar_lea.vmem %s1, 40
      %v922 = vld [vmem:[%s921] sm:$0xf]
      %v923 = vld [vmem:[%s921 + $0x4] sm:$0xf]
      %v926 = vunpack.c.l.b16 %v922
      %v927 = vunpack.c.l.b16 %v923
      %v928 = vpack.c.b16 %v927, %v926
      %v931 = vsel %vm223, %v914, 0
      %v934 = vsel %vm223, %v915, 0
      %v937 = vsel %vm223, %v916, 0
      %v940 = vsel %vm223, %v917, 0
      %v943 = vsel %vm223, %v918, 0
      %v946 = vsel %vm223, %v919, 0
      %v949 = vsel %vm223, %v920, 0
      %951 = vmatprep.subr.bf16.mxu0 0
      %952 = vmatpush1.bf16.msra.mxu0 %v928
      %953 = vmatprep.subr.bf16.mxu0 0
      %954 = vmatpush1.bf16.msra.mxu0 0
      %955 = vmatprep.subr.bf16.mxu0 0
      %956 = vmatpush1.bf16.msra.mxu0 0
      %957 = vmatprep.subr.bf16.mxu0 0
      %958 = vmatpush1.bf16.msra.mxu0 0
      %959 = vmatprep.subr.bf16.mxu0 0
      %960 = vmatpush1.bf16.msra.mxu0 0
      %961 = vmatprep.subr.bf16.mxu0 0
      %962 = vmatpush1.bf16.msra.mxu0 0
      %963 = vmatprep.subr.bf16.mxu0 0
      %964 = vmatpush1.bf16.msra.mxu0 0
      %965 = vmatprep.subr.bf16.mxu0 0
      %966 = vmatpush1.bf16.msra.mxu0 0
      %967 = vmatprep.subr.bf16.mxu0 0
      %968 = vmatpush1.bf16.msra.mxu0 0
      %969 = vmatprep.subr.bf16.mxu0 0
      %970 = vmatpush1.bf16.msra.mxu0 0
      %971 = vmatprep.subr.bf16.mxu0 0
      %972 = vmatpush1.bf16.msra.mxu0 0
      %973 = vmatprep.subr.bf16.mxu0 0
      %974 = vmatpush1.bf16.msra.mxu0 0
      %975 = vmatprep.subr.bf16.mxu0 0
      %976 = vmatpush1.bf16.msra.mxu0 0
      %977 = vmatprep.subr.bf16.mxu0 0
      %978 = vmatpush1.bf16.msra.mxu0 0
      %979 = vmatprep.subr.bf16.mxu0 0
      %980 = vmatpush1.bf16.msra.mxu0 0
      %981 = vmatprep.subr.bf16.mxu0 0
      %982 = vmatpush1.bf16.msra.mxu0 0
      %983 = vmatprep.mubr.bf16.mxu0 0
      %984 = vmatmul.mubr.bf16.gmra.mrb[0].mxu0 %v931
      %v985 = vpop.f32.mrb[0].mxu0
      %v986 = vadd.f32 0.0, %v985
      %v987 = vpop.f32.mrb[0].mxu0
      %v988 = vpop.f32.mrb[0].mxu0
      %v989 = vadd.f32 0.0, %v988
      %v990 = vpop.f32.mrb[0].mxu0
      %991 = vmatprep.mubr.bf16.mxu0 0
      %992 = vmatmul.mubr.bf16.gmra.mrb[0].mxu0 %v934
      %v993 = vpop.f32.mrb[0].mxu0
      %v994 = vadd.f32 0.0, %v993
      %v995 = vpop.f32.mrb[0].mxu0
      %v996 = vpop.f32.mrb[0].mxu0
      %v997 = vadd.f32 0.0, %v996
      %v998 = vpop.f32.mrb[0].mxu0
      %999 = vmatprep.mubr.bf16.mxu0 0
      %1000 = vmatmul.mubr.bf16.gmra.mrb[0].mxu0 %v937
      %v1001 = vpop.f32.mrb[0].mxu0
      %v1002 = vadd.f32 0.0, %v1001
      %v1003 = vpop.f32.mrb[0].mxu0
      %v1004 = vpop.f32.mrb[0].mxu0
      %v1005 = vadd.f32 0.0, %v1004
      %v1006 = vpop.f32.mrb[0].mxu0
      %1007 = vmatprep.mubr.bf16.mxu0 0
      %1008 = vmatmul.mubr.bf16.gmra.mrb[0].mxu0 %v940
      %v1009 = vpop.f32.mrb[0].mxu0
      %v1010 = vadd.f32 0.0, %v1009
      %v1011 = vpop.f32.mrb[0].mxu0
      %v1012 = vpop.f32.mrb[0].mxu0
      %v1013 = vadd.f32 0.0, %v1012
      %v1014 = vpop.f32.mrb[0].mxu0
      %1015 = vmatprep.mubr.bf16.mxu0 0
      %1016 = vmatmul.mubr.bf16.gmra.mrb[0].mxu0 %v943
      %v1017 = vpop.f32.mrb[0].mxu0
      %v1018 = vadd.f32 0.0, %v1017
      %v1019 = vpop.f32.mrb[0].mxu0
      %v1020 = vpop.f32.mrb[0].mxu0
      %v1021 = vadd.f32 0.0, %v1020
      %v1022 = vpop.f32.mrb[0].mxu0
      %1023 = vmatprep.mubr.bf16.mxu0 0
      %1024 = vmatmul.mubr.bf16.gmra.mrb[0].mxu0 %v946
      %v1025 = vpop.f32.mrb[0].mxu0
      %v1026 = vadd.f32 0.0, %v1025
      %v1027 = vpop.f32.mrb[0].mxu0
      %v1028 = vpop.f32.mrb[0].mxu0
      %v1029 = vadd.f32 0.0, %v1028
      %v1030 = vpop.f32.mrb[0].mxu0
      %1031 = vmatprep.mubr.bf16.mxu0 0
      %1032 = vmatmul.mubr.bf16.gmra.mrb[0].mxu0 %v949
      %v1033 = vpop.f32.mrb[0].mxu0
      %v1034 = vadd.f32 0.0, %v1033
      %v1035 = vpop.f32.mrb[0].mxu0
      %v1036 = vpop.f32.mrb[0].mxu0
      %v1037 = vpop.f32.mrb[0].mxu0
      %1038 = vdwg.mxu0
      %v1039 = vadd.f32 %v888, %v986
      %v1040 = vadd.f32 %v889, %v989
      %v1041 = vadd.f32 %v890, %v994
      %v1042 = vadd.f32 %v891, %v997
      %v1043 = vadd.f32 %v892, %v1002
      %v1044 = vadd.f32 %v893, %v1005
      %v1045 = vadd.f32 %v894, %v1010
      %v1046 = vadd.f32 %v895, %v1013
      %v1047 = vadd.f32 %v896, %v1018
      %v1048 = vadd.f32 %v897, %v1021
      %v1049 = vadd.f32 %v898, %v1026
      %v1050 = vadd.f32 %v899, %v1029
      %v1051 = vadd.f32 %v900, %v1034
      %v1052 = vld [vmem:[%s165 + $0x14] sm:$0xff]
      %v1053 = vld [vmem:[%s165 + $0x1c] sm:$0xff]
      %v1054 = vld [vmem:[%s165 + $0x24] sm:$0xff]
      %v1055 = vld [vmem:[%s165 + $0x2c] sm:$0xff]
      %v1056 = vld [vmem:[%s165 + $0x34] sm:$0xff]
      %v1057 = vld [vmem:[%s165 + $0x3c] sm:$0xff]
      %v1058 = vld [vmem:[%s165 + $0x44] sm:$0xff]
      %v1059 = vld [vmem:[%s165 + $0x4c] sm:$0xff]
      %v1060 = vld [vmem:[%s165 + $0x54] sm:$0xff]
      %v1061 = vld [vmem:[%s165 + $0x5c] sm:$0xff]
      %v1062 = vld [vmem:[%s165 + $0x64] sm:$0xff]
      %v1063 = vld [vmem:[%s165 + $0x6c] sm:$0xff]
      %v1064 = vld [vmem:[%s165 + $0x74] sm:$0xf]
      %v1065 = vpack.c.bf16 %v1053, %v1052
      %v1066 = vpack.c.bf16 %v1055, %v1054
      %v1067 = vpack.c.bf16 %v1057, %v1056
      %v1068 = vpack.c.bf16 %v1059, %v1058
      %v1069 = vpack.c.bf16 %v1061, %v1060
      %v1070 = vpack.c.bf16 %v1063, %v1062
      %v1071 = vpack.c.bf16 %v1064, %v1064
      %s1072 = scalar_lea.vmem %s1, 48
      %v1073 = vld [vmem:[%s1072] sm:$0xf]
      %v1074 = vld [vmem:[%s1072 + $0x4] sm:$0xf]
      %v1077 = vunpack.c.l.b16 %v1073
      %v1078 = vunpack.c.l.b16 %v1074
      %v1079 = vpack.c.b16 %v1078, %v1077
      %v1082 = vsel %vm223, %v1065, 0
      %v1085 = vsel %vm223, %v1066, 0
      %v1088 = vsel %vm223, %v1067, 0
      %v1091 = vsel %vm223, %v1068, 0
      %v1094 = vsel %vm223, %v1069, 0
      %v1097 = vsel %vm223, %v1070, 0
      %v1100 = vsel %vm223, %v1071, 0
      %1102 = vmatprep.subr.bf16.mxu0 0
      %1103 = vmatpush1.bf16.msra.mxu0 %v1079
      %1104 = vmatprep.subr.bf16.mxu0 0
      %1105 = vmatpush1.bf16.msra.mxu0 0
      %1106 = vmatprep.subr.bf16.mxu0 0
      %1107 = vmatpush1.bf16.msra.mxu0 0
      %1108 = vmatprep.subr.bf16.mxu0 0
      %1109 = vmatpush1.bf16.msra.mxu0 0
      %1110 = vmatprep.subr.bf16.mxu0 0
      %1111 = vmatpush1.bf16.msra.mxu0 0
      %1112 = vmatprep.subr.bf16.mxu0 0
      %1113 = vmatpush1.bf16.msra.mxu0 0
      %1114 = vmatprep.subr.bf16.mxu0 0
      %1115 = vmatpush1.bf16.msra.mxu0 0
      %1116 = vmatprep.subr.bf16.mxu0 0
      %1117 = vmatpush1.bf16.msra.mxu0 0
      %1118 = vmatprep.subr.bf16.mxu0 0
      %1119 = vmatpush1.bf16.msra.mxu0 0
      %1120 = vmatprep.subr.bf16.mxu0 0
      %1121 = vmatpush1.bf16.msra.mxu0 0
      %1122 = vmatprep.subr.bf16.mxu0 0
      %1123 = vmatpush1.bf16.msra.mxu0 0
      %1124 = vmatprep.subr.bf16.mxu0 0
      %1125 = vmatpush1.bf16.msra.mxu0 0
      %1126 = vmatprep.subr.bf16.mxu0 0
      %1127 = vmatpush1.bf16.msra.mxu0 0
      %1128 = vmatprep.subr.bf16.mxu0 0
      %1129 = vmatpush1.bf16.msra.mxu0 0
      %1130 = vmatprep.subr.bf16.mxu0 0
      %1131 = vmatpush1.bf16.msra.mxu0 0
      %1132 = vmatprep.subr.bf16.mxu0 0
      %1133 = vmatpush1.bf16.msra.mxu0 0
      %1134 = vmatprep.mubr.bf16.mxu0 0
      %1135 = vmatmul.mubr.bf16.gmra.mrb[0].mxu0 %v1082
      %v1136 = vpop.f32.mrb[0].mxu0
      %v1137 = vadd.f32 0.0, %v1136
      %v1138 = vpop.f32.mrb[0].mxu0
      %v1139 = vpop.f32.mrb[0].mxu0
      %v1140 = vadd.f32 0.0, %v1139
      %v1141 = vpop.f32.mrb[0].mxu0
      %1142 = vmatprep.mubr.bf16.mxu0 0
      %1143 = vmatmul.mubr.bf16.gmra.mrb[0].mxu0 %v1085
      %v1144 = vpop.f32.mrb[0].mxu0
      %v1145 = vadd.f32 0.0, %v1144
      %v1146 = vpop.f32.mrb[0].mxu0
      %v1147 = vpop.f32.mrb[0].mxu0
      %v1148 = vadd.f32 0.0, %v1147
      %v1149 = vpop.f32.mrb[0].mxu0
      %1150 = vmatprep.mubr.bf16.mxu0 0
      %1151 = vmatmul.mubr.bf16.gmra.mrb[0].mxu0 %v1088
      %v1152 = vpop.f32.mrb[0].mxu0
      %v1153 = vadd.f32 0.0, %v1152
      %v1154 = vpop.f32.mrb[0].mxu0
      %v1155 = vpop.f32.mrb[0].mxu0
      %v1156 = vadd.f32 0.0, %v1155
      %v1157 = vpop.f32.mrb[0].mxu0
      %1158 = vmatprep.mubr.bf16.mxu0 0
      %1159 = vmatmul.mubr.bf16.gmra.mrb[0].mxu0 %v1091
      %v1160 = vpop.f32.mrb[0].mxu0
      %v1161 = vadd.f32 0.0, %v1160
      %v1162 = vpop.f32.mrb[0].mxu0
      %v1163 = vpop.f32.mrb[0].mxu0
      %v1164 = vadd.f32 0.0, %v1163
      %v1165 = vpop.f32.mrb[0].mxu0
      %1166 = vmatprep.mubr.bf16.mxu0 0
      %1167 = vmatmul.mubr.bf16.gmra.mrb[0].mxu0 %v1094
      %v1168 = vpop.f32.mrb[0].mxu0
      %v1169 = vadd.f32 0.0, %v1168
      %v1170 = vpop.f32.mrb[0].mxu0
      %v1171 = vpop.f32.mrb[0].mxu0
      %v1172 = vadd.f32 0.0, %v1171
      %v1173 = vpop.f32.mrb[0].mxu0
      %1174 = vmatprep.mubr.bf16.mxu0 0
      %1175 = vmatmul.mubr.bf16.gmra.mrb[0].mxu0 %v1097
      %v1176 = vpop.f32.mrb[0].mxu0
      %v1177 = vadd.f32 0.0, %v1176
      %v1178 = vpop.f32.mrb[0].mxu0
      %v1179 = vpop.f32.mrb[0].mxu0
      %v1180 = vadd.f32 0.0, %v1179
      %v1181 = vpop.f32.mrb[0].mxu0
      %1182 = vmatprep.mubr.bf16.mxu0 0
      %1183 = vmatmul.mubr.bf16.gmra.mrb[0].mxu0 %v1100
      %v1184 = vpop.f32.mrb[0].mxu0
      %v1185 = vadd.f32 0.0, %v1184
      %v1186 = vpop.f32.mrb[0].mxu0
      %v1187 = vpop.f32.mrb[0].mxu0
      %v1188 = vpop.f32.mrb[0].mxu0
      %1189 = vdwg.mxu0
      %v1190 = vadd.f32 %v1039, %v1137
      %v1191 = vadd.f32 %v1040, %v1140
      %v1192 = vadd.f32 %v1041, %v1145
      %v1193 = vadd.f32 %v1042, %v1148
      %v1194 = vadd.f32 %v1043, %v1153
      %v1195 = vadd.f32 %v1044, %v1156
      %v1196 = vadd.f32 %v1045, %v1161
      %v1197 = vadd.f32 %v1046, %v1164
      %v1198 = vadd.f32 %v1047, %v1169
      %v1199 = vadd.f32 %v1048, %v1172
      %v1200 = vadd.f32 %v1049, %v1177
      %v1201 = vadd.f32 %v1050, %v1180
      %v1202 = vadd.f32 %v1051, %v1185
      %v1203 = vld [vmem:[%s165 + $0x15] sm:$0xff]
      %v1204 = vld [vmem:[%s165 + $0x1d] sm:$0xff]
      %v1205 = vld [vmem:[%s165 + $0x25] sm:$0xff]
      %v1206 = vld [vmem:[%s165 + $0x2d] sm:$0xff]
      %v1207 = vld [vmem:[%s165 + $0x35] sm:$0xff]
      %v1208 = vld [vmem:[%s165 + $0x3d] sm:$0xff]
      %v1209 = vld [vmem:[%s165 + $0x45] sm:$0xff]
      %v1210 = vld [vmem:[%s165 + $0x4d] sm:$0xff]
      %v1211 = vld [vmem:[%s165 + $0x55] sm:$0xff]
      %v1212 = vld [vmem:[%s165 + $0x5d] sm:$0xff]
      %v1213 = vld [vmem:[%s165 + $0x65] sm:$0xff]
      %v1214 = vld [vmem:[%s165 + $0x6d] sm:$0xff]
      %v1215 = vld [vmem:[%s165 + $0x75] sm:$0xf]
      %v1216 = vpack.c.bf16 %v1204, %v1203
      %v1217 = vpack.c.bf16 %v1206, %v1205
      %v1218 = vpack.c.bf16 %v1208, %v1207
      %v1219 = vpack.c.bf16 %v1210, %v1209
      %v1220 = vpack.c.bf16 %v1212, %v1211
      %v1221 = vpack.c.bf16 %v1214, %v1213
      %v1222 = vpack.c.bf16 %v1215, %v1215
      %s1223 = scalar_lea.vmem %s1, 56
      %v1224 = vld [vmem:[%s1223] sm:$0xf]
      %v1225 = vld [vmem:[%s1223 + $0x4] sm:$0xf]
      %v1228 = vunpack.c.l.b16 %v1224
      %v1229 = vunpack.c.l.b16 %v1225
      %v1230 = vpack.c.b16 %v1229, %v1228
      %v1233 = vsel %vm223, %v1216, 0
      %v1236 = vsel %vm223, %v1217, 0
      %v1239 = vsel %vm223, %v1218, 0
      %v1242 = vsel %vm223, %v1219, 0
      %v1245 = vsel %vm223, %v1220, 0
      %v1248 = vsel %vm223, %v1221, 0
      %v1251 = vsel %vm223, %v1222, 0
      %1253 = vmatprep.subr.bf16.mxu0 0
      %1254 = vmatpush1.bf16.msra.mxu0 %v1230
      %1255 = vmatprep.subr.bf16.mxu0 0
      %1256 = vmatpush1.bf16.msra.mxu0 0
      %1257 = vmatprep.subr.bf16.mxu0 0
      %1258 = vmatpush1.bf16.msra.mxu0 0
      %1259 = vmatprep.subr.bf16.mxu0 0
      %1260 = vmatpush1.bf16.msra.mxu0 0
      %1261 = vmatprep.subr.bf16.mxu0 0
      %1262 = vmatpush1.bf16.msra.mxu0 0
      %1263 = vmatprep.subr.bf16.mxu0 0
      %1264 = vmatpush1.bf16.msra.mxu0 0
      %1265 = vmatprep.subr.bf16.mxu0 0
      %1266 = vmatpush1.bf16.msra.mxu0 0
      %1267 = vmatprep.subr.bf16.mxu0 0
      %1268 = vmatpush1.bf16.msra.mxu0 0
      %1269 = vmatprep.subr.bf16.mxu0 0
      %1270 = vmatpush1.bf16.msra.mxu0 0
      %1271 = vmatprep.subr.bf16.mxu0 0
      %1272 = vmatpush1.bf16.msra.mxu0 0
      %1273 = vmatprep.subr.bf16.mxu0 0
      %1274 = vmatpush1.bf16.msra.mxu0 0
      %1275 = vmatprep.subr.bf16.mxu0 0
      %1276 = vmatpush1.bf16.msra.mxu0 0
      %1277 = vmatprep.subr.bf16.mxu0 0
      %1278 = vmatpush1.bf16.msra.mxu0 0
      %1279 = vmatprep.subr.bf16.mxu0 0
      %1280 = vmatpush1.bf16.msra.mxu0 0
      %1281 = vmatprep.subr.bf16.mxu0 0
      %1282 = vmatpush1.bf16.msra.mxu0 0
      %1283 = vmatprep.subr.bf16.mxu0 0
      %1284 = vmatpush1.bf16.msra.mxu0 0
      %1285 = vmatprep.mubr.bf16.mxu0 0
      %1286 = vmatmul.mubr.bf16.gmra.mrb[0].mxu0 %v1233
      %v1287 = vpop.f32.mrb[0].mxu0
      %v1288 = vadd.f32 0.0, %v1287
      %v1289 = vpop.f32.mrb[0].mxu0
      %v1290 = vpop.f32.mrb[0].mxu0
      %v1291 = vadd.f32 0.0, %v1290
      %v1292 = vpop.f32.mrb[0].mxu0
      %1293 = vmatprep.mubr.bf16.mxu0 0
      %1294 = vmatmul.mubr.bf16.gmra.mrb[0].mxu0 %v1236
      %v1295 = vpop.f32.mrb[0].mxu0
      %v1296 = vadd.f32 0.0, %v1295
      %v1297 = vpop.f32.mrb[0].mxu0
      %v1298 = vpop.f32.mrb[0].mxu0
      %v1299 = vadd.f32 0.0, %v1298
      %v1300 = vpop.f32.mrb[0].mxu0
      %1301 = vmatprep.mubr.bf16.mxu0 0
      %1302 = vmatmul.mubr.bf16.gmra.mrb[0].mxu0 %v1239
      %v1303 = vpop.f32.mrb[0].mxu0
      %v1304 = vadd.f32 0.0, %v1303
      %v1305 = vpop.f32.mrb[0].mxu0
      %v1306 = vpop.f32.mrb[0].mxu0
      %v1307 = vadd.f32 0.0, %v1306
      %v1308 = vpop.f32.mrb[0].mxu0
      %1309 = vmatprep.mubr.bf16.mxu0 0
      %1310 = vmatmul.mubr.bf16.gmra.mrb[0].mxu0 %v1242
      %v1311 = vpop.f32.mrb[0].mxu0
      %v1312 = vadd.f32 0.0, %v1311
      %v1313 = vpop.f32.mrb[0].mxu0
      %v1314 = vpop.f32.mrb[0].mxu0
      %v1315 = vadd.f32 0.0, %v1314
      %v1316 = vpop.f32.mrb[0].mxu0
      %1317 = vmatprep.mubr.bf16.mxu0 0
      %1318 = vmatmul.mubr.bf16.gmra.mrb[0].mxu0 %v1245
      %v1319 = vpop.f32.mrb[0].mxu0
      %v1320 = vadd.f32 0.0, %v1319
      %v1321 = vpop.f32.mrb[0].mxu0
      %v1322 = vpop.f32.mrb[0].mxu0
      %v1323 = vadd.f32 0.0, %v1322
      %v1324 = vpop.f32.mrb[0].mxu0
      %1325 = vmatprep.mubr.bf16.mxu0 0
      %1326 = vmatmul.mubr.bf16.gmra.mrb[0].mxu0 %v1248
      %v1327 = vpop.f32.mrb[0].mxu0
      %v1328 = vadd.f32 0.0, %v1327
      %v1329 = vpop.f32.mrb[0].mxu0
      %v1330 = vpop.f32.mrb[0].mxu0
      %v1331 = vadd.f32 0.0, %v1330
      %v1332 = vpop.f32.mrb[0].mxu0
      %1333 = vmatprep.mubr.bf16.mxu0 0
      %1334 = vmatmul.mubr.bf16.gmra.mrb[0].mxu0 %v1251
      %v1335 = vpop.f32.mrb[0].mxu0
      %v1336 = vadd.f32 0.0, %v1335
      %v1337 = vpop.f32.mrb[0].mxu0
      %v1338 = vpop.f32.mrb[0].mxu0
      %v1339 = vpop.f32.mrb[0].mxu0
      %1340 = vdwg.mxu0
      %v1341 = vadd.f32 %v1190, %v1288
      %v1342 = vadd.f32 %v1191, %v1291
      %v1343 = vadd.f32 %v1192, %v1296
      %v1344 = vadd.f32 %v1193, %v1299
      %v1345 = vadd.f32 %v1194, %v1304
      %v1346 = vadd.f32 %v1195, %v1307
      %v1347 = vadd.f32 %v1196, %v1312
      %v1348 = vadd.f32 %v1197, %v1315
      %v1349 = vadd.f32 %v1198, %v1320
      %v1350 = vadd.f32 %v1199, %v1323
      %v1351 = vadd.f32 %v1200, %v1328
      %v1352 = vadd.f32 %v1201, %v1331
      %v1353 = vadd.f32 %v1202, %v1336
      %v1354 = vld [vmem:[%s165 + $0x16] sm:$0xff]
      %v1355 = vld [vmem:[%s165 + $0x1e] sm:$0xff]
      %v1356 = vld [vmem:[%s165 + $0x26] sm:$0xff]
      %v1357 = vld [vmem:[%s165 + $0x2e] sm:$0xff]
      %v1358 = vld [vmem:[%s165 + $0x36] sm:$0xff]
      %v1359 = vld [vmem:[%s165 + $0x3e] sm:$0xff]
      %v1360 = vld [vmem:[%s165 + $0x46] sm:$0xff]
      %v1361 = vld [vmem:[%s165 + $0x4e] sm:$0xff]
      %v1362 = vld [vmem:[%s165 + $0x56] sm:$0xff]
      %v1363 = vld [vmem:[%s165 + $0x5e] sm:$0xff]
      %v1364 = vld [vmem:[%s165 + $0x66] sm:$0xff]
      %v1365 = vld [vmem:[%s165 + $0x6e] sm:$0xff]
      %v1366 = vld [vmem:[%s165 + $0x76] sm:$0xf]
      %v1367 = vpack.c.bf16 %v1355, %v1354
      %v1368 = vpack.c.bf16 %v1357, %v1356
      %v1369 = vpack.c.bf16 %v1359, %v1358
      %v1370 = vpack.c.bf16 %v1361, %v1360
      %v1371 = vpack.c.bf16 %v1363, %v1362
      %v1372 = vpack.c.bf16 %v1365, %v1364
      %v1373 = vpack.c.bf16 %v1366, %v1366
      %s1374 = scalar_lea.vmem %s1, 64
      %v1375 = vld [vmem:[%s1374] sm:$0xf]
      %v1376 = vld [vmem:[%s1374 + $0x4] sm:$0xf]
      %v1379 = vunpack.c.l.b16 %v1375
      %v1380 = vunpack.c.l.b16 %v1376
      %v1381 = vpack.c.b16 %v1380, %v1379
      %v1384 = vsel %vm223, %v1367, 0
      %v1387 = vsel %vm223, %v1368, 0
      %v1390 = vsel %vm223, %v1369, 0
      %v1393 = vsel %vm223, %v1370, 0
      %v1396 = vsel %vm223, %v1371, 0
      %v1399 = vsel %vm223, %v1372, 0
      %v1402 = vsel %vm223, %v1373, 0
      %1404 = vmatprep.subr.bf16.mxu0 0
      %1405 = vmatpush1.bf16.msra.mxu0 %v1381
      %1406 = vmatprep.subr.bf16.mxu0 0
      %1407 = vmatpush1.bf16.msra.mxu0 0
      %1408 = vmatprep.subr.bf16.mxu0 0
      %1409 = vmatpush1.bf16.msra.mxu0 0
      %1410 = vmatprep.subr.bf16.mxu0 0
      %1411 = vmatpush1.bf16.msra.mxu0 0
      %1412 = vmatprep.subr.bf16.mxu0 0
      %1413 = vmatpush1.bf16.msra.mxu0 0
      %1414 = vmatprep.subr.bf16.mxu0 0
      %1415 = vmatpush1.bf16.msra.mxu0 0
      %1416 = vmatprep.subr.bf16.mxu0 0
      %1417 = vmatpush1.bf16.msra.mxu0 0
      %1418 = vmatprep.subr.bf16.mxu0 0
      %1419 = vmatpush1.bf16.msra.mxu0 0
      %1420 = vmatprep.subr.bf16.mxu0 0
      %1421 = vmatpush1.bf16.msra.mxu0 0
      %1422 = vmatprep.subr.bf16.mxu0 0
      %1423 = vmatpush1.bf16.msra.mxu0 0
      %1424 = vmatprep.subr.bf16.mxu0 0
      %1425 = vmatpush1.bf16.msra.mxu0 0
      %1426 = vmatprep.subr.bf16.mxu0 0
      %1427 = vmatpush1.bf16.msra.mxu0 0
      %1428 = vmatprep.subr.bf16.mxu0 0
      %1429 = vmatpush1.bf16.msra.mxu0 0
      %1430 = vmatprep.subr.bf16.mxu0 0
      %1431 = vmatpush1.bf16.msra.mxu0 0
      %1432 = vmatprep.subr.bf16.mxu0 0
      %1433 = vmatpush1.bf16.msra.mxu0 0
      %1434 = vmatprep.subr.bf16.mxu0 0
      %1435 = vmatpush1.bf16.msra.mxu0 0
      %1436 = vmatprep.mubr.bf16.mxu0 0
      %1437 = vmatmul.mubr.bf16.gmra.mrb[0].mxu0 %v1384
      %v1438 = vpop.f32.mrb[0].mxu0
      %v1439 = vadd.f32 0.0, %v1438
      %v1440 = vpop.f32.mrb[0].mxu0
      %v1441 = vpop.f32.mrb[0].mxu0
      %v1442 = vadd.f32 0.0, %v1441
      %v1443 = vpop.f32.mrb[0].mxu0
      %1444 = vmatprep.mubr.bf16.mxu0 0
      %1445 = vmatmul.mubr.bf16.gmra.mrb[0].mxu0 %v1387
      %v1446 = vpop.f32.mrb[0].mxu0
      %v1447 = vadd.f32 0.0, %v1446
      %v1448 = vpop.f32.mrb[0].mxu0
      %v1449 = vpop.f32.mrb[0].mxu0
      %v1450 = vadd.f32 0.0, %v1449
      %v1451 = vpop.f32.mrb[0].mxu0
      %1452 = vmatprep.mubr.bf16.mxu0 0
      %1453 = vmatmul.mubr.bf16.gmra.mrb[0].mxu0 %v1390
      %v1454 = vpop.f32.mrb[0].mxu0
      %v1455 = vadd.f32 0.0, %v1454
      %v1456 = vpop.f32.mrb[0].mxu0
      %v1457 = vpop.f32.mrb[0].mxu0
      %v1458 = vadd.f32 0.0, %v1457
      %v1459 = vpop.f32.mrb[0].mxu0
      %1460 = vmatprep.mubr.bf16.mxu0 0
      %1461 = vmatmul.mubr.bf16.gmra.mrb[0].mxu0 %v1393
      %v1462 = vpop.f32.mrb[0].mxu0
      %v1463 = vadd.f32 0.0, %v1462
      %v1464 = vpop.f32.mrb[0].mxu0
      %v1465 = vpop.f32.mrb[0].mxu0
      %v1466 = vadd.f32 0.0, %v1465
      %v1467 = vpop.f32.mrb[0].mxu0
      %1468 = vmatprep.mubr.bf16.mxu0 0
      %1469 = vmatmul.mubr.bf16.gmra.mrb[0].mxu0 %v1396
      %v1470 = vpop.f32.mrb[0].mxu0
      %v1471 = vadd.f32 0.0, %v1470
      %v1472 = vpop.f32.mrb[0].mxu0
      %v1473 = vpop.f32.mrb[0].mxu0
      %v1474 = vadd.f32 0.0, %v1473
      %v1475 = vpop.f32.mrb[0].mxu0
      %1476 = vmatprep.mubr.bf16.mxu0 0
      %1477 = vmatmul.mubr.bf16.gmra.mrb[0].mxu0 %v1399
      %v1478 = vpop.f32.mrb[0].mxu0
      %v1479 = vadd.f32 0.0, %v1478
      %v1480 = vpop.f32.mrb[0].mxu0
      %v1481 = vpop.f32.mrb[0].mxu0
      %v1482 = vadd.f32 0.0, %v1481
      %v1483 = vpop.f32.mrb[0].mxu0
      %1484 = vmatprep.mubr.bf16.mxu0 0
      %1485 = vmatmul.mubr.bf16.gmra.mrb[0].mxu0 %v1402
      %v1486 = vpop.f32.mrb[0].mxu0
      %v1487 = vadd.f32 0.0, %v1486
      %v1488 = vpop.f32.mrb[0].mxu0
      %v1489 = vpop.f32.mrb[0].mxu0
      %v1490 = vpop.f32.mrb[0].mxu0
      %1491 = vdwg.mxu0
      %v1492 = vadd.f32 %v1341, %v1439
      %v1493 = vadd.f32 %v1342, %v1442
      %v1494 = vadd.f32 %v1343, %v1447
      %v1495 = vadd.f32 %v1344, %v1450
      %v1496 = vadd.f32 %v1345, %v1455
      %v1497 = vadd.f32 %v1346, %v1458
      %v1498 = vadd.f32 %v1347, %v1463
      %v1499 = vadd.f32 %v1348, %v1466
      %v1500 = vadd.f32 %v1349, %v1471
      %v1501 = vadd.f32 %v1350, %v1474
      %v1502 = vadd.f32 %v1351, %v1479
      %v1503 = vadd.f32 %v1352, %v1482
      %v1504 = vadd.f32 %v1353, %v1487
      %v1505 = vld [vmem:[%s2] sm:$0x1]
      %v1507 = vlaneseq
      %v1508 = vshrl.u32 %v1507, 7
      %v1509 = vsub.s32 0, %v1508
      %v1510 = vrot.slane %v1505, %v1509
      %v1512 = vadd.f32 %v1492, %v1510
      %v1513 = vadd.f32 %v1493, %v1510
      %v1514 = vadd.f32 %v1494, %v1510
      %v1515 = vadd.f32 %v1495, %v1510
      %v1516 = vadd.f32 %v1496, %v1510
      %v1517 = vadd.f32 %v1497, %v1510
      %v1518 = vadd.f32 %v1498, %v1510
      %v1519 = vadd.f32 %v1499, %v1510
      %v1520 = vadd.f32 %v1500, %v1510
      %v1521 = vadd.f32 %v1501, %v1510
      %v1522 = vadd.f32 %v1502, %v1510
      %v1523 = vadd.f32 %v1503, %v1510
      %v1524 = vadd.f32 %v1504, %v1510
      %1525 = vst.msk [vmem:[%s170] sm:$0xff] %vm223, %v1512
      %1526 = vst.msk [vmem:[%s170 + $0x8] sm:$0xff] %vm223, %v1513
      %1527 = vst.msk [vmem:[%s170 + $0x10] sm:$0xff] %vm223, %v1514
      %1528 = vst.msk [vmem:[%s170 + $0x18] sm:$0xff] %vm223, %v1515
      %1529 = vst.msk [vmem:[%s170 + $0x20] sm:$0xff] %vm223, %v1516
      %1530 = vst.msk [vmem:[%s170 + $0x28] sm:$0xff] %vm223, %v1517
      %1531 = vst.msk [vmem:[%s170 + $0x30] sm:$0xff] %vm223, %v1518
      %1532 = vst.msk [vmem:[%s170 + $0x38] sm:$0xff] %vm223, %v1519
      %1533 = vst.msk [vmem:[%s170 + $0x40] sm:$0xff] %vm223, %v1520
      %1534 = vst.msk [vmem:[%s170 + $0x48] sm:$0xff] %vm223, %v1521
      %1535 = vst.msk [vmem:[%s170 + $0x50] sm:$0xff] %vm223, %v1522
      %1536 = vst.msk [vmem:[%s170 + $0x58] sm:$0xff] %vm223, %v1523
      %vm1537 = vcmask 125952
      %1538 = vst.msk [vmem:[%s170 + $0x60] sm:$0xf] %vm1537, %v1524
      %p1539 = scmp.lt.s32.totalorder %s14, 1
      %s1540 = scalar_select %p1539, %s14, 1
      %s1541 = smul.addr %s1540, 13
      %s1542 = smul.addr %s1541, 8
      %s1543 = scalar_lea.vmem %s3, %s1542
      // Predicated region
      $region33: #{review_kd_forward.9} parent=31 // pred_check
        %p1544 = pneg %p100
      $region34: #{review_kd_forward.9} parent=31 // pred_check_branch
        %1546 = sbr.rel (%p1544) target = $region36
      $region35: #{review_kd_forward.9} parent=31 // pred_region
        _
      $region36: #{review_kd_forward.9} parent=31 // pred_fallthru
        _
    $region32: #{review_kd_forward.9} parent=5 // pred_fallthru
      _
    %p1547 = scmp.le.s32.totalorder 2, %s9
    // Predicated region
    $region37: #{review_kd_forward.9} parent=5 // pred_check
      %p1548 = pneg %p1547
    $region38: #{review_kd_forward.9} parent=5 // pred_check_branch
      %1550 = sbr.rel (%p1548) target = $region40
    $region39: #{review_kd_forward.9} parent=5 // pred_region
      %s1551 = ssub.s32 %s9, 2
      // Predicated region
      $region41: #{review_kd_forward.9} parent=39 // pred_check
        %p1552 = pneg %p106
      $region42: #{review_kd_forward.9} parent=39 // pred_check_branch
        %1554 = sbr.rel (%p1552) target = $region44
      $region43: #{review_kd_forward.9} parent=39 // pred_region
        %p1555 = scmp.lt.s32.totalorder %s15, 1
        %s1556 = scalar_select %p1555, %s15, 1
        %s1557 = smul.addr %s1556, 13
        %s1558 = smul.addr %s1557, 8
        %s1559 = scalar_lea.vmem %s3, %s1558
      $region44: #{review_kd_forward.9} parent=39 // pred_fallthru
        _
    $region40: #{review_kd_forward.9} parent=5 // pred_fallthru
      _
  $region6: #{review_kd_forward.9} parent=0 // loop_footer
    %s13 = sadd.s32 1, %s9
  $region7: #{review_kd_forward.9} parent=0 // loop_footer_branch
    %8 = sbr.rel target = $region3
  $region8: #{review_kd_forward.9} parent=0 // loop_exit
    _

// kernel: review_kd_forward.7
$region0: #{review_kd_forward.7}
  #allocation0 [shape = 'u32[]', space=smem, size = 0x4, offset = 0x4, fixed_abs, tag = 'smem constant byte address 0x4 - core index']
  #allocation1 [shape = 'u32[144,128]{1,0:T(1,128)}', space=vmem, size = 0x12000, scoped, tag = 'internal scratch']
  %s0 = inlined_call_operand.vmem [shape: f32[2,50,16], index: 0, kind: input, shape index: {}]
  %s1 = inlined_call_operand.vmem [shape: bf16[9,16,32], index: 1, kind: input, shape index: {}]
  %s2 = inlined_call_operand.vmem [shape: f32[1,32], index: 2, kind: input, shape index: {}]
  %s3 = inlined_call_operand.vmem [shape: f32[2,36,32], index: 3, kind: output, shape index: {}]
  %s4 = sld [smem:[#allocation0]]
  $region45: #{review_kd_forward.7} parent=0
    _
  %s6 = ssub.s32 1, %s4
  %s7 = scalar_select 0, %s6, %s4
  loop: start=0, step=1, limit=4
  $region2: #{review_kd_forward.7} parent=0 // loop_pre_header
    _
  $region3: #{review_kd_forward.7} parent=0 // loop_header
    %s9 = sphi 0, %s13
    %p10 = scmp.ge.s32.totalorder %s9, 4
    %s19 = sphi 0, %s21
    %s22 = sphi 0, %s19
    %s23 = sphi 0, %s22
    %s39 = sphi 0, %s23
    %s43 = sphi 0, %s43
    %s45 = sphi 0, %s43
    %s46 = sphi 0, %s45
    %s60 = sphi 0, %s46
    %s64 = sphi 0, %s64
    %s66 = sphi 0, %s64
    %s67 = sphi 0, %s66
    %s81 = sphi 0, %s67
    %s87 = sphi 0, %s89
    %s90 = sphi 0, %s87
    %s91 = sphi 0, %s90
    %s107 = sphi 0, %s91
  $region4: #{review_kd_forward.7} parent=0 // loop_header_branch
    %12 = sbr.rel (%p10) target = $region8
  $region5: #{review_kd_forward.7} parent=0 // loop_body
    %s14 = ssub.s32 %s9, 1
    %s15 = ssub.s32 %s9, 2
    %s16 = sadd.s32 %s9, 1
    %s17 = ssub.s32 %s9, %s16
    %p18 = scmp.eq.s32.totalorder %s17, 0
    %s20 = sadd.s32 %s19, 1
    %s21 = scalar_select %p18, %s19, %s20
    %p24 = pneg %p18
    %p25 = scmp.eq.s32.totalorder %s9, 1
    %p26 = por %p24, %p25
    %p27 = scmp.ne.s32.totalorder %s19, %s22
    %p28 = scmp.eq.s32.totalorder %s9, 0
    %p29 = por %p27, %p28
    %p30 = scmp.ne.s32.totalorder %s19, %s22
    %p31 = scmp.eq.s32.totalorder %s14, 1
    %p32 = por %p30, %p31
    %p33 = scmp.ne.s32.totalorder %s22, %s23
    %p34 = scmp.eq.s32.totalorder %s14, 0
    %p35 = por %p33, %p34
    %p36 = scmp.ne.s32.totalorder %s22, %s23
    %p37 = scmp.eq.s32.totalorder %s15, 1
    %p38 = por %p36, %p37
    %p40 = scmp.ne.s32.totalorder %s23, %s39
    %p41 = scmp.eq.s32.totalorder %s15, 0
    %p42 = por %p40, %p41
    %s44 = sadd.s32 %s43, 1
    %p47 = scmp.eq.s32.totalorder %s9, 1
    %p48 = scmp.ne.s32.totalorder %s43, %s45
    %p49 = scmp.eq.s32.totalorder %s9, 0
    %p50 = por %p48, %p49
    %p51 = scmp.ne.s32.totalorder %s43, %s45
    %p52 = scmp.eq.s32.totalorder %s14, 1
    %p53 = por %p51, %p52
    %p54 = scmp.ne.s32.totalorder %s45, %s46
    %p55 = scmp.eq.s32.totalorder %s14, 0
    %p56 = por %p54, %p55
    %p57 = scmp.ne.s32.totalorder %s45, %s46
    %p58 = scmp.eq.s32.totalorder %s15, 1
    %p59 = por %p57, %p58
    %p61 = scmp.ne.s32.totalorder %s46, %s60
    %p62 = scmp.eq.s32.totalorder %s15, 0
    %p63 = por %p61, %p62
    %s65 = sadd.s32 %s64, 1
    %p68 = scmp.eq.s32.totalorder %s9, 1
    %p69 = scmp.ne.s32.totalorder %s64, %s66
    %p70 = scmp.eq.s32.totalorder %s9, 0
    %p71 = por %p69, %p70
    %p72 = scmp.ne.s32.totalorder %s64, %s66
    %p73 = scmp.eq.s32.totalorder %s14, 1
    %p74 = por %p72, %p73
    %p75 = scmp.ne.s32.totalorder %s66, %s67
    %p76 = scmp.eq.s32.totalorder %s14, 0
    %p77 = por %p75, %p76
    %p78 = scmp.ne.s32.totalorder %s66, %s67
    %p79 = scmp.eq.s32.totalorder %s15, 1
    %p80 = por %p78, %p79
    %p82 = scmp.ne.s32.totalorder %s67, %s81
    %p83 = scmp.eq.s32.totalorder %s15, 0
    %p84 = por %p82, %p83
    %s85 = ssub.s32 %s9, %s16
    %p86 = scmp.eq.s32.totalorder %s85, 0
    %s88 = sadd.s32 %s87, 1
    %s89 = scalar_select %p86, %s87, %s88
    %p92 = pneg %p86
    %p93 = scmp.eq.s32.totalorder %s9, 1
    %p94 = por %p92, %p93
    %p95 = scmp.ne.s32.totalorder %s87, %s90
    %p96 = scmp.eq.s32.totalorder %s9, 0
    %p97 = por %p95, %p96
    %p98 = scmp.ne.s32.totalorder %s87, %s90
    %p99 = scmp.eq.s32.totalorder %s14, 1
    %p100 = por %p98, %p99
    %p101 = scmp.ne.s32.totalorder %s90, %s91
    %p102 = scmp.eq.s32.totalorder %s14, 0
    %p103 = por %p101, %p102
    %p104 = scmp.ne.s32.totalorder %s90, %s91
    %p105 = scmp.eq.s32.totalorder %s15, 1
    %p106 = por %p104, %p105
    %p108 = scmp.ne.s32.totalorder %s91, %s107
    %p109 = scmp.eq.s32.totalorder %s15, 0
    %p110 = por %p108, %p109
    %p111 = scmp.le.s32.totalorder 1, %s9
    %p112 = scmp.lt.s32.totalorder %s9, 3
    %p113 = pnand %p111, %p112
    %p114 = pneg %p113
    // Predicated region
    $region9: #{review_kd_forward.7} parent=5 // pred_check
      _
    $region10: #{review_kd_forward.7} parent=5 // pred_check_branch
      %116 = sbr.rel (%p113) target = $region12
    $region11: #{review_kd_forward.7} parent=5 // pred_region
      %s117 = ssub.s32 %s9, 1
      // Predicated region
      $region13: #{review_kd_forward.7} parent=11 // pred_check
        %p118 = pneg %p56
      $region14: #{review_kd_forward.7} parent=11 // pred_check_branch
        %120 = sbr.rel (%p118) target = $region16
      $region15: #{review_kd_forward.7} parent=11 // pred_region
        _
      $region16: #{review_kd_forward.7} parent=11 // pred_fallthru
        _
      // Predicated region
      $region17: #{review_kd_forward.7} parent=11 // pred_check
        %p121 = pneg %p77
      $region18: #{review_kd_forward.7} parent=11 // pred_check_branch
        %123 = sbr.rel (%p121) target = $region20
      $region19: #{review_kd_forward.7} parent=11 // pred_region
        _
      $region20: #{review_kd_forward.7} parent=11 // pred_fallthru
        _
    $region12: #{review_kd_forward.7} parent=5 // pred_fallthru
      _
    %p124 = scmp.lt.s32.totalorder %s9, 2
    // Predicated region
    $region21: #{review_kd_forward.7} parent=5 // pred_check
      %p125 = pneg %p124
    $region22: #{review_kd_forward.7} parent=5 // pred_check_branch
      %127 = sbr.rel (%p125) target = $region24
    $region23: #{review_kd_forward.7} parent=5 // pred_region
      // Predicated region
      $region25: #{review_kd_forward.7} parent=23 // pred_check
        %p128 = pneg %p29
      $region26: #{review_kd_forward.7} parent=23 // pred_check_branch
        %130 = sbr.rel (%p128) target = $region28
      $region27: #{review_kd_forward.7} parent=23 // pred_region
        %p131 = scmp.lt.s32.totalorder %s9, 1
        %s132 = scalar_select %p131, %s9, 1
        %s133 = smul.addr %s132, 7
        %s134 = smul.addr %s133, 8
        %s135 = scalar_lea.vmem %s0, %s134
      $region28: #{review_kd_forward.7} parent=23 // pred_fallthru
        _
    $region24: #{review_kd_forward.7} parent=5 // pred_fallthru
      _
    %p136 = scmp.le.s32.totalorder 1, %s9
    %p137 = scmp.lt.s32.totalorder %s9, 3
    %p138 = pnand %p136, %p137
    %p139 = pneg %p138
    // Predicated region
    $region29: #{review_kd_forward.7} parent=5 // pred_check
      _
    $region30: #{review_kd_forward.7} parent=5 // pred_check_branch
      %141 = sbr.rel (%p138) target = $region32
    $region31: #{review_kd_forward.7} parent=5 // pred_region
      %s142 = ssub.s32 %s9, 1
      %p143 = scmp.lt.s32.totalorder %s14, 1
      %s144 = scalar_select %p143, %s14, 1
      %s145 = smul.addr %s144, 7
      %s146 = smul.addr %s145, 8
      %s147 = scalar_lea.vmem %s0, %s146
      %p148 = pneg %p35
      %p149 = pneg %p32
      %p150 = pneg %p56
      %p151 = pneg %p53
      %p152 = pneg %p77
      %p153 = pneg %p74
      %p154 = pneg %p103
      %p155 = pneg %p100
      %p156 = scmp.lt.s32.totalorder %s14, 1
      %s157 = scalar_select %p156, %s14, 1
      %s158 = smul.addr %s157, 5
      %s159 = smul.addr %s158, 8
      %s160 = scalar_lea.vmem %s3, %s159
      %p161 = scmp.lt.s32.totalorder %s14, 1
      %s162 = scalar_select %p161, %s14, 1
      %s163 = smul.addr %s162, 7
      %s164 = smul.addr %s163, 8
      %s165 = scalar_lea.vmem %s0, %s164
      %p166 = scmp.lt.s32.totalorder %s14, 1
      %s167 = scalar_select %p166, %s14, 1
      %s168 = smul.addr %s167, 5
      %s169 = smul.addr %s168, 8
      %s170 = scalar_lea.vmem %s3, %s169
      %v172 = vld [vmem:[%s165] sm:$0xff]
      %v173 = vld [vmem:[%s165 + $0x8] sm:$0xff]
      %v174 = vld [vmem:[%s165 + $0x10] sm:$0xff]
      %v175 = vld [vmem:[%s165 + $0x18] sm:$0xff]
      %v176 = vld [vmem:[%s165 + $0x20] sm:$0xf]
      %v177 = vpack.c.bf16 %v173, %v172
      %v178 = vpack.c.bf16 %v175, %v174
      %v179 = vpack.c.bf16 %v176, %v176
      %v180 = vld [vmem:[%s1] sm:$0xf]
      %v181 = vld [vmem:[%s1 + $0x4] sm:$0xf]
      %v182 = vld [vmem:[%s165 + $0x1] sm:$0xff]
      %v183 = vld [vmem:[%s165 + $0x9] sm:$0xff]
      %v184 = vld [vmem:[%s165 + $0x11] sm:$0xff]
      %v185 = vld [vmem:[%s165 + $0x19] sm:$0xff]
      %v186 = vld [vmem:[%s165 + $0x21] sm:$0xf]
      %v187 = vpack.c.bf16 %v183, %v182
      %v188 = vpack.c.bf16 %v185, %v184
      %v189 = vpack.c.bf16 %v186, %v186
      %s190 = scalar_lea.vmem %s1, 8
      %v191 = vld [vmem:[%s190] sm:$0xf]
      %v192 = vld [vmem:[%s190 + $0x4] sm:$0xf]
      %v195 = vunpack.c.l.b16 %v191
      %v196 = vunpack.c.l.b16 %v192
      %v197 = vpack.c.b16 %v196, %v195
      %vm199 = vcmask 130048
      %v201 = vsel %vm199, %v187, 0
      %v204 = vsel %vm199, %v188, 0
      %v207 = vsel %vm199, %v189, 0
      %209 = vmatprep.subr.bf16.mxu0 0
      %210 = vmatpush1.bf16.msra.mxu0 %v197
      %211 = vmatprep.subr.bf16.mxu0 0
      %212 = vmatpush1.bf16.msra.mxu0 0
      %213 = vmatprep.subr.bf16.mxu0 0
      %214 = vmatpush1.bf16.msra.mxu0 0
      %215 = vmatprep.subr.bf16.mxu0 0
      %216 = vmatpush1.bf16.msra.mxu0 0
      %217 = vmatprep.subr.bf16.mxu0 0
      %218 = vmatpush1.bf16.msra.mxu0 0
      %219 = vmatprep.subr.bf16.mxu0 0
      %220 = vmatpush1.bf16.msra.mxu0 0
      %221 = vmatprep.subr.bf16.mxu0 0
      %222 = vmatpush1.bf16.msra.mxu0 0
      %223 = vmatprep.subr.bf16.mxu0 0
      %224 = vmatpush1.bf16.msra.mxu0 0
      %225 = vmatprep.subr.bf16.mxu0 0
      %226 = vmatpush1.bf16.msra.mxu0 0
      %227 = vmatprep.subr.bf16.mxu0 0
      %228 = vmatpush1.bf16.msra.mxu0 0
      %229 = vmatprep.subr.bf16.mxu0 0
      %230 = vmatpush1.bf16.msra.mxu0 0
      %231 = vmatprep.subr.bf16.mxu0 0
      %232 = vmatpush1.bf16.msra.mxu0 0
      %233 = vmatprep.subr.bf16.mxu0 0
      %234 = vmatpush1.bf16.msra.mxu0 0
      %235 = vmatprep.subr.bf16.mxu0 0
      %236 = vmatpush1.bf16.msra.mxu0 0
      %237 = vmatprep.subr.bf16.mxu0 0
      %238 = vmatpush1.bf16.msra.mxu0 0
      %239 = vmatprep.subr.bf16.mxu0 0
      %240 = vmatpush1.bf16.msra.mxu0 0
      %241 = vmatprep.mubr.bf16.mxu0 0
      %242 = vmatmul.mubr.bf16.gmra.mrb[0].mxu0 %v201
      %v243 = vpop.f32.mrb[0].mxu0
      %v244 = vadd.f32 0.0, %v243
      %v245 = vpop.f32.mrb[0].mxu0
      %v246 = vpop.f32.mrb[0].mxu0
      %v247 = vadd.f32 0.0, %v246
      %v248 = vpop.f32.mrb[0].mxu0
      %249 = vmatprep.mubr.bf16.mxu0 0
      %250 = vmatmul.mubr.bf16.gmra.mrb[0].mxu0 %v204
      %v251 = vpop.f32.mrb[0].mxu0
      %v252 = vadd.f32 0.0, %v251
      %v253 = vpop.f32.mrb[0].mxu0
      %v254 = vpop.f32.mrb[0].mxu0
      %v255 = vadd.f32 0.0, %v254
      %v256 = vpop.f32.mrb[0].mxu0
      %257 = vmatprep.mubr.bf16.mxu0 0
      %258 = vmatmul.mubr.bf16.gmra.mrb[0].mxu0 %v207
      %v259 = vpop.f32.mrb[0].mxu0
      %v260 = vadd.f32 0.0, %v259
      %v261 = vpop.f32.mrb[0].mxu0
      %v262 = vpop.f32.mrb[0].mxu0
      %v263 = vpop.f32.mrb[0].mxu0
      %264 = vdwg.mxu0
      %v267 = vunpack.c.l.b16 %v180
      %v268 = vunpack.c.l.b16 %v181
      %v269 = vpack.c.b16 %v268, %v267
      %v272 = vsel %vm199, %v177, 0
      %v275 = vsel %vm199, %v178, 0
      %v278 = vsel %vm199, %v179, 0
      %280 = vmatprep.subr.bf16.mxu0 0
      %281 = vmatpush1.bf16.msra.mxu0 %v269
      %282 = vmatprep.subr.bf16.mxu0 0
      %283 = vmatpush1.bf16.msra.mxu0 0
      %284 = vmatprep.subr.bf16.mxu0 0
      %285 = vmatpush1.bf16.msra.mxu0 0
      %286 = vmatprep.subr.bf16.mxu0 0
      %287 = vmatpush1.bf16.msra.mxu0 0
      %288 = vmatprep.subr.bf16.mxu0 0
      %289 = vmatpush1.bf16.msra.mxu0 0
      %290 = vmatprep.subr.bf16.mxu0 0
      %291 = vmatpush1.bf16.msra.mxu0 0
      %292 = vmatprep.subr.bf16.mxu0 0
      %293 = vmatpush1.bf16.msra.mxu0 0
      %294 = vmatprep.subr.bf16.mxu0 0
      %295 = vmatpush1.bf16.msra.mxu0 0
      %296 = vmatprep.subr.bf16.mxu0 0
      %297 = vmatpush1.bf16.msra.mxu0 0
      %298 = vmatprep.subr.bf16.mxu0 0
      %299 = vmatpush1.bf16.msra.mxu0 0
      %300 = vmatprep.subr.bf16.mxu0 0
      %301 = vmatpush1.bf16.msra.mxu0 0
      %302 = vmatprep.subr.bf16.mxu0 0
      %303 = vmatpush1.bf16.msra.mxu0 0
      %304 = vmatprep.subr.bf16.mxu0 0
      %305 = vmatpush1.bf16.msra.mxu0 0
      %306 = vmatprep.subr.bf16.mxu0 0
      %307 = vmatpush1.bf16.msra.mxu0 0
      %308 = vmatprep.subr.bf16.mxu0 0
      %309 = vmatpush1.bf16.msra.mxu0 0
      %310 = vmatprep.subr.bf16.mxu0 0
      %311 = vmatpush1.bf16.msra.mxu0 0
      %312 = vmatprep.mubr.bf16.mxu0 0
      %313 = vmatmul.mubr.bf16.gmra.mrb[0].mxu0 %v272
      %v314 = vpop.f32.mrb[0].mxu0
      %v315 = vadd.f32 %v244, %v314
      %v316 = vpop.f32.mrb[0].mxu0
      %v317 = vpop.f32.mrb[0].mxu0
      %v318 = vadd.f32 %v247, %v317
      %v319 = vpop.f32.mrb[0].mxu0
      %320 = vmatprep.mubr.bf16.mxu0 0
      %321 = vmatmul.mubr.bf16.gmra.mrb[0].mxu0 %v275
      %v322 = vpop.f32.mrb[0].mxu0
      %v323 = vadd.f32 %v252, %v322
      %v324 = vpop.f32.mrb[0].mxu0
      %v325 = vpop.f32.mrb[0].mxu0
      %v326 = vadd.f32 %v255, %v325
      %v327 = vpop.f32.mrb[0].mxu0
      %328 = vmatprep.mubr.bf16.mxu0 0
      %329 = vmatmul.mubr.bf16.gmra.mrb[0].mxu0 %v278
      %v330 = vpop.f32.mrb[0].mxu0
      %v331 = vadd.f32 %v260, %v330
      %v332 = vpop.f32.mrb[0].mxu0
      %v333 = vpop.f32.mrb[0].mxu0
      %v334 = vpop.f32.mrb[0].mxu0
      %335 = vdwg.mxu0
      %v336 = vld [vmem:[%s165 + $0x2] sm:$0xff]
      %v337 = vld [vmem:[%s165 + $0xa] sm:$0xff]
      %v338 = vld [vmem:[%s165 + $0x12] sm:$0xff]
      %v339 = vld [vmem:[%s165 + $0x1a] sm:$0xff]
      %v340 = vld [vmem:[%s165 + $0x22] sm:$0xf]
      %v341 = vpack.c.bf16 %v337, %v336
      %v342 = vpack.c.bf16 %v339, %v338
      %v343 = vpack.c.bf16 %v340, %v340
      %s344 = scalar_lea.vmem %s1, 16
      %v345 = vld [vmem:[%s344] sm:$0xf]
      %v346 = vld [vmem:[%s344 + $0x4] sm:$0xf]
      %v349 = vunpack.c.l.b16 %v345
      %v350 = vunpack.c.l.b16 %v346
      %v351 = vpack.c.b16 %v350, %v349
      %v354 = vsel %vm199, %v341, 0
      %v357 = vsel %vm199, %v342, 0
      %v360 = vsel %vm199, %v343, 0
      %362 = vmatprep.subr.bf16.mxu0 0
      %363 = vmatpush1.bf16.msra.mxu0 %v351
      %364 = vmatprep.subr.bf16.mxu0 0
      %365 = vmatpush1.bf16.msra.mxu0 0
      %366 = vmatprep.subr.bf16.mxu0 0
      %367 = vmatpush1.bf16.msra.mxu0 0
      %368 = vmatprep.subr.bf16.mxu0 0
      %369 = vmatpush1.bf16.msra.mxu0 0
      %370 = vmatprep.subr.bf16.mxu0 0
      %371 = vmatpush1.bf16.msra.mxu0 0
      %372 = vmatprep.subr.bf16.mxu0 0
      %373 = vmatpush1.bf16.msra.mxu0 0
      %374 = vmatprep.subr.bf16.mxu0 0
      %375 = vmatpush1.bf16.msra.mxu0 0
      %376 = vmatprep.subr.bf16.mxu0 0
      %377 = vmatpush1.bf16.msra.mxu0 0
      %378 = vmatprep.subr.bf16.mxu0 0
      %379 = vmatpush1.bf16.msra.mxu0 0
      %380 = vmatprep.subr.bf16.mxu0 0
      %381 = vmatpush1.bf16.msra.mxu0 0
      %382 = vmatprep.subr.bf16.mxu0 0
      %383 = vmatpush1.bf16.msra.mxu0 0
      %384 = vmatprep.subr.bf16.mxu0 0
      %385 = vmatpush1.bf16.msra.mxu0 0
      %386 = vmatprep.subr.bf16.mxu0 0
      %387 = vmatpush1.bf16.msra.mxu0 0
      %388 = vmatprep.subr.bf16.mxu0 0
      %389 = vmatpush1.bf16.msra.mxu0 0
      %390 = vmatprep.subr.bf16.mxu0 0
      %391 = vmatpush1.bf16.msra.mxu0 0
      %392 = vmatprep.subr.bf16.mxu0 0
      %393 = vmatpush1.bf16.msra.mxu0 0
      %394 = vmatprep.mubr.bf16.mxu0 0
      %395 = vmatmul.mubr.bf16.gmra.mrb[0].mxu0 %v354
      %v396 = vpop.f32.mrb[0].mxu0
      %v397 = vadd.f32 0.0, %v396
      %v398 = vpop.f32.mrb[0].mxu0
      %v399 = vpop.f32.mrb[0].mxu0
      %v400 = vadd.f32 0.0, %v399
      %v401 = vpop.f32.mrb[0].mxu0
      %402 = vmatprep.mubr.bf16.mxu0 0
      %403 = vmatmul.mubr.bf16.gmra.mrb[0].mxu0 %v357
      %v404 = vpop.f32.mrb[0].mxu0
      %v405 = vadd.f32 0.0, %v404
      %v406 = vpop.f32.mrb[0].mxu0
      %v407 = vpop.f32.mrb[0].mxu0
      %v408 = vadd.f32 0.0, %v407
      %v409 = vpop.f32.mrb[0].mxu0
      %410 = vmatprep.mubr.bf16.mxu0 0
      %411 = vmatmul.mubr.bf16.gmra.mrb[0].mxu0 %v360
      %v412 = vpop.f32.mrb[0].mxu0
      %v413 = vadd.f32 0.0, %v412
      %v414 = vpop.f32.mrb[0].mxu0
      %v415 = vpop.f32.mrb[0].mxu0
      %v416 = vpop.f32.mrb[0].mxu0
      %417 = vdwg.mxu0
      %v418 = vadd.f32 %v315, %v397
      %v419 = vadd.f32 %v318, %v400
      %v420 = vadd.f32 %v323, %v405
      %v421 = vadd.f32 %v326, %v408
      %v422 = vadd.f32 %v331, %v413
      %v423 = vld [vmem:[%s165 + $0x6] sm:$0xff]
      %v424 = vld [vmem:[%s165 + $0xe] sm:$0xff]
      %v425 = vld [vmem:[%s165 + $0x16] sm:$0xff]
      %v426 = vld [vmem:[%s165 + $0x1e] sm:$0xff]
      %v427 = vld [vmem:[%s165 + $0x26] sm:$0xf]
      %v428 = vpack.c.bf16 %v424, %v423
      %v429 = vpack.c.bf16 %v426, %v425
      %v430 = vpack.c.bf16 %v427, %v427
      %s431 = scalar_lea.vmem %s1, 24
      %v432 = vld [vmem:[%s431] sm:$0xf]
      %v433 = vld [vmem:[%s431 + $0x4] sm:$0xf]
      %v436 = vunpack.c.l.b16 %v432
      %v437 = vunpack.c.l.b16 %v433
      %v438 = vpack.c.b16 %v437, %v436
      %v441 = vsel %vm199, %v428, 0
      %v444 = vsel %vm199, %v429, 0
      %v447 = vsel %vm199, %v430, 0
      %449 = vmatprep.subr.bf16.mxu0 0
      %450 = vmatpush1.bf16.msra.mxu0 %v438
      %451 = vmatprep.subr.bf16.mxu0 0
      %452 = vmatpush1.bf16.msra.mxu0 0
      %453 = vmatprep.subr.bf16.mxu0 0
      %454 = vmatpush1.bf16.msra.mxu0 0
      %455 = vmatprep.subr.bf16.mxu0 0
      %456 = vmatpush1.bf16.msra.mxu0 0
      %457 = vmatprep.subr.bf16.mxu0 0
      %458 = vmatpush1.bf16.msra.mxu0 0
      %459 = vmatprep.subr.bf16.mxu0 0
      %460 = vmatpush1.bf16.msra.mxu0 0
      %461 = vmatprep.subr.bf16.mxu0 0
      %462 = vmatpush1.bf16.msra.mxu0 0
      %463 = vmatprep.subr.bf16.mxu0 0
      %464 = vmatpush1.bf16.msra.mxu0 0
      %465 = vmatprep.subr.bf16.mxu0 0
      %466 = vmatpush1.bf16.msra.mxu0 0
      %467 = vmatprep.subr.bf16.mxu0 0
      %468 = vmatpush1.bf16.msra.mxu0 0
      %469 = vmatprep.subr.bf16.mxu0 0
      %470 = vmatpush1.bf16.msra.mxu0 0
      %471 = vmatprep.subr.bf16.mxu0 0
      %472 = vmatpush1.bf16.msra.mxu0 0
      %473 = vmatprep.subr.bf16.mxu0 0
      %474 = vmatpush1.bf16.msra.mxu0 0
      %475 = vmatprep.subr.bf16.mxu0 0
      %476 = vmatpush1.bf16.msra.mxu0 0
      %477 = vmatprep.subr.bf16.mxu0 0
      %478 = vmatpush1.bf16.msra.mxu0 0
      %479 = vmatprep.subr.bf16.mxu0 0
      %480 = vmatpush1.bf16.msra.mxu0 0
      %481 = vmatprep.mubr.bf16.mxu0 0
      %482 = vmatmul.mubr.bf16.gmra.mrb[0].mxu0 %v441
      %v483 = vpop.f32.mrb[0].mxu0
      %v484 = vadd.f32 0.0, %v483
      %v485 = vpop.f32.mrb[0].mxu0
      %v486 = vpop.f32.mrb[0].mxu0
      %v487 = vadd.f32 0.0, %v486
      %v488 = vpop.f32.mrb[0].mxu0
      %489 = vmatprep.mubr.bf16.mxu0 0
      %490 = vmatmul.mubr.bf16.gmra.mrb[0].mxu0 %v444
      %v491 = vpop.f32.mrb[0].mxu0
      %v492 = vadd.f32 0.0, %v491
      %v493 = vpop.f32.mrb[0].mxu0
      %v494 = vpop.f32.mrb[0].mxu0
      %v495 = vadd.f32 0.0, %v494
      %v496 = vpop.f32.mrb[0].mxu0
      %497 = vmatprep.mubr.bf16.mxu0 0
      %498 = vmatmul.mubr.bf16.gmra.mrb[0].mxu0 %v447
      %v499 = vpop.f32.mrb[0].mxu0
      %v500 = vadd.f32 0.0, %v499
      %v501 = vpop.f32.mrb[0].mxu0
      %v502 = vpop.f32.mrb[0].mxu0
      %v503 = vpop.f32.mrb[0].mxu0
      %504 = vdwg.mxu0
      %v505 = vadd.f32 %v418, %v484
      %v506 = vadd.f32 %v419, %v487
      %v507 = vadd.f32 %v420, %v492
      %v508 = vadd.f32 %v421, %v495
      %v509 = vadd.f32 %v422, %v500
      %v510 = vld [vmem:[%s165 + $0x7] sm:$0xff]
      %v511 = vld [vmem:[%s165 + $0xf] sm:$0xff]
      %v512 = vld [vmem:[%s165 + $0x17] sm:$0xff]
      %v513 = vld [vmem:[%s165 + $0x1f] sm:$0xff]
      %v514 = vld [vmem:[%s165 + $0x27] sm:$0xf]
      %v515 = vpack.c.bf16 %v511, %v510
      %v516 = vpack.c.bf16 %v513, %v512
      %v517 = vpack.c.bf16 %v514, %v514
      %s518 = scalar_lea.vmem %s1, 32
      %v519 = vld [vmem:[%s518] sm:$0xf]
      %v520 = vld [vmem:[%s518 + $0x4] sm:$0xf]
      %v523 = vunpack.c.l.b16 %v519
      %v524 = vunpack.c.l.b16 %v520
      %v525 = vpack.c.b16 %v524, %v523
      %v528 = vsel %vm199, %v515, 0
      %v531 = vsel %vm199, %v516, 0
      %v534 = vsel %vm199, %v517, 0
      %536 = vmatprep.subr.bf16.mxu0 0
      %537 = vmatpush1.bf16.msra.mxu0 %v525
      %538 = vmatprep.subr.bf16.mxu0 0
      %539 = vmatpush1.bf16.msra.mxu0 0
      %540 = vmatprep.subr.bf16.mxu0 0
      %541 = vmatpush1.bf16.msra.mxu0 0
      %542 = vmatprep.subr.bf16.mxu0 0
      %543 = vmatpush1.bf16.msra.mxu0 0
      %544 = vmatprep.subr.bf16.mxu0 0
      %545 = vmatpush1.bf16.msra.mxu0 0
      %546 = vmatprep.subr.bf16.mxu0 0
      %547 = vmatpush1.bf16.msra.mxu0 0
      %548 = vmatprep.subr.bf16.mxu0 0
      %549 = vmatpush1.bf16.msra.mxu0 0
      %550 = vmatprep.subr.bf16.mxu0 0
      %551 = vmatpush1.bf16.msra.mxu0 0
      %552 = vmatprep.subr.bf16.mxu0 0
      %553 = vmatpush1.bf16.msra.mxu0 0
      %554 = vmatprep.subr.bf16.mxu0 0
      %555 = vmatpush1.bf16.msra.mxu0 0
      %556 = vmatprep.subr.bf16.mxu0 0
      %557 = vmatpush1.bf16.msra.mxu0 0
      %558 = vmatprep.subr.bf16.mxu0 0
      %559 = vmatpush1.bf16.msra.mxu0 0
      %560 = vmatprep.subr.bf16.mxu0 0
      %561 = vmatpush1.bf16.msra.mxu0 0
      %562 = vmatprep.subr.bf16.mxu0 0
      %563 = vmatpush1.bf16.msra.mxu0 0
      %564 = vmatprep.subr.bf16.mxu0 0
      %565 = vmatpush1.bf16.msra.mxu0 0
      %566 = vmatprep.subr.bf16.mxu0 0
      %567 = vmatpush1.bf16.msra.mxu0 0
      %568 = vmatprep.mubr.bf16.mxu0 0
      %569 = vmatmul.mubr.bf16.gmra.mrb[0].mxu0 %v528
      %v570 = vpop.f32.mrb[0].mxu0
      %v571 = vadd.f32 0.0, %v570
      %v572 = vpop.f32.mrb[0].mxu0
      %v573 = vpop.f32.mrb[0].mxu0
      %v574 = vadd.f32 0.0, %v573
      %v575 = vpop.f32.mrb[0].mxu0
      %576 = vmatprep.mubr.bf16.mxu0 0
      %577 = vmatmul.mubr.bf16.gmra.mrb[0].mxu0 %v531
      %v578 = vpop.f32.mrb[0].mxu0
      %v579 = vadd.f32 0.0, %v578
      %v580 = vpop.f32.mrb[0].mxu0
      %v581 = vpop.f32.mrb[0].mxu0
      %v582 = vadd.f32 0.0, %v581
      %v583 = vpop.f32.mrb[0].mxu0
      %584 = vmatprep.mubr.bf16.mxu0 0
      %585 = vmatmul.mubr.bf16.gmra.mrb[0].mxu0 %v534
      %v586 = vpop.f32.mrb[0].mxu0
      %v587 = vadd.f32 0.0, %v586
      %v588 = vpop.f32.mrb[0].mxu0
      %v589 = vpop.f32.mrb[0].mxu0
      %v590 = vpop.f32.mrb[0].mxu0
      %591 = vdwg.mxu0
      %v592 = vadd.f32 %v505, %v571
      %v593 = vadd.f32 %v506, %v574
      %v594 = vadd.f32 %v507, %v579
      %v595 = vadd.f32 %v508, %v582
      %v596 = vadd.f32 %v509, %v587
      %v597 = vld [vmem:[%s165 + $0x8] sm:$0xff]
      %v598 = vld [vmem:[%s165 + $0x10] sm:$0xff]
      %v599 = vld [vmem:[%s165 + $0x18] sm:$0xff]
      %v600 = vld [vmem:[%s165 + $0x20] sm:$0xff]
      %v601 = vld [vmem:[%s165 + $0x28] sm:$0xf]
      %v602 = vpack.c.bf16 %v598, %v597
      %v603 = vpack.c.bf16 %v600, %v599
      %v604 = vpack.c.bf16 %v601, %v601
      %s605 = scalar_lea.vmem %s1, 40
      %v606 = vld [vmem:[%s605] sm:$0xf]
      %v607 = vld [vmem:[%s605 + $0x4] sm:$0xf]
      %v610 = vunpack.c.l.b16 %v606
      %v611 = vunpack.c.l.b16 %v607
      %v612 = vpack.c.b16 %v611, %v610
      %v615 = vsel %vm199, %v602, 0
      %v618 = vsel %vm199, %v603, 0
      %v621 = vsel %vm199, %v604, 0
      %623 = vmatprep.subr.bf16.mxu0 0
      %624 = vmatpush1.bf16.msra.mxu0 %v612
      %625 = vmatprep.subr.bf16.mxu0 0
      %626 = vmatpush1.bf16.msra.mxu0 0
      %627 = vmatprep.subr.bf16.mxu0 0
      %628 = vmatpush1.bf16.msra.mxu0 0
      %629 = vmatprep.subr.bf16.mxu0 0
      %630 = vmatpush1.bf16.msra.mxu0 0
      %631 = vmatprep.subr.bf16.mxu0 0
      %632 = vmatpush1.bf16.msra.mxu0 0
      %633 = vmatprep.subr.bf16.mxu0 0
      %634 = vmatpush1.bf16.msra.mxu0 0
      %635 = vmatprep.subr.bf16.mxu0 0
      %636 = vmatpush1.bf16.msra.mxu0 0
      %637 = vmatprep.subr.bf16.mxu0 0
      %638 = vmatpush1.bf16.msra.mxu0 0
      %639 = vmatprep.subr.bf16.mxu0 0
      %640 = vmatpush1.bf16.msra.mxu0 0
      %641 = vmatprep.subr.bf16.mxu0 0
      %642 = vmatpush1.bf16.msra.mxu0 0
      %643 = vmatprep.subr.bf16.mxu0 0
      %644 = vmatpush1.bf16.msra.mxu0 0
      %645 = vmatprep.subr.bf16.mxu0 0
      %646 = vmatpush1.bf16.msra.mxu0 0
      %647 = vmatprep.subr.bf16.mxu0 0
      %648 = vmatpush1.bf16.msra.mxu0 0
      %649 = vmatprep.subr.bf16.mxu0 0
      %650 = vmatpush1.bf16.msra.mxu0 0
      %651 = vmatprep.subr.bf16.mxu0 0
      %652 = vmatpush1.bf16.msra.mxu0 0
      %653 = vmatprep.subr.bf16.mxu0 0
      %654 = vmatpush1.bf16.msra.mxu0 0
      %655 = vmatprep.mubr.bf16.mxu0 0
      %656 = vmatmul.mubr.bf16.gmra.mrb[0].mxu0 %v615
      %v657 = vpop.f32.mrb[0].mxu0
      %v658 = vadd.f32 0.0, %v657
      %v659 = vpop.f32.mrb[0].mxu0
      %v660 = vpop.f32.mrb[0].mxu0
      %v661 = vadd.f32 0.0, %v660
      %v662 = vpop.f32.mrb[0].mxu0
      %663 = vmatprep.mubr.bf16.mxu0 0
      %664 = vmatmul.mubr.bf16.gmra.mrb[0].mxu0 %v618
      %v665 = vpop.f32.mrb[0].mxu0
      %v666 = vadd.f32 0.0, %v665
      %v667 = vpop.f32.mrb[0].mxu0
      %v668 = vpop.f32.mrb[0].mxu0
      %v669 = vadd.f32 0.0, %v668
      %v670 = vpop.f32.mrb[0].mxu0
      %671 = vmatprep.mubr.bf16.mxu0 0
      %672 = vmatmul.mubr.bf16.gmra.mrb[0].mxu0 %v621
      %v673 = vpop.f32.mrb[0].mxu0
      %v674 = vadd.f32 0.0, %v673
      %v675 = vpop.f32.mrb[0].mxu0
      %v676 = vpop.f32.mrb[0].mxu0
      %v677 = vpop.f32.mrb[0].mxu0
      %678 = vdwg.mxu0
      %v679 = vadd.f32 %v592, %v658
      %v680 = vadd.f32 %v593, %v661
      %v681 = vadd.f32 %v594, %v666
      %v682 = vadd.f32 %v595, %v669
      %v683 = vadd.f32 %v596, %v674
      %v684 = vld [vmem:[%s165 + $0xc] sm:$0xff]
      %v685 = vld [vmem:[%s165 + $0x14] sm:$0xff]
      %v686 = vld [vmem:[%s165 + $0x1c] sm:$0xff]
      %v687 = vld [vmem:[%s165 + $0x24] sm:$0xff]
      %v688 = vld [vmem:[%s165 + $0x2c] sm:$0xf]
      %v689 = vpack.c.bf16 %v685, %v684
      %v690 = vpack.c.bf16 %v687, %v686
      %v691 = vpack.c.bf16 %v688, %v688
      %s692 = scalar_lea.vmem %s1, 48
      %v693 = vld [vmem:[%s692] sm:$0xf]
      %v694 = vld [vmem:[%s692 + $0x4] sm:$0xf]
      %v697 = vunpack.c.l.b16 %v693
      %v698 = vunpack.c.l.b16 %v694
      %v699 = vpack.c.b16 %v698, %v697
      %v702 = vsel %vm199, %v689, 0
      %v705 = vsel %vm199, %v690, 0
      %v708 = vsel %vm199, %v691, 0
      %710 = vmatprep.subr.bf16.mxu0 0
      %711 = vmatpush1.bf16.msra.mxu0 %v699
      %712 = vmatprep.subr.bf16.mxu0 0
      %713 = vmatpush1.bf16.msra.mxu0 0
      %714 = vmatprep.subr.bf16.mxu0 0
      %715 = vmatpush1.bf16.msra.mxu0 0
      %716 = vmatprep.subr.bf16.mxu0 0
      %717 = vmatpush1.bf16.msra.mxu0 0
      %718 = vmatprep.subr.bf16.mxu0 0
      %719 = vmatpush1.bf16.msra.mxu0 0
      %720 = vmatprep.subr.bf16.mxu0 0
      %721 = vmatpush1.bf16.msra.mxu0 0
      %722 = vmatprep.subr.bf16.mxu0 0
      %723 = vmatpush1.bf16.msra.mxu0 0
      %724 = vmatprep.subr.bf16.mxu0 0
      %725 = vmatpush1.bf16.msra.mxu0 0
      %726 = vmatprep.subr.bf16.mxu0 0
      %727 = vmatpush1.bf16.msra.mxu0 0
      %728 = vmatprep.subr.bf16.mxu0 0
      %729 = vmatpush1.bf16.msra.mxu0 0
      %730 = vmatprep.subr.bf16.mxu0 0
      %731 = vmatpush1.bf16.msra.mxu0 0
      %732 = vmatprep.subr.bf16.mxu0 0
      %733 = vmatpush1.bf16.msra.mxu0 0
      %734 = vmatprep.subr.bf16.mxu0 0
      %735 = vmatpush1.bf16.msra.mxu0 0
      %736 = vmatprep.subr.bf16.mxu0 0
      %737 = vmatpush1.bf16.msra.mxu0 0
      %738 = vmatprep.subr.bf16.mxu0 0
      %739 = vmatpush1.bf16.msra.mxu0 0
      %740 = vmatprep.subr.bf16.mxu0 0
      %741 = vmatpush1.bf16.msra.mxu0 0
      %742 = vmatprep.mubr.bf16.mxu0 0
      %743 = vmatmul.mubr.bf16.gmra.mrb[0].mxu0 %v702
      %v744 = vpop.f32.mrb[0].mxu0
      %v745 = vadd.f32 0.0, %v744
      %v746 = vpop.f32.mrb[0].mxu0
      %v747 = vpop.f32.mrb[0].mxu0
      %v748 = vadd.f32 0.0, %v747
      %v749 = vpop.f32.mrb[0].mxu0
      %750 = vmatprep.mubr.bf16.mxu0 0
      %751 = vmatmul.mubr.bf16.gmra.mrb[0].mxu0 %v705
      %v752 = vpop.f32.mrb[0].mxu0
      %v753 = vadd.f32 0.0, %v752
      %v754 = vpop.f32.mrb[0].mxu0
      %v755 = vpop.f32.mrb[0].mxu0
      %v756 = vadd.f32 0.0, %v755
      %v757 = vpop.f32.mrb[0].mxu0
      %758 = vmatprep.mubr.bf16.mxu0 0
      %759 = vmatmul.mubr.bf16.gmra.mrb[0].mxu0 %v708
      %v760 = vpop.f32.mrb[0].mxu0
      %v761 = vadd.f32 0.0, %v760
      %v762 = vpop.f32.mrb[0].mxu0
      %v763 = vpop.f32.mrb[0].mxu0
      %v764 = vpop.f32.mrb[0].mxu0
      %765 = vdwg.mxu0
      %v766 = vadd.f32 %v679, %v745
      %v767 = vadd.f32 %v680, %v748
      %v768 = vadd.f32 %v681, %v753
      %v769 = vadd.f32 %v682, %v756
      %v770 = vadd.f32 %v683, %v761
      %v771 = vld [vmem:[%s165 + $0xd] sm:$0xff]
      %v772 = vld [vmem:[%s165 + $0x15] sm:$0xff]
      %v773 = vld [vmem:[%s165 + $0x1d] sm:$0xff]
      %v774 = vld [vmem:[%s165 + $0x25] sm:$0xff]
      %v775 = vld [vmem:[%s165 + $0x2d] sm:$0xf]
      %v776 = vpack.c.bf16 %v772, %v771
      %v777 = vpack.c.bf16 %v774, %v773
      %v778 = vpack.c.bf16 %v775, %v775
      %s779 = scalar_lea.vmem %s1, 56
      %v780 = vld [vmem:[%s779] sm:$0xf]
      %v781 = vld [vmem:[%s779 + $0x4] sm:$0xf]
      %v784 = vunpack.c.l.b16 %v780
      %v785 = vunpack.c.l.b16 %v781
      %v786 = vpack.c.b16 %v785, %v784
      %v789 = vsel %vm199, %v776, 0
      %v792 = vsel %vm199, %v777, 0
      %v795 = vsel %vm199, %v778, 0
      %797 = vmatprep.subr.bf16.mxu0 0
      %798 = vmatpush1.bf16.msra.mxu0 %v786
      %799 = vmatprep.subr.bf16.mxu0 0
      %800 = vmatpush1.bf16.msra.mxu0 0
      %801 = vmatprep.subr.bf16.mxu0 0
      %802 = vmatpush1.bf16.msra.mxu0 0
      %803 = vmatprep.subr.bf16.mxu0 0
      %804 = vmatpush1.bf16.msra.mxu0 0
      %805 = vmatprep.subr.bf16.mxu0 0
      %806 = vmatpush1.bf16.msra.mxu0 0
      %807 = vmatprep.subr.bf16.mxu0 0
      %808 = vmatpush1.bf16.msra.mxu0 0
      %809 = vmatprep.subr.bf16.mxu0 0
      %810 = vmatpush1.bf16.msra.mxu0 0
      %811 = vmatprep.subr.bf16.mxu0 0
      %812 = vmatpush1.bf16.msra.mxu0 0
      %813 = vmatprep.subr.bf16.mxu0 0
      %814 = vmatpush1.bf16.msra.mxu0 0
      %815 = vmatprep.subr.bf16.mxu0 0
      %816 = vmatpush1.bf16.msra.mxu0 0
      %817 = vmatprep.subr.bf16.mxu0 0
      %818 = vmatpush1.bf16.msra.mxu0 0
      %819 = vmatprep.subr.bf16.mxu0 0
      %820 = vmatpush1.bf16.msra.mxu0 0
      %821 = vmatprep.subr.bf16.mxu0 0
      %822 = vmatpush1.bf16.msra.mxu0 0
      %823 = vmatprep.subr.bf16.mxu0 0
      %824 = vmatpush1.bf16.msra.mxu0 0
      %825 = vmatprep.subr.bf16.mxu0 0
      %826 = vmatpush1.bf16.msra.mxu0 0
      %827 = vmatprep.subr.bf16.mxu0 0
      %828 = vmatpush1.bf16.msra.mxu0 0
      %829 = vmatprep.mubr.bf16.mxu0 0
      %830 = vmatmul.mubr.bf16.gmra.mrb[0].mxu0 %v789
      %v831 = vpop.f32.mrb[0].mxu0
      %v832 = vadd.f32 0.0, %v831
      %v833 = vpop.f32.mrb[0].mxu0
      %v834 = vpop.f32.mrb[0].mxu0
      %v835 = vadd.f32 0.0, %v834
      %v836 = vpop.f32.mrb[0].mxu0
      %837 = vmatprep.mubr.bf16.mxu0 0
      %838 = vmatmul.mubr.bf16.gmra.mrb[0].mxu0 %v792
      %v839 = vpop.f32.mrb[0].mxu0
      %v840 = vadd.f32 0.0, %v839
      %v841 = vpop.f32.mrb[0].mxu0
      %v842 = vpop.f32.mrb[0].mxu0
      %v843 = vadd.f32 0.0, %v842
      %v844 = vpop.f32.mrb[0].mxu0
      %845 = vmatprep.mubr.bf16.mxu0 0
      %846 = vmatmul.mubr.bf16.gmra.mrb[0].mxu0 %v795
      %v847 = vpop.f32.mrb[0].mxu0
      %v848 = vadd.f32 0.0, %v847
      %v849 = vpop.f32.mrb[0].mxu0
      %v850 = vpop.f32.mrb[0].mxu0
      %v851 = vpop.f32.mrb[0].mxu0
      %852 = vdwg.mxu0
      %v853 = vadd.f32 %v766, %v832
      %v854 = vadd.f32 %v767, %v835
      %v855 = vadd.f32 %v768, %v840
      %v856 = vadd.f32 %v769, %v843
      %v857 = vadd.f32 %v770, %v848
      %v858 = vld [vmem:[%s165 + $0xe] sm:$0xff]
      %v859 = vld [vmem:[%s165 + $0x16] sm:$0xff]
      %v860 = vld [vmem:[%s165 + $0x1e] sm:$0xff]
      %v861 = vld [vmem:[%s165 + $0x26] sm:$0xff]
      %v862 = vld [vmem:[%s165 + $0x2e] sm:$0xf]
      %v863 = vpack.c.bf16 %v859, %v858
      %v864 = vpack.c.bf16 %v861, %v860
      %v865 = vpack.c.bf16 %v862, %v862
      %s866 = scalar_lea.vmem %s1, 64
      %v867 = vld [vmem:[%s866] sm:$0xf]
      %v868 = vld [vmem:[%s866 + $0x4] sm:$0xf]
      %v871 = vunpack.c.l.b16 %v867
      %v872 = vunpack.c.l.b16 %v868
      %v873 = vpack.c.b16 %v872, %v871
      %v876 = vsel %vm199, %v863, 0
      %v879 = vsel %vm199, %v864, 0
      %v882 = vsel %vm199, %v865, 0
      %884 = vmatprep.subr.bf16.mxu0 0
      %885 = vmatpush1.bf16.msra.mxu0 %v873
      %886 = vmatprep.subr.bf16.mxu0 0
      %887 = vmatpush1.bf16.msra.mxu0 0
      %888 = vmatprep.subr.bf16.mxu0 0
      %889 = vmatpush1.bf16.msra.mxu0 0
      %890 = vmatprep.subr.bf16.mxu0 0
      %891 = vmatpush1.bf16.msra.mxu0 0
      %892 = vmatprep.subr.bf16.mxu0 0
      %893 = vmatpush1.bf16.msra.mxu0 0
      %894 = vmatprep.subr.bf16.mxu0 0
      %895 = vmatpush1.bf16.msra.mxu0 0
      %896 = vmatprep.subr.bf16.mxu0 0
      %897 = vmatpush1.bf16.msra.mxu0 0
      %898 = vmatprep.subr.bf16.mxu0 0
      %899 = vmatpush1.bf16.msra.mxu0 0
      %900 = vmatprep.subr.bf16.mxu0 0
      %901 = vmatpush1.bf16.msra.mxu0 0
      %902 = vmatprep.subr.bf16.mxu0 0
      %903 = vmatpush1.bf16.msra.mxu0 0
      %904 = vmatprep.subr.bf16.mxu0 0
      %905 = vmatpush1.bf16.msra.mxu0 0
      %906 = vmatprep.subr.bf16.mxu0 0
      %907 = vmatpush1.bf16.msra.mxu0 0
      %908 = vmatprep.subr.bf16.mxu0 0
      %909 = vmatpush1.bf16.msra.mxu0 0
      %910 = vmatprep.subr.bf16.mxu0 0
      %911 = vmatpush1.bf16.msra.mxu0 0
      %912 = vmatprep.subr.bf16.mxu0 0
      %913 = vmatpush1.bf16.msra.mxu0 0
      %914 = vmatprep.subr.bf16.mxu0 0
      %915 = vmatpush1.bf16.msra.mxu0 0
      %916 = vmatprep.mubr.bf16.mxu0 0
      %917 = vmatmul.mubr.bf16.gmra.mrb[0].mxu0 %v876
      %v918 = vpop.f32.mrb[0].mxu0
      %v919 = vadd.f32 0.0, %v918
      %v920 = vpop.f32.mrb[0].mxu0
      %v921 = vpop.f32.mrb[0].mxu0
      %v922 = vadd.f32 0.0, %v921
      %v923 = vpop.f32.mrb[0].mxu0
      %924 = vmatprep.mubr.bf16.mxu0 0
      %925 = vmatmul.mubr.bf16.gmra.mrb[0].mxu0 %v879
      %v926 = vpop.f32.mrb[0].mxu0
      %v927 = vadd.f32 0.0, %v926
      %v928 = vpop.f32.mrb[0].mxu0
      %v929 = vpop.f32.mrb[0].mxu0
      %v930 = vadd.f32 0.0, %v929
      %v931 = vpop.f32.mrb[0].mxu0
      %932 = vmatprep.mubr.bf16.mxu0 0
      %933 = vmatmul.mubr.bf16.gmra.mrb[0].mxu0 %v882
      %v934 = vpop.f32.mrb[0].mxu0
      %v935 = vadd.f32 0.0, %v934
      %v936 = vpop.f32.mrb[0].mxu0
      %v937 = vpop.f32.mrb[0].mxu0
      %v938 = vpop.f32.mrb[0].mxu0
      %939 = vdwg.mxu0
      %v940 = vadd.f32 %v853, %v919
      %v941 = vadd.f32 %v854, %v922
      %v942 = vadd.f32 %v855, %v927
      %v943 = vadd.f32 %v856, %v930
      %v944 = vadd.f32 %v857, %v935
      %v945 = vld [vmem:[%s2] sm:$0x1]
      %v947 = vlaneseq
      %v948 = vshrl.u32 %v947, 7
      %v949 = vsub.s32 0, %v948
      %v950 = vrot.slane %v945, %v949
      %v952 = vadd.f32 %v940, %v950
      %v953 = vadd.f32 %v941, %v950
      %v954 = vadd.f32 %v942, %v950
      %v955 = vadd.f32 %v943, %v950
      %v956 = vadd.f32 %v944, %v950
      %vm957 = vcmask 261120
      %958 = vst.msk [vmem:[%s170] sm:$0xff] %vm957, %v952
      %959 = vst.msk [vmem:[%s170 + $0x8] sm:$0xff] %vm957, %v953
      %960 = vst.msk [vmem:[%s170 + $0x10] sm:$0xff] %vm957, %v954
      %961 = vst.msk [vmem:[%s170 + $0x18] sm:$0xff] %vm957, %v955
      %vm962 = vcmask 257024
      %963 = vst.msk [vmem:[%s170 + $0x20] sm:$0xf] %vm962, %v956
      %p964 = scmp.lt.s32.totalorder %s14, 1
      %s965 = scalar_select %p964, %s14, 1
      %s966 = smul.addr %s965, 5
      %s967 = smul.addr %s966, 8
      %s968 = scalar_lea.vmem %s3, %s967
      // Predicated region
      $region33: #{review_kd_forward.7} parent=31 // pred_check
        %p969 = pneg %p100
      $region34: #{review_kd_forward.7} parent=31 // pred_check_branch
        %971 = sbr.rel (%p969) target = $region36
      $region35: #{review_kd_forward.7} parent=31 // pred_region
        _
      $region36: #{review_kd_forward.7} parent=31 // pred_fallthru
        _
    $region32: #{review_kd_forward.7} parent=5 // pred_fallthru
      _
    %p972 = scmp.le.s32.totalorder 2, %s9
    // Predicated region
    $region37: #{review_kd_forward.7} parent=5 // pred_check
      %p973 = pneg %p972
    $region38: #{review_kd_forward.7} parent=5 // pred_check_branch
      %975 = sbr.rel (%p973) target = $region40
    $region39: #{review_kd_forward.7} parent=5 // pred_region
      %s976 = ssub.s32 %s9, 2
      // Predicated region
      $region41: #{review_kd_forward.7} parent=39 // pred_check
        %p977 = pneg %p106
      $region42: #{review_kd_forward.7} parent=39 // pred_check_branch
        %979 = sbr.rel (%p977) target = $region44
      $region43: #{review_kd_forward.7} parent=39 // pred_region
        %p980 = scmp.lt.s32.totalorder %s15, 1
        %s981 = scalar_select %p980, %s15, 1
        %s982 = smul.addr %s981, 5
        %s983 = smul.addr %s982, 8
        %s984 = scalar_lea.vmem %s3, %s983
      $region44: #{review_kd_forward.7} parent=39 // pred_fallthru
        _
    $region40: #{review_kd_forward.7} parent=5 // pred_fallthru
      _
  $region6: #{review_kd_forward.7} parent=0 // loop_footer
    %s13 = sadd.s32 1, %s9
  $region7: #{review_kd_forward.7} parent=0 // loop_footer_branch
    %8 = sbr.rel target = $region3
  $region8: #{review_kd_forward.7} parent=0 // loop_exit
    _

</llo_original>
